<compile_context>
chip_gen: v7x
topology: tpu7x:2x2x1
jax: 0.10.0
libtpu: 0.0.40
codegen_flags: <defaults>
</compile_context>

<pallas_src>
import jax
import jax.numpy as jnp
from jax.experimental import pallas as pl
from jax.experimental.pallas import tpu as pltpu

N_PAD = 128  # final (512, 4) layer zero-padded to a lane-dense 128-wide output


# --------------------------------------------------------------------------- #
# Kernel
# --------------------------------------------------------------------------- #
def mlp_kernel(x_ref,
               w0_ref, b0_ref,
               w1_ref, b1_ref,
               w2_ref, b2_ref,
               w3_ref, b3_ref,
               w4_ref, b4_ref,
               o_ref):
    """Whole 5-layer MLP fused; bf16 MXU matmuls with f32 accumulation."""

    def relu_layer(h_bf16, w_ref, b_ref):
        acc = jnp.dot(h_bf16, w_ref[...], preferred_element_type=jnp.float32)
        acc = acc + b_ref[...]                                # f32 bias add
        return jnp.maximum(acc, 0.0).astype(jnp.bfloat16)     # f32 ReLU, bf16 out

    # f32 tile straight from HBM, cast to bf16 on the VPU (no wrapper cast op).
    h = x_ref[...].astype(jnp.bfloat16)
    h = relu_layer(h, w0_ref, b0_ref)
    h = relu_layer(h, w1_ref, b1_ref)
    h = relu_layer(h, w2_ref, b2_ref)
    h = relu_layer(h, w3_ref, b3_ref)
    out = jnp.dot(h, w4_ref[...], preferred_element_type=jnp.float32) + b4_ref[...]
    o_ref[...] = out.astype(o_ref.dtype)                      # lane-dense (tile_b, 128)


# --------------------------------------------------------------------------- #
# Wrapper
# --------------------------------------------------------------------------- #
def prepare_params(params):
    """One-time weight prep: bf16 cast + zero-pad of the last layer to 128 cols.

    Call once and reuse the result (caching this is a 2-3x end-to-end win for
    small-batch calls vs re-casting inside every forward).
    params: list of (W_(in,out) f32, b_(1,out) f32).  Returns (flat, d_out).
    """
    n_layers = len(params)
    d_out = params[-1][0].shape[1]
    flat = []
    for li, (w, b) in enumerate(params):
        w = jnp.asarray(w, jnp.bfloat16)
        b = jnp.asarray(b, jnp.float32).reshape(1, -1)
        if li == n_layers - 1:
            pad = N_PAD - d_out
            w = jnp.pad(w, ((0, 0), (0, pad)))
            b = jnp.pad(b, ((0, 0), (0, pad)))
        flat.append((w, b))
    return flat, d_out


def _pick_tile(B):
    if B <= 128:
        return B  # single grid step; this regime is weight-DMA bound anyway
    # v7x has 2 TensorCores: keep >= 2 grid steps so the "parallel" batch axis
    # shards across both.  Cap at 1024 rows: big enough to amortize the
    # ~0.35 us per-step pipeline overhead (v6e), small enough for 48 MiB VMEM.
    half = -(-B // 2)            # ceil(B / 2)
    half = -(-half // 8) * 8     # round up to a sublane multiple of 8
    return min(1024, half)


def _resident_spec(shape, single_buffer):
    # Constant index_map -> Pallas DMAs this block exactly once across the
    # grid; single-buffering avoids wasting VMEM on the unused second buffer.
    if single_buffer:
        return pl.BlockSpec(shape, lambda i: (0, 0), pipeline_mode=pl.Buffered(1))
    return pl.BlockSpec(shape, lambda i: (0, 0))


def mlp_forward(x, prepared, *, tile_b=None, single_buffer_weights=True):
    """x: (B, 512) float32.  prepared: output of prepare_params()."""
    flat_params, d_out = prepared
    B, D_in = x.shape
    x = x.astype(jnp.float32)

    if tile_b is None:
        tile_b = _pick_tile(B)
    n_steps = pl.cdiv(B, tile_b)
    Bp = n_steps * tile_b
    if Bp != B:
        x = jnp.pad(x, ((0, Bp - B), (0, 0)))

    args = []
    for w, b in flat_params:
        args.extend([w, b])

    def run(single_buffer):
        in_specs = [pl.BlockSpec((tile_b, D_in), lambda i: (i, 0))]
        for w, b in flat_params:
            in_specs.append(_resident_spec(w.shape, single_buffer))
            in_specs.append(_resident_spec(b.shape, single_buffer))
        out_specs = pl.BlockSpec((tile_b, N_PAD), lambda i: (i, 0))

        return pl.pallas_call(
            mlp_kernel,
            out_shape=jax.ShapeDtypeStruct((Bp, N_PAD), jnp.float32),
            grid_spec=pltpu.PrefetchScalarGridSpec(
                num_scalar_prefetch=0,
                grid=(n_steps,),
                in_specs=in_specs,
                out_specs=out_specs,
            ),
            compiler_params=pltpu.CompilerParams(
                dimension_semantics=("parallel",),
                vmem_limit_bytes=48 << 20,   # <= v7x's 64 MiB physical VMEM
            ),
        )(x, *args)

    if single_buffer_weights and hasattr(pl, "Buffered"):
        try:
            out_padded = run(True)
        except Exception:
            # pipeline_mode not supported by this jax build; default buffering.
            out_padded = run(False)
    else:
        out_padded = run(False)

    # Drop batch padding and the 124 zero-padded output columns.
    return out_padded[:B, :d_out]


# --------------------------------------------------------------------------- #
# Reference / init
# --------------------------------------------------------------------------- #
def init_params(key):
    """Deterministic init matching nn.Linear shapes (stored as (in, out))."""
    sizes = [(512, 1024), (1024, 512), (512, 512), (512, 512), (512, 4)]
    params = []
    for (fan_in, fan_out) in sizes:
        kw, kb, key = jax.random.split(key, 3)
        bound = 1.0 / jnp.sqrt(fan_in)
        w = jax.random.uniform(kw, (fan_in, fan_out), jnp.float32, -bound, bound)
        b = jax.random.uniform(kb, (1, fan_out), jnp.float32, -bound, bound)
        params.append((w, b))
    return params


def reference_forward(x, params):
    h = x
    for (w, b) in params[:-1]:
        h = jnp.maximum(h @ w + b, 0.0)
    w, b = params[-1]
    return h @ w + b


if __name__ == "__main__":
    key = jax.random.PRNGKey(0)
    kx, kp = jax.random.split(key)

    params = init_params(kp)
    prepared = prepare_params(params)   # cast/pad ONCE, reuse across calls

    # Small-batch case: single grid step, weight-DMA-bound regime.
    B = 16
    x = jax.random.normal(kx, (B, 512), jnp.float32)
    out = jax.block_until_ready(mlp_forward(x, prepared))
    ref = reference_forward(x, params)
    assert out.shape == (B, 4), out.shape
    # bf16 matmul inputs vs pure-f32 reference: ~1e-2 relative error expected.
    assert jnp.allclose(out, ref, atol=1e-1, rtol=1e-1), "mismatch vs JAX reference (B=16)"

    # Ragged multi-step case: exercises batch padding + 2-step parallel grid
    # (the path that shards across both TensorCores on v7x).
    B2 = 200
    x2 = jax.random.normal(kx, (B2, 512), jnp.float32)
    out2 = jax.block_until_ready(mlp_forward(x2, prepared))
    ref2 = reference_forward(x2, params)
    assert out2.shape == (B2, 4), out2.shape
    assert jnp.allclose(out2, ref2, atol=1e-1, rtol=1e-1), "mismatch vs JAX reference (B=200)"

    print("KERNEL_OK")
</pallas_src>

<mosaic_0001>
module attributes {stable_mosaic.version = 11 : i64} {
  func.func @mlp_kernel(%arg0: i32, %arg1: memref<16x512xf32, #tpu.memory_space<vmem>>, %arg2: memref<512x1024xbf16, #tpu.memory_space<vmem>>, %arg3: memref<1x1024xf32, #tpu.memory_space<vmem>>, %arg4: memref<1024x512xbf16, #tpu.memory_space<vmem>>, %arg5: memref<1x512xf32, #tpu.memory_space<vmem>>, %arg6: memref<512x512xbf16, #tpu.memory_space<vmem>>, %arg7: memref<1x512xf32, #tpu.memory_space<vmem>>, %arg8: memref<512x512xbf16, #tpu.memory_space<vmem>>, %arg9: memref<1x512xf32, #tpu.memory_space<vmem>>, %arg10: memref<512x128xbf16, #tpu.memory_space<vmem>>, %arg11: memref<1x128xf32, #tpu.memory_space<vmem>>, %arg12: memref<16x128xf32, #tpu.memory_space<vmem>>) attributes {dimension_semantics = [#tpu.dimension_semantics<parallel>], iteration_bounds = array<i64: 1>, scalar_prefetch = 0 : i64, scratch_operands = 0 : i64, tpu.core_type = #tpu.core_type<tc>, window_params = [{transform_indices = @transform_0, window_bounds = array<i64: 16, 512>}, {pipeline_mode = #tpu.pipeline_mode<synchronous>, transform_indices = @transform_1, window_bounds = array<i64: 512, 1024>}, {pipeline_mode = #tpu.pipeline_mode<synchronous>, transform_indices = @transform_2, window_bounds = array<i64: 1, 1024>}, {pipeline_mode = #tpu.pipeline_mode<synchronous>, transform_indices = @transform_3, window_bounds = array<i64: 1024, 512>}, {pipeline_mode = #tpu.pipeline_mode<synchronous>, transform_indices = @transform_4, window_bounds = array<i64: 1, 512>}, {pipeline_mode = #tpu.pipeline_mode<synchronous>, transform_indices = @transform_5, window_bounds = array<i64: 512, 512>}, {pipeline_mode = #tpu.pipeline_mode<synchronous>, transform_indices = @transform_6, window_bounds = array<i64: 1, 512>}, {pipeline_mode = #tpu.pipeline_mode<synchronous>, transform_indices = @transform_7, window_bounds = array<i64: 512, 512>}, {pipeline_mode = #tpu.pipeline_mode<synchronous>, transform_indices = @transform_8, window_bounds = array<i64: 1, 512>}, {pipeline_mode = #tpu.pipeline_mode<synchronous>, transform_indices = @transform_9, window_bounds = array<i64: 512, 128>}, {pipeline_mode = #tpu.pipeline_mode<synchronous>, transform_indices = @transform_10, window_bounds = array<i64: 1, 128>}, {transform_indices = @transform_11, window_bounds = array<i64: 16, 128>}]} {
    %c0 = arith.constant 0 : index
    %c0_0 = arith.constant 0 : index
    %0 = vector.load %arg1[%c0, %c0_0] : memref<16x512xf32, #tpu.memory_space<vmem>>, vector<16x512xf32>
    %1 = arith.truncf %0 : vector<16x512xf32> to vector<16x512xbf16>
    %c0_1 = arith.constant 0 : index
    %c0_2 = arith.constant 0 : index
    %2 = vector.load %arg2[%c0_1, %c0_2] : memref<512x1024xbf16, #tpu.memory_space<vmem>>, vector<512x1024xbf16>
    %cst = arith.constant dense<0.000000e+00> : vector<16x1024xf32>
    %3 = tpu.matmul %1, %2, %cst {dimension_numbers = #tpu.dot_dimension_numbers<[1], [0], [0], [1], [0, 0, 1, 1], [], []>} : vector<16x512xbf16>, vector<512x1024xbf16>, vector<16x1024xf32> -> vector<16x1024xf32>
    %c0_3 = arith.constant 0 : index
    %c0_4 = arith.constant 0 : index
    %4 = vector.load %arg3[%c0_3, %c0_4] : memref<1x1024xf32, #tpu.memory_space<vmem>>, vector<1x1024xf32>
    %5 = vector.broadcast %4 : vector<1x1024xf32> to vector<16x1024xf32>
    %6 = arith.addf %3, %5 : vector<16x1024xf32>
    %cst_5 = arith.constant 0.000000e+00 : f32
    %7 = vector.broadcast %cst_5 : f32 to vector<16x1024xf32>
    %8 = arith.maximumf %6, %7 : vector<16x1024xf32>
    %9 = arith.truncf %8 : vector<16x1024xf32> to vector<16x1024xbf16>
    %c0_6 = arith.constant 0 : index
    %c0_7 = arith.constant 0 : index
    %10 = vector.load %arg4[%c0_6, %c0_7] : memref<1024x512xbf16, #tpu.memory_space<vmem>>, vector<1024x512xbf16>
    %cst_8 = arith.constant dense<0.000000e+00> : vector<16x512xf32>
    %11 = tpu.matmul %9, %10, %cst_8 {dimension_numbers = #tpu.dot_dimension_numbers<[1], [0], [0], [1], [0, 0, 1, 1], [], []>} : vector<16x1024xbf16>, vector<1024x512xbf16>, vector<16x512xf32> -> vector<16x512xf32>
    %c0_9 = arith.constant 0 : index
    %c0_10 = arith.constant 0 : index
    %12 = vector.load %arg5[%c0_9, %c0_10] : memref<1x512xf32, #tpu.memory_space<vmem>>, vector<1x512xf32>
    %13 = vector.broadcast %12 : vector<1x512xf32> to vector<16x512xf32>
    %14 = arith.addf %11, %13 : vector<16x512xf32>
    %cst_11 = arith.constant 0.000000e+00 : f32
    %15 = vector.broadcast %cst_11 : f32 to vector<16x512xf32>
    %16 = arith.maximumf %14, %15 : vector<16x512xf32>
    %17 = arith.truncf %16 : vector<16x512xf32> to vector<16x512xbf16>
    %c0_12 = arith.constant 0 : index
    %c0_13 = arith.constant 0 : index
    %18 = vector.load %arg6[%c0_12, %c0_13] : memref<512x512xbf16, #tpu.memory_space<vmem>>, vector<512x512xbf16>
    %cst_14 = arith.constant dense<0.000000e+00> : vector<16x512xf32>
    %19 = tpu.matmul %17, %18, %cst_14 {dimension_numbers = #tpu.dot_dimension_numbers<[1], [0], [0], [1], [0, 0, 1, 1], [], []>} : vector<16x512xbf16>, vector<512x512xbf16>, vector<16x512xf32> -> vector<16x512xf32>
    %c0_15 = arith.constant 0 : index
    %c0_16 = arith.constant 0 : index
    %20 = vector.load %arg7[%c0_15, %c0_16] : memref<1x512xf32, #tpu.memory_space<vmem>>, vector<1x512xf32>
    %21 = vector.broadcast %20 : vector<1x512xf32> to vector<16x512xf32>
    %22 = arith.addf %19, %21 : vector<16x512xf32>
    %cst_17 = arith.constant 0.000000e+00 : f32
    %23 = vector.broadcast %cst_17 : f32 to vector<16x512xf32>
    %24 = arith.maximumf %22, %23 : vector<16x512xf32>
    %25 = arith.truncf %24 : vector<16x512xf32> to vector<16x512xbf16>
    %c0_18 = arith.constant 0 : index
    %c0_19 = arith.constant 0 : index
    %26 = vector.load %arg8[%c0_18, %c0_19] : memref<512x512xbf16, #tpu.memory_space<vmem>>, vector<512x512xbf16>
    %cst_20 = arith.constant dense<0.000000e+00> : vector<16x512xf32>
    %27 = tpu.matmul %25, %26, %cst_20 {dimension_numbers = #tpu.dot_dimension_numbers<[1], [0], [0], [1], [0, 0, 1, 1], [], []>} : vector<16x512xbf16>, vector<512x512xbf16>, vector<16x512xf32> -> vector<16x512xf32>
    %c0_21 = arith.constant 0 : index
    %c0_22 = arith.constant 0 : index
    %28 = vector.load %arg9[%c0_21, %c0_22] : memref<1x512xf32, #tpu.memory_space<vmem>>, vector<1x512xf32>
    %29 = vector.broadcast %28 : vector<1x512xf32> to vector<16x512xf32>
    %30 = arith.addf %27, %29 : vector<16x512xf32>
    %cst_23 = arith.constant 0.000000e+00 : f32
    %31 = vector.broadcast %cst_23 : f32 to vector<16x512xf32>
    %32 = arith.maximumf %30, %31 : vector<16x512xf32>
    %33 = arith.truncf %32 : vector<16x512xf32> to vector<16x512xbf16>
    %c0_24 = arith.constant 0 : index
    %c0_25 = arith.constant 0 : index
    %34 = vector.load %arg10[%c0_24, %c0_25] : memref<512x128xbf16, #tpu.memory_space<vmem>>, vector<512x128xbf16>
    %cst_26 = arith.constant dense<0.000000e+00> : vector<16x128xf32>
    %35 = tpu.matmul %33, %34, %cst_26 {dimension_numbers = #tpu.dot_dimension_numbers<[1], [0], [0], [1], [0, 0, 1, 1], [], []>} : vector<16x512xbf16>, vector<512x128xbf16>, vector<16x128xf32> -> vector<16x128xf32>
    %c0_27 = arith.constant 0 : index
    %c0_28 = arith.constant 0 : index
    %36 = vector.load %arg11[%c0_27, %c0_28] : memref<1x128xf32, #tpu.memory_space<vmem>>, vector<1x128xf32>
    %37 = vector.broadcast %36 : vector<1x128xf32> to vector<16x128xf32>
    %38 = arith.addf %35, %37 : vector<16x128xf32>
    %c0_29 = arith.constant 0 : index
    %c0_30 = arith.constant 0 : index
    %39 = vector.load %arg12[%c0_29, %c0_30] : memref<16x128xf32, #tpu.memory_space<vmem>>, vector<16x128xf32>
    tpu.vector_store %arg12[%c0_29, %c0_30], %38 {strides = array<i32>} : memref<16x128xf32, #tpu.memory_space<vmem>>, vector<16x128xf32>,
    return
  }
  func.func @transform_0(%arg0: i32) -> (i32, i32) {
    %c0_i32 = arith.constant 0 : i32
    %c0_i32_0 = arith.constant 0 : i32
    return %arg0, %c0_i32 : i32, i32
  }
  func.func @transform_1(%arg0: i32) -> (i32, i32) {
    %c0_i32 = arith.constant 0 : i32
    %c0_i32_0 = arith.constant 0 : i32
    %c0_i32_1 = arith.constant 0 : i32
    return %c0_i32, %c0_i32_0 : i32, i32
  }
  func.func @transform_2(%arg0: i32) -> (i32, i32) {
    %c0_i32 = arith.constant 0 : i32
    %c0_i32_0 = arith.constant 0 : i32
    %c0_i32_1 = arith.constant 0 : i32
    return %c0_i32, %c0_i32_0 : i32, i32
  }
  func.func @transform_3(%arg0: i32) -> (i32, i32) {
    %c0_i32 = arith.constant 0 : i32
    %c0_i32_0 = arith.constant 0 : i32
    %c0_i32_1 = arith.constant 0 : i32
    return %c0_i32, %c0_i32_0 : i32, i32
  }
  func.func @transform_4(%arg0: i32) -> (i32, i32) {
    %c0_i32 = arith.constant 0 : i32
    %c0_i32_0 = arith.constant 0 : i32
    %c0_i32_1 = arith.constant 0 : i32
    return %c0_i32, %c0_i32_0 : i32, i32
  }
  func.func @transform_5(%arg0: i32) -> (i32, i32) {
    %c0_i32 = arith.constant 0 : i32
    %c0_i32_0 = arith.constant 0 : i32
    %c0_i32_1 = arith.constant 0 : i32
    return %c0_i32, %c0_i32_0 : i32, i32
  }
  func.func @transform_6(%arg0: i32) -> (i32, i32) {
    %c0_i32 = arith.constant 0 : i32
    %c0_i32_0 = arith.constant 0 : i32
    %c0_i32_1 = arith.constant 0 : i32
    return %c0_i32, %c0_i32_0 : i32, i32
  }
  func.func @transform_7(%arg0: i32) -> (i32, i32) {
    %c0_i32 = arith.constant 0 : i32
    %c0_i32_0 = arith.constant 0 : i32
    %c0_i32_1 = arith.constant 0 : i32
    return %c0_i32, %c0_i32_0 : i32, i32
  }
  func.func @transform_8(%arg0: i32) -> (i32, i32) {
    %c0_i32 = arith.constant 0 : i32
    %c0_i32_0 = arith.constant 0 : i32
    %c0_i32_1 = arith.constant 0 : i32
    return %c0_i32, %c0_i32_0 : i32, i32
  }
  func.func @transform_9(%arg0: i32) -> (i32, i32) {
    %c0_i32 = arith.constant 0 : i32
    %c0_i32_0 = arith.constant 0 : i32
    %c0_i32_1 = arith.constant 0 : i32
    return %c0_i32, %c0_i32_0 : i32, i32
  }
  func.func @transform_10(%arg0: i32) -> (i32, i32) {
    %c0_i32 = arith.constant 0 : i32
    %c0_i32_0 = arith.constant 0 : i32
    %c0_i32_1 = arith.constant 0 : i32
    return %c0_i32, %c0_i32_0 : i32, i32
  }
  func.func @transform_11(%arg0: i32) -> (i32, i32) {
    %c0_i32 = arith.constant 0 : i32
    %c0_i32_0 = arith.constant 0 : i32
    return %arg0, %c0_i32 : i32, i32
  }
}

module attributes {stable_mosaic.version = 11 : i64} {
  func.func @mlp_kernel(%arg0: i32, %arg1: memref<16x512xf32, #tpu.memory_space<vmem>>, %arg2: memref<512x1024xbf16, #tpu.memory_space<vmem>>, %arg3: memref<1x1024xf32, #tpu.memory_space<vmem>>, %arg4: memref<1024x512xbf16, #tpu.memory_space<vmem>>, %arg5: memref<1x512xf32, #tpu.memory_space<vmem>>, %arg6: memref<512x512xbf16, #tpu.memory_space<vmem>>, %arg7: memref<1x512xf32, #tpu.memory_space<vmem>>, %arg8: memref<512x512xbf16, #tpu.memory_space<vmem>>, %arg9: memref<1x512xf32, #tpu.memory_space<vmem>>, %arg10: memref<512x128xbf16, #tpu.memory_space<vmem>>, %arg11: memref<1x128xf32, #tpu.memory_space<vmem>>, %arg12: memref<16x128xf32, #tpu.memory_space<vmem>>) attributes {dimension_semantics = [#tpu.dimension_semantics<parallel>], iteration_bounds = array<i64: 1>, scalar_prefetch = 0 : i64, scratch_operands = 0 : i64, tpu.core_type = #tpu.core_type<tc>, window_params = [{transform_indices = @transform_0, window_bounds = array<i64: 16, 512>}, {pipeline_mode = #tpu.pipeline_mode<synchronous>, transform_indices = @transform_1, window_bounds = array<i64: 512, 1024>}, {pipeline_mode = #tpu.pipeline_mode<synchronous>, transform_indices = @transform_2, window_bounds = array<i64: 1, 1024>}, {pipeline_mode = #tpu.pipeline_mode<synchronous>, transform_indices = @transform_3, window_bounds = array<i64: 1024, 512>}, {pipeline_mode = #tpu.pipeline_mode<synchronous>, transform_indices = @transform_4, window_bounds = array<i64: 1, 512>}, {pipeline_mode = #tpu.pipeline_mode<synchronous>, transform_indices = @transform_5, window_bounds = array<i64: 512, 512>}, {pipeline_mode = #tpu.pipeline_mode<synchronous>, transform_indices = @transform_6, window_bounds = array<i64: 1, 512>}, {pipeline_mode = #tpu.pipeline_mode<synchronous>, transform_indices = @transform_7, window_bounds = array<i64: 512, 512>}, {pipeline_mode = #tpu.pipeline_mode<synchronous>, transform_indices = @transform_8, window_bounds = array<i64: 1, 512>}, {pipeline_mode = #tpu.pipeline_mode<synchronous>, transform_indices = @transform_9, window_bounds = array<i64: 512, 128>}, {pipeline_mode = #tpu.pipeline_mode<synchronous>, transform_indices = @transform_10, window_bounds = array<i64: 1, 128>}, {transform_indices = @transform_11, window_bounds = array<i64: 16, 128>}]} {
    %c0 = arith.constant 0 : index
    %c0_0 = arith.constant 0 : index
    %0 = vector.load %arg1[%c0, %c0_0] : memref<16x512xf32, #tpu.memory_space<vmem>>, vector<16x512xf32>
    %1 = arith.truncf %0 : vector<16x512xf32> to vector<16x512xbf16>
    %c0_1 = arith.constant 0 : index
    %c0_2 = arith.constant 0 : index
    %2 = vector.load %arg2[%c0_1, %c0_2] : memref<512x1024xbf16, #tpu.memory_space<vmem>>, vector<512x1024xbf16>
    %cst = arith.constant dense<0.000000e+00> : vector<16x1024xf32>
    %3 = tpu.matmul %1, %2, %cst {dimension_numbers = #tpu.dot_dimension_numbers<[1], [0], [0], [1], [0, 0, 1, 1], [], []>} : vector<16x512xbf16>, vector<512x1024xbf16>, vector<16x1024xf32> -> vector<16x1024xf32>
    %c0_3 = arith.constant 0 : index
    %c0_4 = arith.constant 0 : index
    %4 = vector.load %arg3[%c0_3, %c0_4] : memref<1x1024xf32, #tpu.memory_space<vmem>>, vector<1x1024xf32>
    %5 = vector.broadcast %4 : vector<1x1024xf32> to vector<16x1024xf32>
    %6 = arith.addf %3, %5 : vector<16x1024xf32>
    %cst_5 = arith.constant 0.000000e+00 : f32
    %7 = vector.broadcast %cst_5 : f32 to vector<16x1024xf32>
    %8 = arith.maximumf %6, %7 : vector<16x1024xf32>
    %9 = arith.truncf %8 : vector<16x1024xf32> to vector<16x1024xbf16>
    %c0_6 = arith.constant 0 : index
    %c0_7 = arith.constant 0 : index
    %10 = vector.load %arg4[%c0_6, %c0_7] : memref<1024x512xbf16, #tpu.memory_space<vmem>>, vector<1024x512xbf16>
    %cst_8 = arith.constant dense<0.000000e+00> : vector<16x512xf32>
    %11 = tpu.matmul %9, %10, %cst_8 {dimension_numbers = #tpu.dot_dimension_numbers<[1], [0], [0], [1], [0, 0, 1, 1], [], []>} : vector<16x1024xbf16>, vector<1024x512xbf16>, vector<16x512xf32> -> vector<16x512xf32>
    %c0_9 = arith.constant 0 : index
    %c0_10 = arith.constant 0 : index
    %12 = vector.load %arg5[%c0_9, %c0_10] : memref<1x512xf32, #tpu.memory_space<vmem>>, vector<1x512xf32>
    %13 = vector.broadcast %12 : vector<1x512xf32> to vector<16x512xf32>
    %14 = arith.addf %11, %13 : vector<16x512xf32>
    %cst_11 = arith.constant 0.000000e+00 : f32
    %15 = vector.broadcast %cst_11 : f32 to vector<16x512xf32>
    %16 = arith.maximumf %14, %15 : vector<16x512xf32>
    %17 = arith.truncf %16 : vector<16x512xf32> to vector<16x512xbf16>
    %c0_12 = arith.constant 0 : index
    %c0_13 = arith.constant 0 : index
    %18 = vector.load %arg6[%c0_12, %c0_13] : memref<512x512xbf16, #tpu.memory_space<vmem>>, vector<512x512xbf16>
    %cst_14 = arith.constant dense<0.000000e+00> : vector<16x512xf32>
    %19 = tpu.matmul %17, %18, %cst_14 {dimension_numbers = #tpu.dot_dimension_numbers<[1], [0], [0], [1], [0, 0, 1, 1], [], []>} : vector<16x512xbf16>, vector<512x512xbf16>, vector<16x512xf32> -> vector<16x512xf32>
    %c0_15 = arith.constant 0 : index
    %c0_16 = arith.constant 0 : index
    %20 = vector.load %arg7[%c0_15, %c0_16] : memref<1x512xf32, #tpu.memory_space<vmem>>, vector<1x512xf32>
    %21 = vector.broadcast %20 : vector<1x512xf32> to vector<16x512xf32>
    %22 = arith.addf %19, %21 : vector<16x512xf32>
    %cst_17 = arith.constant 0.000000e+00 : f32
    %23 = vector.broadcast %cst_17 : f32 to vector<16x512xf32>
    %24 = arith.maximumf %22, %23 : vector<16x512xf32>
    %25 = arith.truncf %24 : vector<16x512xf32> to vector<16x512xbf16>
    %c0_18 = arith.constant 0 : index
    %c0_19 = arith.constant 0 : index
    %26 = vector.load %arg8[%c0_18, %c0_19] : memref<512x512xbf16, #tpu.memory_space<vmem>>, vector<512x512xbf16>
    %cst_20 = arith.constant dense<0.000000e+00> : vector<16x512xf32>
    %27 = tpu.matmul %25, %26, %cst_20 {dimension_numbers = #tpu.dot_dimension_numbers<[1], [0], [0], [1], [0, 0, 1, 1], [], []>} : vector<16x512xbf16>, vector<512x512xbf16>, vector<16x512xf32> -> vector<16x512xf32>
    %c0_21 = arith.constant 0 : index
    %c0_22 = arith.constant 0 : index
    %28 = vector.load %arg9[%c0_21, %c0_22] : memref<1x512xf32, #tpu.memory_space<vmem>>, vector<1x512xf32>
    %29 = vector.broadcast %28 : vector<1x512xf32> to vector<16x512xf32>
    %30 = arith.addf %27, %29 : vector<16x512xf32>
    %cst_23 = arith.constant 0.000000e+00 : f32
    %31 = vector.broadcast %cst_23 : f32 to vector<16x512xf32>
    %32 = arith.maximumf %30, %31 : vector<16x512xf32>
    %33 = arith.truncf %32 : vector<16x512xf32> to vector<16x512xbf16>
    %c0_24 = arith.constant 0 : index
    %c0_25 = arith.constant 0 : index
    %34 = vector.load %arg10[%c0_24, %c0_25] : memref<512x128xbf16, #tpu.memory_space<vmem>>, vector<512x128xbf16>
    %cst_26 = arith.constant dense<0.000000e+00> : vector<16x128xf32>
    %35 = tpu.matmul %33, %34, %cst_26 {dimension_numbers = #tpu.dot_dimension_numbers<[1], [0], [0], [1], [0, 0, 1, 1], [], []>} : vector<16x512xbf16>, vector<512x128xbf16>, vector<16x128xf32> -> vector<16x128xf32>
    %c0_27 = arith.constant 0 : index
    %c0_28 = arith.constant 0 : index
    %36 = vector.load %arg11[%c0_27, %c0_28] : memref<1x128xf32, #tpu.memory_space<vmem>>, vector<1x128xf32>
    %37 = vector.broadcast %36 : vector<1x128xf32> to vector<16x128xf32>
    %38 = arith.addf %35, %37 : vector<16x128xf32>
    %c0_29 = arith.constant 0 : index
    %c0_30 = arith.constant 0 : index
    %39 = vector.load %arg12[%c0_29, %c0_30] : memref<16x128xf32, #tpu.memory_space<vmem>>, vector<16x128xf32>
    tpu.vector_store %arg12[%c0_29, %c0_30], %38 {strides = array<i32>} : memref<16x128xf32, #tpu.memory_space<vmem>>, vector<16x128xf32>,
    return
  }
  func.func @transform_0(%arg0: i32) -> (i32, i32) {
    %c0_i32 = arith.constant 0 : i32
    %c0_i32_0 = arith.constant 0 : i32
    return %arg0, %c0_i32 : i32, i32
  }
  func.func @transform_1(%arg0: i32) -> (i32, i32) {
    %c0_i32 = arith.constant 0 : i32
    %c0_i32_0 = arith.constant 0 : i32
    %c0_i32_1 = arith.constant 0 : i32
    return %c0_i32, %c0_i32_0 : i32, i32
  }
  func.func @transform_2(%arg0: i32) -> (i32, i32) {
    %c0_i32 = arith.constant 0 : i32
    %c0_i32_0 = arith.constant 0 : i32
    %c0_i32_1 = arith.constant 0 : i32
    return %c0_i32, %c0_i32_0 : i32, i32
  }
  func.func @transform_3(%arg0: i32) -> (i32, i32) {
    %c0_i32 = arith.constant 0 : i32
    %c0_i32_0 = arith.constant 0 : i32
    %c0_i32_1 = arith.constant 0 : i32
    return %c0_i32, %c0_i32_0 : i32, i32
  }
  func.func @transform_4(%arg0: i32) -> (i32, i32) {
    %c0_i32 = arith.constant 0 : i32
    %c0_i32_0 = arith.constant 0 : i32
    %c0_i32_1 = arith.constant 0 : i32
    return %c0_i32, %c0_i32_0 : i32, i32
  }
  func.func @transform_5(%arg0: i32) -> (i32, i32) {
    %c0_i32 = arith.constant 0 : i32
    %c0_i32_0 = arith.constant 0 : i32
    %c0_i32_1 = arith.constant 0 : i32
    return %c0_i32, %c0_i32_0 : i32, i32
  }
  func.func @transform_6(%arg0: i32) -> (i32, i32) {
    %c0_i32 = arith.constant 0 : i32
    %c0_i32_0 = arith.constant 0 : i32
    %c0_i32_1 = arith.constant 0 : i32
    return %c0_i32, %c0_i32_0 : i32, i32
  }
  func.func @transform_7(%arg0: i32) -> (i32, i32) {
    %c0_i32 = arith.constant 0 : i32
    %c0_i32_0 = arith.constant 0 : i32
    %c0_i32_1 = arith.constant 0 : i32
    return %c0_i32, %c0_i32_0 : i32, i32
  }
  func.func @transform_8(%arg0: i32) -> (i32, i32) {
    %c0_i32 = arith.constant 0 : i32
    %c0_i32_0 = arith.constant 0 : i32
    %c0_i32_1 = arith.constant 0 : i32
    return %c0_i32, %c0_i32_0 : i32, i32
  }
  func.func @transform_9(%arg0: i32) -> (i32, i32) {
    %c0_i32 = arith.constant 0 : i32
    %c0_i32_0 = arith.constant 0 : i32
    %c0_i32_1 = arith.constant 0 : i32
    return %c0_i32, %c0_i32_0 : i32, i32
  }
  func.func @transform_10(%arg0: i32) -> (i32, i32) {
    %c0_i32 = arith.constant 0 : i32
    %c0_i32_0 = arith.constant 0 : i32
    %c0_i32_1 = arith.constant 0 : i32
    return %c0_i32, %c0_i32_0 : i32, i32
  }
  func.func @transform_11(%arg0: i32) -> (i32, i32) {
    %c0_i32 = arith.constant 0 : i32
    %c0_i32_0 = arith.constant 0 : i32
    return %arg0, %c0_i32 : i32, i32
  }
}

</mosaic_0001>

<llo_original>
// kernel: tpu_custom_call.1
$region0: #{tpu_custom_call.1}
  #allocation0 [shape = 'u32[]', space=smem, size = 0x4, offset = 0x4, fixed_abs, tag = 'smem constant byte address 0x4 - core index']
  #allocation1 [shape = 'u32[144,128]{1,0:T(1,128)}', space=vmem, size = 0x12000, scoped, tag = 'internal scratch']
  %s0 = inlined_call_operand.hbm [shape: f32[16,512], index: 0, kind: input, shape index: {}]
  %s1 = inlined_call_operand.hbm [shape: bf16[512,1024], index: 1, kind: input, shape index: {}]
  %s2 = inlined_call_operand.hbm [shape: f32[1,1024], index: 2, kind: input, shape index: {}]
  %s3 = inlined_call_operand.hbm [shape: bf16[1024,512], index: 3, kind: input, shape index: {}]
  %s4 = inlined_call_operand.vmem [shape: f32[1,512], index: 4, kind: input, shape index: {}]
  %s5 = inlined_call_operand.hbm [shape: bf16[512,512], index: 5, kind: input, shape index: {}]
  %s6 = inlined_call_operand.vmem [shape: f32[1,512], index: 6, kind: input, shape index: {}]
  %s7 = inlined_call_operand.hbm [shape: bf16[512,512], index: 7, kind: input, shape index: {}]
  %s8 = inlined_call_operand.vmem [shape: f32[1,512], index: 8, kind: input, shape index: {}]
  %s9 = inlined_call_operand.hbm [shape: bf16[512,128], index: 9, kind: input, shape index: {}]
  %s10 = inlined_call_operand.vmem [shape: f32[1,128], index: 10, kind: input, shape index: {}]
  %s11 = inlined_call_operand.hbm [shape: f32[16,128], index: 11, kind: output, shape index: {}]
  %s12 = sld [smem:[#allocation0]]
  $region82: #{tpu_custom_call.1} parent=0
    _
  %s14 = ssub.s32 1, %s12
  %s15 = scalar_select 0, %s14, %s12
  $region1: #{tpu_custom_call.1} parent=0
    #allocation2 [shape = 'u8[32768]{0}', space=vmem, size = 0x8000, scoped, tag = 'input window, operand 0, single buffered']
    #allocation3 [shape = 's32[1]{0}', space=sflag, size = 0x4, scoped, tag = 'scoped memory for tpu_custom_call.1']
    #allocation4 [shape = 's32[1]{0}', space=sflag, size = 0x4, scoped, tag = 'scoped memory for tpu_custom_call.1']
    #allocation5 [shape = 'u8[1048576]{0}', space=vmem, size = 0x100000, scoped, tag = 'input window, operand 1, single buffered']
    #allocation6 [shape = 's32[1]{0}', space=sflag, size = 0x4, scoped, tag = 'scoped memory for tpu_custom_call.1']
    #allocation7 [shape = 'u8[4096]{0}', space=vmem, size = 0x1000, scoped, tag = 'input window, operand 2, single buffered']
    #allocation8 [shape = 'u8[1048576]{0}', space=vmem, size = 0x100000, scoped, tag = 'input window, operand 3, single buffered']
    #allocation9 [shape = 's32[1]{0}', space=sflag, size = 0x4, scoped, tag = 'scoped memory for tpu_custom_call.1']
    #allocation10 [shape = 'u8[524288]{0}', space=vmem, size = 0x80000, scoped, tag = 'input window, operand 5, single buffered']
    #allocation11 [shape = 'u8[524288]{0}', space=vmem, size = 0x80000, scoped, tag = 'input window, operand 7, single buffered']
    #allocation12 [shape = 's32[1]{0}', space=sflag, size = 0x4, scoped, tag = 'scoped memory for tpu_custom_call.1']
    #allocation13 [shape = 'u8[131072]{0}', space=vmem, size = 0x20000, scoped, tag = 'input window, operand 9, single buffered']
    #allocation14 [shape = 'u8[8192]{0}', space=vmem, size = 0x2000, scoped, tag = 'output window, operand 0, single buffered']
    %16 = vsyncpa [#allocation3], 0
    %17 = vsyncpa [#allocation6], 0
    %18 = vsyncpa [#allocation9], 0
    %19 = vsyncpa [#allocation12], 0
    %20 = vsyncpa [#allocation4], 0
    // Predicated region
    $region2: #{tpu_custom_call.1} parent=1 // pred_check
      _
    $region3: #{tpu_custom_call.1} parent=1 // pred_check_branch
      %22 = sbr.rel (0) target = $region5
    $region4: #{tpu_custom_call.1} parent=1 // pred_region
      %s24 = ssub.s32 1024, 1024
      %25 = vsyncadd [#allocation3], %s24
      %s26 = sshll.u32 [#allocation2], 4
      %s27 = int_to_ptr.vmem [resolvable:$true] %s26
      %32 = dma.hbm_to_vmem [thread:$0]  %s0, 1024, %s27, [#allocation3], 512, 512, 32
    $region5: #{tpu_custom_call.1} parent=1 // pred_fallthru
      _
    // Predicated region
    $region6: #{tpu_custom_call.1} parent=1 // pred_check
      _
    $region7: #{tpu_custom_call.1} parent=1 // pred_check_branch
      %34 = sbr.rel (0) target = $region9
    $region8: #{tpu_custom_call.1} parent=1 // pred_region
      %s36 = ssub.s32 32768, 32768
      %37 = vsyncadd [#allocation6], %s36
      %s38 = sshll.u32 [#allocation5], 4
      %s39 = int_to_ptr.vmem [resolvable:$true] %s38
      %44 = dma.hbm_to_vmem [thread:$0]  %s1, 32768, %s39, [#allocation6], 512, 512, 32
    $region9: #{tpu_custom_call.1} parent=1 // pred_fallthru
      _
    // Predicated region
    $region10: #{tpu_custom_call.1} parent=1 // pred_check
      _
    $region11: #{tpu_custom_call.1} parent=1 // pred_check_branch
      %46 = sbr.rel (0) target = $region13
    $region12: #{tpu_custom_call.1} parent=1 // pred_region
      %s48 = ssub.s32 128, 128
      %49 = vsyncadd [#allocation6], %s48
      %s51 = sshll.u32 [#allocation7], 4
      %s52 = int_to_ptr.vmem [resolvable:$true] %s51
      %54 = dma.hbm_to_vmem [thread:$0]  %s2, 128, %s52, [#allocation6]
    $region13: #{tpu_custom_call.1} parent=1 // pred_fallthru
      _
    // Predicated region
    $region14: #{tpu_custom_call.1} parent=1 // pred_check
      _
    $region15: #{tpu_custom_call.1} parent=1 // pred_check_branch
      %56 = sbr.rel (0) target = $region17
    $region16: #{tpu_custom_call.1} parent=1 // pred_region
      %s58 = ssub.s32 32768, 32768
      %59 = vsyncadd [#allocation9], %s58
      %s60 = sshll.u32 [#allocation8], 4
      %s61 = int_to_ptr.vmem [resolvable:$true] %s60
      %66 = dma.hbm_to_vmem [thread:$0]  %s3, 32768, %s61, [#allocation9], 256, 256, 16
    $region17: #{tpu_custom_call.1} parent=1 // pred_fallthru
      _
    // Predicated region
    $region18: #{tpu_custom_call.1} parent=1 // pred_check
      _
    $region19: #{tpu_custom_call.1} parent=1 // pred_check_branch
      %68 = sbr.rel (0) target = $region21
    $region20: #{tpu_custom_call.1} parent=1 // pred_region
      _
    $region21: #{tpu_custom_call.1} parent=1 // pred_fallthru
      _
    // Predicated region
    $region22: #{tpu_custom_call.1} parent=1 // pred_check
      _
    $region23: #{tpu_custom_call.1} parent=1 // pred_check_branch
      %70 = sbr.rel (0) target = $region25
    $region24: #{tpu_custom_call.1} parent=1 // pred_region
      %s72 = ssub.s32 16384, 16384
      %73 = vsyncadd [#allocation9], %s72
      %s74 = sshll.u32 [#allocation10], 4
      %s75 = int_to_ptr.vmem [resolvable:$true] %s74
      %80 = dma.hbm_to_vmem [thread:$0]  %s5, 16384, %s75, [#allocation9], 256, 256, 16
    $region25: #{tpu_custom_call.1} parent=1 // pred_fallthru
      _
    // Predicated region
    $region26: #{tpu_custom_call.1} parent=1 // pred_check
      _
    $region27: #{tpu_custom_call.1} parent=1 // pred_check_branch
      %82 = sbr.rel (0) target = $region29
    $region28: #{tpu_custom_call.1} parent=1 // pred_region
      _
    $region29: #{tpu_custom_call.1} parent=1 // pred_fallthru
      _
    // Predicated region
    $region30: #{tpu_custom_call.1} parent=1 // pred_check
      _
    $region31: #{tpu_custom_call.1} parent=1 // pred_check_branch
      %84 = sbr.rel (0) target = $region33
    $region32: #{tpu_custom_call.1} parent=1 // pred_region
      %s86 = ssub.s32 16384, 16384
      %87 = vsyncadd [#allocation12], %s86
      %s88 = sshll.u32 [#allocation11], 4
      %s89 = int_to_ptr.vmem [resolvable:$true] %s88
      %94 = dma.hbm_to_vmem [thread:$0]  %s7, 16384, %s89, [#allocation12], 256, 256, 16
    $region33: #{tpu_custom_call.1} parent=1 // pred_fallthru
      _
    // Predicated region
    $region34: #{tpu_custom_call.1} parent=1 // pred_check
      _
    $region35: #{tpu_custom_call.1} parent=1 // pred_check_branch
      %96 = sbr.rel (0) target = $region37
    $region36: #{tpu_custom_call.1} parent=1 // pred_region
      _
    $region37: #{tpu_custom_call.1} parent=1 // pred_fallthru
      _
    // Predicated region
    $region38: #{tpu_custom_call.1} parent=1 // pred_check
      _
    $region39: #{tpu_custom_call.1} parent=1 // pred_check_branch
      %98 = sbr.rel (0) target = $region41
    $region40: #{tpu_custom_call.1} parent=1 // pred_region
      %s100 = ssub.s32 4096, 4096
      %101 = vsyncadd [#allocation12], %s100
      %s102 = sshll.u32 [#allocation13], 4
      %s103 = int_to_ptr.vmem [resolvable:$true] %s102
      %108 = dma.hbm_to_vmem [thread:$0]  %s9, 4096, %s103, [#allocation12], 64, 64, 4
    $region41: #{tpu_custom_call.1} parent=1 // pred_fallthru
      _
    // Predicated region
    $region42: #{tpu_custom_call.1} parent=1 // pred_check
      _
    $region43: #{tpu_custom_call.1} parent=1 // pred_check_branch
      %110 = sbr.rel (0) target = $region45
    $region44: #{tpu_custom_call.1} parent=1 // pred_region
      _
    $region45: #{tpu_custom_call.1} parent=1 // pred_fallthru
      _
    // Predicated region
    $region46: #{tpu_custom_call.1} parent=1 // pred_check
      _
    $region47: #{tpu_custom_call.1} parent=1 // pred_check_branch
      %112 = sbr.rel (0) target = $region49
    $region48: #{tpu_custom_call.1} parent=1 // pred_region
      %113 = dma.done [#allocation3], 1024
    $region49: #{tpu_custom_call.1} parent=1 // pred_fallthru
      _
    // Predicated region
    $region50: #{tpu_custom_call.1} parent=1 // pred_check
      _
    $region51: #{tpu_custom_call.1} parent=1 // pred_check_branch
      %115 = sbr.rel (0) target = $region53
    $region52: #{tpu_custom_call.1} parent=1 // pred_region
      %116 = dma.done [#allocation6], 32768
    $region53: #{tpu_custom_call.1} parent=1 // pred_fallthru
      _
    // Predicated region
    $region54: #{tpu_custom_call.1} parent=1 // pred_check
      _
    $region55: #{tpu_custom_call.1} parent=1 // pred_check_branch
      %118 = sbr.rel (0) target = $region57
    $region56: #{tpu_custom_call.1} parent=1 // pred_region
      %119 = dma.done [#allocation6], 128
    $region57: #{tpu_custom_call.1} parent=1 // pred_fallthru
      _
    // Predicated region
    $region58: #{tpu_custom_call.1} parent=1 // pred_check
      _
    $region59: #{tpu_custom_call.1} parent=1 // pred_check_branch
      %121 = sbr.rel (0) target = $region61
    $region60: #{tpu_custom_call.1} parent=1 // pred_region
      %122 = dma.done [#allocation9], 32768
    $region61: #{tpu_custom_call.1} parent=1 // pred_fallthru
      _
    // Predicated region
    $region62: #{tpu_custom_call.1} parent=1 // pred_check
      _
    $region63: #{tpu_custom_call.1} parent=1 // pred_check_branch
      %124 = sbr.rel (0) target = $region65
    $region64: #{tpu_custom_call.1} parent=1 // pred_region
      %125 = dma.done [#allocation9], 16384
    $region65: #{tpu_custom_call.1} parent=1 // pred_fallthru
      _
    // Predicated region
    $region66: #{tpu_custom_call.1} parent=1 // pred_check
      _
    $region67: #{tpu_custom_call.1} parent=1 // pred_check_branch
      %127 = sbr.rel (0) target = $region69
    $region68: #{tpu_custom_call.1} parent=1 // pred_region
      %128 = dma.done [#allocation12], 16384
    $region69: #{tpu_custom_call.1} parent=1 // pred_fallthru
      _
    // Predicated region
    $region70: #{tpu_custom_call.1} parent=1 // pred_check
      _
    $region71: #{tpu_custom_call.1} parent=1 // pred_check_branch
      %130 = sbr.rel (0) target = $region73
    $region72: #{tpu_custom_call.1} parent=1 // pred_region
      %131 = dma.done [#allocation12], 4096
    $region73: #{tpu_custom_call.1} parent=1 // pred_fallthru
      _
    %v133 = vld [vmem:[#allocation2] sm:$0xff]
    %v134 = vld [vmem:[#allocation2 + $0x8] sm:$0xff]
    %v135 = vld [vmem:[#allocation2 + $0x10] sm:$0xff]
    %v136 = vld [vmem:[#allocation2 + $0x18] sm:$0xff]
    %v137 = vld [vmem:[#allocation2 + $0x20] sm:$0xff]
    %v138 = vld [vmem:[#allocation2 + $0x28] sm:$0xff]
    %v139 = vld [vmem:[#allocation2 + $0x30] sm:$0xff]
    %v140 = vld [vmem:[#allocation2 + $0x38] sm:$0xff]
    %v141 = vpack.c.bf16 %v137, %v133
    %v142 = vpack.c.bf16 %v138, %v134
    %v143 = vpack.c.bf16 %v139, %v135
    %v144 = vpack.c.bf16 %v140, %v136
    %v145 = vld [vmem:[#allocation5] sm:$0xff]
    %v146 = vld [vmem:[#allocation5 + $0x8] sm:$0xff]
    %v147 = vld [vmem:[#allocation5 + $0x10] sm:$0xff]
    %v148 = vld [vmem:[#allocation5 + $0x18] sm:$0xff]
    %v149 = vld [vmem:[#allocation5 + $0x20] sm:$0xff]
    %v150 = vld [vmem:[#allocation5 + $0x28] sm:$0xff]
    %v151 = vld [vmem:[#allocation5 + $0x30] sm:$0xff]
    %v152 = vld [vmem:[#allocation5 + $0x38] sm:$0xff]
    %v153 = vld [vmem:[#allocation5 + $0x40] sm:$0xff]
    %v154 = vld [vmem:[#allocation5 + $0x48] sm:$0xff]
    %v155 = vld [vmem:[#allocation5 + $0x50] sm:$0xff]
    %v156 = vld [vmem:[#allocation5 + $0x58] sm:$0xff]
    %v157 = vld [vmem:[#allocation5 + $0x60] sm:$0xff]
    %v158 = vld [vmem:[#allocation5 + $0x68] sm:$0xff]
    %v159 = vld [vmem:[#allocation5 + $0x70] sm:$0xff]
    %v160 = vld [vmem:[#allocation5 + $0x78] sm:$0xff]
    %v161 = vld [vmem:[#allocation5 + $0x80] sm:$0xff]
    %v162 = vld [vmem:[#allocation5 + $0x88] sm:$0xff]
    %v163 = vld [vmem:[#allocation5 + $0x90] sm:$0xff]
    %v164 = vld [vmem:[#allocation5 + $0x98] sm:$0xff]
    %v165 = vld [vmem:[#allocation5 + $0xa0] sm:$0xff]
    %v166 = vld [vmem:[#allocation5 + $0xa8] sm:$0xff]
    %v167 = vld [vmem:[#allocation5 + $0xb0] sm:$0xff]
    %v168 = vld [vmem:[#allocation5 + $0xb8] sm:$0xff]
    %v169 = vld [vmem:[#allocation5 + $0xc0] sm:$0xff]
    %v170 = vld [vmem:[#allocation5 + $0xc8] sm:$0xff]
    %v171 = vld [vmem:[#allocation5 + $0xd0] sm:$0xff]
    %v172 = vld [vmem:[#allocation5 + $0xd8] sm:$0xff]
    %v173 = vld [vmem:[#allocation5 + $0xe0] sm:$0xff]
    %v174 = vld [vmem:[#allocation5 + $0xe8] sm:$0xff]
    %v175 = vld [vmem:[#allocation5 + $0xf0] sm:$0xff]
    %v176 = vld [vmem:[#allocation5 + $0xf8] sm:$0xff]
    %v177 = vld [vmem:[#allocation5 + $0x100] sm:$0xff]
    %v178 = vld [vmem:[#allocation5 + $0x108] sm:$0xff]
    %v179 = vld [vmem:[#allocation5 + $0x110] sm:$0xff]
    %v180 = vld [vmem:[#allocation5 + $0x118] sm:$0xff]
    %v181 = vld [vmem:[#allocation5 + $0x120] sm:$0xff]
    %v182 = vld [vmem:[#allocation5 + $0x128] sm:$0xff]
    %v183 = vld [vmem:[#allocation5 + $0x130] sm:$0xff]
    %v184 = vld [vmem:[#allocation5 + $0x138] sm:$0xff]
    %v185 = vld [vmem:[#allocation5 + $0x140] sm:$0xff]
    %v186 = vld [vmem:[#allocation5 + $0x148] sm:$0xff]
    %v187 = vld [vmem:[#allocation5 + $0x150] sm:$0xff]
    %v188 = vld [vmem:[#allocation5 + $0x158] sm:$0xff]
    %v189 = vld [vmem:[#allocation5 + $0x160] sm:$0xff]
    %v190 = vld [vmem:[#allocation5 + $0x168] sm:$0xff]
    %v191 = vld [vmem:[#allocation5 + $0x170] sm:$0xff]
    %v192 = vld [vmem:[#allocation5 + $0x178] sm:$0xff]
    %v193 = vld [vmem:[#allocation5 + $0x180] sm:$0xff]
    %v194 = vld [vmem:[#allocation5 + $0x188] sm:$0xff]
    %v195 = vld [vmem:[#allocation5 + $0x190] sm:$0xff]
    %v196 = vld [vmem:[#allocation5 + $0x198] sm:$0xff]
    %v197 = vld [vmem:[#allocation5 + $0x1a0] sm:$0xff]
    %v198 = vld [vmem:[#allocation5 + $0x1a8] sm:$0xff]
    %v199 = vld [vmem:[#allocation5 + $0x1b0] sm:$0xff]
    %v200 = vld [vmem:[#allocation5 + $0x1b8] sm:$0xff]
    %v201 = vld [vmem:[#allocation5 + $0x1c0] sm:$0xff]
    %v202 = vld [vmem:[#allocation5 + $0x1c8] sm:$0xff]
    %v203 = vld [vmem:[#allocation5 + $0x1d0] sm:$0xff]
    %v204 = vld [vmem:[#allocation5 + $0x1d8] sm:$0xff]
    %v205 = vld [vmem:[#allocation5 + $0x1e0] sm:$0xff]
    %v206 = vld [vmem:[#allocation5 + $0x1e8] sm:$0xff]
    %v207 = vld [vmem:[#allocation5 + $0x1f0] sm:$0xff]
    %v208 = vld [vmem:[#allocation5 + $0x1f8] sm:$0xff]
    %v209 = vld [vmem:[#allocation5 + $0x200] sm:$0xff]
    %v210 = vld [vmem:[#allocation5 + $0x208] sm:$0xff]
    %v211 = vld [vmem:[#allocation5 + $0x210] sm:$0xff]
    %v212 = vld [vmem:[#allocation5 + $0x218] sm:$0xff]
    %v213 = vld [vmem:[#allocation5 + $0x220] sm:$0xff]
    %v214 = vld [vmem:[#allocation5 + $0x228] sm:$0xff]
    %v215 = vld [vmem:[#allocation5 + $0x230] sm:$0xff]
    %v216 = vld [vmem:[#allocation5 + $0x238] sm:$0xff]
    %v217 = vld [vmem:[#allocation5 + $0x240] sm:$0xff]
    %v218 = vld [vmem:[#allocation5 + $0x248] sm:$0xff]
    %v219 = vld [vmem:[#allocation5 + $0x250] sm:$0xff]
    %v220 = vld [vmem:[#allocation5 + $0x258] sm:$0xff]
    %v221 = vld [vmem:[#allocation5 + $0x260] sm:$0xff]
    %v222 = vld [vmem:[#allocation5 + $0x268] sm:$0xff]
    %v223 = vld [vmem:[#allocation5 + $0x270] sm:$0xff]
    %v224 = vld [vmem:[#allocation5 + $0x278] sm:$0xff]
    %v225 = vld [vmem:[#allocation5 + $0x280] sm:$0xff]
    %v226 = vld [vmem:[#allocation5 + $0x288] sm:$0xff]
    %v227 = vld [vmem:[#allocation5 + $0x290] sm:$0xff]
    %v228 = vld [vmem:[#allocation5 + $0x298] sm:$0xff]
    %v229 = vld [vmem:[#allocation5 + $0x2a0] sm:$0xff]
    %v230 = vld [vmem:[#allocation5 + $0x2a8] sm:$0xff]
    %v231 = vld [vmem:[#allocation5 + $0x2b0] sm:$0xff]
    %v232 = vld [vmem:[#allocation5 + $0x2b8] sm:$0xff]
    %v233 = vld [vmem:[#allocation5 + $0x2c0] sm:$0xff]
    %v234 = vld [vmem:[#allocation5 + $0x2c8] sm:$0xff]
    %v235 = vld [vmem:[#allocation5 + $0x2d0] sm:$0xff]
    %v236 = vld [vmem:[#allocation5 + $0x2d8] sm:$0xff]
    %v237 = vld [vmem:[#allocation5 + $0x2e0] sm:$0xff]
    %v238 = vld [vmem:[#allocation5 + $0x2e8] sm:$0xff]
    %v239 = vld [vmem:[#allocation5 + $0x2f0] sm:$0xff]
    %v240 = vld [vmem:[#allocation5 + $0x2f8] sm:$0xff]
    %v241 = vld [vmem:[#allocation5 + $0x300] sm:$0xff]
    %v242 = vld [vmem:[#allocation5 + $0x308] sm:$0xff]
    %v243 = vld [vmem:[#allocation5 + $0x310] sm:$0xff]
    %v244 = vld [vmem:[#allocation5 + $0x318] sm:$0xff]
    %v245 = vld [vmem:[#allocation5 + $0x320] sm:$0xff]
    %v246 = vld [vmem:[#allocation5 + $0x328] sm:$0xff]
    %v247 = vld [vmem:[#allocation5 + $0x330] sm:$0xff]
    %v248 = vld [vmem:[#allocation5 + $0x338] sm:$0xff]
    %v249 = vld [vmem:[#allocation5 + $0x340] sm:$0xff]
    %v250 = vld [vmem:[#allocation5 + $0x348] sm:$0xff]
    %v251 = vld [vmem:[#allocation5 + $0x350] sm:$0xff]
    %v252 = vld [vmem:[#allocation5 + $0x358] sm:$0xff]
    %v253 = vld [vmem:[#allocation5 + $0x360] sm:$0xff]
    %v254 = vld [vmem:[#allocation5 + $0x368] sm:$0xff]
    %v255 = vld [vmem:[#allocation5 + $0x370] sm:$0xff]
    %v256 = vld [vmem:[#allocation5 + $0x378] sm:$0xff]
    %v257 = vld [vmem:[#allocation5 + $0x380] sm:$0xff]
    %v258 = vld [vmem:[#allocation5 + $0x388] sm:$0xff]
    %v259 = vld [vmem:[#allocation5 + $0x390] sm:$0xff]
    %v260 = vld [vmem:[#allocation5 + $0x398] sm:$0xff]
    %v261 = vld [vmem:[#allocation5 + $0x3a0] sm:$0xff]
    %v262 = vld [vmem:[#allocation5 + $0x3a8] sm:$0xff]
    %v263 = vld [vmem:[#allocation5 + $0x3b0] sm:$0xff]
    %v264 = vld [vmem:[#allocation5 + $0x3b8] sm:$0xff]
    %v265 = vld [vmem:[#allocation5 + $0x3c0] sm:$0xff]
    %v266 = vld [vmem:[#allocation5 + $0x3c8] sm:$0xff]
    %v267 = vld [vmem:[#allocation5 + $0x3d0] sm:$0xff]
    %v268 = vld [vmem:[#allocation5 + $0x3d8] sm:$0xff]
    %v269 = vld [vmem:[#allocation5 + $0x3e0] sm:$0xff]
    %v270 = vld [vmem:[#allocation5 + $0x3e8] sm:$0xff]
    %v271 = vld [vmem:[#allocation5 + $0x3f0] sm:$0xff]
    %v272 = vld [vmem:[#allocation5 + $0x3f8] sm:$0xff]
    %v273 = vld [vmem:[#allocation5 + $0x400] sm:$0xff]
    %v274 = vld [vmem:[#allocation5 + $0x408] sm:$0xff]
    %v275 = vld [vmem:[#allocation5 + $0x410] sm:$0xff]
    %v276 = vld [vmem:[#allocation5 + $0x418] sm:$0xff]
    %v277 = vld [vmem:[#allocation5 + $0x420] sm:$0xff]
    %v278 = vld [vmem:[#allocation5 + $0x428] sm:$0xff]
    %v279 = vld [vmem:[#allocation5 + $0x430] sm:$0xff]
    %v280 = vld [vmem:[#allocation5 + $0x438] sm:$0xff]
    %v281 = vld [vmem:[#allocation5 + $0x440] sm:$0xff]
    %v282 = vld [vmem:[#allocation5 + $0x448] sm:$0xff]
    %v283 = vld [vmem:[#allocation5 + $0x450] sm:$0xff]
    %v284 = vld [vmem:[#allocation5 + $0x458] sm:$0xff]
    %v285 = vld [vmem:[#allocation5 + $0x460] sm:$0xff]
    %v286 = vld [vmem:[#allocation5 + $0x468] sm:$0xff]
    %v287 = vld [vmem:[#allocation5 + $0x470] sm:$0xff]
    %v288 = vld [vmem:[#allocation5 + $0x478] sm:$0xff]
    %v289 = vld [vmem:[#allocation5 + $0x480] sm:$0xff]
    %v290 = vld [vmem:[#allocation5 + $0x488] sm:$0xff]
    %v291 = vld [vmem:[#allocation5 + $0x490] sm:$0xff]
    %v292 = vld [vmem:[#allocation5 + $0x498] sm:$0xff]
    %v293 = vld [vmem:[#allocation5 + $0x4a0] sm:$0xff]
    %v294 = vld [vmem:[#allocation5 + $0x4a8] sm:$0xff]
    %v295 = vld [vmem:[#allocation5 + $0x4b0] sm:$0xff]
    %v296 = vld [vmem:[#allocation5 + $0x4b8] sm:$0xff]
    %v297 = vld [vmem:[#allocation5 + $0x4c0] sm:$0xff]
    %v298 = vld [vmem:[#allocation5 + $0x4c8] sm:$0xff]
    %v299 = vld [vmem:[#allocation5 + $0x4d0] sm:$0xff]
    %v300 = vld [vmem:[#allocation5 + $0x4d8] sm:$0xff]
    %v301 = vld [vmem:[#allocation5 + $0x4e0] sm:$0xff]
    %v302 = vld [vmem:[#allocation5 + $0x4e8] sm:$0xff]
    %v303 = vld [vmem:[#allocation5 + $0x4f0] sm:$0xff]
    %v304 = vld [vmem:[#allocation5 + $0x4f8] sm:$0xff]
    %v305 = vld [vmem:[#allocation5 + $0x500] sm:$0xff]
    %v306 = vld [vmem:[#allocation5 + $0x508] sm:$0xff]
    %v307 = vld [vmem:[#allocation5 + $0x510] sm:$0xff]
    %v308 = vld [vmem:[#allocation5 + $0x518] sm:$0xff]
    %v309 = vld [vmem:[#allocation5 + $0x520] sm:$0xff]
    %v310 = vld [vmem:[#allocation5 + $0x528] sm:$0xff]
    %v311 = vld [vmem:[#allocation5 + $0x530] sm:$0xff]
    %v312 = vld [vmem:[#allocation5 + $0x538] sm:$0xff]
    %v313 = vld [vmem:[#allocation5 + $0x540] sm:$0xff]
    %v314 = vld [vmem:[#allocation5 + $0x548] sm:$0xff]
    %v315 = vld [vmem:[#allocation5 + $0x550] sm:$0xff]
    %v316 = vld [vmem:[#allocation5 + $0x558] sm:$0xff]
    %v317 = vld [vmem:[#allocation5 + $0x560] sm:$0xff]
    %v318 = vld [vmem:[#allocation5 + $0x568] sm:$0xff]
    %v319 = vld [vmem:[#allocation5 + $0x570] sm:$0xff]
    %v320 = vld [vmem:[#allocation5 + $0x578] sm:$0xff]
    %v321 = vld [vmem:[#allocation5 + $0x580] sm:$0xff]
    %v322 = vld [vmem:[#allocation5 + $0x588] sm:$0xff]
    %v323 = vld [vmem:[#allocation5 + $0x590] sm:$0xff]
    %v324 = vld [vmem:[#allocation5 + $0x598] sm:$0xff]
    %v325 = vld [vmem:[#allocation5 + $0x5a0] sm:$0xff]
    %v326 = vld [vmem:[#allocation5 + $0x5a8] sm:$0xff]
    %v327 = vld [vmem:[#allocation5 + $0x5b0] sm:$0xff]
    %v328 = vld [vmem:[#allocation5 + $0x5b8] sm:$0xff]
    %v329 = vld [vmem:[#allocation5 + $0x5c0] sm:$0xff]
    %v330 = vld [vmem:[#allocation5 + $0x5c8] sm:$0xff]
    %v331 = vld [vmem:[#allocation5 + $0x5d0] sm:$0xff]
    %v332 = vld [vmem:[#allocation5 + $0x5d8] sm:$0xff]
    %v333 = vld [vmem:[#allocation5 + $0x5e0] sm:$0xff]
    %v334 = vld [vmem:[#allocation5 + $0x5e8] sm:$0xff]
    %v335 = vld [vmem:[#allocation5 + $0x5f0] sm:$0xff]
    %v336 = vld [vmem:[#allocation5 + $0x5f8] sm:$0xff]
    %v337 = vld [vmem:[#allocation5 + $0x600] sm:$0xff]
    %v338 = vld [vmem:[#allocation5 + $0x608] sm:$0xff]
    %v339 = vld [vmem:[#allocation5 + $0x610] sm:$0xff]
    %v340 = vld [vmem:[#allocation5 + $0x618] sm:$0xff]
    %v341 = vld [vmem:[#allocation5 + $0x620] sm:$0xff]
    %v342 = vld [vmem:[#allocation5 + $0x628] sm:$0xff]
    %v343 = vld [vmem:[#allocation5 + $0x630] sm:$0xff]
    %v344 = vld [vmem:[#allocation5 + $0x638] sm:$0xff]
    %v345 = vld [vmem:[#allocation5 + $0x640] sm:$0xff]
    %v346 = vld [vmem:[#allocation5 + $0x648] sm:$0xff]
    %v347 = vld [vmem:[#allocation5 + $0x650] sm:$0xff]
    %v348 = vld [vmem:[#allocation5 + $0x658] sm:$0xff]
    %v349 = vld [vmem:[#allocation5 + $0x660] sm:$0xff]
    %v350 = vld [vmem:[#allocation5 + $0x668] sm:$0xff]
    %v351 = vld [vmem:[#allocation5 + $0x670] sm:$0xff]
    %v352 = vld [vmem:[#allocation5 + $0x678] sm:$0xff]
    %v353 = vld [vmem:[#allocation5 + $0x680] sm:$0xff]
    %v354 = vld [vmem:[#allocation5 + $0x688] sm:$0xff]
    %v355 = vld [vmem:[#allocation5 + $0x690] sm:$0xff]
    %v356 = vld [vmem:[#allocation5 + $0x698] sm:$0xff]
    %v357 = vld [vmem:[#allocation5 + $0x6a0] sm:$0xff]
    %v358 = vld [vmem:[#allocation5 + $0x6a8] sm:$0xff]
    %v359 = vld [vmem:[#allocation5 + $0x6b0] sm:$0xff]
    %v360 = vld [vmem:[#allocation5 + $0x6b8] sm:$0xff]
    %v361 = vld [vmem:[#allocation5 + $0x6c0] sm:$0xff]
    %v362 = vld [vmem:[#allocation5 + $0x6c8] sm:$0xff]
    %v363 = vld [vmem:[#allocation5 + $0x6d0] sm:$0xff]
    %v364 = vld [vmem:[#allocation5 + $0x6d8] sm:$0xff]
    %v365 = vld [vmem:[#allocation5 + $0x6e0] sm:$0xff]
    %v366 = vld [vmem:[#allocation5 + $0x6e8] sm:$0xff]
    %v367 = vld [vmem:[#allocation5 + $0x6f0] sm:$0xff]
    %v368 = vld [vmem:[#allocation5 + $0x6f8] sm:$0xff]
    %v369 = vld [vmem:[#allocation5 + $0x700] sm:$0xff]
    %v370 = vld [vmem:[#allocation5 + $0x708] sm:$0xff]
    %v371 = vld [vmem:[#allocation5 + $0x710] sm:$0xff]
    %v372 = vld [vmem:[#allocation5 + $0x718] sm:$0xff]
    %v373 = vld [vmem:[#allocation5 + $0x720] sm:$0xff]
    %v374 = vld [vmem:[#allocation5 + $0x728] sm:$0xff]
    %v375 = vld [vmem:[#allocation5 + $0x730] sm:$0xff]
    %v376 = vld [vmem:[#allocation5 + $0x738] sm:$0xff]
    %v377 = vld [vmem:[#allocation5 + $0x740] sm:$0xff]
    %v378 = vld [vmem:[#allocation5 + $0x748] sm:$0xff]
    %v379 = vld [vmem:[#allocation5 + $0x750] sm:$0xff]
    %v380 = vld [vmem:[#allocation5 + $0x758] sm:$0xff]
    %v381 = vld [vmem:[#allocation5 + $0x760] sm:$0xff]
    %v382 = vld [vmem:[#allocation5 + $0x768] sm:$0xff]
    %v383 = vld [vmem:[#allocation5 + $0x770] sm:$0xff]
    %v384 = vld [vmem:[#allocation5 + $0x778] sm:$0xff]
    %v385 = vld [vmem:[#allocation5 + $0x780] sm:$0xff]
    %v386 = vld [vmem:[#allocation5 + $0x788] sm:$0xff]
    %v387 = vld [vmem:[#allocation5 + $0x790] sm:$0xff]
    %v388 = vld [vmem:[#allocation5 + $0x798] sm:$0xff]
    %v389 = vld [vmem:[#allocation5 + $0x7a0] sm:$0xff]
    %v390 = vld [vmem:[#allocation5 + $0x7a8] sm:$0xff]
    %v391 = vld [vmem:[#allocation5 + $0x7b0] sm:$0xff]
    %v392 = vld [vmem:[#allocation5 + $0x7b8] sm:$0xff]
    %v393 = vld [vmem:[#allocation5 + $0x7c0] sm:$0xff]
    %v394 = vld [vmem:[#allocation5 + $0x7c8] sm:$0xff]
    %v395 = vld [vmem:[#allocation5 + $0x7d0] sm:$0xff]
    %v396 = vld [vmem:[#allocation5 + $0x7d8] sm:$0xff]
    %v397 = vld [vmem:[#allocation5 + $0x7e0] sm:$0xff]
    %v398 = vld [vmem:[#allocation5 + $0x7e8] sm:$0xff]
    %v399 = vld [vmem:[#allocation5 + $0x7f0] sm:$0xff]
    %v400 = vld [vmem:[#allocation5 + $0x7f8] sm:$0xff]
    %v401 = vld [vmem:[#allocation7] sm:$0xff]
    %v403 = vlaneseq
    %v404 = vshrl.u32 %v403, 7
    %v405 = vsub.s32 0, %v404
    %v406 = vrot.slane %v401, %v405
    %v407 = vlaneseq
    %v408 = vshrl.u32 %v407, 7
    %v409 = vsub.s32 1, %v408
    %v410 = vrot.slane %v401, %v409
    %v411 = vlaneseq
    %v412 = vshrl.u32 %v411, 7
    %v413 = vsub.s32 2, %v412
    %v414 = vrot.slane %v401, %v413
    %v415 = vlaneseq
    %v416 = vshrl.u32 %v415, 7
    %v417 = vsub.s32 3, %v416
    %v418 = vrot.slane %v401, %v417
    %v419 = vlaneseq
    %v420 = vshrl.u32 %v419, 7
    %v421 = vsub.s32 4, %v420
    %v422 = vrot.slane %v401, %v421
    %v423 = vlaneseq
    %v424 = vshrl.u32 %v423, 7
    %v425 = vsub.s32 5, %v424
    %v426 = vrot.slane %v401, %v425
    %v427 = vlaneseq
    %v428 = vshrl.u32 %v427, 7
    %v429 = vsub.s32 6, %v428
    %v430 = vrot.slane %v401, %v429
    %v431 = vlaneseq
    %v432 = vshrl.u32 %v431, 7
    %v433 = vsub.s32 7, %v432
    %v434 = vrot.slane %v401, %v433
    %v699 = vunpack.c.l.b16 %v145
    %v700 = vunpack.c.h.b16 %v145
    %v701 = vunpack.c.l.b16 %v146
    %v702 = vunpack.c.h.b16 %v146
    %v703 = vunpack.c.l.b16 %v147
    %v704 = vunpack.c.h.b16 %v147
    %v705 = vunpack.c.l.b16 %v148
    %v706 = vunpack.c.h.b16 %v148
    %v707 = vunpack.c.l.b16 %v149
    %v708 = vunpack.c.h.b16 %v149
    %v709 = vunpack.c.l.b16 %v150
    %v710 = vunpack.c.h.b16 %v150
    %v711 = vunpack.c.l.b16 %v151
    %v712 = vunpack.c.h.b16 %v151
    %v713 = vunpack.c.l.b16 %v152
    %v714 = vunpack.c.h.b16 %v152
    %v715 = vunpack.c.l.b16 %v153
    %v716 = vunpack.c.h.b16 %v153
    %v717 = vunpack.c.l.b16 %v154
    %v718 = vunpack.c.h.b16 %v154
    %v719 = vunpack.c.l.b16 %v155
    %v720 = vunpack.c.h.b16 %v155
    %v721 = vunpack.c.l.b16 %v156
    %v722 = vunpack.c.h.b16 %v156
    %v723 = vunpack.c.l.b16 %v157
    %v724 = vunpack.c.h.b16 %v157
    %v725 = vunpack.c.l.b16 %v158
    %v726 = vunpack.c.h.b16 %v158
    %v727 = vunpack.c.l.b16 %v159
    %v728 = vunpack.c.h.b16 %v159
    %v729 = vunpack.c.l.b16 %v160
    %v730 = vunpack.c.h.b16 %v160
    %v731 = vunpack.c.l.b16 %v161
    %v732 = vunpack.c.h.b16 %v161
    %v733 = vunpack.c.l.b16 %v162
    %v734 = vunpack.c.h.b16 %v162
    %v735 = vunpack.c.l.b16 %v163
    %v736 = vunpack.c.h.b16 %v163
    %v737 = vunpack.c.l.b16 %v164
    %v738 = vunpack.c.h.b16 %v164
    %v739 = vunpack.c.l.b16 %v165
    %v740 = vunpack.c.h.b16 %v165
    %v741 = vunpack.c.l.b16 %v166
    %v742 = vunpack.c.h.b16 %v166
    %v743 = vunpack.c.l.b16 %v167
    %v744 = vunpack.c.h.b16 %v167
    %v745 = vunpack.c.l.b16 %v168
    %v746 = vunpack.c.h.b16 %v168
    %v747 = vunpack.c.l.b16 %v169
    %v748 = vunpack.c.h.b16 %v169
    %v749 = vunpack.c.l.b16 %v170
    %v750 = vunpack.c.h.b16 %v170
    %v751 = vunpack.c.l.b16 %v171
    %v752 = vunpack.c.h.b16 %v171
    %v753 = vunpack.c.l.b16 %v172
    %v754 = vunpack.c.h.b16 %v172
    %v755 = vunpack.c.l.b16 %v173
    %v756 = vunpack.c.h.b16 %v173
    %v757 = vunpack.c.l.b16 %v174
    %v758 = vunpack.c.h.b16 %v174
    %v759 = vunpack.c.l.b16 %v175
    %v760 = vunpack.c.h.b16 %v175
    %v761 = vunpack.c.l.b16 %v176
    %v762 = vunpack.c.h.b16 %v176
    %v763 = vunpack.c.l.b16 %v177
    %v764 = vunpack.c.h.b16 %v177
    %v765 = vunpack.c.l.b16 %v178
    %v766 = vunpack.c.h.b16 %v178
    %v767 = vunpack.c.l.b16 %v179
    %v768 = vunpack.c.h.b16 %v179
    %v769 = vunpack.c.l.b16 %v180
    %v770 = vunpack.c.h.b16 %v180
    %v771 = vunpack.c.l.b16 %v181
    %v772 = vunpack.c.h.b16 %v181
    %v773 = vunpack.c.l.b16 %v182
    %v774 = vunpack.c.h.b16 %v182
    %v775 = vunpack.c.l.b16 %v183
    %v776 = vunpack.c.h.b16 %v183
    %v777 = vunpack.c.l.b16 %v184
    %v778 = vunpack.c.h.b16 %v184
    %v779 = vunpack.c.l.b16 %v185
    %v780 = vunpack.c.h.b16 %v185
    %v781 = vunpack.c.l.b16 %v186
    %v782 = vunpack.c.h.b16 %v186
    %v783 = vunpack.c.l.b16 %v187
    %v784 = vunpack.c.h.b16 %v187
    %v785 = vunpack.c.l.b16 %v188
    %v786 = vunpack.c.h.b16 %v188
    %v787 = vunpack.c.l.b16 %v189
    %v788 = vunpack.c.h.b16 %v189
    %v789 = vunpack.c.l.b16 %v190
    %v790 = vunpack.c.h.b16 %v190
    %v791 = vunpack.c.l.b16 %v191
    %v792 = vunpack.c.h.b16 %v191
    %v793 = vunpack.c.l.b16 %v192
    %v794 = vunpack.c.h.b16 %v192
    %v795 = vunpack.c.l.b16 %v193
    %v796 = vunpack.c.h.b16 %v193
    %v797 = vunpack.c.l.b16 %v194
    %v798 = vunpack.c.h.b16 %v194
    %v799 = vunpack.c.l.b16 %v195
    %v800 = vunpack.c.h.b16 %v195
    %v801 = vunpack.c.l.b16 %v196
    %v802 = vunpack.c.h.b16 %v196
    %v803 = vunpack.c.l.b16 %v197
    %v804 = vunpack.c.h.b16 %v197
    %v805 = vunpack.c.l.b16 %v198
    %v806 = vunpack.c.h.b16 %v198
    %v807 = vunpack.c.l.b16 %v199
    %v808 = vunpack.c.h.b16 %v199
    %v809 = vunpack.c.l.b16 %v200
    %v810 = vunpack.c.h.b16 %v200
    %v811 = vunpack.c.l.b16 %v201
    %v812 = vunpack.c.h.b16 %v201
    %v813 = vunpack.c.l.b16 %v202
    %v814 = vunpack.c.h.b16 %v202
    %v815 = vunpack.c.l.b16 %v203
    %v816 = vunpack.c.h.b16 %v203
    %v817 = vunpack.c.l.b16 %v204
    %v818 = vunpack.c.h.b16 %v204
    %v819 = vunpack.c.l.b16 %v205
    %v820 = vunpack.c.h.b16 %v205
    %v821 = vunpack.c.l.b16 %v206
    %v822 = vunpack.c.h.b16 %v206
    %v823 = vunpack.c.l.b16 %v207
    %v824 = vunpack.c.h.b16 %v207
    %v825 = vunpack.c.l.b16 %v208
    %v826 = vunpack.c.h.b16 %v208
    %v827 = vunpack.c.l.b16 %v209
    %v828 = vunpack.c.h.b16 %v209
    %v829 = vunpack.c.l.b16 %v210
    %v830 = vunpack.c.h.b16 %v210
    %v831 = vunpack.c.l.b16 %v211
    %v832 = vunpack.c.h.b16 %v211
    %v833 = vunpack.c.l.b16 %v212
    %v834 = vunpack.c.h.b16 %v212
    %v835 = vunpack.c.l.b16 %v213
    %v836 = vunpack.c.h.b16 %v213
    %v837 = vunpack.c.l.b16 %v214
    %v838 = vunpack.c.h.b16 %v214
    %v839 = vunpack.c.l.b16 %v215
    %v840 = vunpack.c.h.b16 %v215
    %v841 = vunpack.c.l.b16 %v216
    %v842 = vunpack.c.h.b16 %v216
    %v843 = vunpack.c.l.b16 %v217
    %v844 = vunpack.c.h.b16 %v217
    %v845 = vunpack.c.l.b16 %v218
    %v846 = vunpack.c.h.b16 %v218
    %v847 = vunpack.c.l.b16 %v219
    %v848 = vunpack.c.h.b16 %v219
    %v849 = vunpack.c.l.b16 %v220
    %v850 = vunpack.c.h.b16 %v220
    %v851 = vunpack.c.l.b16 %v221
    %v852 = vunpack.c.h.b16 %v221
    %v853 = vunpack.c.l.b16 %v222
    %v854 = vunpack.c.h.b16 %v222
    %v855 = vunpack.c.l.b16 %v223
    %v856 = vunpack.c.h.b16 %v223
    %v857 = vunpack.c.l.b16 %v224
    %v858 = vunpack.c.h.b16 %v224
    %v859 = vunpack.c.l.b16 %v225
    %v860 = vunpack.c.h.b16 %v225
    %v861 = vunpack.c.l.b16 %v226
    %v862 = vunpack.c.h.b16 %v226
    %v863 = vunpack.c.l.b16 %v227
    %v864 = vunpack.c.h.b16 %v227
    %v865 = vunpack.c.l.b16 %v228
    %v866 = vunpack.c.h.b16 %v228
    %v867 = vunpack.c.l.b16 %v229
    %v868 = vunpack.c.h.b16 %v229
    %v869 = vunpack.c.l.b16 %v230
    %v870 = vunpack.c.h.b16 %v230
    %v871 = vunpack.c.l.b16 %v231
    %v872 = vunpack.c.h.b16 %v231
    %v873 = vunpack.c.l.b16 %v232
    %v874 = vunpack.c.h.b16 %v232
    %v875 = vunpack.c.l.b16 %v233
    %v876 = vunpack.c.h.b16 %v233
    %v877 = vunpack.c.l.b16 %v234
    %v878 = vunpack.c.h.b16 %v234
    %v879 = vunpack.c.l.b16 %v235
    %v880 = vunpack.c.h.b16 %v235
    %v881 = vunpack.c.l.b16 %v236
    %v882 = vunpack.c.h.b16 %v236
    %v883 = vunpack.c.l.b16 %v237
    %v884 = vunpack.c.h.b16 %v237
    %v885 = vunpack.c.l.b16 %v238
    %v886 = vunpack.c.h.b16 %v238
    %v887 = vunpack.c.l.b16 %v239
    %v888 = vunpack.c.h.b16 %v239
    %v889 = vunpack.c.l.b16 %v240
    %v890 = vunpack.c.h.b16 %v240
    %v891 = vunpack.c.l.b16 %v241
    %v892 = vunpack.c.h.b16 %v241
    %v893 = vunpack.c.l.b16 %v242
    %v894 = vunpack.c.h.b16 %v242
    %v895 = vunpack.c.l.b16 %v243
    %v896 = vunpack.c.h.b16 %v243
    %v897 = vunpack.c.l.b16 %v244
    %v898 = vunpack.c.h.b16 %v244
    %v899 = vunpack.c.l.b16 %v245
    %v900 = vunpack.c.h.b16 %v245
    %v901 = vunpack.c.l.b16 %v246
    %v902 = vunpack.c.h.b16 %v246
    %v903 = vunpack.c.l.b16 %v247
    %v904 = vunpack.c.h.b16 %v247
    %v905 = vunpack.c.l.b16 %v248
    %v906 = vunpack.c.h.b16 %v248
    %v907 = vunpack.c.l.b16 %v249
    %v908 = vunpack.c.h.b16 %v249
    %v909 = vunpack.c.l.b16 %v250
    %v910 = vunpack.c.h.b16 %v250
    %v911 = vunpack.c.l.b16 %v251
    %v912 = vunpack.c.h.b16 %v251
    %v913 = vunpack.c.l.b16 %v252
    %v914 = vunpack.c.h.b16 %v252
    %v915 = vunpack.c.l.b16 %v253
    %v916 = vunpack.c.h.b16 %v253
    %v917 = vunpack.c.l.b16 %v254
    %v918 = vunpack.c.h.b16 %v254
    %v919 = vunpack.c.l.b16 %v255
    %v920 = vunpack.c.h.b16 %v255
    %v921 = vunpack.c.l.b16 %v256
    %v922 = vunpack.c.h.b16 %v256
    %v923 = vunpack.c.l.b16 %v257
    %v924 = vunpack.c.h.b16 %v257
    %v925 = vunpack.c.l.b16 %v258
    %v926 = vunpack.c.h.b16 %v258
    %v927 = vunpack.c.l.b16 %v259
    %v928 = vunpack.c.h.b16 %v259
    %v929 = vunpack.c.l.b16 %v260
    %v930 = vunpack.c.h.b16 %v260
    %v931 = vunpack.c.l.b16 %v261
    %v932 = vunpack.c.h.b16 %v261
    %v933 = vunpack.c.l.b16 %v262
    %v934 = vunpack.c.h.b16 %v262
    %v935 = vunpack.c.l.b16 %v263
    %v936 = vunpack.c.h.b16 %v263
    %v937 = vunpack.c.l.b16 %v264
    %v938 = vunpack.c.h.b16 %v264
    %v939 = vunpack.c.l.b16 %v265
    %v940 = vunpack.c.h.b16 %v265
    %v941 = vunpack.c.l.b16 %v266
    %v942 = vunpack.c.h.b16 %v266
    %v943 = vunpack.c.l.b16 %v267
    %v944 = vunpack.c.h.b16 %v267
    %v945 = vunpack.c.l.b16 %v268
    %v946 = vunpack.c.h.b16 %v268
    %v947 = vunpack.c.l.b16 %v269
    %v948 = vunpack.c.h.b16 %v269
    %v949 = vunpack.c.l.b16 %v270
    %v950 = vunpack.c.h.b16 %v270
    %v951 = vunpack.c.l.b16 %v271
    %v952 = vunpack.c.h.b16 %v271
    %v953 = vunpack.c.l.b16 %v272
    %v954 = vunpack.c.h.b16 %v272
    %v955 = vunpack.c.l.b16 %v273
    %v956 = vunpack.c.h.b16 %v273
    %v957 = vunpack.c.l.b16 %v274
    %v958 = vunpack.c.h.b16 %v274
    %v959 = vunpack.c.l.b16 %v275
    %v960 = vunpack.c.h.b16 %v275
    %v961 = vunpack.c.l.b16 %v276
    %v962 = vunpack.c.h.b16 %v276
    %v963 = vunpack.c.l.b16 %v277
    %v964 = vunpack.c.h.b16 %v277
    %v965 = vunpack.c.l.b16 %v278
    %v966 = vunpack.c.h.b16 %v278
    %v967 = vunpack.c.l.b16 %v279
    %v968 = vunpack.c.h.b16 %v279
    %v969 = vunpack.c.l.b16 %v280
    %v970 = vunpack.c.h.b16 %v280
    %v971 = vunpack.c.l.b16 %v281
    %v972 = vunpack.c.h.b16 %v281
    %v973 = vunpack.c.l.b16 %v282
    %v974 = vunpack.c.h.b16 %v282
    %v975 = vunpack.c.l.b16 %v283
    %v976 = vunpack.c.h.b16 %v283
    %v977 = vunpack.c.l.b16 %v284
    %v978 = vunpack.c.h.b16 %v284
    %v979 = vunpack.c.l.b16 %v285
    %v980 = vunpack.c.h.b16 %v285
    %v981 = vunpack.c.l.b16 %v286
    %v982 = vunpack.c.h.b16 %v286
    %v983 = vunpack.c.l.b16 %v287
    %v984 = vunpack.c.h.b16 %v287
    %v985 = vunpack.c.l.b16 %v288
    %v986 = vunpack.c.h.b16 %v288
    %v987 = vunpack.c.l.b16 %v289
    %v988 = vunpack.c.h.b16 %v289
    %v989 = vunpack.c.l.b16 %v290
    %v990 = vunpack.c.h.b16 %v290
    %v991 = vunpack.c.l.b16 %v291
    %v992 = vunpack.c.h.b16 %v291
    %v993 = vunpack.c.l.b16 %v292
    %v994 = vunpack.c.h.b16 %v292
    %v995 = vunpack.c.l.b16 %v293
    %v996 = vunpack.c.h.b16 %v293
    %v997 = vunpack.c.l.b16 %v294
    %v998 = vunpack.c.h.b16 %v294
    %v999 = vunpack.c.l.b16 %v295
    %v1000 = vunpack.c.h.b16 %v295
    %v1001 = vunpack.c.l.b16 %v296
    %v1002 = vunpack.c.h.b16 %v296
    %v1003 = vunpack.c.l.b16 %v297
    %v1004 = vunpack.c.h.b16 %v297
    %v1005 = vunpack.c.l.b16 %v298
    %v1006 = vunpack.c.h.b16 %v298
    %v1007 = vunpack.c.l.b16 %v299
    %v1008 = vunpack.c.h.b16 %v299
    %v1009 = vunpack.c.l.b16 %v300
    %v1010 = vunpack.c.h.b16 %v300
    %v1011 = vunpack.c.l.b16 %v301
    %v1012 = vunpack.c.h.b16 %v301
    %v1013 = vunpack.c.l.b16 %v302
    %v1014 = vunpack.c.h.b16 %v302
    %v1015 = vunpack.c.l.b16 %v303
    %v1016 = vunpack.c.h.b16 %v303
    %v1017 = vunpack.c.l.b16 %v304
    %v1018 = vunpack.c.h.b16 %v304
    %v1019 = vunpack.c.l.b16 %v305
    %v1020 = vunpack.c.h.b16 %v305
    %v1021 = vunpack.c.l.b16 %v306
    %v1022 = vunpack.c.h.b16 %v306
    %v1023 = vunpack.c.l.b16 %v307
    %v1024 = vunpack.c.h.b16 %v307
    %v1025 = vunpack.c.l.b16 %v308
    %v1026 = vunpack.c.h.b16 %v308
    %v1027 = vunpack.c.l.b16 %v309
    %v1028 = vunpack.c.h.b16 %v309
    %v1029 = vunpack.c.l.b16 %v310
    %v1030 = vunpack.c.h.b16 %v310
    %v1031 = vunpack.c.l.b16 %v311
    %v1032 = vunpack.c.h.b16 %v311
    %v1033 = vunpack.c.l.b16 %v312
    %v1034 = vunpack.c.h.b16 %v312
    %v1035 = vunpack.c.l.b16 %v313
    %v1036 = vunpack.c.h.b16 %v313
    %v1037 = vunpack.c.l.b16 %v314
    %v1038 = vunpack.c.h.b16 %v314
    %v1039 = vunpack.c.l.b16 %v315
    %v1040 = vunpack.c.h.b16 %v315
    %v1041 = vunpack.c.l.b16 %v316
    %v1042 = vunpack.c.h.b16 %v316
    %v1043 = vunpack.c.l.b16 %v317
    %v1044 = vunpack.c.h.b16 %v317
    %v1045 = vunpack.c.l.b16 %v318
    %v1046 = vunpack.c.h.b16 %v318
    %v1047 = vunpack.c.l.b16 %v319
    %v1048 = vunpack.c.h.b16 %v319
    %v1049 = vunpack.c.l.b16 %v320
    %v1050 = vunpack.c.h.b16 %v320
    %v1051 = vunpack.c.l.b16 %v321
    %v1052 = vunpack.c.h.b16 %v321
    %v1053 = vunpack.c.l.b16 %v322
    %v1054 = vunpack.c.h.b16 %v322
    %v1055 = vunpack.c.l.b16 %v323
    %v1056 = vunpack.c.h.b16 %v323
    %v1057 = vunpack.c.l.b16 %v324
    %v1058 = vunpack.c.h.b16 %v324
    %v1059 = vunpack.c.l.b16 %v325
    %v1060 = vunpack.c.h.b16 %v325
    %v1061 = vunpack.c.l.b16 %v326
    %v1062 = vunpack.c.h.b16 %v326
    %v1063 = vunpack.c.l.b16 %v327
    %v1064 = vunpack.c.h.b16 %v327
    %v1065 = vunpack.c.l.b16 %v328
    %v1066 = vunpack.c.h.b16 %v328
    %v1067 = vunpack.c.l.b16 %v329
    %v1068 = vunpack.c.h.b16 %v329
    %v1069 = vunpack.c.l.b16 %v330
    %v1070 = vunpack.c.h.b16 %v330
    %v1071 = vunpack.c.l.b16 %v331
    %v1072 = vunpack.c.h.b16 %v331
    %v1073 = vunpack.c.l.b16 %v332
    %v1074 = vunpack.c.h.b16 %v332
    %v1075 = vunpack.c.l.b16 %v333
    %v1076 = vunpack.c.h.b16 %v333
    %v1077 = vunpack.c.l.b16 %v334
    %v1078 = vunpack.c.h.b16 %v334
    %v1079 = vunpack.c.l.b16 %v335
    %v1080 = vunpack.c.h.b16 %v335
    %v1081 = vunpack.c.l.b16 %v336
    %v1082 = vunpack.c.h.b16 %v336
    %v1083 = vunpack.c.l.b16 %v337
    %v1084 = vunpack.c.h.b16 %v337
    %v1085 = vunpack.c.l.b16 %v338
    %v1086 = vunpack.c.h.b16 %v338
    %v1087 = vunpack.c.l.b16 %v339
    %v1088 = vunpack.c.h.b16 %v339
    %v1089 = vunpack.c.l.b16 %v340
    %v1090 = vunpack.c.h.b16 %v340
    %v1091 = vunpack.c.l.b16 %v341
    %v1092 = vunpack.c.h.b16 %v341
    %v1093 = vunpack.c.l.b16 %v342
    %v1094 = vunpack.c.h.b16 %v342
    %v1095 = vunpack.c.l.b16 %v343
    %v1096 = vunpack.c.h.b16 %v343
    %v1097 = vunpack.c.l.b16 %v344
    %v1098 = vunpack.c.h.b16 %v344
    %v1099 = vunpack.c.l.b16 %v345
    %v1100 = vunpack.c.h.b16 %v345
    %v1101 = vunpack.c.l.b16 %v346
    %v1102 = vunpack.c.h.b16 %v346
    %v1103 = vunpack.c.l.b16 %v347
    %v1104 = vunpack.c.h.b16 %v347
    %v1105 = vunpack.c.l.b16 %v348
    %v1106 = vunpack.c.h.b16 %v348
    %v1107 = vunpack.c.l.b16 %v349
    %v1108 = vunpack.c.h.b16 %v349
    %v1109 = vunpack.c.l.b16 %v350
    %v1110 = vunpack.c.h.b16 %v350
    %v1111 = vunpack.c.l.b16 %v351
    %v1112 = vunpack.c.h.b16 %v351
    %v1113 = vunpack.c.l.b16 %v352
    %v1114 = vunpack.c.h.b16 %v352
    %v1115 = vunpack.c.l.b16 %v353
    %v1116 = vunpack.c.h.b16 %v353
    %v1117 = vunpack.c.l.b16 %v354
    %v1118 = vunpack.c.h.b16 %v354
    %v1119 = vunpack.c.l.b16 %v355
    %v1120 = vunpack.c.h.b16 %v355
    %v1121 = vunpack.c.l.b16 %v356
    %v1122 = vunpack.c.h.b16 %v356
    %v1123 = vunpack.c.l.b16 %v357
    %v1124 = vunpack.c.h.b16 %v357
    %v1125 = vunpack.c.l.b16 %v358
    %v1126 = vunpack.c.h.b16 %v358
    %v1127 = vunpack.c.l.b16 %v359
    %v1128 = vunpack.c.h.b16 %v359
    %v1129 = vunpack.c.l.b16 %v360
    %v1130 = vunpack.c.h.b16 %v360
    %v1131 = vunpack.c.l.b16 %v361
    %v1132 = vunpack.c.h.b16 %v361
    %v1133 = vunpack.c.l.b16 %v362
    %v1134 = vunpack.c.h.b16 %v362
    %v1135 = vunpack.c.l.b16 %v363
    %v1136 = vunpack.c.h.b16 %v363
    %v1137 = vunpack.c.l.b16 %v364
    %v1138 = vunpack.c.h.b16 %v364
    %v1139 = vunpack.c.l.b16 %v365
    %v1140 = vunpack.c.h.b16 %v365
    %v1141 = vunpack.c.l.b16 %v366
    %v1142 = vunpack.c.h.b16 %v366
    %v1143 = vunpack.c.l.b16 %v367
    %v1144 = vunpack.c.h.b16 %v367
    %v1145 = vunpack.c.l.b16 %v368
    %v1146 = vunpack.c.h.b16 %v368
    %v1147 = vunpack.c.l.b16 %v369
    %v1148 = vunpack.c.h.b16 %v369
    %v1149 = vunpack.c.l.b16 %v370
    %v1150 = vunpack.c.h.b16 %v370
    %v1151 = vunpack.c.l.b16 %v371
    %v1152 = vunpack.c.h.b16 %v371
    %v1153 = vunpack.c.l.b16 %v372
    %v1154 = vunpack.c.h.b16 %v372
    %v1155 = vunpack.c.l.b16 %v373
    %v1156 = vunpack.c.h.b16 %v373
    %v1157 = vunpack.c.l.b16 %v374
    %v1158 = vunpack.c.h.b16 %v374
    %v1159 = vunpack.c.l.b16 %v375
    %v1160 = vunpack.c.h.b16 %v375
    %v1161 = vunpack.c.l.b16 %v376
    %v1162 = vunpack.c.h.b16 %v376
    %v1163 = vunpack.c.l.b16 %v377
    %v1164 = vunpack.c.h.b16 %v377
    %v1165 = vunpack.c.l.b16 %v378
    %v1166 = vunpack.c.h.b16 %v378
    %v1167 = vunpack.c.l.b16 %v379
    %v1168 = vunpack.c.h.b16 %v379
    %v1169 = vunpack.c.l.b16 %v380
    %v1170 = vunpack.c.h.b16 %v380
    %v1171 = vunpack.c.l.b16 %v381
    %v1172 = vunpack.c.h.b16 %v381
    %v1173 = vunpack.c.l.b16 %v382
    %v1174 = vunpack.c.h.b16 %v382
    %v1175 = vunpack.c.l.b16 %v383
    %v1176 = vunpack.c.h.b16 %v383
    %v1177 = vunpack.c.l.b16 %v384
    %v1178 = vunpack.c.h.b16 %v384
    %v1179 = vunpack.c.l.b16 %v385
    %v1180 = vunpack.c.h.b16 %v385
    %v1181 = vunpack.c.l.b16 %v386
    %v1182 = vunpack.c.h.b16 %v386
    %v1183 = vunpack.c.l.b16 %v387
    %v1184 = vunpack.c.h.b16 %v387
    %v1185 = vunpack.c.l.b16 %v388
    %v1186 = vunpack.c.h.b16 %v388
    %v1187 = vunpack.c.l.b16 %v389
    %v1188 = vunpack.c.h.b16 %v389
    %v1189 = vunpack.c.l.b16 %v390
    %v1190 = vunpack.c.h.b16 %v390
    %v1191 = vunpack.c.l.b16 %v391
    %v1192 = vunpack.c.h.b16 %v391
    %v1193 = vunpack.c.l.b16 %v392
    %v1194 = vunpack.c.h.b16 %v392
    %v1195 = vunpack.c.l.b16 %v393
    %v1196 = vunpack.c.h.b16 %v393
    %v1197 = vunpack.c.l.b16 %v394
    %v1198 = vunpack.c.h.b16 %v394
    %v1199 = vunpack.c.l.b16 %v395
    %v1200 = vunpack.c.h.b16 %v395
    %v1201 = vunpack.c.l.b16 %v396
    %v1202 = vunpack.c.h.b16 %v396
    %v1203 = vunpack.c.l.b16 %v397
    %v1204 = vunpack.c.h.b16 %v397
    %v1205 = vunpack.c.l.b16 %v398
    %v1206 = vunpack.c.h.b16 %v398
    %v1207 = vunpack.c.l.b16 %v399
    %v1208 = vunpack.c.h.b16 %v399
    %v1209 = vunpack.c.l.b16 %v400
    %v1210 = vunpack.c.h.b16 %v400
    %v1211 = vpack.c.b16 %v707, %v699
    %v1212 = vpack.c.b16 %v708, %v700
    %v1213 = vpack.c.b16 %v709, %v701
    %v1214 = vpack.c.b16 %v710, %v702
    %v1215 = vpack.c.b16 %v711, %v703
    %v1216 = vpack.c.b16 %v712, %v704
    %v1217 = vpack.c.b16 %v713, %v705
    %v1218 = vpack.c.b16 %v714, %v706
    %v1219 = vpack.c.b16 %v723, %v715
    %v1220 = vpack.c.b16 %v724, %v716
    %v1221 = vpack.c.b16 %v725, %v717
    %v1222 = vpack.c.b16 %v726, %v718
    %v1223 = vpack.c.b16 %v727, %v719
    %v1224 = vpack.c.b16 %v728, %v720
    %v1225 = vpack.c.b16 %v729, %v721
    %v1226 = vpack.c.b16 %v730, %v722
    %v1227 = vpack.c.b16 %v739, %v731
    %v1228 = vpack.c.b16 %v740, %v732
    %v1229 = vpack.c.b16 %v741, %v733
    %v1230 = vpack.c.b16 %v742, %v734
    %v1231 = vpack.c.b16 %v743, %v735
    %v1232 = vpack.c.b16 %v744, %v736
    %v1233 = vpack.c.b16 %v745, %v737
    %v1234 = vpack.c.b16 %v746, %v738
    %v1235 = vpack.c.b16 %v755, %v747
    %v1236 = vpack.c.b16 %v756, %v748
    %v1237 = vpack.c.b16 %v757, %v749
    %v1238 = vpack.c.b16 %v758, %v750
    %v1239 = vpack.c.b16 %v759, %v751
    %v1240 = vpack.c.b16 %v760, %v752
    %v1241 = vpack.c.b16 %v761, %v753
    %v1242 = vpack.c.b16 %v762, %v754
    %v1243 = vpack.c.b16 %v771, %v763
    %v1244 = vpack.c.b16 %v772, %v764
    %v1245 = vpack.c.b16 %v773, %v765
    %v1246 = vpack.c.b16 %v774, %v766
    %v1247 = vpack.c.b16 %v775, %v767
    %v1248 = vpack.c.b16 %v776, %v768
    %v1249 = vpack.c.b16 %v777, %v769
    %v1250 = vpack.c.b16 %v778, %v770
    %v1251 = vpack.c.b16 %v787, %v779
    %v1252 = vpack.c.b16 %v788, %v780
    %v1253 = vpack.c.b16 %v789, %v781
    %v1254 = vpack.c.b16 %v790, %v782
    %v1255 = vpack.c.b16 %v791, %v783
    %v1256 = vpack.c.b16 %v792, %v784
    %v1257 = vpack.c.b16 %v793, %v785
    %v1258 = vpack.c.b16 %v794, %v786
    %v1259 = vpack.c.b16 %v803, %v795
    %v1260 = vpack.c.b16 %v804, %v796
    %v1261 = vpack.c.b16 %v805, %v797
    %v1262 = vpack.c.b16 %v806, %v798
    %v1263 = vpack.c.b16 %v807, %v799
    %v1264 = vpack.c.b16 %v808, %v800
    %v1265 = vpack.c.b16 %v809, %v801
    %v1266 = vpack.c.b16 %v810, %v802
    %v1267 = vpack.c.b16 %v819, %v811
    %v1268 = vpack.c.b16 %v820, %v812
    %v1269 = vpack.c.b16 %v821, %v813
    %v1270 = vpack.c.b16 %v822, %v814
    %v1271 = vpack.c.b16 %v823, %v815
    %v1272 = vpack.c.b16 %v824, %v816
    %v1273 = vpack.c.b16 %v825, %v817
    %v1274 = vpack.c.b16 %v826, %v818
    %v1275 = vpack.c.b16 %v835, %v827
    %v1276 = vpack.c.b16 %v836, %v828
    %v1277 = vpack.c.b16 %v837, %v829
    %v1278 = vpack.c.b16 %v838, %v830
    %v1279 = vpack.c.b16 %v839, %v831
    %v1280 = vpack.c.b16 %v840, %v832
    %v1281 = vpack.c.b16 %v841, %v833
    %v1282 = vpack.c.b16 %v842, %v834
    %v1283 = vpack.c.b16 %v851, %v843
    %v1284 = vpack.c.b16 %v852, %v844
    %v1285 = vpack.c.b16 %v853, %v845
    %v1286 = vpack.c.b16 %v854, %v846
    %v1287 = vpack.c.b16 %v855, %v847
    %v1288 = vpack.c.b16 %v856, %v848
    %v1289 = vpack.c.b16 %v857, %v849
    %v1290 = vpack.c.b16 %v858, %v850
    %v1291 = vpack.c.b16 %v867, %v859
    %v1292 = vpack.c.b16 %v868, %v860
    %v1293 = vpack.c.b16 %v869, %v861
    %v1294 = vpack.c.b16 %v870, %v862
    %v1295 = vpack.c.b16 %v871, %v863
    %v1296 = vpack.c.b16 %v872, %v864
    %v1297 = vpack.c.b16 %v873, %v865
    %v1298 = vpack.c.b16 %v874, %v866
    %v1299 = vpack.c.b16 %v883, %v875
    %v1300 = vpack.c.b16 %v884, %v876
    %v1301 = vpack.c.b16 %v885, %v877
    %v1302 = vpack.c.b16 %v886, %v878
    %v1303 = vpack.c.b16 %v887, %v879
    %v1304 = vpack.c.b16 %v888, %v880
    %v1305 = vpack.c.b16 %v889, %v881
    %v1306 = vpack.c.b16 %v890, %v882
    %v1307 = vpack.c.b16 %v899, %v891
    %v1308 = vpack.c.b16 %v900, %v892
    %v1309 = vpack.c.b16 %v901, %v893
    %v1310 = vpack.c.b16 %v902, %v894
    %v1311 = vpack.c.b16 %v903, %v895
    %v1312 = vpack.c.b16 %v904, %v896
    %v1313 = vpack.c.b16 %v905, %v897
    %v1314 = vpack.c.b16 %v906, %v898
    %v1315 = vpack.c.b16 %v915, %v907
    %v1316 = vpack.c.b16 %v916, %v908
    %v1317 = vpack.c.b16 %v917, %v909
    %v1318 = vpack.c.b16 %v918, %v910
    %v1319 = vpack.c.b16 %v919, %v911
    %v1320 = vpack.c.b16 %v920, %v912
    %v1321 = vpack.c.b16 %v921, %v913
    %v1322 = vpack.c.b16 %v922, %v914
    %v1323 = vpack.c.b16 %v931, %v923
    %v1324 = vpack.c.b16 %v932, %v924
    %v1325 = vpack.c.b16 %v933, %v925
    %v1326 = vpack.c.b16 %v934, %v926
    %v1327 = vpack.c.b16 %v935, %v927
    %v1328 = vpack.c.b16 %v936, %v928
    %v1329 = vpack.c.b16 %v937, %v929
    %v1330 = vpack.c.b16 %v938, %v930
    %v1331 = vpack.c.b16 %v947, %v939
    %v1332 = vpack.c.b16 %v948, %v940
    %v1333 = vpack.c.b16 %v949, %v941
    %v1334 = vpack.c.b16 %v950, %v942
    %v1335 = vpack.c.b16 %v951, %v943
    %v1336 = vpack.c.b16 %v952, %v944
    %v1337 = vpack.c.b16 %v953, %v945
    %v1338 = vpack.c.b16 %v954, %v946
    %v1339 = vpack.c.b16 %v963, %v955
    %v1340 = vpack.c.b16 %v964, %v956
    %v1341 = vpack.c.b16 %v965, %v957
    %v1342 = vpack.c.b16 %v966, %v958
    %v1343 = vpack.c.b16 %v967, %v959
    %v1344 = vpack.c.b16 %v968, %v960
    %v1345 = vpack.c.b16 %v969, %v961
    %v1346 = vpack.c.b16 %v970, %v962
    %v1347 = vpack.c.b16 %v979, %v971
    %v1348 = vpack.c.b16 %v980, %v972
    %v1349 = vpack.c.b16 %v981, %v973
    %v1350 = vpack.c.b16 %v982, %v974
    %v1351 = vpack.c.b16 %v983, %v975
    %v1352 = vpack.c.b16 %v984, %v976
    %v1353 = vpack.c.b16 %v985, %v977
    %v1354 = vpack.c.b16 %v986, %v978
    %v1355 = vpack.c.b16 %v995, %v987
    %v1356 = vpack.c.b16 %v996, %v988
    %v1357 = vpack.c.b16 %v997, %v989
    %v1358 = vpack.c.b16 %v998, %v990
    %v1359 = vpack.c.b16 %v999, %v991
    %v1360 = vpack.c.b16 %v1000, %v992
    %v1361 = vpack.c.b16 %v1001, %v993
    %v1362 = vpack.c.b16 %v1002, %v994
    %v1363 = vpack.c.b16 %v1011, %v1003
    %v1364 = vpack.c.b16 %v1012, %v1004
    %v1365 = vpack.c.b16 %v1013, %v1005
    %v1366 = vpack.c.b16 %v1014, %v1006
    %v1367 = vpack.c.b16 %v1015, %v1007
    %v1368 = vpack.c.b16 %v1016, %v1008
    %v1369 = vpack.c.b16 %v1017, %v1009
    %v1370 = vpack.c.b16 %v1018, %v1010
    %v1371 = vpack.c.b16 %v1027, %v1019
    %v1372 = vpack.c.b16 %v1028, %v1020
    %v1373 = vpack.c.b16 %v1029, %v1021
    %v1374 = vpack.c.b16 %v1030, %v1022
    %v1375 = vpack.c.b16 %v1031, %v1023
    %v1376 = vpack.c.b16 %v1032, %v1024
    %v1377 = vpack.c.b16 %v1033, %v1025
    %v1378 = vpack.c.b16 %v1034, %v1026
    %v1379 = vpack.c.b16 %v1043, %v1035
    %v1380 = vpack.c.b16 %v1044, %v1036
    %v1381 = vpack.c.b16 %v1045, %v1037
    %v1382 = vpack.c.b16 %v1046, %v1038
    %v1383 = vpack.c.b16 %v1047, %v1039
    %v1384 = vpack.c.b16 %v1048, %v1040
    %v1385 = vpack.c.b16 %v1049, %v1041
    %v1386 = vpack.c.b16 %v1050, %v1042
    %v1387 = vpack.c.b16 %v1059, %v1051
    %v1388 = vpack.c.b16 %v1060, %v1052
    %v1389 = vpack.c.b16 %v1061, %v1053
    %v1390 = vpack.c.b16 %v1062, %v1054
    %v1391 = vpack.c.b16 %v1063, %v1055
    %v1392 = vpack.c.b16 %v1064, %v1056
    %v1393 = vpack.c.b16 %v1065, %v1057
    %v1394 = vpack.c.b16 %v1066, %v1058
    %v1395 = vpack.c.b16 %v1075, %v1067
    %v1396 = vpack.c.b16 %v1076, %v1068
    %v1397 = vpack.c.b16 %v1077, %v1069
    %v1398 = vpack.c.b16 %v1078, %v1070
    %v1399 = vpack.c.b16 %v1079, %v1071
    %v1400 = vpack.c.b16 %v1080, %v1072
    %v1401 = vpack.c.b16 %v1081, %v1073
    %v1402 = vpack.c.b16 %v1082, %v1074
    %v1403 = vpack.c.b16 %v1091, %v1083
    %v1404 = vpack.c.b16 %v1092, %v1084
    %v1405 = vpack.c.b16 %v1093, %v1085
    %v1406 = vpack.c.b16 %v1094, %v1086
    %v1407 = vpack.c.b16 %v1095, %v1087
    %v1408 = vpack.c.b16 %v1096, %v1088
    %v1409 = vpack.c.b16 %v1097, %v1089
    %v1410 = vpack.c.b16 %v1098, %v1090
    %v1411 = vpack.c.b16 %v1107, %v1099
    %v1412 = vpack.c.b16 %v1108, %v1100
    %v1413 = vpack.c.b16 %v1109, %v1101
    %v1414 = vpack.c.b16 %v1110, %v1102
    %v1415 = vpack.c.b16 %v1111, %v1103
    %v1416 = vpack.c.b16 %v1112, %v1104
    %v1417 = vpack.c.b16 %v1113, %v1105
    %v1418 = vpack.c.b16 %v1114, %v1106
    %v1419 = vpack.c.b16 %v1123, %v1115
    %v1420 = vpack.c.b16 %v1124, %v1116
    %v1421 = vpack.c.b16 %v1125, %v1117
    %v1422 = vpack.c.b16 %v1126, %v1118
    %v1423 = vpack.c.b16 %v1127, %v1119
    %v1424 = vpack.c.b16 %v1128, %v1120
    %v1425 = vpack.c.b16 %v1129, %v1121
    %v1426 = vpack.c.b16 %v1130, %v1122
    %v1427 = vpack.c.b16 %v1139, %v1131
    %v1428 = vpack.c.b16 %v1140, %v1132
    %v1429 = vpack.c.b16 %v1141, %v1133
    %v1430 = vpack.c.b16 %v1142, %v1134
    %v1431 = vpack.c.b16 %v1143, %v1135
    %v1432 = vpack.c.b16 %v1144, %v1136
    %v1433 = vpack.c.b16 %v1145, %v1137
    %v1434 = vpack.c.b16 %v1146, %v1138
    %v1435 = vpack.c.b16 %v1155, %v1147
    %v1436 = vpack.c.b16 %v1156, %v1148
    %v1437 = vpack.c.b16 %v1157, %v1149
    %v1438 = vpack.c.b16 %v1158, %v1150
    %v1439 = vpack.c.b16 %v1159, %v1151
    %v1440 = vpack.c.b16 %v1160, %v1152
    %v1441 = vpack.c.b16 %v1161, %v1153
    %v1442 = vpack.c.b16 %v1162, %v1154
    %v1443 = vpack.c.b16 %v1171, %v1163
    %v1444 = vpack.c.b16 %v1172, %v1164
    %v1445 = vpack.c.b16 %v1173, %v1165
    %v1446 = vpack.c.b16 %v1174, %v1166
    %v1447 = vpack.c.b16 %v1175, %v1167
    %v1448 = vpack.c.b16 %v1176, %v1168
    %v1449 = vpack.c.b16 %v1177, %v1169
    %v1450 = vpack.c.b16 %v1178, %v1170
    %v1451 = vpack.c.b16 %v1187, %v1179
    %v1452 = vpack.c.b16 %v1188, %v1180
    %v1453 = vpack.c.b16 %v1189, %v1181
    %v1454 = vpack.c.b16 %v1190, %v1182
    %v1455 = vpack.c.b16 %v1191, %v1183
    %v1456 = vpack.c.b16 %v1192, %v1184
    %v1457 = vpack.c.b16 %v1193, %v1185
    %v1458 = vpack.c.b16 %v1194, %v1186
    %v1459 = vpack.c.b16 %v1203, %v1195
    %v1460 = vpack.c.b16 %v1204, %v1196
    %v1461 = vpack.c.b16 %v1205, %v1197
    %v1462 = vpack.c.b16 %v1206, %v1198
    %v1463 = vpack.c.b16 %v1207, %v1199
    %v1464 = vpack.c.b16 %v1208, %v1200
    %v1465 = vpack.c.b16 %v1209, %v1201
    %v1466 = vpack.c.b16 %v1210, %v1202
    %1723 = vmatprep.subr.bf16.mxu0 %v1212
    %1724 = vmatpush1.bf16.msra.mxu0 %v1211
    %1725 = vmatprep.subr.bf16.mxu0 %v1220
    %1726 = vmatpush1.bf16.msra.mxu0 %v1219
    %1727 = vmatprep.subr.bf16.mxu0 %v1228
    %1728 = vmatpush1.bf16.msra.mxu0 %v1227
    %1729 = vmatprep.subr.bf16.mxu0 %v1236
    %1730 = vmatpush1.bf16.msra.mxu0 %v1235
    %1731 = vmatprep.subr.bf16.mxu0 %v1244
    %1732 = vmatpush1.bf16.msra.mxu0 %v1243
    %1733 = vmatprep.subr.bf16.mxu0 %v1252
    %1734 = vmatpush1.bf16.msra.mxu0 %v1251
    %1735 = vmatprep.subr.bf16.mxu0 %v1260
    %1736 = vmatpush1.bf16.msra.mxu0 %v1259
    %1737 = vmatprep.subr.bf16.mxu0 %v1268
    %1738 = vmatpush1.bf16.msra.mxu0 %v1267
    %1739 = vmatprep.subr.bf16.mxu0 %v1276
    %1740 = vmatpush1.bf16.msra.mxu0 %v1275
    %1741 = vmatprep.subr.bf16.mxu0 %v1284
    %1742 = vmatpush1.bf16.msra.mxu0 %v1283
    %1743 = vmatprep.subr.bf16.mxu0 %v1292
    %1744 = vmatpush1.bf16.msra.mxu0 %v1291
    %1745 = vmatprep.subr.bf16.mxu0 %v1300
    %1746 = vmatpush1.bf16.msra.mxu0 %v1299
    %1747 = vmatprep.subr.bf16.mxu0 %v1308
    %1748 = vmatpush1.bf16.msra.mxu0 %v1307
    %1749 = vmatprep.subr.bf16.mxu0 %v1316
    %1750 = vmatpush1.bf16.msra.mxu0 %v1315
    %1751 = vmatprep.subr.bf16.mxu0 %v1324
    %1752 = vmatpush1.bf16.msra.mxu0 %v1323
    %1753 = vmatprep.subr.bf16.mxu0 %v1332
    %1754 = vmatpush1.bf16.msra.mxu0 %v1331
    %1755 = vmatprep.mubr.bf16.mxu0 %v142
    %1756 = vmatmul.mubr.bf16.gmra.mrb[0].mxu0 %v141
    %v1757 = vpop.f32.mrb[0].mxu0
    %v1758 = vadd.f32 %v406, %v1757
    %v1759 = vpop.f32.mrb[0].mxu0
    %v1760 = vadd.f32 %v410, %v1759
    %v1761 = vpop.f32.mrb[0].mxu0
    %v1762 = vadd.f32 %v406, %v1761
    %v1763 = vpop.f32.mrb[0].mxu0
    %v1764 = vadd.f32 %v410, %v1763
    %1765 = vdwg.mxu0
    %1766 = vmatprep.subr.bf16.mxu0 %v1340
    %1767 = vmatpush1.bf16.msra.mxu0 %v1339
    %1768 = vmatprep.subr.bf16.mxu0 %v1348
    %1769 = vmatpush1.bf16.msra.mxu0 %v1347
    %1770 = vmatprep.subr.bf16.mxu0 %v1356
    %1771 = vmatpush1.bf16.msra.mxu0 %v1355
    %1772 = vmatprep.subr.bf16.mxu0 %v1364
    %1773 = vmatpush1.bf16.msra.mxu0 %v1363
    %1774 = vmatprep.subr.bf16.mxu0 %v1372
    %1775 = vmatpush1.bf16.msra.mxu0 %v1371
    %1776 = vmatprep.subr.bf16.mxu0 %v1380
    %1777 = vmatpush1.bf16.msra.mxu0 %v1379
    %1778 = vmatprep.subr.bf16.mxu0 %v1388
    %1779 = vmatpush1.bf16.msra.mxu0 %v1387
    %1780 = vmatprep.subr.bf16.mxu0 %v1396
    %1781 = vmatpush1.bf16.msra.mxu0 %v1395
    %1782 = vmatprep.subr.bf16.mxu0 %v1404
    %1783 = vmatpush1.bf16.msra.mxu0 %v1403
    %1784 = vmatprep.subr.bf16.mxu0 %v1412
    %1785 = vmatpush1.bf16.msra.mxu0 %v1411
    %1786 = vmatprep.subr.bf16.mxu0 %v1420
    %1787 = vmatpush1.bf16.msra.mxu0 %v1419
    %1788 = vmatprep.subr.bf16.mxu0 %v1428
    %1789 = vmatpush1.bf16.msra.mxu0 %v1427
    %1790 = vmatprep.subr.bf16.mxu0 %v1436
    %1791 = vmatpush1.bf16.msra.mxu0 %v1435
    %1792 = vmatprep.subr.bf16.mxu0 %v1444
    %1793 = vmatpush1.bf16.msra.mxu0 %v1443
    %1794 = vmatprep.subr.bf16.mxu0 %v1452
    %1795 = vmatpush1.bf16.msra.mxu0 %v1451
    %1796 = vmatprep.subr.bf16.mxu0 %v1460
    %1797 = vmatpush1.bf16.msra.mxu0 %v1459
    %1798 = vmatprep.mubr.bf16.mxu0 %v144
    %1799 = vmatmul.mubr.bf16.gmra.mrb[0].mxu0 %v143
    %v1800 = vpop.f32.mrb[0].mxu0
    %v1801 = vadd.f32 %v1758, %v1800
    %v1802 = vpop.f32.mrb[0].mxu0
    %v1803 = vadd.f32 %v1760, %v1802
    %v1804 = vpop.f32.mrb[0].mxu0
    %v1805 = vadd.f32 %v1762, %v1804
    %v1806 = vpop.f32.mrb[0].mxu0
    %v1807 = vadd.f32 %v1764, %v1806
    %1808 = vdwg.mxu0
    %1809 = vmatprep.subr.bf16.mxu0 %v1214
    %1810 = vmatpush1.bf16.msra.mxu0 %v1213
    %1811 = vmatprep.subr.bf16.mxu0 %v1222
    %1812 = vmatpush1.bf16.msra.mxu0 %v1221
    %1813 = vmatprep.subr.bf16.mxu0 %v1230
    %1814 = vmatpush1.bf16.msra.mxu0 %v1229
    %1815 = vmatprep.subr.bf16.mxu0 %v1238
    %1816 = vmatpush1.bf16.msra.mxu0 %v1237
    %1817 = vmatprep.subr.bf16.mxu0 %v1246
    %1818 = vmatpush1.bf16.msra.mxu0 %v1245
    %1819 = vmatprep.subr.bf16.mxu0 %v1254
    %1820 = vmatpush1.bf16.msra.mxu0 %v1253
    %1821 = vmatprep.subr.bf16.mxu0 %v1262
    %1822 = vmatpush1.bf16.msra.mxu0 %v1261
    %1823 = vmatprep.subr.bf16.mxu0 %v1270
    %1824 = vmatpush1.bf16.msra.mxu0 %v1269
    %1825 = vmatprep.subr.bf16.mxu0 %v1278
    %1826 = vmatpush1.bf16.msra.mxu0 %v1277
    %1827 = vmatprep.subr.bf16.mxu0 %v1286
    %1828 = vmatpush1.bf16.msra.mxu0 %v1285
    %1829 = vmatprep.subr.bf16.mxu0 %v1294
    %1830 = vmatpush1.bf16.msra.mxu0 %v1293
    %1831 = vmatprep.subr.bf16.mxu0 %v1302
    %1832 = vmatpush1.bf16.msra.mxu0 %v1301
    %1833 = vmatprep.subr.bf16.mxu0 %v1310
    %1834 = vmatpush1.bf16.msra.mxu0 %v1309
    %1835 = vmatprep.subr.bf16.mxu0 %v1318
    %1836 = vmatpush1.bf16.msra.mxu0 %v1317
    %1837 = vmatprep.subr.bf16.mxu0 %v1326
    %1838 = vmatpush1.bf16.msra.mxu0 %v1325
    %1839 = vmatprep.subr.bf16.mxu0 %v1334
    %1840 = vmatpush1.bf16.msra.mxu0 %v1333
    %1841 = vmatprep.mubr.bf16.mxu0 %v142
    %1842 = vmatmul.mubr.bf16.gmra.mrb[0].mxu0 %v141
    %v1843 = vpop.f32.mrb[0].mxu0
    %v1844 = vadd.f32 %v414, %v1843
    %v1845 = vpop.f32.mrb[0].mxu0
    %v1846 = vadd.f32 %v418, %v1845
    %v1847 = vpop.f32.mrb[0].mxu0
    %v1848 = vadd.f32 %v414, %v1847
    %v1849 = vpop.f32.mrb[0].mxu0
    %v1850 = vadd.f32 %v418, %v1849
    %1851 = vdwg.mxu0
    %1852 = vmatprep.subr.bf16.mxu0 %v1342
    %1853 = vmatpush1.bf16.msra.mxu0 %v1341
    %1854 = vmatprep.subr.bf16.mxu0 %v1350
    %1855 = vmatpush1.bf16.msra.mxu0 %v1349
    %1856 = vmatprep.subr.bf16.mxu0 %v1358
    %1857 = vmatpush1.bf16.msra.mxu0 %v1357
    %1858 = vmatprep.subr.bf16.mxu0 %v1366
    %1859 = vmatpush1.bf16.msra.mxu0 %v1365
    %1860 = vmatprep.subr.bf16.mxu0 %v1374
    %1861 = vmatpush1.bf16.msra.mxu0 %v1373
    %1862 = vmatprep.subr.bf16.mxu0 %v1382
    %1863 = vmatpush1.bf16.msra.mxu0 %v1381
    %1864 = vmatprep.subr.bf16.mxu0 %v1390
    %1865 = vmatpush1.bf16.msra.mxu0 %v1389
    %1866 = vmatprep.subr.bf16.mxu0 %v1398
    %1867 = vmatpush1.bf16.msra.mxu0 %v1397
    %1868 = vmatprep.subr.bf16.mxu0 %v1406
    %1869 = vmatpush1.bf16.msra.mxu0 %v1405
    %1870 = vmatprep.subr.bf16.mxu0 %v1414
    %1871 = vmatpush1.bf16.msra.mxu0 %v1413
    %1872 = vmatprep.subr.bf16.mxu0 %v1422
    %1873 = vmatpush1.bf16.msra.mxu0 %v1421
    %1874 = vmatprep.subr.bf16.mxu0 %v1430
    %1875 = vmatpush1.bf16.msra.mxu0 %v1429
    %1876 = vmatprep.subr.bf16.mxu0 %v1438
    %1877 = vmatpush1.bf16.msra.mxu0 %v1437
    %1878 = vmatprep.subr.bf16.mxu0 %v1446
    %1879 = vmatpush1.bf16.msra.mxu0 %v1445
    %1880 = vmatprep.subr.bf16.mxu0 %v1454
    %1881 = vmatpush1.bf16.msra.mxu0 %v1453
    %1882 = vmatprep.subr.bf16.mxu0 %v1462
    %1883 = vmatpush1.bf16.msra.mxu0 %v1461
    %1884 = vmatprep.mubr.bf16.mxu0 %v144
    %1885 = vmatmul.mubr.bf16.gmra.mrb[0].mxu0 %v143
    %v1886 = vpop.f32.mrb[0].mxu0
    %v1887 = vadd.f32 %v1844, %v1886
    %v1888 = vpop.f32.mrb[0].mxu0
    %v1889 = vadd.f32 %v1846, %v1888
    %v1890 = vpop.f32.mrb[0].mxu0
    %v1891 = vadd.f32 %v1848, %v1890
    %v1892 = vpop.f32.mrb[0].mxu0
    %v1893 = vadd.f32 %v1850, %v1892
    %1894 = vdwg.mxu0
    %1895 = vmatprep.subr.bf16.mxu0 %v1216
    %1896 = vmatpush1.bf16.msra.mxu0 %v1215
    %1897 = vmatprep.subr.bf16.mxu0 %v1224
    %1898 = vmatpush1.bf16.msra.mxu0 %v1223
    %1899 = vmatprep.subr.bf16.mxu0 %v1232
    %1900 = vmatpush1.bf16.msra.mxu0 %v1231
    %1901 = vmatprep.subr.bf16.mxu0 %v1240
    %1902 = vmatpush1.bf16.msra.mxu0 %v1239
    %1903 = vmatprep.subr.bf16.mxu0 %v1248
    %1904 = vmatpush1.bf16.msra.mxu0 %v1247
    %1905 = vmatprep.subr.bf16.mxu0 %v1256
    %1906 = vmatpush1.bf16.msra.mxu0 %v1255
    %1907 = vmatprep.subr.bf16.mxu0 %v1264
    %1908 = vmatpush1.bf16.msra.mxu0 %v1263
    %1909 = vmatprep.subr.bf16.mxu0 %v1272
    %1910 = vmatpush1.bf16.msra.mxu0 %v1271
    %1911 = vmatprep.subr.bf16.mxu0 %v1280
    %1912 = vmatpush1.bf16.msra.mxu0 %v1279
    %1913 = vmatprep.subr.bf16.mxu0 %v1288
    %1914 = vmatpush1.bf16.msra.mxu0 %v1287
    %1915 = vmatprep.subr.bf16.mxu0 %v1296
    %1916 = vmatpush1.bf16.msra.mxu0 %v1295
    %1917 = vmatprep.subr.bf16.mxu0 %v1304
    %1918 = vmatpush1.bf16.msra.mxu0 %v1303
    %1919 = vmatprep.subr.bf16.mxu0 %v1312
    %1920 = vmatpush1.bf16.msra.mxu0 %v1311
    %1921 = vmatprep.subr.bf16.mxu0 %v1320
    %1922 = vmatpush1.bf16.msra.mxu0 %v1319
    %1923 = vmatprep.subr.bf16.mxu0 %v1328
    %1924 = vmatpush1.bf16.msra.mxu0 %v1327
    %1925 = vmatprep.subr.bf16.mxu0 %v1336
    %1926 = vmatpush1.bf16.msra.mxu0 %v1335
    %1927 = vmatprep.mubr.bf16.mxu0 %v142
    %1928 = vmatmul.mubr.bf16.gmra.mrb[0].mxu0 %v141
    %v1929 = vpop.f32.mrb[0].mxu0
    %v1930 = vadd.f32 %v422, %v1929
    %v1931 = vpop.f32.mrb[0].mxu0
    %v1932 = vadd.f32 %v426, %v1931
    %v1933 = vpop.f32.mrb[0].mxu0
    %v1934 = vadd.f32 %v422, %v1933
    %v1935 = vpop.f32.mrb[0].mxu0
    %v1936 = vadd.f32 %v426, %v1935
    %1937 = vdwg.mxu0
    %1938 = vmatprep.subr.bf16.mxu0 %v1344
    %1939 = vmatpush1.bf16.msra.mxu0 %v1343
    %1940 = vmatprep.subr.bf16.mxu0 %v1352
    %1941 = vmatpush1.bf16.msra.mxu0 %v1351
    %1942 = vmatprep.subr.bf16.mxu0 %v1360
    %1943 = vmatpush1.bf16.msra.mxu0 %v1359
    %1944 = vmatprep.subr.bf16.mxu0 %v1368
    %1945 = vmatpush1.bf16.msra.mxu0 %v1367
    %1946 = vmatprep.subr.bf16.mxu0 %v1376
    %1947 = vmatpush1.bf16.msra.mxu0 %v1375
    %1948 = vmatprep.subr.bf16.mxu0 %v1384
    %1949 = vmatpush1.bf16.msra.mxu0 %v1383
    %1950 = vmatprep.subr.bf16.mxu0 %v1392
    %1951 = vmatpush1.bf16.msra.mxu0 %v1391
    %1952 = vmatprep.subr.bf16.mxu0 %v1400
    %1953 = vmatpush1.bf16.msra.mxu0 %v1399
    %1954 = vmatprep.subr.bf16.mxu0 %v1408
    %1955 = vmatpush1.bf16.msra.mxu0 %v1407
    %1956 = vmatprep.subr.bf16.mxu0 %v1416
    %1957 = vmatpush1.bf16.msra.mxu0 %v1415
    %1958 = vmatprep.subr.bf16.mxu0 %v1424
    %1959 = vmatpush1.bf16.msra.mxu0 %v1423
    %1960 = vmatprep.subr.bf16.mxu0 %v1432
    %1961 = vmatpush1.bf16.msra.mxu0 %v1431
    %1962 = vmatprep.subr.bf16.mxu0 %v1440
    %1963 = vmatpush1.bf16.msra.mxu0 %v1439
    %1964 = vmatprep.subr.bf16.mxu0 %v1448
    %1965 = vmatpush1.bf16.msra.mxu0 %v1447
    %1966 = vmatprep.subr.bf16.mxu0 %v1456
    %1967 = vmatpush1.bf16.msra.mxu0 %v1455
    %1968 = vmatprep.subr.bf16.mxu0 %v1464
    %1969 = vmatpush1.bf16.msra.mxu0 %v1463
    %1970 = vmatprep.mubr.bf16.mxu0 %v144
    %1971 = vmatmul.mubr.bf16.gmra.mrb[0].mxu0 %v143
    %v1972 = vpop.f32.mrb[0].mxu0
    %v1973 = vadd.f32 %v1930, %v1972
    %v1974 = vpop.f32.mrb[0].mxu0
    %v1975 = vadd.f32 %v1932, %v1974
    %v1976 = vpop.f32.mrb[0].mxu0
    %v1977 = vadd.f32 %v1934, %v1976
    %v1978 = vpop.f32.mrb[0].mxu0
    %v1979 = vadd.f32 %v1936, %v1978
    %1980 = vdwg.mxu0
    %1981 = vmatprep.subr.bf16.mxu0 %v1218
    %1982 = vmatpush1.bf16.msra.mxu0 %v1217
    %1983 = vmatprep.subr.bf16.mxu0 %v1226
    %1984 = vmatpush1.bf16.msra.mxu0 %v1225
    %1985 = vmatprep.subr.bf16.mxu0 %v1234
    %1986 = vmatpush1.bf16.msra.mxu0 %v1233
    %1987 = vmatprep.subr.bf16.mxu0 %v1242
    %1988 = vmatpush1.bf16.msra.mxu0 %v1241
    %1989 = vmatprep.subr.bf16.mxu0 %v1250
    %1990 = vmatpush1.bf16.msra.mxu0 %v1249
    %1991 = vmatprep.subr.bf16.mxu0 %v1258
    %1992 = vmatpush1.bf16.msra.mxu0 %v1257
    %1993 = vmatprep.subr.bf16.mxu0 %v1266
    %1994 = vmatpush1.bf16.msra.mxu0 %v1265
    %1995 = vmatprep.subr.bf16.mxu0 %v1274
    %1996 = vmatpush1.bf16.msra.mxu0 %v1273
    %1997 = vmatprep.subr.bf16.mxu0 %v1282
    %1998 = vmatpush1.bf16.msra.mxu0 %v1281
    %1999 = vmatprep.subr.bf16.mxu0 %v1290
    %2000 = vmatpush1.bf16.msra.mxu0 %v1289
    %2001 = vmatprep.subr.bf16.mxu0 %v1298
    %2002 = vmatpush1.bf16.msra.mxu0 %v1297
    %2003 = vmatprep.subr.bf16.mxu0 %v1306
    %2004 = vmatpush1.bf16.msra.mxu0 %v1305
    %2005 = vmatprep.subr.bf16.mxu0 %v1314
    %2006 = vmatpush1.bf16.msra.mxu0 %v1313
    %2007 = vmatprep.subr.bf16.mxu0 %v1322
    %2008 = vmatpush1.bf16.msra.mxu0 %v1321
    %2009 = vmatprep.subr.bf16.mxu0 %v1330
    %2010 = vmatpush1.bf16.msra.mxu0 %v1329
    %2011 = vmatprep.subr.bf16.mxu0 %v1338
    %2012 = vmatpush1.bf16.msra.mxu0 %v1337
    %2013 = vmatprep.mubr.bf16.mxu0 %v142
    %2014 = vmatmul.mubr.bf16.gmra.mrb[0].mxu0 %v141
    %v2015 = vpop.f32.mrb[0].mxu0
    %v2016 = vadd.f32 %v430, %v2015
    %v2017 = vpop.f32.mrb[0].mxu0
    %v2018 = vadd.f32 %v434, %v2017
    %v2019 = vpop.f32.mrb[0].mxu0
    %v2020 = vadd.f32 %v430, %v2019
    %v2021 = vpop.f32.mrb[0].mxu0
    %v2022 = vadd.f32 %v434, %v2021
    %2023 = vdwg.mxu0
    %2024 = vmatprep.subr.bf16.mxu0 %v1346
    %2025 = vmatpush1.bf16.msra.mxu0 %v1345
    %2026 = vmatprep.subr.bf16.mxu0 %v1354
    %2027 = vmatpush1.bf16.msra.mxu0 %v1353
    %2028 = vmatprep.subr.bf16.mxu0 %v1362
    %2029 = vmatpush1.bf16.msra.mxu0 %v1361
    %2030 = vmatprep.subr.bf16.mxu0 %v1370
    %2031 = vmatpush1.bf16.msra.mxu0 %v1369
    %2032 = vmatprep.subr.bf16.mxu0 %v1378
    %2033 = vmatpush1.bf16.msra.mxu0 %v1377
    %2034 = vmatprep.subr.bf16.mxu0 %v1386
    %2035 = vmatpush1.bf16.msra.mxu0 %v1385
    %2036 = vmatprep.subr.bf16.mxu0 %v1394
    %2037 = vmatpush1.bf16.msra.mxu0 %v1393
    %2038 = vmatprep.subr.bf16.mxu0 %v1402
    %2039 = vmatpush1.bf16.msra.mxu0 %v1401
    %2040 = vmatprep.subr.bf16.mxu0 %v1410
    %2041 = vmatpush1.bf16.msra.mxu0 %v1409
    %2042 = vmatprep.subr.bf16.mxu0 %v1418
    %2043 = vmatpush1.bf16.msra.mxu0 %v1417
    %2044 = vmatprep.subr.bf16.mxu0 %v1426
    %2045 = vmatpush1.bf16.msra.mxu0 %v1425
    %2046 = vmatprep.subr.bf16.mxu0 %v1434
    %2047 = vmatpush1.bf16.msra.mxu0 %v1433
    %2048 = vmatprep.subr.bf16.mxu0 %v1442
    %2049 = vmatpush1.bf16.msra.mxu0 %v1441
    %2050 = vmatprep.subr.bf16.mxu0 %v1450
    %2051 = vmatpush1.bf16.msra.mxu0 %v1449
    %2052 = vmatprep.subr.bf16.mxu0 %v1458
    %2053 = vmatpush1.bf16.msra.mxu0 %v1457
    %2054 = vmatprep.subr.bf16.mxu0 %v1466
    %2055 = vmatpush1.bf16.msra.mxu0 %v1465
    %2056 = vmatprep.mubr.bf16.mxu0 %v144
    %2057 = vmatmul.mubr.bf16.gmra.mrb[0].mxu0 %v143
    %v2058 = vpop.f32.mrb[0].mxu0
    %v2059 = vadd.f32 %v2016, %v2058
    %v2060 = vpop.f32.mrb[0].mxu0
    %v2061 = vadd.f32 %v2018, %v2060
    %v2062 = vpop.f32.mrb[0].mxu0
    %v2063 = vadd.f32 %v2020, %v2062
    %v2064 = vpop.f32.mrb[0].mxu0
    %v2065 = vadd.f32 %v2022, %v2064
    %2066 = vdwg.mxu0
    %v2067 = vmax.f32 %v1801, 0.0
    %v2068 = vmax.f32 %v1803, 0.0
    %v2069 = vmax.f32 %v1887, 0.0
    %v2070 = vmax.f32 %v1889, 0.0
    %v2071 = vmax.f32 %v1973, 0.0
    %v2072 = vmax.f32 %v1975, 0.0
    %v2073 = vmax.f32 %v2059, 0.0
    %v2074 = vmax.f32 %v2061, 0.0
    %v2075 = vmax.f32 %v1805, 0.0
    %v2076 = vmax.f32 %v1807, 0.0
    %v2077 = vmax.f32 %v1891, 0.0
    %v2078 = vmax.f32 %v1893, 0.0
    %v2079 = vmax.f32 %v1977, 0.0
    %v2080 = vmax.f32 %v1979, 0.0
    %v2081 = vmax.f32 %v2063, 0.0
    %v2082 = vmax.f32 %v2065, 0.0
    %v2083 = vpack.c.bf16 %v2075, %v2067
    %v2084 = vpack.c.bf16 %v2076, %v2068
    %v2085 = vpack.c.bf16 %v2077, %v2069
    %v2086 = vpack.c.bf16 %v2078, %v2070
    %v2087 = vpack.c.bf16 %v2079, %v2071
    %v2088 = vpack.c.bf16 %v2080, %v2072
    %v2089 = vpack.c.bf16 %v2081, %v2073
    %v2090 = vpack.c.bf16 %v2082, %v2074
    %v2091 = vld [vmem:[#allocation8] sm:$0xff]
    %v2092 = vld [vmem:[#allocation8 + $0x8] sm:$0xff]
    %v2093 = vld [vmem:[#allocation8 + $0x10] sm:$0xff]
    %v2094 = vld [vmem:[#allocation8 + $0x18] sm:$0xff]
    %v2095 = vld [vmem:[#allocation8 + $0x20] sm:$0xff]
    %v2096 = vld [vmem:[#allocation8 + $0x28] sm:$0xff]
    %v2097 = vld [vmem:[#allocation8 + $0x30] sm:$0xff]
    %v2098 = vld [vmem:[#allocation8 + $0x38] sm:$0xff]
    %v2099 = vld [vmem:[#allocation8 + $0x40] sm:$0xff]
    %v2100 = vld [vmem:[#allocation8 + $0x48] sm:$0xff]
    %v2101 = vld [vmem:[#allocation8 + $0x50] sm:$0xff]
    %v2102 = vld [vmem:[#allocation8 + $0x58] sm:$0xff]
    %v2103 = vld [vmem:[#allocation8 + $0x60] sm:$0xff]
    %v2104 = vld [vmem:[#allocation8 + $0x68] sm:$0xff]
    %v2105 = vld [vmem:[#allocation8 + $0x70] sm:$0xff]
    %v2106 = vld [vmem:[#allocation8 + $0x78] sm:$0xff]
    %v2107 = vld [vmem:[#allocation8 + $0x80] sm:$0xff]
    %v2108 = vld [vmem:[#allocation8 + $0x88] sm:$0xff]
    %v2109 = vld [vmem:[#allocation8 + $0x90] sm:$0xff]
    %v2110 = vld [vmem:[#allocation8 + $0x98] sm:$0xff]
    %v2111 = vld [vmem:[#allocation8 + $0xa0] sm:$0xff]
    %v2112 = vld [vmem:[#allocation8 + $0xa8] sm:$0xff]
    %v2113 = vld [vmem:[#allocation8 + $0xb0] sm:$0xff]
    %v2114 = vld [vmem:[#allocation8 + $0xb8] sm:$0xff]
    %v2115 = vld [vmem:[#allocation8 + $0xc0] sm:$0xff]
    %v2116 = vld [vmem:[#allocation8 + $0xc8] sm:$0xff]
    %v2117 = vld [vmem:[#allocation8 + $0xd0] sm:$0xff]
    %v2118 = vld [vmem:[#allocation8 + $0xd8] sm:$0xff]
    %v2119 = vld [vmem:[#allocation8 + $0xe0] sm:$0xff]
    %v2120 = vld [vmem:[#allocation8 + $0xe8] sm:$0xff]
    %v2121 = vld [vmem:[#allocation8 + $0xf0] sm:$0xff]
    %v2122 = vld [vmem:[#allocation8 + $0xf8] sm:$0xff]
    %v2123 = vld [vmem:[#allocation8 + $0x100] sm:$0xff]
    %v2124 = vld [vmem:[#allocation8 + $0x108] sm:$0xff]
    %v2125 = vld [vmem:[#allocation8 + $0x110] sm:$0xff]
    %v2126 = vld [vmem:[#allocation8 + $0x118] sm:$0xff]
    %v2127 = vld [vmem:[#allocation8 + $0x120] sm:$0xff]
    %v2128 = vld [vmem:[#allocation8 + $0x128] sm:$0xff]
    %v2129 = vld [vmem:[#allocation8 + $0x130] sm:$0xff]
    %v2130 = vld [vmem:[#allocation8 + $0x138] sm:$0xff]
    %v2131 = vld [vmem:[#allocation8 + $0x140] sm:$0xff]
    %v2132 = vld [vmem:[#allocation8 + $0x148] sm:$0xff]
    %v2133 = vld [vmem:[#allocation8 + $0x150] sm:$0xff]
    %v2134 = vld [vmem:[#allocation8 + $0x158] sm:$0xff]
    %v2135 = vld [vmem:[#allocation8 + $0x160] sm:$0xff]
    %v2136 = vld [vmem:[#allocation8 + $0x168] sm:$0xff]
    %v2137 = vld [vmem:[#allocation8 + $0x170] sm:$0xff]
    %v2138 = vld [vmem:[#allocation8 + $0x178] sm:$0xff]
    %v2139 = vld [vmem:[#allocation8 + $0x180] sm:$0xff]
    %v2140 = vld [vmem:[#allocation8 + $0x188] sm:$0xff]
    %v2141 = vld [vmem:[#allocation8 + $0x190] sm:$0xff]
    %v2142 = vld [vmem:[#allocation8 + $0x198] sm:$0xff]
    %v2143 = vld [vmem:[#allocation8 + $0x1a0] sm:$0xff]
    %v2144 = vld [vmem:[#allocation8 + $0x1a8] sm:$0xff]
    %v2145 = vld [vmem:[#allocation8 + $0x1b0] sm:$0xff]
    %v2146 = vld [vmem:[#allocation8 + $0x1b8] sm:$0xff]
    %v2147 = vld [vmem:[#allocation8 + $0x1c0] sm:$0xff]
    %v2148 = vld [vmem:[#allocation8 + $0x1c8] sm:$0xff]
    %v2149 = vld [vmem:[#allocation8 + $0x1d0] sm:$0xff]
    %v2150 = vld [vmem:[#allocation8 + $0x1d8] sm:$0xff]
    %v2151 = vld [vmem:[#allocation8 + $0x1e0] sm:$0xff]
    %v2152 = vld [vmem:[#allocation8 + $0x1e8] sm:$0xff]
    %v2153 = vld [vmem:[#allocation8 + $0x1f0] sm:$0xff]
    %v2154 = vld [vmem:[#allocation8 + $0x1f8] sm:$0xff]
    %v2155 = vld [vmem:[#allocation8 + $0x200] sm:$0xff]
    %v2156 = vld [vmem:[#allocation8 + $0x208] sm:$0xff]
    %v2157 = vld [vmem:[#allocation8 + $0x210] sm:$0xff]
    %v2158 = vld [vmem:[#allocation8 + $0x218] sm:$0xff]
    %v2159 = vld [vmem:[#allocation8 + $0x220] sm:$0xff]
    %v2160 = vld [vmem:[#allocation8 + $0x228] sm:$0xff]
    %v2161 = vld [vmem:[#allocation8 + $0x230] sm:$0xff]
    %v2162 = vld [vmem:[#allocation8 + $0x238] sm:$0xff]
    %v2163 = vld [vmem:[#allocation8 + $0x240] sm:$0xff]
    %v2164 = vld [vmem:[#allocation8 + $0x248] sm:$0xff]
    %v2165 = vld [vmem:[#allocation8 + $0x250] sm:$0xff]
    %v2166 = vld [vmem:[#allocation8 + $0x258] sm:$0xff]
    %v2167 = vld [vmem:[#allocation8 + $0x260] sm:$0xff]
    %v2168 = vld [vmem:[#allocation8 + $0x268] sm:$0xff]
    %v2169 = vld [vmem:[#allocation8 + $0x270] sm:$0xff]
    %v2170 = vld [vmem:[#allocation8 + $0x278] sm:$0xff]
    %v2171 = vld [vmem:[#allocation8 + $0x280] sm:$0xff]
    %v2172 = vld [vmem:[#allocation8 + $0x288] sm:$0xff]
    %v2173 = vld [vmem:[#allocation8 + $0x290] sm:$0xff]
    %v2174 = vld [vmem:[#allocation8 + $0x298] sm:$0xff]
    %v2175 = vld [vmem:[#allocation8 + $0x2a0] sm:$0xff]
    %v2176 = vld [vmem:[#allocation8 + $0x2a8] sm:$0xff]
    %v2177 = vld [vmem:[#allocation8 + $0x2b0] sm:$0xff]
    %v2178 = vld [vmem:[#allocation8 + $0x2b8] sm:$0xff]
    %v2179 = vld [vmem:[#allocation8 + $0x2c0] sm:$0xff]
    %v2180 = vld [vmem:[#allocation8 + $0x2c8] sm:$0xff]
    %v2181 = vld [vmem:[#allocation8 + $0x2d0] sm:$0xff]
    %v2182 = vld [vmem:[#allocation8 + $0x2d8] sm:$0xff]
    %v2183 = vld [vmem:[#allocation8 + $0x2e0] sm:$0xff]
    %v2184 = vld [vmem:[#allocation8 + $0x2e8] sm:$0xff]
    %v2185 = vld [vmem:[#allocation8 + $0x2f0] sm:$0xff]
    %v2186 = vld [vmem:[#allocation8 + $0x2f8] sm:$0xff]
    %v2187 = vld [vmem:[#allocation8 + $0x300] sm:$0xff]
    %v2188 = vld [vmem:[#allocation8 + $0x308] sm:$0xff]
    %v2189 = vld [vmem:[#allocation8 + $0x310] sm:$0xff]
    %v2190 = vld [vmem:[#allocation8 + $0x318] sm:$0xff]
    %v2191 = vld [vmem:[#allocation8 + $0x320] sm:$0xff]
    %v2192 = vld [vmem:[#allocation8 + $0x328] sm:$0xff]
    %v2193 = vld [vmem:[#allocation8 + $0x330] sm:$0xff]
    %v2194 = vld [vmem:[#allocation8 + $0x338] sm:$0xff]
    %v2195 = vld [vmem:[#allocation8 + $0x340] sm:$0xff]
    %v2196 = vld [vmem:[#allocation8 + $0x348] sm:$0xff]
    %v2197 = vld [vmem:[#allocation8 + $0x350] sm:$0xff]
    %v2198 = vld [vmem:[#allocation8 + $0x358] sm:$0xff]
    %v2199 = vld [vmem:[#allocation8 + $0x360] sm:$0xff]
    %v2200 = vld [vmem:[#allocation8 + $0x368] sm:$0xff]
    %v2201 = vld [vmem:[#allocation8 + $0x370] sm:$0xff]
    %v2202 = vld [vmem:[#allocation8 + $0x378] sm:$0xff]
    %v2203 = vld [vmem:[#allocation8 + $0x380] sm:$0xff]
    %v2204 = vld [vmem:[#allocation8 + $0x388] sm:$0xff]
    %v2205 = vld [vmem:[#allocation8 + $0x390] sm:$0xff]
    %v2206 = vld [vmem:[#allocation8 + $0x398] sm:$0xff]
    %v2207 = vld [vmem:[#allocation8 + $0x3a0] sm:$0xff]
    %v2208 = vld [vmem:[#allocation8 + $0x3a8] sm:$0xff]
    %v2209 = vld [vmem:[#allocation8 + $0x3b0] sm:$0xff]
    %v2210 = vld [vmem:[#allocation8 + $0x3b8] sm:$0xff]
    %v2211 = vld [vmem:[#allocation8 + $0x3c0] sm:$0xff]
    %v2212 = vld [vmem:[#allocation8 + $0x3c8] sm:$0xff]
    %v2213 = vld [vmem:[#allocation8 + $0x3d0] sm:$0xff]
    %v2214 = vld [vmem:[#allocation8 + $0x3d8] sm:$0xff]
    %v2215 = vld [vmem:[#allocation8 + $0x3e0] sm:$0xff]
    %v2216 = vld [vmem:[#allocation8 + $0x3e8] sm:$0xff]
    %v2217 = vld [vmem:[#allocation8 + $0x3f0] sm:$0xff]
    %v2218 = vld [vmem:[#allocation8 + $0x3f8] sm:$0xff]
    %v2219 = vld [vmem:[#allocation8 + $0x400] sm:$0xff]
    %v2220 = vld [vmem:[#allocation8 + $0x408] sm:$0xff]
    %v2221 = vld [vmem:[#allocation8 + $0x410] sm:$0xff]
    %v2222 = vld [vmem:[#allocation8 + $0x418] sm:$0xff]
    %v2223 = vld [vmem:[#allocation8 + $0x420] sm:$0xff]
    %v2224 = vld [vmem:[#allocation8 + $0x428] sm:$0xff]
    %v2225 = vld [vmem:[#allocation8 + $0x430] sm:$0xff]
    %v2226 = vld [vmem:[#allocation8 + $0x438] sm:$0xff]
    %v2227 = vld [vmem:[#allocation8 + $0x440] sm:$0xff]
    %v2228 = vld [vmem:[#allocation8 + $0x448] sm:$0xff]
    %v2229 = vld [vmem:[#allocation8 + $0x450] sm:$0xff]
    %v2230 = vld [vmem:[#allocation8 + $0x458] sm:$0xff]
    %v2231 = vld [vmem:[#allocation8 + $0x460] sm:$0xff]
    %v2232 = vld [vmem:[#allocation8 + $0x468] sm:$0xff]
    %v2233 = vld [vmem:[#allocation8 + $0x470] sm:$0xff]
    %v2234 = vld [vmem:[#allocation8 + $0x478] sm:$0xff]
    %v2235 = vld [vmem:[#allocation8 + $0x480] sm:$0xff]
    %v2236 = vld [vmem:[#allocation8 + $0x488] sm:$0xff]
    %v2237 = vld [vmem:[#allocation8 + $0x490] sm:$0xff]
    %v2238 = vld [vmem:[#allocation8 + $0x498] sm:$0xff]
    %v2239 = vld [vmem:[#allocation8 + $0x4a0] sm:$0xff]
    %v2240 = vld [vmem:[#allocation8 + $0x4a8] sm:$0xff]
    %v2241 = vld [vmem:[#allocation8 + $0x4b0] sm:$0xff]
    %v2242 = vld [vmem:[#allocation8 + $0x4b8] sm:$0xff]
    %v2243 = vld [vmem:[#allocation8 + $0x4c0] sm:$0xff]
    %v2244 = vld [vmem:[#allocation8 + $0x4c8] sm:$0xff]
    %v2245 = vld [vmem:[#allocation8 + $0x4d0] sm:$0xff]
    %v2246 = vld [vmem:[#allocation8 + $0x4d8] sm:$0xff]
    %v2247 = vld [vmem:[#allocation8 + $0x4e0] sm:$0xff]
    %v2248 = vld [vmem:[#allocation8 + $0x4e8] sm:$0xff]
    %v2249 = vld [vmem:[#allocation8 + $0x4f0] sm:$0xff]
    %v2250 = vld [vmem:[#allocation8 + $0x4f8] sm:$0xff]
    %v2251 = vld [vmem:[#allocation8 + $0x500] sm:$0xff]
    %v2252 = vld [vmem:[#allocation8 + $0x508] sm:$0xff]
    %v2253 = vld [vmem:[#allocation8 + $0x510] sm:$0xff]
    %v2254 = vld [vmem:[#allocation8 + $0x518] sm:$0xff]
    %v2255 = vld [vmem:[#allocation8 + $0x520] sm:$0xff]
    %v2256 = vld [vmem:[#allocation8 + $0x528] sm:$0xff]
    %v2257 = vld [vmem:[#allocation8 + $0x530] sm:$0xff]
    %v2258 = vld [vmem:[#allocation8 + $0x538] sm:$0xff]
    %v2259 = vld [vmem:[#allocation8 + $0x540] sm:$0xff]
    %v2260 = vld [vmem:[#allocation8 + $0x548] sm:$0xff]
    %v2261 = vld [vmem:[#allocation8 + $0x550] sm:$0xff]
    %v2262 = vld [vmem:[#allocation8 + $0x558] sm:$0xff]
    %v2263 = vld [vmem:[#allocation8 + $0x560] sm:$0xff]
    %v2264 = vld [vmem:[#allocation8 + $0x568] sm:$0xff]
    %v2265 = vld [vmem:[#allocation8 + $0x570] sm:$0xff]
    %v2266 = vld [vmem:[#allocation8 + $0x578] sm:$0xff]
    %v2267 = vld [vmem:[#allocation8 + $0x580] sm:$0xff]
    %v2268 = vld [vmem:[#allocation8 + $0x588] sm:$0xff]
    %v2269 = vld [vmem:[#allocation8 + $0x590] sm:$0xff]
    %v2270 = vld [vmem:[#allocation8 + $0x598] sm:$0xff]
    %v2271 = vld [vmem:[#allocation8 + $0x5a0] sm:$0xff]
    %v2272 = vld [vmem:[#allocation8 + $0x5a8] sm:$0xff]
    %v2273 = vld [vmem:[#allocation8 + $0x5b0] sm:$0xff]
    %v2274 = vld [vmem:[#allocation8 + $0x5b8] sm:$0xff]
    %v2275 = vld [vmem:[#allocation8 + $0x5c0] sm:$0xff]
    %v2276 = vld [vmem:[#allocation8 + $0x5c8] sm:$0xff]
    %v2277 = vld [vmem:[#allocation8 + $0x5d0] sm:$0xff]
    %v2278 = vld [vmem:[#allocation8 + $0x5d8] sm:$0xff]
    %v2279 = vld [vmem:[#allocation8 + $0x5e0] sm:$0xff]
    %v2280 = vld [vmem:[#allocation8 + $0x5e8] sm:$0xff]
    %v2281 = vld [vmem:[#allocation8 + $0x5f0] sm:$0xff]
    %v2282 = vld [vmem:[#allocation8 + $0x5f8] sm:$0xff]
    %v2283 = vld [vmem:[#allocation8 + $0x600] sm:$0xff]
    %v2284 = vld [vmem:[#allocation8 + $0x608] sm:$0xff]
    %v2285 = vld [vmem:[#allocation8 + $0x610] sm:$0xff]
    %v2286 = vld [vmem:[#allocation8 + $0x618] sm:$0xff]
    %v2287 = vld [vmem:[#allocation8 + $0x620] sm:$0xff]
    %v2288 = vld [vmem:[#allocation8 + $0x628] sm:$0xff]
    %v2289 = vld [vmem:[#allocation8 + $0x630] sm:$0xff]
    %v2290 = vld [vmem:[#allocation8 + $0x638] sm:$0xff]
    %v2291 = vld [vmem:[#allocation8 + $0x640] sm:$0xff]
    %v2292 = vld [vmem:[#allocation8 + $0x648] sm:$0xff]
    %v2293 = vld [vmem:[#allocation8 + $0x650] sm:$0xff]
    %v2294 = vld [vmem:[#allocation8 + $0x658] sm:$0xff]
    %v2295 = vld [vmem:[#allocation8 + $0x660] sm:$0xff]
    %v2296 = vld [vmem:[#allocation8 + $0x668] sm:$0xff]
    %v2297 = vld [vmem:[#allocation8 + $0x670] sm:$0xff]
    %v2298 = vld [vmem:[#allocation8 + $0x678] sm:$0xff]
    %v2299 = vld [vmem:[#allocation8 + $0x680] sm:$0xff]
    %v2300 = vld [vmem:[#allocation8 + $0x688] sm:$0xff]
    %v2301 = vld [vmem:[#allocation8 + $0x690] sm:$0xff]
    %v2302 = vld [vmem:[#allocation8 + $0x698] sm:$0xff]
    %v2303 = vld [vmem:[#allocation8 + $0x6a0] sm:$0xff]
    %v2304 = vld [vmem:[#allocation8 + $0x6a8] sm:$0xff]
    %v2305 = vld [vmem:[#allocation8 + $0x6b0] sm:$0xff]
    %v2306 = vld [vmem:[#allocation8 + $0x6b8] sm:$0xff]
    %v2307 = vld [vmem:[#allocation8 + $0x6c0] sm:$0xff]
    %v2308 = vld [vmem:[#allocation8 + $0x6c8] sm:$0xff]
    %v2309 = vld [vmem:[#allocation8 + $0x6d0] sm:$0xff]
    %v2310 = vld [vmem:[#allocation8 + $0x6d8] sm:$0xff]
    %v2311 = vld [vmem:[#allocation8 + $0x6e0] sm:$0xff]
    %v2312 = vld [vmem:[#allocation8 + $0x6e8] sm:$0xff]
    %v2313 = vld [vmem:[#allocation8 + $0x6f0] sm:$0xff]
    %v2314 = vld [vmem:[#allocation8 + $0x6f8] sm:$0xff]
    %v2315 = vld [vmem:[#allocation8 + $0x700] sm:$0xff]
    %v2316 = vld [vmem:[#allocation8 + $0x708] sm:$0xff]
    %v2317 = vld [vmem:[#allocation8 + $0x710] sm:$0xff]
    %v2318 = vld [vmem:[#allocation8 + $0x718] sm:$0xff]
    %v2319 = vld [vmem:[#allocation8 + $0x720] sm:$0xff]
    %v2320 = vld [vmem:[#allocation8 + $0x728] sm:$0xff]
    %v2321 = vld [vmem:[#allocation8 + $0x730] sm:$0xff]
    %v2322 = vld [vmem:[#allocation8 + $0x738] sm:$0xff]
    %v2323 = vld [vmem:[#allocation8 + $0x740] sm:$0xff]
    %v2324 = vld [vmem:[#allocation8 + $0x748] sm:$0xff]
    %v2325 = vld [vmem:[#allocation8 + $0x750] sm:$0xff]
    %v2326 = vld [vmem:[#allocation8 + $0x758] sm:$0xff]
    %v2327 = vld [vmem:[#allocation8 + $0x760] sm:$0xff]
    %v2328 = vld [vmem:[#allocation8 + $0x768] sm:$0xff]
    %v2329 = vld [vmem:[#allocation8 + $0x770] sm:$0xff]
    %v2330 = vld [vmem:[#allocation8 + $0x778] sm:$0xff]
    %v2331 = vld [vmem:[#allocation8 + $0x780] sm:$0xff]
    %v2332 = vld [vmem:[#allocation8 + $0x788] sm:$0xff]
    %v2333 = vld [vmem:[#allocation8 + $0x790] sm:$0xff]
    %v2334 = vld [vmem:[#allocation8 + $0x798] sm:$0xff]
    %v2335 = vld [vmem:[#allocation8 + $0x7a0] sm:$0xff]
    %v2336 = vld [vmem:[#allocation8 + $0x7a8] sm:$0xff]
    %v2337 = vld [vmem:[#allocation8 + $0x7b0] sm:$0xff]
    %v2338 = vld [vmem:[#allocation8 + $0x7b8] sm:$0xff]
    %v2339 = vld [vmem:[#allocation8 + $0x7c0] sm:$0xff]
    %v2340 = vld [vmem:[#allocation8 + $0x7c8] sm:$0xff]
    %v2341 = vld [vmem:[#allocation8 + $0x7d0] sm:$0xff]
    %v2342 = vld [vmem:[#allocation8 + $0x7d8] sm:$0xff]
    %v2343 = vld [vmem:[#allocation8 + $0x7e0] sm:$0xff]
    %v2344 = vld [vmem:[#allocation8 + $0x7e8] sm:$0xff]
    %v2345 = vld [vmem:[#allocation8 + $0x7f0] sm:$0xff]
    %v2346 = vld [vmem:[#allocation8 + $0x7f8] sm:$0xff]
    %v2347 = vld [vmem:[%s4] sm:$0xf]
    %v2349 = vlaneseq
    %v2350 = vshrl.u32 %v2349, 7
    %v2351 = vsub.s32 0, %v2350
    %v2352 = vrot.slane %v2347, %v2351
    %v2353 = vlaneseq
    %v2354 = vshrl.u32 %v2353, 7
    %v2355 = vsub.s32 1, %v2354
    %v2356 = vrot.slane %v2347, %v2355
    %v2357 = vlaneseq
    %v2358 = vshrl.u32 %v2357, 7
    %v2359 = vsub.s32 2, %v2358
    %v2360 = vrot.slane %v2347, %v2359
    %v2361 = vlaneseq
    %v2362 = vshrl.u32 %v2361, 7
    %v2363 = vsub.s32 3, %v2362
    %v2364 = vrot.slane %v2347, %v2363
    %v2625 = vunpack.c.l.b16 %v2091
    %v2626 = vunpack.c.h.b16 %v2091
    %v2627 = vunpack.c.l.b16 %v2092
    %v2628 = vunpack.c.h.b16 %v2092
    %v2629 = vunpack.c.l.b16 %v2093
    %v2630 = vunpack.c.h.b16 %v2093
    %v2631 = vunpack.c.l.b16 %v2094
    %v2632 = vunpack.c.h.b16 %v2094
    %v2633 = vunpack.c.l.b16 %v2095
    %v2634 = vunpack.c.h.b16 %v2095
    %v2635 = vunpack.c.l.b16 %v2096
    %v2636 = vunpack.c.h.b16 %v2096
    %v2637 = vunpack.c.l.b16 %v2097
    %v2638 = vunpack.c.h.b16 %v2097
    %v2639 = vunpack.c.l.b16 %v2098
    %v2640 = vunpack.c.h.b16 %v2098
    %v2641 = vunpack.c.l.b16 %v2099
    %v2642 = vunpack.c.h.b16 %v2099
    %v2643 = vunpack.c.l.b16 %v2100
    %v2644 = vunpack.c.h.b16 %v2100
    %v2645 = vunpack.c.l.b16 %v2101
    %v2646 = vunpack.c.h.b16 %v2101
    %v2647 = vunpack.c.l.b16 %v2102
    %v2648 = vunpack.c.h.b16 %v2102
    %v2649 = vunpack.c.l.b16 %v2103
    %v2650 = vunpack.c.h.b16 %v2103
    %v2651 = vunpack.c.l.b16 %v2104
    %v2652 = vunpack.c.h.b16 %v2104
    %v2653 = vunpack.c.l.b16 %v2105
    %v2654 = vunpack.c.h.b16 %v2105
    %v2655 = vunpack.c.l.b16 %v2106
    %v2656 = vunpack.c.h.b16 %v2106
    %v2657 = vunpack.c.l.b16 %v2107
    %v2658 = vunpack.c.h.b16 %v2107
    %v2659 = vunpack.c.l.b16 %v2108
    %v2660 = vunpack.c.h.b16 %v2108
    %v2661 = vunpack.c.l.b16 %v2109
    %v2662 = vunpack.c.h.b16 %v2109
    %v2663 = vunpack.c.l.b16 %v2110
    %v2664 = vunpack.c.h.b16 %v2110
    %v2665 = vunpack.c.l.b16 %v2111
    %v2666 = vunpack.c.h.b16 %v2111
    %v2667 = vunpack.c.l.b16 %v2112
    %v2668 = vunpack.c.h.b16 %v2112
    %v2669 = vunpack.c.l.b16 %v2113
    %v2670 = vunpack.c.h.b16 %v2113
    %v2671 = vunpack.c.l.b16 %v2114
    %v2672 = vunpack.c.h.b16 %v2114
    %v2673 = vunpack.c.l.b16 %v2115
    %v2674 = vunpack.c.h.b16 %v2115
    %v2675 = vunpack.c.l.b16 %v2116
    %v2676 = vunpack.c.h.b16 %v2116
    %v2677 = vunpack.c.l.b16 %v2117
    %v2678 = vunpack.c.h.b16 %v2117
    %v2679 = vunpack.c.l.b16 %v2118
    %v2680 = vunpack.c.h.b16 %v2118
    %v2681 = vunpack.c.l.b16 %v2119
    %v2682 = vunpack.c.h.b16 %v2119
    %v2683 = vunpack.c.l.b16 %v2120
    %v2684 = vunpack.c.h.b16 %v2120
    %v2685 = vunpack.c.l.b16 %v2121
    %v2686 = vunpack.c.h.b16 %v2121
    %v2687 = vunpack.c.l.b16 %v2122
    %v2688 = vunpack.c.h.b16 %v2122
    %v2689 = vunpack.c.l.b16 %v2123
    %v2690 = vunpack.c.h.b16 %v2123
    %v2691 = vunpack.c.l.b16 %v2124
    %v2692 = vunpack.c.h.b16 %v2124
    %v2693 = vunpack.c.l.b16 %v2125
    %v2694 = vunpack.c.h.b16 %v2125
    %v2695 = vunpack.c.l.b16 %v2126
    %v2696 = vunpack.c.h.b16 %v2126
    %v2697 = vunpack.c.l.b16 %v2127
    %v2698 = vunpack.c.h.b16 %v2127
    %v2699 = vunpack.c.l.b16 %v2128
    %v2700 = vunpack.c.h.b16 %v2128
    %v2701 = vunpack.c.l.b16 %v2129
    %v2702 = vunpack.c.h.b16 %v2129
    %v2703 = vunpack.c.l.b16 %v2130
    %v2704 = vunpack.c.h.b16 %v2130
    %v2705 = vunpack.c.l.b16 %v2131
    %v2706 = vunpack.c.h.b16 %v2131
    %v2707 = vunpack.c.l.b16 %v2132
    %v2708 = vunpack.c.h.b16 %v2132
    %v2709 = vunpack.c.l.b16 %v2133
    %v2710 = vunpack.c.h.b16 %v2133
    %v2711 = vunpack.c.l.b16 %v2134
    %v2712 = vunpack.c.h.b16 %v2134
    %v2713 = vunpack.c.l.b16 %v2135
    %v2714 = vunpack.c.h.b16 %v2135
    %v2715 = vunpack.c.l.b16 %v2136
    %v2716 = vunpack.c.h.b16 %v2136
    %v2717 = vunpack.c.l.b16 %v2137
    %v2718 = vunpack.c.h.b16 %v2137
    %v2719 = vunpack.c.l.b16 %v2138
    %v2720 = vunpack.c.h.b16 %v2138
    %v2721 = vunpack.c.l.b16 %v2139
    %v2722 = vunpack.c.h.b16 %v2139
    %v2723 = vunpack.c.l.b16 %v2140
    %v2724 = vunpack.c.h.b16 %v2140
    %v2725 = vunpack.c.l.b16 %v2141
    %v2726 = vunpack.c.h.b16 %v2141
    %v2727 = vunpack.c.l.b16 %v2142
    %v2728 = vunpack.c.h.b16 %v2142
    %v2729 = vunpack.c.l.b16 %v2143
    %v2730 = vunpack.c.h.b16 %v2143
    %v2731 = vunpack.c.l.b16 %v2144
    %v2732 = vunpack.c.h.b16 %v2144
    %v2733 = vunpack.c.l.b16 %v2145
    %v2734 = vunpack.c.h.b16 %v2145
    %v2735 = vunpack.c.l.b16 %v2146
    %v2736 = vunpack.c.h.b16 %v2146
    %v2737 = vunpack.c.l.b16 %v2147
    %v2738 = vunpack.c.h.b16 %v2147
    %v2739 = vunpack.c.l.b16 %v2148
    %v2740 = vunpack.c.h.b16 %v2148
    %v2741 = vunpack.c.l.b16 %v2149
    %v2742 = vunpack.c.h.b16 %v2149
    %v2743 = vunpack.c.l.b16 %v2150
    %v2744 = vunpack.c.h.b16 %v2150
    %v2745 = vunpack.c.l.b16 %v2151
    %v2746 = vunpack.c.h.b16 %v2151
    %v2747 = vunpack.c.l.b16 %v2152
    %v2748 = vunpack.c.h.b16 %v2152
    %v2749 = vunpack.c.l.b16 %v2153
    %v2750 = vunpack.c.h.b16 %v2153
    %v2751 = vunpack.c.l.b16 %v2154
    %v2752 = vunpack.c.h.b16 %v2154
    %v2753 = vunpack.c.l.b16 %v2155
    %v2754 = vunpack.c.h.b16 %v2155
    %v2755 = vunpack.c.l.b16 %v2156
    %v2756 = vunpack.c.h.b16 %v2156
    %v2757 = vunpack.c.l.b16 %v2157
    %v2758 = vunpack.c.h.b16 %v2157
    %v2759 = vunpack.c.l.b16 %v2158
    %v2760 = vunpack.c.h.b16 %v2158
    %v2761 = vunpack.c.l.b16 %v2159
    %v2762 = vunpack.c.h.b16 %v2159
    %v2763 = vunpack.c.l.b16 %v2160
    %v2764 = vunpack.c.h.b16 %v2160
    %v2765 = vunpack.c.l.b16 %v2161
    %v2766 = vunpack.c.h.b16 %v2161
    %v2767 = vunpack.c.l.b16 %v2162
    %v2768 = vunpack.c.h.b16 %v2162
    %v2769 = vunpack.c.l.b16 %v2163
    %v2770 = vunpack.c.h.b16 %v2163
    %v2771 = vunpack.c.l.b16 %v2164
    %v2772 = vunpack.c.h.b16 %v2164
    %v2773 = vunpack.c.l.b16 %v2165
    %v2774 = vunpack.c.h.b16 %v2165
    %v2775 = vunpack.c.l.b16 %v2166
    %v2776 = vunpack.c.h.b16 %v2166
    %v2777 = vunpack.c.l.b16 %v2167
    %v2778 = vunpack.c.h.b16 %v2167
    %v2779 = vunpack.c.l.b16 %v2168
    %v2780 = vunpack.c.h.b16 %v2168
    %v2781 = vunpack.c.l.b16 %v2169
    %v2782 = vunpack.c.h.b16 %v2169
    %v2783 = vunpack.c.l.b16 %v2170
    %v2784 = vunpack.c.h.b16 %v2170
    %v2785 = vunpack.c.l.b16 %v2171
    %v2786 = vunpack.c.h.b16 %v2171
    %v2787 = vunpack.c.l.b16 %v2172
    %v2788 = vunpack.c.h.b16 %v2172
    %v2789 = vunpack.c.l.b16 %v2173
    %v2790 = vunpack.c.h.b16 %v2173
    %v2791 = vunpack.c.l.b16 %v2174
    %v2792 = vunpack.c.h.b16 %v2174
    %v2793 = vunpack.c.l.b16 %v2175
    %v2794 = vunpack.c.h.b16 %v2175
    %v2795 = vunpack.c.l.b16 %v2176
    %v2796 = vunpack.c.h.b16 %v2176
    %v2797 = vunpack.c.l.b16 %v2177
    %v2798 = vunpack.c.h.b16 %v2177
    %v2799 = vunpack.c.l.b16 %v2178
    %v2800 = vunpack.c.h.b16 %v2178
    %v2801 = vunpack.c.l.b16 %v2179
    %v2802 = vunpack.c.h.b16 %v2179
    %v2803 = vunpack.c.l.b16 %v2180
    %v2804 = vunpack.c.h.b16 %v2180
    %v2805 = vunpack.c.l.b16 %v2181
    %v2806 = vunpack.c.h.b16 %v2181
    %v2807 = vunpack.c.l.b16 %v2182
    %v2808 = vunpack.c.h.b16 %v2182
    %v2809 = vunpack.c.l.b16 %v2183
    %v2810 = vunpack.c.h.b16 %v2183
    %v2811 = vunpack.c.l.b16 %v2184
    %v2812 = vunpack.c.h.b16 %v2184
    %v2813 = vunpack.c.l.b16 %v2185
    %v2814 = vunpack.c.h.b16 %v2185
    %v2815 = vunpack.c.l.b16 %v2186
    %v2816 = vunpack.c.h.b16 %v2186
    %v2817 = vunpack.c.l.b16 %v2187
    %v2818 = vunpack.c.h.b16 %v2187
    %v2819 = vunpack.c.l.b16 %v2188
    %v2820 = vunpack.c.h.b16 %v2188
    %v2821 = vunpack.c.l.b16 %v2189
    %v2822 = vunpack.c.h.b16 %v2189
    %v2823 = vunpack.c.l.b16 %v2190
    %v2824 = vunpack.c.h.b16 %v2190
    %v2825 = vunpack.c.l.b16 %v2191
    %v2826 = vunpack.c.h.b16 %v2191
    %v2827 = vunpack.c.l.b16 %v2192
    %v2828 = vunpack.c.h.b16 %v2192
    %v2829 = vunpack.c.l.b16 %v2193
    %v2830 = vunpack.c.h.b16 %v2193
    %v2831 = vunpack.c.l.b16 %v2194
    %v2832 = vunpack.c.h.b16 %v2194
    %v2833 = vunpack.c.l.b16 %v2195
    %v2834 = vunpack.c.h.b16 %v2195
    %v2835 = vunpack.c.l.b16 %v2196
    %v2836 = vunpack.c.h.b16 %v2196
    %v2837 = vunpack.c.l.b16 %v2197
    %v2838 = vunpack.c.h.b16 %v2197
    %v2839 = vunpack.c.l.b16 %v2198
    %v2840 = vunpack.c.h.b16 %v2198
    %v2841 = vunpack.c.l.b16 %v2199
    %v2842 = vunpack.c.h.b16 %v2199
    %v2843 = vunpack.c.l.b16 %v2200
    %v2844 = vunpack.c.h.b16 %v2200
    %v2845 = vunpack.c.l.b16 %v2201
    %v2846 = vunpack.c.h.b16 %v2201
    %v2847 = vunpack.c.l.b16 %v2202
    %v2848 = vunpack.c.h.b16 %v2202
    %v2849 = vunpack.c.l.b16 %v2203
    %v2850 = vunpack.c.h.b16 %v2203
    %v2851 = vunpack.c.l.b16 %v2204
    %v2852 = vunpack.c.h.b16 %v2204
    %v2853 = vunpack.c.l.b16 %v2205
    %v2854 = vunpack.c.h.b16 %v2205
    %v2855 = vunpack.c.l.b16 %v2206
    %v2856 = vunpack.c.h.b16 %v2206
    %v2857 = vunpack.c.l.b16 %v2207
    %v2858 = vunpack.c.h.b16 %v2207
    %v2859 = vunpack.c.l.b16 %v2208
    %v2860 = vunpack.c.h.b16 %v2208
    %v2861 = vunpack.c.l.b16 %v2209
    %v2862 = vunpack.c.h.b16 %v2209
    %v2863 = vunpack.c.l.b16 %v2210
    %v2864 = vunpack.c.h.b16 %v2210
    %v2865 = vunpack.c.l.b16 %v2211
    %v2866 = vunpack.c.h.b16 %v2211
    %v2867 = vunpack.c.l.b16 %v2212
    %v2868 = vunpack.c.h.b16 %v2212
    %v2869 = vunpack.c.l.b16 %v2213
    %v2870 = vunpack.c.h.b16 %v2213
    %v2871 = vunpack.c.l.b16 %v2214
    %v2872 = vunpack.c.h.b16 %v2214
    %v2873 = vunpack.c.l.b16 %v2215
    %v2874 = vunpack.c.h.b16 %v2215
    %v2875 = vunpack.c.l.b16 %v2216
    %v2876 = vunpack.c.h.b16 %v2216
    %v2877 = vunpack.c.l.b16 %v2217
    %v2878 = vunpack.c.h.b16 %v2217
    %v2879 = vunpack.c.l.b16 %v2218
    %v2880 = vunpack.c.h.b16 %v2218
    %v2881 = vunpack.c.l.b16 %v2219
    %v2882 = vunpack.c.h.b16 %v2219
    %v2883 = vunpack.c.l.b16 %v2220
    %v2884 = vunpack.c.h.b16 %v2220
    %v2885 = vunpack.c.l.b16 %v2221
    %v2886 = vunpack.c.h.b16 %v2221
    %v2887 = vunpack.c.l.b16 %v2222
    %v2888 = vunpack.c.h.b16 %v2222
    %v2889 = vunpack.c.l.b16 %v2223
    %v2890 = vunpack.c.h.b16 %v2223
    %v2891 = vunpack.c.l.b16 %v2224
    %v2892 = vunpack.c.h.b16 %v2224
    %v2893 = vunpack.c.l.b16 %v2225
    %v2894 = vunpack.c.h.b16 %v2225
    %v2895 = vunpack.c.l.b16 %v2226
    %v2896 = vunpack.c.h.b16 %v2226
    %v2897 = vunpack.c.l.b16 %v2227
    %v2898 = vunpack.c.h.b16 %v2227
    %v2899 = vunpack.c.l.b16 %v2228
    %v2900 = vunpack.c.h.b16 %v2228
    %v2901 = vunpack.c.l.b16 %v2229
    %v2902 = vunpack.c.h.b16 %v2229
    %v2903 = vunpack.c.l.b16 %v2230
    %v2904 = vunpack.c.h.b16 %v2230
    %v2905 = vunpack.c.l.b16 %v2231
    %v2906 = vunpack.c.h.b16 %v2231
    %v2907 = vunpack.c.l.b16 %v2232
    %v2908 = vunpack.c.h.b16 %v2232
    %v2909 = vunpack.c.l.b16 %v2233
    %v2910 = vunpack.c.h.b16 %v2233
    %v2911 = vunpack.c.l.b16 %v2234
    %v2912 = vunpack.c.h.b16 %v2234
    %v2913 = vunpack.c.l.b16 %v2235
    %v2914 = vunpack.c.h.b16 %v2235
    %v2915 = vunpack.c.l.b16 %v2236
    %v2916 = vunpack.c.h.b16 %v2236
    %v2917 = vunpack.c.l.b16 %v2237
    %v2918 = vunpack.c.h.b16 %v2237
    %v2919 = vunpack.c.l.b16 %v2238
    %v2920 = vunpack.c.h.b16 %v2238
    %v2921 = vunpack.c.l.b16 %v2239
    %v2922 = vunpack.c.h.b16 %v2239
    %v2923 = vunpack.c.l.b16 %v2240
    %v2924 = vunpack.c.h.b16 %v2240
    %v2925 = vunpack.c.l.b16 %v2241
    %v2926 = vunpack.c.h.b16 %v2241
    %v2927 = vunpack.c.l.b16 %v2242
    %v2928 = vunpack.c.h.b16 %v2242
    %v2929 = vunpack.c.l.b16 %v2243
    %v2930 = vunpack.c.h.b16 %v2243
    %v2931 = vunpack.c.l.b16 %v2244
    %v2932 = vunpack.c.h.b16 %v2244
    %v2933 = vunpack.c.l.b16 %v2245
    %v2934 = vunpack.c.h.b16 %v2245
    %v2935 = vunpack.c.l.b16 %v2246
    %v2936 = vunpack.c.h.b16 %v2246
    %v2937 = vunpack.c.l.b16 %v2247
    %v2938 = vunpack.c.h.b16 %v2247
    %v2939 = vunpack.c.l.b16 %v2248
    %v2940 = vunpack.c.h.b16 %v2248
    %v2941 = vunpack.c.l.b16 %v2249
    %v2942 = vunpack.c.h.b16 %v2249
    %v2943 = vunpack.c.l.b16 %v2250
    %v2944 = vunpack.c.h.b16 %v2250
    %v2945 = vunpack.c.l.b16 %v2251
    %v2946 = vunpack.c.h.b16 %v2251
    %v2947 = vunpack.c.l.b16 %v2252
    %v2948 = vunpack.c.h.b16 %v2252
    %v2949 = vunpack.c.l.b16 %v2253
    %v2950 = vunpack.c.h.b16 %v2253
    %v2951 = vunpack.c.l.b16 %v2254
    %v2952 = vunpack.c.h.b16 %v2254
    %v2953 = vunpack.c.l.b16 %v2255
    %v2954 = vunpack.c.h.b16 %v2255
    %v2955 = vunpack.c.l.b16 %v2256
    %v2956 = vunpack.c.h.b16 %v2256
    %v2957 = vunpack.c.l.b16 %v2257
    %v2958 = vunpack.c.h.b16 %v2257
    %v2959 = vunpack.c.l.b16 %v2258
    %v2960 = vunpack.c.h.b16 %v2258
    %v2961 = vunpack.c.l.b16 %v2259
    %v2962 = vunpack.c.h.b16 %v2259
    %v2963 = vunpack.c.l.b16 %v2260
    %v2964 = vunpack.c.h.b16 %v2260
    %v2965 = vunpack.c.l.b16 %v2261
    %v2966 = vunpack.c.h.b16 %v2261
    %v2967 = vunpack.c.l.b16 %v2262
    %v2968 = vunpack.c.h.b16 %v2262
    %v2969 = vunpack.c.l.b16 %v2263
    %v2970 = vunpack.c.h.b16 %v2263
    %v2971 = vunpack.c.l.b16 %v2264
    %v2972 = vunpack.c.h.b16 %v2264
    %v2973 = vunpack.c.l.b16 %v2265
    %v2974 = vunpack.c.h.b16 %v2265
    %v2975 = vunpack.c.l.b16 %v2266
    %v2976 = vunpack.c.h.b16 %v2266
    %v2977 = vunpack.c.l.b16 %v2267
    %v2978 = vunpack.c.h.b16 %v2267
    %v2979 = vunpack.c.l.b16 %v2268
    %v2980 = vunpack.c.h.b16 %v2268
    %v2981 = vunpack.c.l.b16 %v2269
    %v2982 = vunpack.c.h.b16 %v2269
    %v2983 = vunpack.c.l.b16 %v2270
    %v2984 = vunpack.c.h.b16 %v2270
    %v2985 = vunpack.c.l.b16 %v2271
    %v2986 = vunpack.c.h.b16 %v2271
    %v2987 = vunpack.c.l.b16 %v2272
    %v2988 = vunpack.c.h.b16 %v2272
    %v2989 = vunpack.c.l.b16 %v2273
    %v2990 = vunpack.c.h.b16 %v2273
    %v2991 = vunpack.c.l.b16 %v2274
    %v2992 = vunpack.c.h.b16 %v2274
    %v2993 = vunpack.c.l.b16 %v2275
    %v2994 = vunpack.c.h.b16 %v2275
    %v2995 = vunpack.c.l.b16 %v2276
    %v2996 = vunpack.c.h.b16 %v2276
    %v2997 = vunpack.c.l.b16 %v2277
    %v2998 = vunpack.c.h.b16 %v2277
    %v2999 = vunpack.c.l.b16 %v2278
    %v3000 = vunpack.c.h.b16 %v2278
    %v3001 = vunpack.c.l.b16 %v2279
    %v3002 = vunpack.c.h.b16 %v2279
    %v3003 = vunpack.c.l.b16 %v2280
    %v3004 = vunpack.c.h.b16 %v2280
    %v3005 = vunpack.c.l.b16 %v2281
    %v3006 = vunpack.c.h.b16 %v2281
    %v3007 = vunpack.c.l.b16 %v2282
    %v3008 = vunpack.c.h.b16 %v2282
    %v3009 = vunpack.c.l.b16 %v2283
    %v3010 = vunpack.c.h.b16 %v2283
    %v3011 = vunpack.c.l.b16 %v2284
    %v3012 = vunpack.c.h.b16 %v2284
    %v3013 = vunpack.c.l.b16 %v2285
    %v3014 = vunpack.c.h.b16 %v2285
    %v3015 = vunpack.c.l.b16 %v2286
    %v3016 = vunpack.c.h.b16 %v2286
    %v3017 = vunpack.c.l.b16 %v2287
    %v3018 = vunpack.c.h.b16 %v2287
    %v3019 = vunpack.c.l.b16 %v2288
    %v3020 = vunpack.c.h.b16 %v2288
    %v3021 = vunpack.c.l.b16 %v2289
    %v3022 = vunpack.c.h.b16 %v2289
    %v3023 = vunpack.c.l.b16 %v2290
    %v3024 = vunpack.c.h.b16 %v2290
    %v3025 = vunpack.c.l.b16 %v2291
    %v3026 = vunpack.c.h.b16 %v2291
    %v3027 = vunpack.c.l.b16 %v2292
    %v3028 = vunpack.c.h.b16 %v2292
    %v3029 = vunpack.c.l.b16 %v2293
    %v3030 = vunpack.c.h.b16 %v2293
    %v3031 = vunpack.c.l.b16 %v2294
    %v3032 = vunpack.c.h.b16 %v2294
    %v3033 = vunpack.c.l.b16 %v2295
    %v3034 = vunpack.c.h.b16 %v2295
    %v3035 = vunpack.c.l.b16 %v2296
    %v3036 = vunpack.c.h.b16 %v2296
    %v3037 = vunpack.c.l.b16 %v2297
    %v3038 = vunpack.c.h.b16 %v2297
    %v3039 = vunpack.c.l.b16 %v2298
    %v3040 = vunpack.c.h.b16 %v2298
    %v3041 = vunpack.c.l.b16 %v2299
    %v3042 = vunpack.c.h.b16 %v2299
    %v3043 = vunpack.c.l.b16 %v2300
    %v3044 = vunpack.c.h.b16 %v2300
    %v3045 = vunpack.c.l.b16 %v2301
    %v3046 = vunpack.c.h.b16 %v2301
    %v3047 = vunpack.c.l.b16 %v2302
    %v3048 = vunpack.c.h.b16 %v2302
    %v3049 = vunpack.c.l.b16 %v2303
    %v3050 = vunpack.c.h.b16 %v2303
    %v3051 = vunpack.c.l.b16 %v2304
    %v3052 = vunpack.c.h.b16 %v2304
    %v3053 = vunpack.c.l.b16 %v2305
    %v3054 = vunpack.c.h.b16 %v2305
    %v3055 = vunpack.c.l.b16 %v2306
    %v3056 = vunpack.c.h.b16 %v2306
    %v3057 = vunpack.c.l.b16 %v2307
    %v3058 = vunpack.c.h.b16 %v2307
    %v3059 = vunpack.c.l.b16 %v2308
    %v3060 = vunpack.c.h.b16 %v2308
    %v3061 = vunpack.c.l.b16 %v2309
    %v3062 = vunpack.c.h.b16 %v2309
    %v3063 = vunpack.c.l.b16 %v2310
    %v3064 = vunpack.c.h.b16 %v2310
    %v3065 = vunpack.c.l.b16 %v2311
    %v3066 = vunpack.c.h.b16 %v2311
    %v3067 = vunpack.c.l.b16 %v2312
    %v3068 = vunpack.c.h.b16 %v2312
    %v3069 = vunpack.c.l.b16 %v2313
    %v3070 = vunpack.c.h.b16 %v2313
    %v3071 = vunpack.c.l.b16 %v2314
    %v3072 = vunpack.c.h.b16 %v2314
    %v3073 = vunpack.c.l.b16 %v2315
    %v3074 = vunpack.c.h.b16 %v2315
    %v3075 = vunpack.c.l.b16 %v2316
    %v3076 = vunpack.c.h.b16 %v2316
    %v3077 = vunpack.c.l.b16 %v2317
    %v3078 = vunpack.c.h.b16 %v2317
    %v3079 = vunpack.c.l.b16 %v2318
    %v3080 = vunpack.c.h.b16 %v2318
    %v3081 = vunpack.c.l.b16 %v2319
    %v3082 = vunpack.c.h.b16 %v2319
    %v3083 = vunpack.c.l.b16 %v2320
    %v3084 = vunpack.c.h.b16 %v2320
    %v3085 = vunpack.c.l.b16 %v2321
    %v3086 = vunpack.c.h.b16 %v2321
    %v3087 = vunpack.c.l.b16 %v2322
    %v3088 = vunpack.c.h.b16 %v2322
    %v3089 = vunpack.c.l.b16 %v2323
    %v3090 = vunpack.c.h.b16 %v2323
    %v3091 = vunpack.c.l.b16 %v2324
    %v3092 = vunpack.c.h.b16 %v2324
    %v3093 = vunpack.c.l.b16 %v2325
    %v3094 = vunpack.c.h.b16 %v2325
    %v3095 = vunpack.c.l.b16 %v2326
    %v3096 = vunpack.c.h.b16 %v2326
    %v3097 = vunpack.c.l.b16 %v2327
    %v3098 = vunpack.c.h.b16 %v2327
    %v3099 = vunpack.c.l.b16 %v2328
    %v3100 = vunpack.c.h.b16 %v2328
    %v3101 = vunpack.c.l.b16 %v2329
    %v3102 = vunpack.c.h.b16 %v2329
    %v3103 = vunpack.c.l.b16 %v2330
    %v3104 = vunpack.c.h.b16 %v2330
    %v3105 = vunpack.c.l.b16 %v2331
    %v3106 = vunpack.c.h.b16 %v2331
    %v3107 = vunpack.c.l.b16 %v2332
    %v3108 = vunpack.c.h.b16 %v2332
    %v3109 = vunpack.c.l.b16 %v2333
    %v3110 = vunpack.c.h.b16 %v2333
    %v3111 = vunpack.c.l.b16 %v2334
    %v3112 = vunpack.c.h.b16 %v2334
    %v3113 = vunpack.c.l.b16 %v2335
    %v3114 = vunpack.c.h.b16 %v2335
    %v3115 = vunpack.c.l.b16 %v2336
    %v3116 = vunpack.c.h.b16 %v2336
    %v3117 = vunpack.c.l.b16 %v2337
    %v3118 = vunpack.c.h.b16 %v2337
    %v3119 = vunpack.c.l.b16 %v2338
    %v3120 = vunpack.c.h.b16 %v2338
    %v3121 = vunpack.c.l.b16 %v2339
    %v3122 = vunpack.c.h.b16 %v2339
    %v3123 = vunpack.c.l.b16 %v2340
    %v3124 = vunpack.c.h.b16 %v2340
    %v3125 = vunpack.c.l.b16 %v2341
    %v3126 = vunpack.c.h.b16 %v2341
    %v3127 = vunpack.c.l.b16 %v2342
    %v3128 = vunpack.c.h.b16 %v2342
    %v3129 = vunpack.c.l.b16 %v2343
    %v3130 = vunpack.c.h.b16 %v2343
    %v3131 = vunpack.c.l.b16 %v2344
    %v3132 = vunpack.c.h.b16 %v2344
    %v3133 = vunpack.c.l.b16 %v2345
    %v3134 = vunpack.c.h.b16 %v2345
    %v3135 = vunpack.c.l.b16 %v2346
    %v3136 = vunpack.c.h.b16 %v2346
    %v3137 = vpack.c.b16 %v2629, %v2625
    %v3138 = vpack.c.b16 %v2630, %v2626
    %v3139 = vpack.c.b16 %v2631, %v2627
    %v3140 = vpack.c.b16 %v2632, %v2628
    %v3141 = vpack.c.b16 %v2637, %v2633
    %v3142 = vpack.c.b16 %v2638, %v2634
    %v3143 = vpack.c.b16 %v2639, %v2635
    %v3144 = vpack.c.b16 %v2640, %v2636
    %v3145 = vpack.c.b16 %v2645, %v2641
    %v3146 = vpack.c.b16 %v2646, %v2642
    %v3147 = vpack.c.b16 %v2647, %v2643
    %v3148 = vpack.c.b16 %v2648, %v2644
    %v3149 = vpack.c.b16 %v2653, %v2649
    %v3150 = vpack.c.b16 %v2654, %v2650
    %v3151 = vpack.c.b16 %v2655, %v2651
    %v3152 = vpack.c.b16 %v2656, %v2652
    %v3153 = vpack.c.b16 %v2661, %v2657
    %v3154 = vpack.c.b16 %v2662, %v2658
    %v3155 = vpack.c.b16 %v2663, %v2659
    %v3156 = vpack.c.b16 %v2664, %v2660
    %v3157 = vpack.c.b16 %v2669, %v2665
    %v3158 = vpack.c.b16 %v2670, %v2666
    %v3159 = vpack.c.b16 %v2671, %v2667
    %v3160 = vpack.c.b16 %v2672, %v2668
    %v3161 = vpack.c.b16 %v2677, %v2673
    %v3162 = vpack.c.b16 %v2678, %v2674
    %v3163 = vpack.c.b16 %v2679, %v2675
    %v3164 = vpack.c.b16 %v2680, %v2676
    %v3165 = vpack.c.b16 %v2685, %v2681
    %v3166 = vpack.c.b16 %v2686, %v2682
    %v3167 = vpack.c.b16 %v2687, %v2683
    %v3168 = vpack.c.b16 %v2688, %v2684
    %v3169 = vpack.c.b16 %v2693, %v2689
    %v3170 = vpack.c.b16 %v2694, %v2690
    %v3171 = vpack.c.b16 %v2695, %v2691
    %v3172 = vpack.c.b16 %v2696, %v2692
    %v3173 = vpack.c.b16 %v2701, %v2697
    %v3174 = vpack.c.b16 %v2702, %v2698
    %v3175 = vpack.c.b16 %v2703, %v2699
    %v3176 = vpack.c.b16 %v2704, %v2700
    %v3177 = vpack.c.b16 %v2709, %v2705
    %v3178 = vpack.c.b16 %v2710, %v2706
    %v3179 = vpack.c.b16 %v2711, %v2707
    %v3180 = vpack.c.b16 %v2712, %v2708
    %v3181 = vpack.c.b16 %v2717, %v2713
    %v3182 = vpack.c.b16 %v2718, %v2714
    %v3183 = vpack.c.b16 %v2719, %v2715
    %v3184 = vpack.c.b16 %v2720, %v2716
    %v3185 = vpack.c.b16 %v2725, %v2721
    %v3186 = vpack.c.b16 %v2726, %v2722
    %v3187 = vpack.c.b16 %v2727, %v2723
    %v3188 = vpack.c.b16 %v2728, %v2724
    %v3189 = vpack.c.b16 %v2733, %v2729
    %v3190 = vpack.c.b16 %v2734, %v2730
    %v3191 = vpack.c.b16 %v2735, %v2731
    %v3192 = vpack.c.b16 %v2736, %v2732
    %v3193 = vpack.c.b16 %v2741, %v2737
    %v3194 = vpack.c.b16 %v2742, %v2738
    %v3195 = vpack.c.b16 %v2743, %v2739
    %v3196 = vpack.c.b16 %v2744, %v2740
    %v3197 = vpack.c.b16 %v2749, %v2745
    %v3198 = vpack.c.b16 %v2750, %v2746
    %v3199 = vpack.c.b16 %v2751, %v2747
    %v3200 = vpack.c.b16 %v2752, %v2748
    %v3201 = vpack.c.b16 %v2757, %v2753
    %v3202 = vpack.c.b16 %v2758, %v2754
    %v3203 = vpack.c.b16 %v2759, %v2755
    %v3204 = vpack.c.b16 %v2760, %v2756
    %v3205 = vpack.c.b16 %v2765, %v2761
    %v3206 = vpack.c.b16 %v2766, %v2762
    %v3207 = vpack.c.b16 %v2767, %v2763
    %v3208 = vpack.c.b16 %v2768, %v2764
    %v3209 = vpack.c.b16 %v2773, %v2769
    %v3210 = vpack.c.b16 %v2774, %v2770
    %v3211 = vpack.c.b16 %v2775, %v2771
    %v3212 = vpack.c.b16 %v2776, %v2772
    %v3213 = vpack.c.b16 %v2781, %v2777
    %v3214 = vpack.c.b16 %v2782, %v2778
    %v3215 = vpack.c.b16 %v2783, %v2779
    %v3216 = vpack.c.b16 %v2784, %v2780
    %v3217 = vpack.c.b16 %v2789, %v2785
    %v3218 = vpack.c.b16 %v2790, %v2786
    %v3219 = vpack.c.b16 %v2791, %v2787
    %v3220 = vpack.c.b16 %v2792, %v2788
    %v3221 = vpack.c.b16 %v2797, %v2793
    %v3222 = vpack.c.b16 %v2798, %v2794
    %v3223 = vpack.c.b16 %v2799, %v2795
    %v3224 = vpack.c.b16 %v2800, %v2796
    %v3225 = vpack.c.b16 %v2805, %v2801
    %v3226 = vpack.c.b16 %v2806, %v2802
    %v3227 = vpack.c.b16 %v2807, %v2803
    %v3228 = vpack.c.b16 %v2808, %v2804
    %v3229 = vpack.c.b16 %v2813, %v2809
    %v3230 = vpack.c.b16 %v2814, %v2810
    %v3231 = vpack.c.b16 %v2815, %v2811
    %v3232 = vpack.c.b16 %v2816, %v2812
    %v3233 = vpack.c.b16 %v2821, %v2817
    %v3234 = vpack.c.b16 %v2822, %v2818
    %v3235 = vpack.c.b16 %v2823, %v2819
    %v3236 = vpack.c.b16 %v2824, %v2820
    %v3237 = vpack.c.b16 %v2829, %v2825
    %v3238 = vpack.c.b16 %v2830, %v2826
    %v3239 = vpack.c.b16 %v2831, %v2827
    %v3240 = vpack.c.b16 %v2832, %v2828
    %v3241 = vpack.c.b16 %v2837, %v2833
    %v3242 = vpack.c.b16 %v2838, %v2834
    %v3243 = vpack.c.b16 %v2839, %v2835
    %v3244 = vpack.c.b16 %v2840, %v2836
    %v3245 = vpack.c.b16 %v2845, %v2841
    %v3246 = vpack.c.b16 %v2846, %v2842
    %v3247 = vpack.c.b16 %v2847, %v2843
    %v3248 = vpack.c.b16 %v2848, %v2844
    %v3249 = vpack.c.b16 %v2853, %v2849
    %v3250 = vpack.c.b16 %v2854, %v2850
    %v3251 = vpack.c.b16 %v2855, %v2851
    %v3252 = vpack.c.b16 %v2856, %v2852
    %v3253 = vpack.c.b16 %v2861, %v2857
    %v3254 = vpack.c.b16 %v2862, %v2858
    %v3255 = vpack.c.b16 %v2863, %v2859
    %v3256 = vpack.c.b16 %v2864, %v2860
    %v3257 = vpack.c.b16 %v2869, %v2865
    %v3258 = vpack.c.b16 %v2870, %v2866
    %v3259 = vpack.c.b16 %v2871, %v2867
    %v3260 = vpack.c.b16 %v2872, %v2868
    %v3261 = vpack.c.b16 %v2877, %v2873
    %v3262 = vpack.c.b16 %v2878, %v2874
    %v3263 = vpack.c.b16 %v2879, %v2875
    %v3264 = vpack.c.b16 %v2880, %v2876
    %v3265 = vpack.c.b16 %v2885, %v2881
    %v3266 = vpack.c.b16 %v2886, %v2882
    %v3267 = vpack.c.b16 %v2887, %v2883
    %v3268 = vpack.c.b16 %v2888, %v2884
    %v3269 = vpack.c.b16 %v2893, %v2889
    %v3270 = vpack.c.b16 %v2894, %v2890
    %v3271 = vpack.c.b16 %v2895, %v2891
    %v3272 = vpack.c.b16 %v2896, %v2892
    %v3273 = vpack.c.b16 %v2901, %v2897
    %v3274 = vpack.c.b16 %v2902, %v2898
    %v3275 = vpack.c.b16 %v2903, %v2899
    %v3276 = vpack.c.b16 %v2904, %v2900
    %v3277 = vpack.c.b16 %v2909, %v2905
    %v3278 = vpack.c.b16 %v2910, %v2906
    %v3279 = vpack.c.b16 %v2911, %v2907
    %v3280 = vpack.c.b16 %v2912, %v2908
    %v3281 = vpack.c.b16 %v2917, %v2913
    %v3282 = vpack.c.b16 %v2918, %v2914
    %v3283 = vpack.c.b16 %v2919, %v2915
    %v3284 = vpack.c.b16 %v2920, %v2916
    %v3285 = vpack.c.b16 %v2925, %v2921
    %v3286 = vpack.c.b16 %v2926, %v2922
    %v3287 = vpack.c.b16 %v2927, %v2923
    %v3288 = vpack.c.b16 %v2928, %v2924
    %v3289 = vpack.c.b16 %v2933, %v2929
    %v3290 = vpack.c.b16 %v2934, %v2930
    %v3291 = vpack.c.b16 %v2935, %v2931
    %v3292 = vpack.c.b16 %v2936, %v2932
    %v3293 = vpack.c.b16 %v2941, %v2937
    %v3294 = vpack.c.b16 %v2942, %v2938
    %v3295 = vpack.c.b16 %v2943, %v2939
    %v3296 = vpack.c.b16 %v2944, %v2940
    %v3297 = vpack.c.b16 %v2949, %v2945
    %v3298 = vpack.c.b16 %v2950, %v2946
    %v3299 = vpack.c.b16 %v2951, %v2947
    %v3300 = vpack.c.b16 %v2952, %v2948
    %v3301 = vpack.c.b16 %v2957, %v2953
    %v3302 = vpack.c.b16 %v2958, %v2954
    %v3303 = vpack.c.b16 %v2959, %v2955
    %v3304 = vpack.c.b16 %v2960, %v2956
    %v3305 = vpack.c.b16 %v2965, %v2961
    %v3306 = vpack.c.b16 %v2966, %v2962
    %v3307 = vpack.c.b16 %v2967, %v2963
    %v3308 = vpack.c.b16 %v2968, %v2964
    %v3309 = vpack.c.b16 %v2973, %v2969
    %v3310 = vpack.c.b16 %v2974, %v2970
    %v3311 = vpack.c.b16 %v2975, %v2971
    %v3312 = vpack.c.b16 %v2976, %v2972
    %v3313 = vpack.c.b16 %v2981, %v2977
    %v3314 = vpack.c.b16 %v2982, %v2978
    %v3315 = vpack.c.b16 %v2983, %v2979
    %v3316 = vpack.c.b16 %v2984, %v2980
    %v3317 = vpack.c.b16 %v2989, %v2985
    %v3318 = vpack.c.b16 %v2990, %v2986
    %v3319 = vpack.c.b16 %v2991, %v2987
    %v3320 = vpack.c.b16 %v2992, %v2988
    %v3321 = vpack.c.b16 %v2997, %v2993
    %v3322 = vpack.c.b16 %v2998, %v2994
    %v3323 = vpack.c.b16 %v2999, %v2995
    %v3324 = vpack.c.b16 %v3000, %v2996
    %v3325 = vpack.c.b16 %v3005, %v3001
    %v3326 = vpack.c.b16 %v3006, %v3002
    %v3327 = vpack.c.b16 %v3007, %v3003
    %v3328 = vpack.c.b16 %v3008, %v3004
    %v3329 = vpack.c.b16 %v3013, %v3009
    %v3330 = vpack.c.b16 %v3014, %v3010
    %v3331 = vpack.c.b16 %v3015, %v3011
    %v3332 = vpack.c.b16 %v3016, %v3012
    %v3333 = vpack.c.b16 %v3021, %v3017
    %v3334 = vpack.c.b16 %v3022, %v3018
    %v3335 = vpack.c.b16 %v3023, %v3019
    %v3336 = vpack.c.b16 %v3024, %v3020
    %v3337 = vpack.c.b16 %v3029, %v3025
    %v3338 = vpack.c.b16 %v3030, %v3026
    %v3339 = vpack.c.b16 %v3031, %v3027
    %v3340 = vpack.c.b16 %v3032, %v3028
    %v3341 = vpack.c.b16 %v3037, %v3033
    %v3342 = vpack.c.b16 %v3038, %v3034
    %v3343 = vpack.c.b16 %v3039, %v3035
    %v3344 = vpack.c.b16 %v3040, %v3036
    %v3345 = vpack.c.b16 %v3045, %v3041
    %v3346 = vpack.c.b16 %v3046, %v3042
    %v3347 = vpack.c.b16 %v3047, %v3043
    %v3348 = vpack.c.b16 %v3048, %v3044
    %v3349 = vpack.c.b16 %v3053, %v3049
    %v3350 = vpack.c.b16 %v3054, %v3050
    %v3351 = vpack.c.b16 %v3055, %v3051
    %v3352 = vpack.c.b16 %v3056, %v3052
    %v3353 = vpack.c.b16 %v3061, %v3057
    %v3354 = vpack.c.b16 %v3062, %v3058
    %v3355 = vpack.c.b16 %v3063, %v3059
    %v3356 = vpack.c.b16 %v3064, %v3060
    %v3357 = vpack.c.b16 %v3069, %v3065
    %v3358 = vpack.c.b16 %v3070, %v3066
    %v3359 = vpack.c.b16 %v3071, %v3067
    %v3360 = vpack.c.b16 %v3072, %v3068
    %v3361 = vpack.c.b16 %v3077, %v3073
    %v3362 = vpack.c.b16 %v3078, %v3074
    %v3363 = vpack.c.b16 %v3079, %v3075
    %v3364 = vpack.c.b16 %v3080, %v3076
    %v3365 = vpack.c.b16 %v3085, %v3081
    %v3366 = vpack.c.b16 %v3086, %v3082
    %v3367 = vpack.c.b16 %v3087, %v3083
    %v3368 = vpack.c.b16 %v3088, %v3084
    %v3369 = vpack.c.b16 %v3093, %v3089
    %v3370 = vpack.c.b16 %v3094, %v3090
    %v3371 = vpack.c.b16 %v3095, %v3091
    %v3372 = vpack.c.b16 %v3096, %v3092
    %v3373 = vpack.c.b16 %v3101, %v3097
    %v3374 = vpack.c.b16 %v3102, %v3098
    %v3375 = vpack.c.b16 %v3103, %v3099
    %v3376 = vpack.c.b16 %v3104, %v3100
    %v3377 = vpack.c.b16 %v3109, %v3105
    %v3378 = vpack.c.b16 %v3110, %v3106
    %v3379 = vpack.c.b16 %v3111, %v3107
    %v3380 = vpack.c.b16 %v3112, %v3108
    %v3381 = vpack.c.b16 %v3117, %v3113
    %v3382 = vpack.c.b16 %v3118, %v3114
    %v3383 = vpack.c.b16 %v3119, %v3115
    %v3384 = vpack.c.b16 %v3120, %v3116
    %v3385 = vpack.c.b16 %v3125, %v3121
    %v3386 = vpack.c.b16 %v3126, %v3122
    %v3387 = vpack.c.b16 %v3127, %v3123
    %v3388 = vpack.c.b16 %v3128, %v3124
    %v3389 = vpack.c.b16 %v3133, %v3129
    %v3390 = vpack.c.b16 %v3134, %v3130
    %v3391 = vpack.c.b16 %v3135, %v3131
    %v3392 = vpack.c.b16 %v3136, %v3132
    %3649 = vmatprep.subr.bf16.mxu0 %v3138
    %3650 = vmatpush1.bf16.msra.mxu0 %v3137
    %3651 = vmatprep.subr.bf16.mxu0 %v3142
    %3652 = vmatpush1.bf16.msra.mxu0 %v3141
    %3653 = vmatprep.subr.bf16.mxu0 %v3146
    %3654 = vmatpush1.bf16.msra.mxu0 %v3145
    %3655 = vmatprep.subr.bf16.mxu0 %v3150
    %3656 = vmatpush1.bf16.msra.mxu0 %v3149
    %3657 = vmatprep.subr.bf16.mxu0 %v3154
    %3658 = vmatpush1.bf16.msra.mxu0 %v3153
    %3659 = vmatprep.subr.bf16.mxu0 %v3158
    %3660 = vmatpush1.bf16.msra.mxu0 %v3157
    %3661 = vmatprep.subr.bf16.mxu0 %v3162
    %3662 = vmatpush1.bf16.msra.mxu0 %v3161
    %3663 = vmatprep.subr.bf16.mxu0 %v3166
    %3664 = vmatpush1.bf16.msra.mxu0 %v3165
    %3665 = vmatprep.subr.bf16.mxu0 %v3170
    %3666 = vmatpush1.bf16.msra.mxu0 %v3169
    %3667 = vmatprep.subr.bf16.mxu0 %v3174
    %3668 = vmatpush1.bf16.msra.mxu0 %v3173
    %3669 = vmatprep.subr.bf16.mxu0 %v3178
    %3670 = vmatpush1.bf16.msra.mxu0 %v3177
    %3671 = vmatprep.subr.bf16.mxu0 %v3182
    %3672 = vmatpush1.bf16.msra.mxu0 %v3181
    %3673 = vmatprep.subr.bf16.mxu0 %v3186
    %3674 = vmatpush1.bf16.msra.mxu0 %v3185
    %3675 = vmatprep.subr.bf16.mxu0 %v3190
    %3676 = vmatpush1.bf16.msra.mxu0 %v3189
    %3677 = vmatprep.subr.bf16.mxu0 %v3194
    %3678 = vmatpush1.bf16.msra.mxu0 %v3193
    %3679 = vmatprep.subr.bf16.mxu0 %v3198
    %3680 = vmatpush1.bf16.msra.mxu0 %v3197
    %3681 = vmatprep.mubr.bf16.mxu0 %v2084
    %3682 = vmatmul.mubr.bf16.gmra.mrb[0].mxu0 %v2083
    %v3683 = vpop.f32.mrb[0].mxu0
    %v3684 = vadd.f32 %v2352, %v3683
    %v3685 = vpop.f32.mrb[0].mxu0
    %v3686 = vadd.f32 %v2356, %v3685
    %v3687 = vpop.f32.mrb[0].mxu0
    %v3688 = vadd.f32 %v2352, %v3687
    %v3689 = vpop.f32.mrb[0].mxu0
    %v3690 = vadd.f32 %v2356, %v3689
    %3691 = vdwg.mxu0
    %3692 = vmatprep.subr.bf16.mxu0 %v3202
    %3693 = vmatpush1.bf16.msra.mxu0 %v3201
    %3694 = vmatprep.subr.bf16.mxu0 %v3206
    %3695 = vmatpush1.bf16.msra.mxu0 %v3205
    %3696 = vmatprep.subr.bf16.mxu0 %v3210
    %3697 = vmatpush1.bf16.msra.mxu0 %v3209
    %3698 = vmatprep.subr.bf16.mxu0 %v3214
    %3699 = vmatpush1.bf16.msra.mxu0 %v3213
    %3700 = vmatprep.subr.bf16.mxu0 %v3218
    %3701 = vmatpush1.bf16.msra.mxu0 %v3217
    %3702 = vmatprep.subr.bf16.mxu0 %v3222
    %3703 = vmatpush1.bf16.msra.mxu0 %v3221
    %3704 = vmatprep.subr.bf16.mxu0 %v3226
    %3705 = vmatpush1.bf16.msra.mxu0 %v3225
    %3706 = vmatprep.subr.bf16.mxu0 %v3230
    %3707 = vmatpush1.bf16.msra.mxu0 %v3229
    %3708 = vmatprep.subr.bf16.mxu0 %v3234
    %3709 = vmatpush1.bf16.msra.mxu0 %v3233
    %3710 = vmatprep.subr.bf16.mxu0 %v3238
    %3711 = vmatpush1.bf16.msra.mxu0 %v3237
    %3712 = vmatprep.subr.bf16.mxu0 %v3242
    %3713 = vmatpush1.bf16.msra.mxu0 %v3241
    %3714 = vmatprep.subr.bf16.mxu0 %v3246
    %3715 = vmatpush1.bf16.msra.mxu0 %v3245
    %3716 = vmatprep.subr.bf16.mxu0 %v3250
    %3717 = vmatpush1.bf16.msra.mxu0 %v3249
    %3718 = vmatprep.subr.bf16.mxu0 %v3254
    %3719 = vmatpush1.bf16.msra.mxu0 %v3253
    %3720 = vmatprep.subr.bf16.mxu0 %v3258
    %3721 = vmatpush1.bf16.msra.mxu0 %v3257
    %3722 = vmatprep.subr.bf16.mxu0 %v3262
    %3723 = vmatpush1.bf16.msra.mxu0 %v3261
    %3724 = vmatprep.mubr.bf16.mxu0 %v2086
    %3725 = vmatmul.mubr.bf16.gmra.mrb[0].mxu0 %v2085
    %v3726 = vpop.f32.mrb[0].mxu0
    %v3727 = vadd.f32 %v3684, %v3726
    %v3728 = vpop.f32.mrb[0].mxu0
    %v3729 = vadd.f32 %v3686, %v3728
    %v3730 = vpop.f32.mrb[0].mxu0
    %v3731 = vadd.f32 %v3688, %v3730
    %v3732 = vpop.f32.mrb[0].mxu0
    %v3733 = vadd.f32 %v3690, %v3732
    %3734 = vdwg.mxu0
    %3735 = vmatprep.subr.bf16.mxu0 %v3266
    %3736 = vmatpush1.bf16.msra.mxu0 %v3265
    %3737 = vmatprep.subr.bf16.mxu0 %v3270
    %3738 = vmatpush1.bf16.msra.mxu0 %v3269
    %3739 = vmatprep.subr.bf16.mxu0 %v3274
    %3740 = vmatpush1.bf16.msra.mxu0 %v3273
    %3741 = vmatprep.subr.bf16.mxu0 %v3278
    %3742 = vmatpush1.bf16.msra.mxu0 %v3277
    %3743 = vmatprep.subr.bf16.mxu0 %v3282
    %3744 = vmatpush1.bf16.msra.mxu0 %v3281
    %3745 = vmatprep.subr.bf16.mxu0 %v3286
    %3746 = vmatpush1.bf16.msra.mxu0 %v3285
    %3747 = vmatprep.subr.bf16.mxu0 %v3290
    %3748 = vmatpush1.bf16.msra.mxu0 %v3289
    %3749 = vmatprep.subr.bf16.mxu0 %v3294
    %3750 = vmatpush1.bf16.msra.mxu0 %v3293
    %3751 = vmatprep.subr.bf16.mxu0 %v3298
    %3752 = vmatpush1.bf16.msra.mxu0 %v3297
    %3753 = vmatprep.subr.bf16.mxu0 %v3302
    %3754 = vmatpush1.bf16.msra.mxu0 %v3301
    %3755 = vmatprep.subr.bf16.mxu0 %v3306
    %3756 = vmatpush1.bf16.msra.mxu0 %v3305
    %3757 = vmatprep.subr.bf16.mxu0 %v3310
    %3758 = vmatpush1.bf16.msra.mxu0 %v3309
    %3759 = vmatprep.subr.bf16.mxu0 %v3314
    %3760 = vmatpush1.bf16.msra.mxu0 %v3313
    %3761 = vmatprep.subr.bf16.mxu0 %v3318
    %3762 = vmatpush1.bf16.msra.mxu0 %v3317
    %3763 = vmatprep.subr.bf16.mxu0 %v3322
    %3764 = vmatpush1.bf16.msra.mxu0 %v3321
    %3765 = vmatprep.subr.bf16.mxu0 %v3326
    %3766 = vmatpush1.bf16.msra.mxu0 %v3325
    %3767 = vmatprep.mubr.bf16.mxu0 %v2088
    %3768 = vmatmul.mubr.bf16.gmra.mrb[0].mxu0 %v2087
    %v3769 = vpop.f32.mrb[0].mxu0
    %v3770 = vadd.f32 %v3727, %v3769
    %v3771 = vpop.f32.mrb[0].mxu0
    %v3772 = vadd.f32 %v3729, %v3771
    %v3773 = vpop.f32.mrb[0].mxu0
    %v3774 = vadd.f32 %v3731, %v3773
    %v3775 = vpop.f32.mrb[0].mxu0
    %v3776 = vadd.f32 %v3733, %v3775
    %3777 = vdwg.mxu0
    %3778 = vmatprep.subr.bf16.mxu0 %v3330
    %3779 = vmatpush1.bf16.msra.mxu0 %v3329
    %3780 = vmatprep.subr.bf16.mxu0 %v3334
    %3781 = vmatpush1.bf16.msra.mxu0 %v3333
    %3782 = vmatprep.subr.bf16.mxu0 %v3338
    %3783 = vmatpush1.bf16.msra.mxu0 %v3337
    %3784 = vmatprep.subr.bf16.mxu0 %v3342
    %3785 = vmatpush1.bf16.msra.mxu0 %v3341
    %3786 = vmatprep.subr.bf16.mxu0 %v3346
    %3787 = vmatpush1.bf16.msra.mxu0 %v3345
    %3788 = vmatprep.subr.bf16.mxu0 %v3350
    %3789 = vmatpush1.bf16.msra.mxu0 %v3349
    %3790 = vmatprep.subr.bf16.mxu0 %v3354
    %3791 = vmatpush1.bf16.msra.mxu0 %v3353
    %3792 = vmatprep.subr.bf16.mxu0 %v3358
    %3793 = vmatpush1.bf16.msra.mxu0 %v3357
    %3794 = vmatprep.subr.bf16.mxu0 %v3362
    %3795 = vmatpush1.bf16.msra.mxu0 %v3361
    %3796 = vmatprep.subr.bf16.mxu0 %v3366
    %3797 = vmatpush1.bf16.msra.mxu0 %v3365
    %3798 = vmatprep.subr.bf16.mxu0 %v3370
    %3799 = vmatpush1.bf16.msra.mxu0 %v3369
    %3800 = vmatprep.subr.bf16.mxu0 %v3374
    %3801 = vmatpush1.bf16.msra.mxu0 %v3373
    %3802 = vmatprep.subr.bf16.mxu0 %v3378
    %3803 = vmatpush1.bf16.msra.mxu0 %v3377
    %3804 = vmatprep.subr.bf16.mxu0 %v3382
    %3805 = vmatpush1.bf16.msra.mxu0 %v3381
    %3806 = vmatprep.subr.bf16.mxu0 %v3386
    %3807 = vmatpush1.bf16.msra.mxu0 %v3385
    %3808 = vmatprep.subr.bf16.mxu0 %v3390
    %3809 = vmatpush1.bf16.msra.mxu0 %v3389
    %3810 = vmatprep.mubr.bf16.mxu0 %v2090
    %3811 = vmatmul.mubr.bf16.gmra.mrb[0].mxu0 %v2089
    %v3812 = vpop.f32.mrb[0].mxu0
    %v3813 = vadd.f32 %v3770, %v3812
    %v3814 = vpop.f32.mrb[0].mxu0
    %v3815 = vadd.f32 %v3772, %v3814
    %v3816 = vpop.f32.mrb[0].mxu0
    %v3817 = vadd.f32 %v3774, %v3816
    %v3818 = vpop.f32.mrb[0].mxu0
    %v3819 = vadd.f32 %v3776, %v3818
    %3820 = vdwg.mxu0
    %3821 = vmatprep.subr.bf16.mxu0 %v3140
    %3822 = vmatpush1.bf16.msra.mxu0 %v3139
    %3823 = vmatprep.subr.bf16.mxu0 %v3144
    %3824 = vmatpush1.bf16.msra.mxu0 %v3143
    %3825 = vmatprep.subr.bf16.mxu0 %v3148
    %3826 = vmatpush1.bf16.msra.mxu0 %v3147
    %3827 = vmatprep.subr.bf16.mxu0 %v3152
    %3828 = vmatpush1.bf16.msra.mxu0 %v3151
    %3829 = vmatprep.subr.bf16.mxu0 %v3156
    %3830 = vmatpush1.bf16.msra.mxu0 %v3155
    %3831 = vmatprep.subr.bf16.mxu0 %v3160
    %3832 = vmatpush1.bf16.msra.mxu0 %v3159
    %3833 = vmatprep.subr.bf16.mxu0 %v3164
    %3834 = vmatpush1.bf16.msra.mxu0 %v3163
    %3835 = vmatprep.subr.bf16.mxu0 %v3168
    %3836 = vmatpush1.bf16.msra.mxu0 %v3167
    %3837 = vmatprep.subr.bf16.mxu0 %v3172
    %3838 = vmatpush1.bf16.msra.mxu0 %v3171
    %3839 = vmatprep.subr.bf16.mxu0 %v3176
    %3840 = vmatpush1.bf16.msra.mxu0 %v3175
    %3841 = vmatprep.subr.bf16.mxu0 %v3180
    %3842 = vmatpush1.bf16.msra.mxu0 %v3179
    %3843 = vmatprep.subr.bf16.mxu0 %v3184
    %3844 = vmatpush1.bf16.msra.mxu0 %v3183
    %3845 = vmatprep.subr.bf16.mxu0 %v3188
    %3846 = vmatpush1.bf16.msra.mxu0 %v3187
    %3847 = vmatprep.subr.bf16.mxu0 %v3192
    %3848 = vmatpush1.bf16.msra.mxu0 %v3191
    %3849 = vmatprep.subr.bf16.mxu0 %v3196
    %3850 = vmatpush1.bf16.msra.mxu0 %v3195
    %3851 = vmatprep.subr.bf16.mxu0 %v3200
    %3852 = vmatpush1.bf16.msra.mxu0 %v3199
    %3853 = vmatprep.mubr.bf16.mxu0 %v2084
    %3854 = vmatmul.mubr.bf16.gmra.mrb[0].mxu0 %v2083
    %v3855 = vpop.f32.mrb[0].mxu0
    %v3856 = vadd.f32 %v2360, %v3855
    %v3857 = vpop.f32.mrb[0].mxu0
    %v3858 = vadd.f32 %v2364, %v3857
    %v3859 = vpop.f32.mrb[0].mxu0
    %v3860 = vadd.f32 %v2360, %v3859
    %v3861 = vpop.f32.mrb[0].mxu0
    %v3862 = vadd.f32 %v2364, %v3861
    %3863 = vdwg.mxu0
    %3864 = vmatprep.subr.bf16.mxu0 %v3204
    %3865 = vmatpush1.bf16.msra.mxu0 %v3203
    %3866 = vmatprep.subr.bf16.mxu0 %v3208
    %3867 = vmatpush1.bf16.msra.mxu0 %v3207
    %3868 = vmatprep.subr.bf16.mxu0 %v3212
    %3869 = vmatpush1.bf16.msra.mxu0 %v3211
    %3870 = vmatprep.subr.bf16.mxu0 %v3216
    %3871 = vmatpush1.bf16.msra.mxu0 %v3215
    %3872 = vmatprep.subr.bf16.mxu0 %v3220
    %3873 = vmatpush1.bf16.msra.mxu0 %v3219
    %3874 = vmatprep.subr.bf16.mxu0 %v3224
    %3875 = vmatpush1.bf16.msra.mxu0 %v3223
    %3876 = vmatprep.subr.bf16.mxu0 %v3228
    %3877 = vmatpush1.bf16.msra.mxu0 %v3227
    %3878 = vmatprep.subr.bf16.mxu0 %v3232
    %3879 = vmatpush1.bf16.msra.mxu0 %v3231
    %3880 = vmatprep.subr.bf16.mxu0 %v3236
    %3881 = vmatpush1.bf16.msra.mxu0 %v3235
    %3882 = vmatprep.subr.bf16.mxu0 %v3240
    %3883 = vmatpush1.bf16.msra.mxu0 %v3239
    %3884 = vmatprep.subr.bf16.mxu0 %v3244
    %3885 = vmatpush1.bf16.msra.mxu0 %v3243
    %3886 = vmatprep.subr.bf16.mxu0 %v3248
    %3887 = vmatpush1.bf16.msra.mxu0 %v3247
    %3888 = vmatprep.subr.bf16.mxu0 %v3252
    %3889 = vmatpush1.bf16.msra.mxu0 %v3251
    %3890 = vmatprep.subr.bf16.mxu0 %v3256
    %3891 = vmatpush1.bf16.msra.mxu0 %v3255
    %3892 = vmatprep.subr.bf16.mxu0 %v3260
    %3893 = vmatpush1.bf16.msra.mxu0 %v3259
    %3894 = vmatprep.subr.bf16.mxu0 %v3264
    %3895 = vmatpush1.bf16.msra.mxu0 %v3263
    %3896 = vmatprep.mubr.bf16.mxu0 %v2086
    %3897 = vmatmul.mubr.bf16.gmra.mrb[0].mxu0 %v2085
    %v3898 = vpop.f32.mrb[0].mxu0
    %v3899 = vadd.f32 %v3856, %v3898
    %v3900 = vpop.f32.mrb[0].mxu0
    %v3901 = vadd.f32 %v3858, %v3900
    %v3902 = vpop.f32.mrb[0].mxu0
    %v3903 = vadd.f32 %v3860, %v3902
    %v3904 = vpop.f32.mrb[0].mxu0
    %v3905 = vadd.f32 %v3862, %v3904
    %3906 = vdwg.mxu0
    %3907 = vmatprep.subr.bf16.mxu0 %v3268
    %3908 = vmatpush1.bf16.msra.mxu0 %v3267
    %3909 = vmatprep.subr.bf16.mxu0 %v3272
    %3910 = vmatpush1.bf16.msra.mxu0 %v3271
    %3911 = vmatprep.subr.bf16.mxu0 %v3276
    %3912 = vmatpush1.bf16.msra.mxu0 %v3275
    %3913 = vmatprep.subr.bf16.mxu0 %v3280
    %3914 = vmatpush1.bf16.msra.mxu0 %v3279
    %3915 = vmatprep.subr.bf16.mxu0 %v3284
    %3916 = vmatpush1.bf16.msra.mxu0 %v3283
    %3917 = vmatprep.subr.bf16.mxu0 %v3288
    %3918 = vmatpush1.bf16.msra.mxu0 %v3287
    %3919 = vmatprep.subr.bf16.mxu0 %v3292
    %3920 = vmatpush1.bf16.msra.mxu0 %v3291
    %3921 = vmatprep.subr.bf16.mxu0 %v3296
    %3922 = vmatpush1.bf16.msra.mxu0 %v3295
    %3923 = vmatprep.subr.bf16.mxu0 %v3300
    %3924 = vmatpush1.bf16.msra.mxu0 %v3299
    %3925 = vmatprep.subr.bf16.mxu0 %v3304
    %3926 = vmatpush1.bf16.msra.mxu0 %v3303
    %3927 = vmatprep.subr.bf16.mxu0 %v3308
    %3928 = vmatpush1.bf16.msra.mxu0 %v3307
    %3929 = vmatprep.subr.bf16.mxu0 %v3312
    %3930 = vmatpush1.bf16.msra.mxu0 %v3311
    %3931 = vmatprep.subr.bf16.mxu0 %v3316
    %3932 = vmatpush1.bf16.msra.mxu0 %v3315
    %3933 = vmatprep.subr.bf16.mxu0 %v3320
    %3934 = vmatpush1.bf16.msra.mxu0 %v3319
    %3935 = vmatprep.subr.bf16.mxu0 %v3324
    %3936 = vmatpush1.bf16.msra.mxu0 %v3323
    %3937 = vmatprep.subr.bf16.mxu0 %v3328
    %3938 = vmatpush1.bf16.msra.mxu0 %v3327
    %3939 = vmatprep.mubr.bf16.mxu0 %v2088
    %3940 = vmatmul.mubr.bf16.gmra.mrb[0].mxu0 %v2087
    %v3941 = vpop.f32.mrb[0].mxu0
    %v3942 = vadd.f32 %v3899, %v3941
    %v3943 = vpop.f32.mrb[0].mxu0
    %v3944 = vadd.f32 %v3901, %v3943
    %v3945 = vpop.f32.mrb[0].mxu0
    %v3946 = vadd.f32 %v3903, %v3945
    %v3947 = vpop.f32.mrb[0].mxu0
    %v3948 = vadd.f32 %v3905, %v3947
    %3949 = vdwg.mxu0
    %3950 = vmatprep.subr.bf16.mxu0 %v3332
    %3951 = vmatpush1.bf16.msra.mxu0 %v3331
    %3952 = vmatprep.subr.bf16.mxu0 %v3336
    %3953 = vmatpush1.bf16.msra.mxu0 %v3335
    %3954 = vmatprep.subr.bf16.mxu0 %v3340
    %3955 = vmatpush1.bf16.msra.mxu0 %v3339
    %3956 = vmatprep.subr.bf16.mxu0 %v3344
    %3957 = vmatpush1.bf16.msra.mxu0 %v3343
    %3958 = vmatprep.subr.bf16.mxu0 %v3348
    %3959 = vmatpush1.bf16.msra.mxu0 %v3347
    %3960 = vmatprep.subr.bf16.mxu0 %v3352
    %3961 = vmatpush1.bf16.msra.mxu0 %v3351
    %3962 = vmatprep.subr.bf16.mxu0 %v3356
    %3963 = vmatpush1.bf16.msra.mxu0 %v3355
    %3964 = vmatprep.subr.bf16.mxu0 %v3360
    %3965 = vmatpush1.bf16.msra.mxu0 %v3359
    %3966 = vmatprep.subr.bf16.mxu0 %v3364
    %3967 = vmatpush1.bf16.msra.mxu0 %v3363
    %3968 = vmatprep.subr.bf16.mxu0 %v3368
    %3969 = vmatpush1.bf16.msra.mxu0 %v3367
    %3970 = vmatprep.subr.bf16.mxu0 %v3372
    %3971 = vmatpush1.bf16.msra.mxu0 %v3371
    %3972 = vmatprep.subr.bf16.mxu0 %v3376
    %3973 = vmatpush1.bf16.msra.mxu0 %v3375
    %3974 = vmatprep.subr.bf16.mxu0 %v3380
    %3975 = vmatpush1.bf16.msra.mxu0 %v3379
    %3976 = vmatprep.subr.bf16.mxu0 %v3384
    %3977 = vmatpush1.bf16.msra.mxu0 %v3383
    %3978 = vmatprep.subr.bf16.mxu0 %v3388
    %3979 = vmatpush1.bf16.msra.mxu0 %v3387
    %3980 = vmatprep.subr.bf16.mxu0 %v3392
    %3981 = vmatpush1.bf16.msra.mxu0 %v3391
    %3982 = vmatprep.mubr.bf16.mxu0 %v2090
    %3983 = vmatmul.mubr.bf16.gmra.mrb[0].mxu0 %v2089
    %v3984 = vpop.f32.mrb[0].mxu0
    %v3985 = vadd.f32 %v3942, %v3984
    %v3986 = vpop.f32.mrb[0].mxu0
    %v3987 = vadd.f32 %v3944, %v3986
    %v3988 = vpop.f32.mrb[0].mxu0
    %v3989 = vadd.f32 %v3946, %v3988
    %v3990 = vpop.f32.mrb[0].mxu0
    %v3991 = vadd.f32 %v3948, %v3990
    %3992 = vdwg.mxu0
    %v3993 = vmax.f32 %v3813, 0.0
    %v3994 = vmax.f32 %v3815, 0.0
    %v3995 = vmax.f32 %v3985, 0.0
    %v3996 = vmax.f32 %v3987, 0.0
    %v3997 = vmax.f32 %v3817, 0.0
    %v3998 = vmax.f32 %v3819, 0.0
    %v3999 = vmax.f32 %v3989, 0.0
    %v4000 = vmax.f32 %v3991, 0.0
    %v4001 = vpack.c.bf16 %v3997, %v3993
    %v4002 = vpack.c.bf16 %v3998, %v3994
    %v4003 = vpack.c.bf16 %v3999, %v3995
    %v4004 = vpack.c.bf16 %v4000, %v3996
    %v4005 = vld [vmem:[#allocation10] sm:$0xff]
    %v4006 = vld [vmem:[#allocation10 + $0x8] sm:$0xff]
    %v4007 = vld [vmem:[#allocation10 + $0x10] sm:$0xff]
    %v4008 = vld [vmem:[#allocation10 + $0x18] sm:$0xff]
    %v4009 = vld [vmem:[#allocation10 + $0x20] sm:$0xff]
    %v4010 = vld [vmem:[#allocation10 + $0x28] sm:$0xff]
    %v4011 = vld [vmem:[#allocation10 + $0x30] sm:$0xff]
    %v4012 = vld [vmem:[#allocation10 + $0x38] sm:$0xff]
    %v4013 = vld [vmem:[#allocation10 + $0x40] sm:$0xff]
    %v4014 = vld [vmem:[#allocation10 + $0x48] sm:$0xff]
    %v4015 = vld [vmem:[#allocation10 + $0x50] sm:$0xff]
    %v4016 = vld [vmem:[#allocation10 + $0x58] sm:$0xff]
    %v4017 = vld [vmem:[#allocation10 + $0x60] sm:$0xff]
    %v4018 = vld [vmem:[#allocation10 + $0x68] sm:$0xff]
    %v4019 = vld [vmem:[#allocation10 + $0x70] sm:$0xff]
    %v4020 = vld [vmem:[#allocation10 + $0x78] sm:$0xff]
    %v4021 = vld [vmem:[#allocation10 + $0x80] sm:$0xff]
    %v4022 = vld [vmem:[#allocation10 + $0x88] sm:$0xff]
    %v4023 = vld [vmem:[#allocation10 + $0x90] sm:$0xff]
    %v4024 = vld [vmem:[#allocation10 + $0x98] sm:$0xff]
    %v4025 = vld [vmem:[#allocation10 + $0xa0] sm:$0xff]
    %v4026 = vld [vmem:[#allocation10 + $0xa8] sm:$0xff]
    %v4027 = vld [vmem:[#allocation10 + $0xb0] sm:$0xff]
    %v4028 = vld [vmem:[#allocation10 + $0xb8] sm:$0xff]
    %v4029 = vld [vmem:[#allocation10 + $0xc0] sm:$0xff]
    %v4030 = vld [vmem:[#allocation10 + $0xc8] sm:$0xff]
    %v4031 = vld [vmem:[#allocation10 + $0xd0] sm:$0xff]
    %v4032 = vld [vmem:[#allocation10 + $0xd8] sm:$0xff]
    %v4033 = vld [vmem:[#allocation10 + $0xe0] sm:$0xff]
    %v4034 = vld [vmem:[#allocation10 + $0xe8] sm:$0xff]
    %v4035 = vld [vmem:[#allocation10 + $0xf0] sm:$0xff]
    %v4036 = vld [vmem:[#allocation10 + $0xf8] sm:$0xff]
    %v4037 = vld [vmem:[#allocation10 + $0x100] sm:$0xff]
    %v4038 = vld [vmem:[#allocation10 + $0x108] sm:$0xff]
    %v4039 = vld [vmem:[#allocation10 + $0x110] sm:$0xff]
    %v4040 = vld [vmem:[#allocation10 + $0x118] sm:$0xff]
    %v4041 = vld [vmem:[#allocation10 + $0x120] sm:$0xff]
    %v4042 = vld [vmem:[#allocation10 + $0x128] sm:$0xff]
    %v4043 = vld [vmem:[#allocation10 + $0x130] sm:$0xff]
    %v4044 = vld [vmem:[#allocation10 + $0x138] sm:$0xff]
    %v4045 = vld [vmem:[#allocation10 + $0x140] sm:$0xff]
    %v4046 = vld [vmem:[#allocation10 + $0x148] sm:$0xff]
    %v4047 = vld [vmem:[#allocation10 + $0x150] sm:$0xff]
    %v4048 = vld [vmem:[#allocation10 + $0x158] sm:$0xff]
    %v4049 = vld [vmem:[#allocation10 + $0x160] sm:$0xff]
    %v4050 = vld [vmem:[#allocation10 + $0x168] sm:$0xff]
    %v4051 = vld [vmem:[#allocation10 + $0x170] sm:$0xff]
    %v4052 = vld [vmem:[#allocation10 + $0x178] sm:$0xff]
    %v4053 = vld [vmem:[#allocation10 + $0x180] sm:$0xff]
    %v4054 = vld [vmem:[#allocation10 + $0x188] sm:$0xff]
    %v4055 = vld [vmem:[#allocation10 + $0x190] sm:$0xff]
    %v4056 = vld [vmem:[#allocation10 + $0x198] sm:$0xff]
    %v4057 = vld [vmem:[#allocation10 + $0x1a0] sm:$0xff]
    %v4058 = vld [vmem:[#allocation10 + $0x1a8] sm:$0xff]
    %v4059 = vld [vmem:[#allocation10 + $0x1b0] sm:$0xff]
    %v4060 = vld [vmem:[#allocation10 + $0x1b8] sm:$0xff]
    %v4061 = vld [vmem:[#allocation10 + $0x1c0] sm:$0xff]
    %v4062 = vld [vmem:[#allocation10 + $0x1c8] sm:$0xff]
    %v4063 = vld [vmem:[#allocation10 + $0x1d0] sm:$0xff]
    %v4064 = vld [vmem:[#allocation10 + $0x1d8] sm:$0xff]
    %v4065 = vld [vmem:[#allocation10 + $0x1e0] sm:$0xff]
    %v4066 = vld [vmem:[#allocation10 + $0x1e8] sm:$0xff]
    %v4067 = vld [vmem:[#allocation10 + $0x1f0] sm:$0xff]
    %v4068 = vld [vmem:[#allocation10 + $0x1f8] sm:$0xff]
    %v4069 = vld [vmem:[#allocation10 + $0x200] sm:$0xff]
    %v4070 = vld [vmem:[#allocation10 + $0x208] sm:$0xff]
    %v4071 = vld [vmem:[#allocation10 + $0x210] sm:$0xff]
    %v4072 = vld [vmem:[#allocation10 + $0x218] sm:$0xff]
    %v4073 = vld [vmem:[#allocation10 + $0x220] sm:$0xff]
    %v4074 = vld [vmem:[#allocation10 + $0x228] sm:$0xff]
    %v4075 = vld [vmem:[#allocation10 + $0x230] sm:$0xff]
    %v4076 = vld [vmem:[#allocation10 + $0x238] sm:$0xff]
    %v4077 = vld [vmem:[#allocation10 + $0x240] sm:$0xff]
    %v4078 = vld [vmem:[#allocation10 + $0x248] sm:$0xff]
    %v4079 = vld [vmem:[#allocation10 + $0x250] sm:$0xff]
    %v4080 = vld [vmem:[#allocation10 + $0x258] sm:$0xff]
    %v4081 = vld [vmem:[#allocation10 + $0x260] sm:$0xff]
    %v4082 = vld [vmem:[#allocation10 + $0x268] sm:$0xff]
    %v4083 = vld [vmem:[#allocation10 + $0x270] sm:$0xff]
    %v4084 = vld [vmem:[#allocation10 + $0x278] sm:$0xff]
    %v4085 = vld [vmem:[#allocation10 + $0x280] sm:$0xff]
    %v4086 = vld [vmem:[#allocation10 + $0x288] sm:$0xff]
    %v4087 = vld [vmem:[#allocation10 + $0x290] sm:$0xff]
    %v4088 = vld [vmem:[#allocation10 + $0x298] sm:$0xff]
    %v4089 = vld [vmem:[#allocation10 + $0x2a0] sm:$0xff]
    %v4090 = vld [vmem:[#allocation10 + $0x2a8] sm:$0xff]
    %v4091 = vld [vmem:[#allocation10 + $0x2b0] sm:$0xff]
    %v4092 = vld [vmem:[#allocation10 + $0x2b8] sm:$0xff]
    %v4093 = vld [vmem:[#allocation10 + $0x2c0] sm:$0xff]
    %v4094 = vld [vmem:[#allocation10 + $0x2c8] sm:$0xff]
    %v4095 = vld [vmem:[#allocation10 + $0x2d0] sm:$0xff]
    %v4096 = vld [vmem:[#allocation10 + $0x2d8] sm:$0xff]
    %v4097 = vld [vmem:[#allocation10 + $0x2e0] sm:$0xff]
    %v4098 = vld [vmem:[#allocation10 + $0x2e8] sm:$0xff]
    %v4099 = vld [vmem:[#allocation10 + $0x2f0] sm:$0xff]
    %v4100 = vld [vmem:[#allocation10 + $0x2f8] sm:$0xff]
    %v4101 = vld [vmem:[#allocation10 + $0x300] sm:$0xff]
    %v4102 = vld [vmem:[#allocation10 + $0x308] sm:$0xff]
    %v4103 = vld [vmem:[#allocation10 + $0x310] sm:$0xff]
    %v4104 = vld [vmem:[#allocation10 + $0x318] sm:$0xff]
    %v4105 = vld [vmem:[#allocation10 + $0x320] sm:$0xff]
    %v4106 = vld [vmem:[#allocation10 + $0x328] sm:$0xff]
    %v4107 = vld [vmem:[#allocation10 + $0x330] sm:$0xff]
    %v4108 = vld [vmem:[#allocation10 + $0x338] sm:$0xff]
    %v4109 = vld [vmem:[#allocation10 + $0x340] sm:$0xff]
    %v4110 = vld [vmem:[#allocation10 + $0x348] sm:$0xff]
    %v4111 = vld [vmem:[#allocation10 + $0x350] sm:$0xff]
    %v4112 = vld [vmem:[#allocation10 + $0x358] sm:$0xff]
    %v4113 = vld [vmem:[#allocation10 + $0x360] sm:$0xff]
    %v4114 = vld [vmem:[#allocation10 + $0x368] sm:$0xff]
    %v4115 = vld [vmem:[#allocation10 + $0x370] sm:$0xff]
    %v4116 = vld [vmem:[#allocation10 + $0x378] sm:$0xff]
    %v4117 = vld [vmem:[#allocation10 + $0x380] sm:$0xff]
    %v4118 = vld [vmem:[#allocation10 + $0x388] sm:$0xff]
    %v4119 = vld [vmem:[#allocation10 + $0x390] sm:$0xff]
    %v4120 = vld [vmem:[#allocation10 + $0x398] sm:$0xff]
    %v4121 = vld [vmem:[#allocation10 + $0x3a0] sm:$0xff]
    %v4122 = vld [vmem:[#allocation10 + $0x3a8] sm:$0xff]
    %v4123 = vld [vmem:[#allocation10 + $0x3b0] sm:$0xff]
    %v4124 = vld [vmem:[#allocation10 + $0x3b8] sm:$0xff]
    %v4125 = vld [vmem:[#allocation10 + $0x3c0] sm:$0xff]
    %v4126 = vld [vmem:[#allocation10 + $0x3c8] sm:$0xff]
    %v4127 = vld [vmem:[#allocation10 + $0x3d0] sm:$0xff]
    %v4128 = vld [vmem:[#allocation10 + $0x3d8] sm:$0xff]
    %v4129 = vld [vmem:[#allocation10 + $0x3e0] sm:$0xff]
    %v4130 = vld [vmem:[#allocation10 + $0x3e8] sm:$0xff]
    %v4131 = vld [vmem:[#allocation10 + $0x3f0] sm:$0xff]
    %v4132 = vld [vmem:[#allocation10 + $0x3f8] sm:$0xff]
    %v4133 = vld [vmem:[%s6] sm:$0xf]
    %v4135 = vlaneseq
    %v4136 = vshrl.u32 %v4135, 7
    %v4137 = vsub.s32 0, %v4136
    %v4138 = vrot.slane %v4133, %v4137
    %v4139 = vlaneseq
    %v4140 = vshrl.u32 %v4139, 7
    %v4141 = vsub.s32 1, %v4140
    %v4142 = vrot.slane %v4133, %v4141
    %v4143 = vlaneseq
    %v4144 = vshrl.u32 %v4143, 7
    %v4145 = vsub.s32 2, %v4144
    %v4146 = vrot.slane %v4133, %v4145
    %v4147 = vlaneseq
    %v4148 = vshrl.u32 %v4147, 7
    %v4149 = vsub.s32 3, %v4148
    %v4150 = vrot.slane %v4133, %v4149
    %v4283 = vunpack.c.l.b16 %v4005
    %v4284 = vunpack.c.h.b16 %v4005
    %v4285 = vunpack.c.l.b16 %v4006
    %v4286 = vunpack.c.h.b16 %v4006
    %v4287 = vunpack.c.l.b16 %v4007
    %v4288 = vunpack.c.h.b16 %v4007
    %v4289 = vunpack.c.l.b16 %v4008
    %v4290 = vunpack.c.h.b16 %v4008
    %v4291 = vunpack.c.l.b16 %v4009
    %v4292 = vunpack.c.h.b16 %v4009
    %v4293 = vunpack.c.l.b16 %v4010
    %v4294 = vunpack.c.h.b16 %v4010
    %v4295 = vunpack.c.l.b16 %v4011
    %v4296 = vunpack.c.h.b16 %v4011
    %v4297 = vunpack.c.l.b16 %v4012
    %v4298 = vunpack.c.h.b16 %v4012
    %v4299 = vunpack.c.l.b16 %v4013
    %v4300 = vunpack.c.h.b16 %v4013
    %v4301 = vunpack.c.l.b16 %v4014
    %v4302 = vunpack.c.h.b16 %v4014
    %v4303 = vunpack.c.l.b16 %v4015
    %v4304 = vunpack.c.h.b16 %v4015
    %v4305 = vunpack.c.l.b16 %v4016
    %v4306 = vunpack.c.h.b16 %v4016
    %v4307 = vunpack.c.l.b16 %v4017
    %v4308 = vunpack.c.h.b16 %v4017
    %v4309 = vunpack.c.l.b16 %v4018
    %v4310 = vunpack.c.h.b16 %v4018
    %v4311 = vunpack.c.l.b16 %v4019
    %v4312 = vunpack.c.h.b16 %v4019
    %v4313 = vunpack.c.l.b16 %v4020
    %v4314 = vunpack.c.h.b16 %v4020
    %v4315 = vunpack.c.l.b16 %v4021
    %v4316 = vunpack.c.h.b16 %v4021
    %v4317 = vunpack.c.l.b16 %v4022
    %v4318 = vunpack.c.h.b16 %v4022
    %v4319 = vunpack.c.l.b16 %v4023
    %v4320 = vunpack.c.h.b16 %v4023
    %v4321 = vunpack.c.l.b16 %v4024
    %v4322 = vunpack.c.h.b16 %v4024
    %v4323 = vunpack.c.l.b16 %v4025
    %v4324 = vunpack.c.h.b16 %v4025
    %v4325 = vunpack.c.l.b16 %v4026
    %v4326 = vunpack.c.h.b16 %v4026
    %v4327 = vunpack.c.l.b16 %v4027
    %v4328 = vunpack.c.h.b16 %v4027
    %v4329 = vunpack.c.l.b16 %v4028
    %v4330 = vunpack.c.h.b16 %v4028
    %v4331 = vunpack.c.l.b16 %v4029
    %v4332 = vunpack.c.h.b16 %v4029
    %v4333 = vunpack.c.l.b16 %v4030
    %v4334 = vunpack.c.h.b16 %v4030
    %v4335 = vunpack.c.l.b16 %v4031
    %v4336 = vunpack.c.h.b16 %v4031
    %v4337 = vunpack.c.l.b16 %v4032
    %v4338 = vunpack.c.h.b16 %v4032
    %v4339 = vunpack.c.l.b16 %v4033
    %v4340 = vunpack.c.h.b16 %v4033
    %v4341 = vunpack.c.l.b16 %v4034
    %v4342 = vunpack.c.h.b16 %v4034
    %v4343 = vunpack.c.l.b16 %v4035
    %v4344 = vunpack.c.h.b16 %v4035
    %v4345 = vunpack.c.l.b16 %v4036
    %v4346 = vunpack.c.h.b16 %v4036
    %v4347 = vunpack.c.l.b16 %v4037
    %v4348 = vunpack.c.h.b16 %v4037
    %v4349 = vunpack.c.l.b16 %v4038
    %v4350 = vunpack.c.h.b16 %v4038
    %v4351 = vunpack.c.l.b16 %v4039
    %v4352 = vunpack.c.h.b16 %v4039
    %v4353 = vunpack.c.l.b16 %v4040
    %v4354 = vunpack.c.h.b16 %v4040
    %v4355 = vunpack.c.l.b16 %v4041
    %v4356 = vunpack.c.h.b16 %v4041
    %v4357 = vunpack.c.l.b16 %v4042
    %v4358 = vunpack.c.h.b16 %v4042
    %v4359 = vunpack.c.l.b16 %v4043
    %v4360 = vunpack.c.h.b16 %v4043
    %v4361 = vunpack.c.l.b16 %v4044
    %v4362 = vunpack.c.h.b16 %v4044
    %v4363 = vunpack.c.l.b16 %v4045
    %v4364 = vunpack.c.h.b16 %v4045
    %v4365 = vunpack.c.l.b16 %v4046
    %v4366 = vunpack.c.h.b16 %v4046
    %v4367 = vunpack.c.l.b16 %v4047
    %v4368 = vunpack.c.h.b16 %v4047
    %v4369 = vunpack.c.l.b16 %v4048
    %v4370 = vunpack.c.h.b16 %v4048
    %v4371 = vunpack.c.l.b16 %v4049
    %v4372 = vunpack.c.h.b16 %v4049
    %v4373 = vunpack.c.l.b16 %v4050
    %v4374 = vunpack.c.h.b16 %v4050
    %v4375 = vunpack.c.l.b16 %v4051
    %v4376 = vunpack.c.h.b16 %v4051
    %v4377 = vunpack.c.l.b16 %v4052
    %v4378 = vunpack.c.h.b16 %v4052
    %v4379 = vunpack.c.l.b16 %v4053
    %v4380 = vunpack.c.h.b16 %v4053
    %v4381 = vunpack.c.l.b16 %v4054
    %v4382 = vunpack.c.h.b16 %v4054
    %v4383 = vunpack.c.l.b16 %v4055
    %v4384 = vunpack.c.h.b16 %v4055
    %v4385 = vunpack.c.l.b16 %v4056
    %v4386 = vunpack.c.h.b16 %v4056
    %v4387 = vunpack.c.l.b16 %v4057
    %v4388 = vunpack.c.h.b16 %v4057
    %v4389 = vunpack.c.l.b16 %v4058
    %v4390 = vunpack.c.h.b16 %v4058
    %v4391 = vunpack.c.l.b16 %v4059
    %v4392 = vunpack.c.h.b16 %v4059
    %v4393 = vunpack.c.l.b16 %v4060
    %v4394 = vunpack.c.h.b16 %v4060
    %v4395 = vunpack.c.l.b16 %v4061
    %v4396 = vunpack.c.h.b16 %v4061
    %v4397 = vunpack.c.l.b16 %v4062
    %v4398 = vunpack.c.h.b16 %v4062
    %v4399 = vunpack.c.l.b16 %v4063
    %v4400 = vunpack.c.h.b16 %v4063
    %v4401 = vunpack.c.l.b16 %v4064
    %v4402 = vunpack.c.h.b16 %v4064
    %v4403 = vunpack.c.l.b16 %v4065
    %v4404 = vunpack.c.h.b16 %v4065
    %v4405 = vunpack.c.l.b16 %v4066
    %v4406 = vunpack.c.h.b16 %v4066
    %v4407 = vunpack.c.l.b16 %v4067
    %v4408 = vunpack.c.h.b16 %v4067
    %v4409 = vunpack.c.l.b16 %v4068
    %v4410 = vunpack.c.h.b16 %v4068
    %v4411 = vunpack.c.l.b16 %v4069
    %v4412 = vunpack.c.h.b16 %v4069
    %v4413 = vunpack.c.l.b16 %v4070
    %v4414 = vunpack.c.h.b16 %v4070
    %v4415 = vunpack.c.l.b16 %v4071
    %v4416 = vunpack.c.h.b16 %v4071
    %v4417 = vunpack.c.l.b16 %v4072
    %v4418 = vunpack.c.h.b16 %v4072
    %v4419 = vunpack.c.l.b16 %v4073
    %v4420 = vunpack.c.h.b16 %v4073
    %v4421 = vunpack.c.l.b16 %v4074
    %v4422 = vunpack.c.h.b16 %v4074
    %v4423 = vunpack.c.l.b16 %v4075
    %v4424 = vunpack.c.h.b16 %v4075
    %v4425 = vunpack.c.l.b16 %v4076
    %v4426 = vunpack.c.h.b16 %v4076
    %v4427 = vunpack.c.l.b16 %v4077
    %v4428 = vunpack.c.h.b16 %v4077
    %v4429 = vunpack.c.l.b16 %v4078
    %v4430 = vunpack.c.h.b16 %v4078
    %v4431 = vunpack.c.l.b16 %v4079
    %v4432 = vunpack.c.h.b16 %v4079
    %v4433 = vunpack.c.l.b16 %v4080
    %v4434 = vunpack.c.h.b16 %v4080
    %v4435 = vunpack.c.l.b16 %v4081
    %v4436 = vunpack.c.h.b16 %v4081
    %v4437 = vunpack.c.l.b16 %v4082
    %v4438 = vunpack.c.h.b16 %v4082
    %v4439 = vunpack.c.l.b16 %v4083
    %v4440 = vunpack.c.h.b16 %v4083
    %v4441 = vunpack.c.l.b16 %v4084
    %v4442 = vunpack.c.h.b16 %v4084
    %v4443 = vunpack.c.l.b16 %v4085
    %v4444 = vunpack.c.h.b16 %v4085
    %v4445 = vunpack.c.l.b16 %v4086
    %v4446 = vunpack.c.h.b16 %v4086
    %v4447 = vunpack.c.l.b16 %v4087
    %v4448 = vunpack.c.h.b16 %v4087
    %v4449 = vunpack.c.l.b16 %v4088
    %v4450 = vunpack.c.h.b16 %v4088
    %v4451 = vunpack.c.l.b16 %v4089
    %v4452 = vunpack.c.h.b16 %v4089
    %v4453 = vunpack.c.l.b16 %v4090
    %v4454 = vunpack.c.h.b16 %v4090
    %v4455 = vunpack.c.l.b16 %v4091
    %v4456 = vunpack.c.h.b16 %v4091
    %v4457 = vunpack.c.l.b16 %v4092
    %v4458 = vunpack.c.h.b16 %v4092
    %v4459 = vunpack.c.l.b16 %v4093
    %v4460 = vunpack.c.h.b16 %v4093
    %v4461 = vunpack.c.l.b16 %v4094
    %v4462 = vunpack.c.h.b16 %v4094
    %v4463 = vunpack.c.l.b16 %v4095
    %v4464 = vunpack.c.h.b16 %v4095
    %v4465 = vunpack.c.l.b16 %v4096
    %v4466 = vunpack.c.h.b16 %v4096
    %v4467 = vunpack.c.l.b16 %v4097
    %v4468 = vunpack.c.h.b16 %v4097
    %v4469 = vunpack.c.l.b16 %v4098
    %v4470 = vunpack.c.h.b16 %v4098
    %v4471 = vunpack.c.l.b16 %v4099
    %v4472 = vunpack.c.h.b16 %v4099
    %v4473 = vunpack.c.l.b16 %v4100
    %v4474 = vunpack.c.h.b16 %v4100
    %v4475 = vunpack.c.l.b16 %v4101
    %v4476 = vunpack.c.h.b16 %v4101
    %v4477 = vunpack.c.l.b16 %v4102
    %v4478 = vunpack.c.h.b16 %v4102
    %v4479 = vunpack.c.l.b16 %v4103
    %v4480 = vunpack.c.h.b16 %v4103
    %v4481 = vunpack.c.l.b16 %v4104
    %v4482 = vunpack.c.h.b16 %v4104
    %v4483 = vunpack.c.l.b16 %v4105
    %v4484 = vunpack.c.h.b16 %v4105
    %v4485 = vunpack.c.l.b16 %v4106
    %v4486 = vunpack.c.h.b16 %v4106
    %v4487 = vunpack.c.l.b16 %v4107
    %v4488 = vunpack.c.h.b16 %v4107
    %v4489 = vunpack.c.l.b16 %v4108
    %v4490 = vunpack.c.h.b16 %v4108
    %v4491 = vunpack.c.l.b16 %v4109
    %v4492 = vunpack.c.h.b16 %v4109
    %v4493 = vunpack.c.l.b16 %v4110
    %v4494 = vunpack.c.h.b16 %v4110
    %v4495 = vunpack.c.l.b16 %v4111
    %v4496 = vunpack.c.h.b16 %v4111
    %v4497 = vunpack.c.l.b16 %v4112
    %v4498 = vunpack.c.h.b16 %v4112
    %v4499 = vunpack.c.l.b16 %v4113
    %v4500 = vunpack.c.h.b16 %v4113
    %v4501 = vunpack.c.l.b16 %v4114
    %v4502 = vunpack.c.h.b16 %v4114
    %v4503 = vunpack.c.l.b16 %v4115
    %v4504 = vunpack.c.h.b16 %v4115
    %v4505 = vunpack.c.l.b16 %v4116
    %v4506 = vunpack.c.h.b16 %v4116
    %v4507 = vunpack.c.l.b16 %v4117
    %v4508 = vunpack.c.h.b16 %v4117
    %v4509 = vunpack.c.l.b16 %v4118
    %v4510 = vunpack.c.h.b16 %v4118
    %v4511 = vunpack.c.l.b16 %v4119
    %v4512 = vunpack.c.h.b16 %v4119
    %v4513 = vunpack.c.l.b16 %v4120
    %v4514 = vunpack.c.h.b16 %v4120
    %v4515 = vunpack.c.l.b16 %v4121
    %v4516 = vunpack.c.h.b16 %v4121
    %v4517 = vunpack.c.l.b16 %v4122
    %v4518 = vunpack.c.h.b16 %v4122
    %v4519 = vunpack.c.l.b16 %v4123
    %v4520 = vunpack.c.h.b16 %v4123
    %v4521 = vunpack.c.l.b16 %v4124
    %v4522 = vunpack.c.h.b16 %v4124
    %v4523 = vunpack.c.l.b16 %v4125
    %v4524 = vunpack.c.h.b16 %v4125
    %v4525 = vunpack.c.l.b16 %v4126
    %v4526 = vunpack.c.h.b16 %v4126
    %v4527 = vunpack.c.l.b16 %v4127
    %v4528 = vunpack.c.h.b16 %v4127
    %v4529 = vunpack.c.l.b16 %v4128
    %v4530 = vunpack.c.h.b16 %v4128
    %v4531 = vunpack.c.l.b16 %v4129
    %v4532 = vunpack.c.h.b16 %v4129
    %v4533 = vunpack.c.l.b16 %v4130
    %v4534 = vunpack.c.h.b16 %v4130
    %v4535 = vunpack.c.l.b16 %v4131
    %v4536 = vunpack.c.h.b16 %v4131
    %v4537 = vunpack.c.l.b16 %v4132
    %v4538 = vunpack.c.h.b16 %v4132
    %v4539 = vpack.c.b16 %v4287, %v4283
    %v4540 = vpack.c.b16 %v4288, %v4284
    %v4541 = vpack.c.b16 %v4289, %v4285
    %v4542 = vpack.c.b16 %v4290, %v4286
    %v4543 = vpack.c.b16 %v4295, %v4291
    %v4544 = vpack.c.b16 %v4296, %v4292
    %v4545 = vpack.c.b16 %v4297, %v4293
    %v4546 = vpack.c.b16 %v4298, %v4294
    %v4547 = vpack.c.b16 %v4303, %v4299
    %v4548 = vpack.c.b16 %v4304, %v4300
    %v4549 = vpack.c.b16 %v4305, %v4301
    %v4550 = vpack.c.b16 %v4306, %v4302
    %v4551 = vpack.c.b16 %v4311, %v4307
    %v4552 = vpack.c.b16 %v4312, %v4308
    %v4553 = vpack.c.b16 %v4313, %v4309
    %v4554 = vpack.c.b16 %v4314, %v4310
    %v4555 = vpack.c.b16 %v4319, %v4315
    %v4556 = vpack.c.b16 %v4320, %v4316
    %v4557 = vpack.c.b16 %v4321, %v4317
    %v4558 = vpack.c.b16 %v4322, %v4318
    %v4559 = vpack.c.b16 %v4327, %v4323
    %v4560 = vpack.c.b16 %v4328, %v4324
    %v4561 = vpack.c.b16 %v4329, %v4325
    %v4562 = vpack.c.b16 %v4330, %v4326
    %v4563 = vpack.c.b16 %v4335, %v4331
    %v4564 = vpack.c.b16 %v4336, %v4332
    %v4565 = vpack.c.b16 %v4337, %v4333
    %v4566 = vpack.c.b16 %v4338, %v4334
    %v4567 = vpack.c.b16 %v4343, %v4339
    %v4568 = vpack.c.b16 %v4344, %v4340
    %v4569 = vpack.c.b16 %v4345, %v4341
    %v4570 = vpack.c.b16 %v4346, %v4342
    %v4571 = vpack.c.b16 %v4351, %v4347
    %v4572 = vpack.c.b16 %v4352, %v4348
    %v4573 = vpack.c.b16 %v4353, %v4349
    %v4574 = vpack.c.b16 %v4354, %v4350
    %v4575 = vpack.c.b16 %v4359, %v4355
    %v4576 = vpack.c.b16 %v4360, %v4356
    %v4577 = vpack.c.b16 %v4361, %v4357
    %v4578 = vpack.c.b16 %v4362, %v4358
    %v4579 = vpack.c.b16 %v4367, %v4363
    %v4580 = vpack.c.b16 %v4368, %v4364
    %v4581 = vpack.c.b16 %v4369, %v4365
    %v4582 = vpack.c.b16 %v4370, %v4366
    %v4583 = vpack.c.b16 %v4375, %v4371
    %v4584 = vpack.c.b16 %v4376, %v4372
    %v4585 = vpack.c.b16 %v4377, %v4373
    %v4586 = vpack.c.b16 %v4378, %v4374
    %v4587 = vpack.c.b16 %v4383, %v4379
    %v4588 = vpack.c.b16 %v4384, %v4380
    %v4589 = vpack.c.b16 %v4385, %v4381
    %v4590 = vpack.c.b16 %v4386, %v4382
    %v4591 = vpack.c.b16 %v4391, %v4387
    %v4592 = vpack.c.b16 %v4392, %v4388
    %v4593 = vpack.c.b16 %v4393, %v4389
    %v4594 = vpack.c.b16 %v4394, %v4390
    %v4595 = vpack.c.b16 %v4399, %v4395
    %v4596 = vpack.c.b16 %v4400, %v4396
    %v4597 = vpack.c.b16 %v4401, %v4397
    %v4598 = vpack.c.b16 %v4402, %v4398
    %v4599 = vpack.c.b16 %v4407, %v4403
    %v4600 = vpack.c.b16 %v4408, %v4404
    %v4601 = vpack.c.b16 %v4409, %v4405
    %v4602 = vpack.c.b16 %v4410, %v4406
    %v4603 = vpack.c.b16 %v4415, %v4411
    %v4604 = vpack.c.b16 %v4416, %v4412
    %v4605 = vpack.c.b16 %v4417, %v4413
    %v4606 = vpack.c.b16 %v4418, %v4414
    %v4607 = vpack.c.b16 %v4423, %v4419
    %v4608 = vpack.c.b16 %v4424, %v4420
    %v4609 = vpack.c.b16 %v4425, %v4421
    %v4610 = vpack.c.b16 %v4426, %v4422
    %v4611 = vpack.c.b16 %v4431, %v4427
    %v4612 = vpack.c.b16 %v4432, %v4428
    %v4613 = vpack.c.b16 %v4433, %v4429
    %v4614 = vpack.c.b16 %v4434, %v4430
    %v4615 = vpack.c.b16 %v4439, %v4435
    %v4616 = vpack.c.b16 %v4440, %v4436
    %v4617 = vpack.c.b16 %v4441, %v4437
    %v4618 = vpack.c.b16 %v4442, %v4438
    %v4619 = vpack.c.b16 %v4447, %v4443
    %v4620 = vpack.c.b16 %v4448, %v4444
    %v4621 = vpack.c.b16 %v4449, %v4445
    %v4622 = vpack.c.b16 %v4450, %v4446
    %v4623 = vpack.c.b16 %v4455, %v4451
    %v4624 = vpack.c.b16 %v4456, %v4452
    %v4625 = vpack.c.b16 %v4457, %v4453
    %v4626 = vpack.c.b16 %v4458, %v4454
    %v4627 = vpack.c.b16 %v4463, %v4459
    %v4628 = vpack.c.b16 %v4464, %v4460
    %v4629 = vpack.c.b16 %v4465, %v4461
    %v4630 = vpack.c.b16 %v4466, %v4462
    %v4631 = vpack.c.b16 %v4471, %v4467
    %v4632 = vpack.c.b16 %v4472, %v4468
    %v4633 = vpack.c.b16 %v4473, %v4469
    %v4634 = vpack.c.b16 %v4474, %v4470
    %v4635 = vpack.c.b16 %v4479, %v4475
    %v4636 = vpack.c.b16 %v4480, %v4476
    %v4637 = vpack.c.b16 %v4481, %v4477
    %v4638 = vpack.c.b16 %v4482, %v4478
    %v4639 = vpack.c.b16 %v4487, %v4483
    %v4640 = vpack.c.b16 %v4488, %v4484
    %v4641 = vpack.c.b16 %v4489, %v4485
    %v4642 = vpack.c.b16 %v4490, %v4486
    %v4643 = vpack.c.b16 %v4495, %v4491
    %v4644 = vpack.c.b16 %v4496, %v4492
    %v4645 = vpack.c.b16 %v4497, %v4493
    %v4646 = vpack.c.b16 %v4498, %v4494
    %v4647 = vpack.c.b16 %v4503, %v4499
    %v4648 = vpack.c.b16 %v4504, %v4500
    %v4649 = vpack.c.b16 %v4505, %v4501
    %v4650 = vpack.c.b16 %v4506, %v4502
    %v4651 = vpack.c.b16 %v4511, %v4507
    %v4652 = vpack.c.b16 %v4512, %v4508
    %v4653 = vpack.c.b16 %v4513, %v4509
    %v4654 = vpack.c.b16 %v4514, %v4510
    %v4655 = vpack.c.b16 %v4519, %v4515
    %v4656 = vpack.c.b16 %v4520, %v4516
    %v4657 = vpack.c.b16 %v4521, %v4517
    %v4658 = vpack.c.b16 %v4522, %v4518
    %v4659 = vpack.c.b16 %v4527, %v4523
    %v4660 = vpack.c.b16 %v4528, %v4524
    %v4661 = vpack.c.b16 %v4529, %v4525
    %v4662 = vpack.c.b16 %v4530, %v4526
    %v4663 = vpack.c.b16 %v4535, %v4531
    %v4664 = vpack.c.b16 %v4536, %v4532
    %v4665 = vpack.c.b16 %v4537, %v4533
    %v4666 = vpack.c.b16 %v4538, %v4534
    %4795 = vmatprep.subr.bf16.mxu0 %v4540
    %4796 = vmatpush1.bf16.msra.mxu0 %v4539
    %4797 = vmatprep.subr.bf16.mxu0 %v4544
    %4798 = vmatpush1.bf16.msra.mxu0 %v4543
    %4799 = vmatprep.subr.bf16.mxu0 %v4548
    %4800 = vmatpush1.bf16.msra.mxu0 %v4547
    %4801 = vmatprep.subr.bf16.mxu0 %v4552
    %4802 = vmatpush1.bf16.msra.mxu0 %v4551
    %4803 = vmatprep.subr.bf16.mxu0 %v4556
    %4804 = vmatpush1.bf16.msra.mxu0 %v4555
    %4805 = vmatprep.subr.bf16.mxu0 %v4560
    %4806 = vmatpush1.bf16.msra.mxu0 %v4559
    %4807 = vmatprep.subr.bf16.mxu0 %v4564
    %4808 = vmatpush1.bf16.msra.mxu0 %v4563
    %4809 = vmatprep.subr.bf16.mxu0 %v4568
    %4810 = vmatpush1.bf16.msra.mxu0 %v4567
    %4811 = vmatprep.subr.bf16.mxu0 %v4572
    %4812 = vmatpush1.bf16.msra.mxu0 %v4571
    %4813 = vmatprep.subr.bf16.mxu0 %v4576
    %4814 = vmatpush1.bf16.msra.mxu0 %v4575
    %4815 = vmatprep.subr.bf16.mxu0 %v4580
    %4816 = vmatpush1.bf16.msra.mxu0 %v4579
    %4817 = vmatprep.subr.bf16.mxu0 %v4584
    %4818 = vmatpush1.bf16.msra.mxu0 %v4583
    %4819 = vmatprep.subr.bf16.mxu0 %v4588
    %4820 = vmatpush1.bf16.msra.mxu0 %v4587
    %4821 = vmatprep.subr.bf16.mxu0 %v4592
    %4822 = vmatpush1.bf16.msra.mxu0 %v4591
    %4823 = vmatprep.subr.bf16.mxu0 %v4596
    %4824 = vmatpush1.bf16.msra.mxu0 %v4595
    %4825 = vmatprep.subr.bf16.mxu0 %v4600
    %4826 = vmatpush1.bf16.msra.mxu0 %v4599
    %4827 = vmatprep.mubr.bf16.mxu0 %v4002
    %4828 = vmatmul.mubr.bf16.gmra.mrb[0].mxu0 %v4001
    %v4829 = vpop.f32.mrb[0].mxu0
    %v4830 = vadd.f32 %v4138, %v4829
    %v4831 = vpop.f32.mrb[0].mxu0
    %v4832 = vadd.f32 %v4142, %v4831
    %v4833 = vpop.f32.mrb[0].mxu0
    %v4834 = vadd.f32 %v4138, %v4833
    %v4835 = vpop.f32.mrb[0].mxu0
    %v4836 = vadd.f32 %v4142, %v4835
    %4837 = vdwg.mxu0
    %4838 = vmatprep.subr.bf16.mxu0 %v4604
    %4839 = vmatpush1.bf16.msra.mxu0 %v4603
    %4840 = vmatprep.subr.bf16.mxu0 %v4608
    %4841 = vmatpush1.bf16.msra.mxu0 %v4607
    %4842 = vmatprep.subr.bf16.mxu0 %v4612
    %4843 = vmatpush1.bf16.msra.mxu0 %v4611
    %4844 = vmatprep.subr.bf16.mxu0 %v4616
    %4845 = vmatpush1.bf16.msra.mxu0 %v4615
    %4846 = vmatprep.subr.bf16.mxu0 %v4620
    %4847 = vmatpush1.bf16.msra.mxu0 %v4619
    %4848 = vmatprep.subr.bf16.mxu0 %v4624
    %4849 = vmatpush1.bf16.msra.mxu0 %v4623
    %4850 = vmatprep.subr.bf16.mxu0 %v4628
    %4851 = vmatpush1.bf16.msra.mxu0 %v4627
    %4852 = vmatprep.subr.bf16.mxu0 %v4632
    %4853 = vmatpush1.bf16.msra.mxu0 %v4631
    %4854 = vmatprep.subr.bf16.mxu0 %v4636
    %4855 = vmatpush1.bf16.msra.mxu0 %v4635
    %4856 = vmatprep.subr.bf16.mxu0 %v4640
    %4857 = vmatpush1.bf16.msra.mxu0 %v4639
    %4858 = vmatprep.subr.bf16.mxu0 %v4644
    %4859 = vmatpush1.bf16.msra.mxu0 %v4643
    %4860 = vmatprep.subr.bf16.mxu0 %v4648
    %4861 = vmatpush1.bf16.msra.mxu0 %v4647
    %4862 = vmatprep.subr.bf16.mxu0 %v4652
    %4863 = vmatpush1.bf16.msra.mxu0 %v4651
    %4864 = vmatprep.subr.bf16.mxu0 %v4656
    %4865 = vmatpush1.bf16.msra.mxu0 %v4655
    %4866 = vmatprep.subr.bf16.mxu0 %v4660
    %4867 = vmatpush1.bf16.msra.mxu0 %v4659
    %4868 = vmatprep.subr.bf16.mxu0 %v4664
    %4869 = vmatpush1.bf16.msra.mxu0 %v4663
    %4870 = vmatprep.mubr.bf16.mxu0 %v4004
    %4871 = vmatmul.mubr.bf16.gmra.mrb[0].mxu0 %v4003
    %v4872 = vpop.f32.mrb[0].mxu0
    %v4873 = vadd.f32 %v4830, %v4872
    %v4874 = vpop.f32.mrb[0].mxu0
    %v4875 = vadd.f32 %v4832, %v4874
    %v4876 = vpop.f32.mrb[0].mxu0
    %v4877 = vadd.f32 %v4834, %v4876
    %v4878 = vpop.f32.mrb[0].mxu0
    %v4879 = vadd.f32 %v4836, %v4878
    %4880 = vdwg.mxu0
    %4881 = vmatprep.subr.bf16.mxu0 %v4542
    %4882 = vmatpush1.bf16.msra.mxu0 %v4541
    %4883 = vmatprep.subr.bf16.mxu0 %v4546
    %4884 = vmatpush1.bf16.msra.mxu0 %v4545
    %4885 = vmatprep.subr.bf16.mxu0 %v4550
    %4886 = vmatpush1.bf16.msra.mxu0 %v4549
    %4887 = vmatprep.subr.bf16.mxu0 %v4554
    %4888 = vmatpush1.bf16.msra.mxu0 %v4553
    %4889 = vmatprep.subr.bf16.mxu0 %v4558
    %4890 = vmatpush1.bf16.msra.mxu0 %v4557
    %4891 = vmatprep.subr.bf16.mxu0 %v4562
    %4892 = vmatpush1.bf16.msra.mxu0 %v4561
    %4893 = vmatprep.subr.bf16.mxu0 %v4566
    %4894 = vmatpush1.bf16.msra.mxu0 %v4565
    %4895 = vmatprep.subr.bf16.mxu0 %v4570
    %4896 = vmatpush1.bf16.msra.mxu0 %v4569
    %4897 = vmatprep.subr.bf16.mxu0 %v4574
    %4898 = vmatpush1.bf16.msra.mxu0 %v4573
    %4899 = vmatprep.subr.bf16.mxu0 %v4578
    %4900 = vmatpush1.bf16.msra.mxu0 %v4577
    %4901 = vmatprep.subr.bf16.mxu0 %v4582
    %4902 = vmatpush1.bf16.msra.mxu0 %v4581
    %4903 = vmatprep.subr.bf16.mxu0 %v4586
    %4904 = vmatpush1.bf16.msra.mxu0 %v4585
    %4905 = vmatprep.subr.bf16.mxu0 %v4590
    %4906 = vmatpush1.bf16.msra.mxu0 %v4589
    %4907 = vmatprep.subr.bf16.mxu0 %v4594
    %4908 = vmatpush1.bf16.msra.mxu0 %v4593
    %4909 = vmatprep.subr.bf16.mxu0 %v4598
    %4910 = vmatpush1.bf16.msra.mxu0 %v4597
    %4911 = vmatprep.subr.bf16.mxu0 %v4602
    %4912 = vmatpush1.bf16.msra.mxu0 %v4601
    %4913 = vmatprep.mubr.bf16.mxu0 %v4002
    %4914 = vmatmul.mubr.bf16.gmra.mrb[0].mxu0 %v4001
    %v4915 = vpop.f32.mrb[0].mxu0
    %v4916 = vadd.f32 %v4146, %v4915
    %v4917 = vpop.f32.mrb[0].mxu0
    %v4918 = vadd.f32 %v4150, %v4917
    %v4919 = vpop.f32.mrb[0].mxu0
    %v4920 = vadd.f32 %v4146, %v4919
    %v4921 = vpop.f32.mrb[0].mxu0
    %v4922 = vadd.f32 %v4150, %v4921
    %4923 = vdwg.mxu0
    %4924 = vmatprep.subr.bf16.mxu0 %v4606
    %4925 = vmatpush1.bf16.msra.mxu0 %v4605
    %4926 = vmatprep.subr.bf16.mxu0 %v4610
    %4927 = vmatpush1.bf16.msra.mxu0 %v4609
    %4928 = vmatprep.subr.bf16.mxu0 %v4614
    %4929 = vmatpush1.bf16.msra.mxu0 %v4613
    %4930 = vmatprep.subr.bf16.mxu0 %v4618
    %4931 = vmatpush1.bf16.msra.mxu0 %v4617
    %4932 = vmatprep.subr.bf16.mxu0 %v4622
    %4933 = vmatpush1.bf16.msra.mxu0 %v4621
    %4934 = vmatprep.subr.bf16.mxu0 %v4626
    %4935 = vmatpush1.bf16.msra.mxu0 %v4625
    %4936 = vmatprep.subr.bf16.mxu0 %v4630
    %4937 = vmatpush1.bf16.msra.mxu0 %v4629
    %4938 = vmatprep.subr.bf16.mxu0 %v4634
    %4939 = vmatpush1.bf16.msra.mxu0 %v4633
    %4940 = vmatprep.subr.bf16.mxu0 %v4638
    %4941 = vmatpush1.bf16.msra.mxu0 %v4637
    %4942 = vmatprep.subr.bf16.mxu0 %v4642
    %4943 = vmatpush1.bf16.msra.mxu0 %v4641
    %4944 = vmatprep.subr.bf16.mxu0 %v4646
    %4945 = vmatpush1.bf16.msra.mxu0 %v4645
    %4946 = vmatprep.subr.bf16.mxu0 %v4650
    %4947 = vmatpush1.bf16.msra.mxu0 %v4649
    %4948 = vmatprep.subr.bf16.mxu0 %v4654
    %4949 = vmatpush1.bf16.msra.mxu0 %v4653
    %4950 = vmatprep.subr.bf16.mxu0 %v4658
    %4951 = vmatpush1.bf16.msra.mxu0 %v4657
    %4952 = vmatprep.subr.bf16.mxu0 %v4662
    %4953 = vmatpush1.bf16.msra.mxu0 %v4661
    %4954 = vmatprep.subr.bf16.mxu0 %v4666
    %4955 = vmatpush1.bf16.msra.mxu0 %v4665
    %4956 = vmatprep.mubr.bf16.mxu0 %v4004
    %4957 = vmatmul.mubr.bf16.gmra.mrb[0].mxu0 %v4003
    %v4958 = vpop.f32.mrb[0].mxu0
    %v4959 = vadd.f32 %v4916, %v4958
    %v4960 = vpop.f32.mrb[0].mxu0
    %v4961 = vadd.f32 %v4918, %v4960
    %v4962 = vpop.f32.mrb[0].mxu0
    %v4963 = vadd.f32 %v4920, %v4962
    %v4964 = vpop.f32.mrb[0].mxu0
    %v4965 = vadd.f32 %v4922, %v4964
    %4966 = vdwg.mxu0
    %v4967 = vmax.f32 %v4873, 0.0
    %v4968 = vmax.f32 %v4875, 0.0
    %v4969 = vmax.f32 %v4959, 0.0
    %v4970 = vmax.f32 %v4961, 0.0
    %v4971 = vmax.f32 %v4877, 0.0
    %v4972 = vmax.f32 %v4879, 0.0
    %v4973 = vmax.f32 %v4963, 0.0
    %v4974 = vmax.f32 %v4965, 0.0
    %v4975 = vpack.c.bf16 %v4971, %v4967
    %v4976 = vpack.c.bf16 %v4972, %v4968
    %v4977 = vpack.c.bf16 %v4973, %v4969
    %v4978 = vpack.c.bf16 %v4974, %v4970
    %v4979 = vld [vmem:[#allocation11] sm:$0xff]
    %v4980 = vld [vmem:[#allocation11 + $0x8] sm:$0xff]
    %v4981 = vld [vmem:[#allocation11 + $0x10] sm:$0xff]
    %v4982 = vld [vmem:[#allocation11 + $0x18] sm:$0xff]
    %v4983 = vld [vmem:[#allocation11 + $0x20] sm:$0xff]
    %v4984 = vld [vmem:[#allocation11 + $0x28] sm:$0xff]
    %v4985 = vld [vmem:[#allocation11 + $0x30] sm:$0xff]
    %v4986 = vld [vmem:[#allocation11 + $0x38] sm:$0xff]
    %v4987 = vld [vmem:[#allocation11 + $0x40] sm:$0xff]
    %v4988 = vld [vmem:[#allocation11 + $0x48] sm:$0xff]
    %v4989 = vld [vmem:[#allocation11 + $0x50] sm:$0xff]
    %v4990 = vld [vmem:[#allocation11 + $0x58] sm:$0xff]
    %v4991 = vld [vmem:[#allocation11 + $0x60] sm:$0xff]
    %v4992 = vld [vmem:[#allocation11 + $0x68] sm:$0xff]
    %v4993 = vld [vmem:[#allocation11 + $0x70] sm:$0xff]
    %v4994 = vld [vmem:[#allocation11 + $0x78] sm:$0xff]
    %v4995 = vld [vmem:[#allocation11 + $0x80] sm:$0xff]
    %v4996 = vld [vmem:[#allocation11 + $0x88] sm:$0xff]
    %v4997 = vld [vmem:[#allocation11 + $0x90] sm:$0xff]
    %v4998 = vld [vmem:[#allocation11 + $0x98] sm:$0xff]
    %v4999 = vld [vmem:[#allocation11 + $0xa0] sm:$0xff]
    %v5000 = vld [vmem:[#allocation11 + $0xa8] sm:$0xff]
    %v5001 = vld [vmem:[#allocation11 + $0xb0] sm:$0xff]
    %v5002 = vld [vmem:[#allocation11 + $0xb8] sm:$0xff]
    %v5003 = vld [vmem:[#allocation11 + $0xc0] sm:$0xff]
    %v5004 = vld [vmem:[#allocation11 + $0xc8] sm:$0xff]
    %v5005 = vld [vmem:[#allocation11 + $0xd0] sm:$0xff]
    %v5006 = vld [vmem:[#allocation11 + $0xd8] sm:$0xff]
    %v5007 = vld [vmem:[#allocation11 + $0xe0] sm:$0xff]
    %v5008 = vld [vmem:[#allocation11 + $0xe8] sm:$0xff]
    %v5009 = vld [vmem:[#allocation11 + $0xf0] sm:$0xff]
    %v5010 = vld [vmem:[#allocation11 + $0xf8] sm:$0xff]
    %v5011 = vld [vmem:[#allocation11 + $0x100] sm:$0xff]
    %v5012 = vld [vmem:[#allocation11 + $0x108] sm:$0xff]
    %v5013 = vld [vmem:[#allocation11 + $0x110] sm:$0xff]
    %v5014 = vld [vmem:[#allocation11 + $0x118] sm:$0xff]
    %v5015 = vld [vmem:[#allocation11 + $0x120] sm:$0xff]
    %v5016 = vld [vmem:[#allocation11 + $0x128] sm:$0xff]
    %v5017 = vld [vmem:[#allocation11 + $0x130] sm:$0xff]
    %v5018 = vld [vmem:[#allocation11 + $0x138] sm:$0xff]
    %v5019 = vld [vmem:[#allocation11 + $0x140] sm:$0xff]
    %v5020 = vld [vmem:[#allocation11 + $0x148] sm:$0xff]
    %v5021 = vld [vmem:[#allocation11 + $0x150] sm:$0xff]
    %v5022 = vld [vmem:[#allocation11 + $0x158] sm:$0xff]
    %v5023 = vld [vmem:[#allocation11 + $0x160] sm:$0xff]
    %v5024 = vld [vmem:[#allocation11 + $0x168] sm:$0xff]
    %v5025 = vld [vmem:[#allocation11 + $0x170] sm:$0xff]
    %v5026 = vld [vmem:[#allocation11 + $0x178] sm:$0xff]
    %v5027 = vld [vmem:[#allocation11 + $0x180] sm:$0xff]
    %v5028 = vld [vmem:[#allocation11 + $0x188] sm:$0xff]
    %v5029 = vld [vmem:[#allocation11 + $0x190] sm:$0xff]
    %v5030 = vld [vmem:[#allocation11 + $0x198] sm:$0xff]
    %v5031 = vld [vmem:[#allocation11 + $0x1a0] sm:$0xff]
    %v5032 = vld [vmem:[#allocation11 + $0x1a8] sm:$0xff]
    %v5033 = vld [vmem:[#allocation11 + $0x1b0] sm:$0xff]
    %v5034 = vld [vmem:[#allocation11 + $0x1b8] sm:$0xff]
    %v5035 = vld [vmem:[#allocation11 + $0x1c0] sm:$0xff]
    %v5036 = vld [vmem:[#allocation11 + $0x1c8] sm:$0xff]
    %v5037 = vld [vmem:[#allocation11 + $0x1d0] sm:$0xff]
    %v5038 = vld [vmem:[#allocation11 + $0x1d8] sm:$0xff]
    %v5039 = vld [vmem:[#allocation11 + $0x1e0] sm:$0xff]
    %v5040 = vld [vmem:[#allocation11 + $0x1e8] sm:$0xff]
    %v5041 = vld [vmem:[#allocation11 + $0x1f0] sm:$0xff]
    %v5042 = vld [vmem:[#allocation11 + $0x1f8] sm:$0xff]
    %v5043 = vld [vmem:[#allocation11 + $0x200] sm:$0xff]
    %v5044 = vld [vmem:[#allocation11 + $0x208] sm:$0xff]
    %v5045 = vld [vmem:[#allocation11 + $0x210] sm:$0xff]
    %v5046 = vld [vmem:[#allocation11 + $0x218] sm:$0xff]
    %v5047 = vld [vmem:[#allocation11 + $0x220] sm:$0xff]
    %v5048 = vld [vmem:[#allocation11 + $0x228] sm:$0xff]
    %v5049 = vld [vmem:[#allocation11 + $0x230] sm:$0xff]
    %v5050 = vld [vmem:[#allocation11 + $0x238] sm:$0xff]
    %v5051 = vld [vmem:[#allocation11 + $0x240] sm:$0xff]
    %v5052 = vld [vmem:[#allocation11 + $0x248] sm:$0xff]
    %v5053 = vld [vmem:[#allocation11 + $0x250] sm:$0xff]
    %v5054 = vld [vmem:[#allocation11 + $0x258] sm:$0xff]
    %v5055 = vld [vmem:[#allocation11 + $0x260] sm:$0xff]
    %v5056 = vld [vmem:[#allocation11 + $0x268] sm:$0xff]
    %v5057 = vld [vmem:[#allocation11 + $0x270] sm:$0xff]
    %v5058 = vld [vmem:[#allocation11 + $0x278] sm:$0xff]
    %v5059 = vld [vmem:[#allocation11 + $0x280] sm:$0xff]
    %v5060 = vld [vmem:[#allocation11 + $0x288] sm:$0xff]
    %v5061 = vld [vmem:[#allocation11 + $0x290] sm:$0xff]
    %v5062 = vld [vmem:[#allocation11 + $0x298] sm:$0xff]
    %v5063 = vld [vmem:[#allocation11 + $0x2a0] sm:$0xff]
    %v5064 = vld [vmem:[#allocation11 + $0x2a8] sm:$0xff]
    %v5065 = vld [vmem:[#allocation11 + $0x2b0] sm:$0xff]
    %v5066 = vld [vmem:[#allocation11 + $0x2b8] sm:$0xff]
    %v5067 = vld [vmem:[#allocation11 + $0x2c0] sm:$0xff]
    %v5068 = vld [vmem:[#allocation11 + $0x2c8] sm:$0xff]
    %v5069 = vld [vmem:[#allocation11 + $0x2d0] sm:$0xff]
    %v5070 = vld [vmem:[#allocation11 + $0x2d8] sm:$0xff]
    %v5071 = vld [vmem:[#allocation11 + $0x2e0] sm:$0xff]
    %v5072 = vld [vmem:[#allocation11 + $0x2e8] sm:$0xff]
    %v5073 = vld [vmem:[#allocation11 + $0x2f0] sm:$0xff]
    %v5074 = vld [vmem:[#allocation11 + $0x2f8] sm:$0xff]
    %v5075 = vld [vmem:[#allocation11 + $0x300] sm:$0xff]
    %v5076 = vld [vmem:[#allocation11 + $0x308] sm:$0xff]
    %v5077 = vld [vmem:[#allocation11 + $0x310] sm:$0xff]
    %v5078 = vld [vmem:[#allocation11 + $0x318] sm:$0xff]
    %v5079 = vld [vmem:[#allocation11 + $0x320] sm:$0xff]
    %v5080 = vld [vmem:[#allocation11 + $0x328] sm:$0xff]
    %v5081 = vld [vmem:[#allocation11 + $0x330] sm:$0xff]
    %v5082 = vld [vmem:[#allocation11 + $0x338] sm:$0xff]
    %v5083 = vld [vmem:[#allocation11 + $0x340] sm:$0xff]
    %v5084 = vld [vmem:[#allocation11 + $0x348] sm:$0xff]
    %v5085 = vld [vmem:[#allocation11 + $0x350] sm:$0xff]
    %v5086 = vld [vmem:[#allocation11 + $0x358] sm:$0xff]
    %v5087 = vld [vmem:[#allocation11 + $0x360] sm:$0xff]
    %v5088 = vld [vmem:[#allocation11 + $0x368] sm:$0xff]
    %v5089 = vld [vmem:[#allocation11 + $0x370] sm:$0xff]
    %v5090 = vld [vmem:[#allocation11 + $0x378] sm:$0xff]
    %v5091 = vld [vmem:[#allocation11 + $0x380] sm:$0xff]
    %v5092 = vld [vmem:[#allocation11 + $0x388] sm:$0xff]
    %v5093 = vld [vmem:[#allocation11 + $0x390] sm:$0xff]
    %v5094 = vld [vmem:[#allocation11 + $0x398] sm:$0xff]
    %v5095 = vld [vmem:[#allocation11 + $0x3a0] sm:$0xff]
    %v5096 = vld [vmem:[#allocation11 + $0x3a8] sm:$0xff]
    %v5097 = vld [vmem:[#allocation11 + $0x3b0] sm:$0xff]
    %v5098 = vld [vmem:[#allocation11 + $0x3b8] sm:$0xff]
    %v5099 = vld [vmem:[#allocation11 + $0x3c0] sm:$0xff]
    %v5100 = vld [vmem:[#allocation11 + $0x3c8] sm:$0xff]
    %v5101 = vld [vmem:[#allocation11 + $0x3d0] sm:$0xff]
    %v5102 = vld [vmem:[#allocation11 + $0x3d8] sm:$0xff]
    %v5103 = vld [vmem:[#allocation11 + $0x3e0] sm:$0xff]
    %v5104 = vld [vmem:[#allocation11 + $0x3e8] sm:$0xff]
    %v5105 = vld [vmem:[#allocation11 + $0x3f0] sm:$0xff]
    %v5106 = vld [vmem:[#allocation11 + $0x3f8] sm:$0xff]
    %v5107 = vld [vmem:[%s8] sm:$0xf]
    %v5109 = vlaneseq
    %v5110 = vshrl.u32 %v5109, 7
    %v5111 = vsub.s32 0, %v5110
    %v5112 = vrot.slane %v5107, %v5111
    %v5113 = vlaneseq
    %v5114 = vshrl.u32 %v5113, 7
    %v5115 = vsub.s32 1, %v5114
    %v5116 = vrot.slane %v5107, %v5115
    %v5117 = vlaneseq
    %v5118 = vshrl.u32 %v5117, 7
    %v5119 = vsub.s32 2, %v5118
    %v5120 = vrot.slane %v5107, %v5119
    %v5121 = vlaneseq
    %v5122 = vshrl.u32 %v5121, 7
    %v5123 = vsub.s32 3, %v5122
    %v5124 = vrot.slane %v5107, %v5123
    %v5257 = vunpack.c.l.b16 %v4979
    %v5258 = vunpack.c.h.b16 %v4979
    %v5259 = vunpack.c.l.b16 %v4980
    %v5260 = vunpack.c.h.b16 %v4980
    %v5261 = vunpack.c.l.b16 %v4981
    %v5262 = vunpack.c.h.b16 %v4981
    %v5263 = vunpack.c.l.b16 %v4982
    %v5264 = vunpack.c.h.b16 %v4982
    %v5265 = vunpack.c.l.b16 %v4983
    %v5266 = vunpack.c.h.b16 %v4983
    %v5267 = vunpack.c.l.b16 %v4984
    %v5268 = vunpack.c.h.b16 %v4984
    %v5269 = vunpack.c.l.b16 %v4985
    %v5270 = vunpack.c.h.b16 %v4985
    %v5271 = vunpack.c.l.b16 %v4986
    %v5272 = vunpack.c.h.b16 %v4986
    %v5273 = vunpack.c.l.b16 %v4987
    %v5274 = vunpack.c.h.b16 %v4987
    %v5275 = vunpack.c.l.b16 %v4988
    %v5276 = vunpack.c.h.b16 %v4988
    %v5277 = vunpack.c.l.b16 %v4989
    %v5278 = vunpack.c.h.b16 %v4989
    %v5279 = vunpack.c.l.b16 %v4990
    %v5280 = vunpack.c.h.b16 %v4990
    %v5281 = vunpack.c.l.b16 %v4991
    %v5282 = vunpack.c.h.b16 %v4991
    %v5283 = vunpack.c.l.b16 %v4992
    %v5284 = vunpack.c.h.b16 %v4992
    %v5285 = vunpack.c.l.b16 %v4993
    %v5286 = vunpack.c.h.b16 %v4993
    %v5287 = vunpack.c.l.b16 %v4994
    %v5288 = vunpack.c.h.b16 %v4994
    %v5289 = vunpack.c.l.b16 %v4995
    %v5290 = vunpack.c.h.b16 %v4995
    %v5291 = vunpack.c.l.b16 %v4996
    %v5292 = vunpack.c.h.b16 %v4996
    %v5293 = vunpack.c.l.b16 %v4997
    %v5294 = vunpack.c.h.b16 %v4997
    %v5295 = vunpack.c.l.b16 %v4998
    %v5296 = vunpack.c.h.b16 %v4998
    %v5297 = vunpack.c.l.b16 %v4999
    %v5298 = vunpack.c.h.b16 %v4999
    %v5299 = vunpack.c.l.b16 %v5000
    %v5300 = vunpack.c.h.b16 %v5000
    %v5301 = vunpack.c.l.b16 %v5001
    %v5302 = vunpack.c.h.b16 %v5001
    %v5303 = vunpack.c.l.b16 %v5002
    %v5304 = vunpack.c.h.b16 %v5002
    %v5305 = vunpack.c.l.b16 %v5003
    %v5306 = vunpack.c.h.b16 %v5003
    %v5307 = vunpack.c.l.b16 %v5004
    %v5308 = vunpack.c.h.b16 %v5004
    %v5309 = vunpack.c.l.b16 %v5005
    %v5310 = vunpack.c.h.b16 %v5005
    %v5311 = vunpack.c.l.b16 %v5006
    %v5312 = vunpack.c.h.b16 %v5006
    %v5313 = vunpack.c.l.b16 %v5007
    %v5314 = vunpack.c.h.b16 %v5007
    %v5315 = vunpack.c.l.b16 %v5008
    %v5316 = vunpack.c.h.b16 %v5008
    %v5317 = vunpack.c.l.b16 %v5009
    %v5318 = vunpack.c.h.b16 %v5009
    %v5319 = vunpack.c.l.b16 %v5010
    %v5320 = vunpack.c.h.b16 %v5010
    %v5321 = vunpack.c.l.b16 %v5011
    %v5322 = vunpack.c.h.b16 %v5011
    %v5323 = vunpack.c.l.b16 %v5012
    %v5324 = vunpack.c.h.b16 %v5012
    %v5325 = vunpack.c.l.b16 %v5013
    %v5326 = vunpack.c.h.b16 %v5013
    %v5327 = vunpack.c.l.b16 %v5014
    %v5328 = vunpack.c.h.b16 %v5014
    %v5329 = vunpack.c.l.b16 %v5015
    %v5330 = vunpack.c.h.b16 %v5015
    %v5331 = vunpack.c.l.b16 %v5016
    %v5332 = vunpack.c.h.b16 %v5016
    %v5333 = vunpack.c.l.b16 %v5017
    %v5334 = vunpack.c.h.b16 %v5017
    %v5335 = vunpack.c.l.b16 %v5018
    %v5336 = vunpack.c.h.b16 %v5018
    %v5337 = vunpack.c.l.b16 %v5019
    %v5338 = vunpack.c.h.b16 %v5019
    %v5339 = vunpack.c.l.b16 %v5020
    %v5340 = vunpack.c.h.b16 %v5020
    %v5341 = vunpack.c.l.b16 %v5021
    %v5342 = vunpack.c.h.b16 %v5021
    %v5343 = vunpack.c.l.b16 %v5022
    %v5344 = vunpack.c.h.b16 %v5022
    %v5345 = vunpack.c.l.b16 %v5023
    %v5346 = vunpack.c.h.b16 %v5023
    %v5347 = vunpack.c.l.b16 %v5024
    %v5348 = vunpack.c.h.b16 %v5024
    %v5349 = vunpack.c.l.b16 %v5025
    %v5350 = vunpack.c.h.b16 %v5025
    %v5351 = vunpack.c.l.b16 %v5026
    %v5352 = vunpack.c.h.b16 %v5026
    %v5353 = vunpack.c.l.b16 %v5027
    %v5354 = vunpack.c.h.b16 %v5027
    %v5355 = vunpack.c.l.b16 %v5028
    %v5356 = vunpack.c.h.b16 %v5028
    %v5357 = vunpack.c.l.b16 %v5029
    %v5358 = vunpack.c.h.b16 %v5029
    %v5359 = vunpack.c.l.b16 %v5030
    %v5360 = vunpack.c.h.b16 %v5030
    %v5361 = vunpack.c.l.b16 %v5031
    %v5362 = vunpack.c.h.b16 %v5031
    %v5363 = vunpack.c.l.b16 %v5032
    %v5364 = vunpack.c.h.b16 %v5032
    %v5365 = vunpack.c.l.b16 %v5033
    %v5366 = vunpack.c.h.b16 %v5033
    %v5367 = vunpack.c.l.b16 %v5034
    %v5368 = vunpack.c.h.b16 %v5034
    %v5369 = vunpack.c.l.b16 %v5035
    %v5370 = vunpack.c.h.b16 %v5035
    %v5371 = vunpack.c.l.b16 %v5036
    %v5372 = vunpack.c.h.b16 %v5036
    %v5373 = vunpack.c.l.b16 %v5037
    %v5374 = vunpack.c.h.b16 %v5037
    %v5375 = vunpack.c.l.b16 %v5038
    %v5376 = vunpack.c.h.b16 %v5038
    %v5377 = vunpack.c.l.b16 %v5039
    %v5378 = vunpack.c.h.b16 %v5039
    %v5379 = vunpack.c.l.b16 %v5040
    %v5380 = vunpack.c.h.b16 %v5040
    %v5381 = vunpack.c.l.b16 %v5041
    %v5382 = vunpack.c.h.b16 %v5041
    %v5383 = vunpack.c.l.b16 %v5042
    %v5384 = vunpack.c.h.b16 %v5042
    %v5385 = vunpack.c.l.b16 %v5043
    %v5386 = vunpack.c.h.b16 %v5043
    %v5387 = vunpack.c.l.b16 %v5044
    %v5388 = vunpack.c.h.b16 %v5044
    %v5389 = vunpack.c.l.b16 %v5045
    %v5390 = vunpack.c.h.b16 %v5045
    %v5391 = vunpack.c.l.b16 %v5046
    %v5392 = vunpack.c.h.b16 %v5046
    %v5393 = vunpack.c.l.b16 %v5047
    %v5394 = vunpack.c.h.b16 %v5047
    %v5395 = vunpack.c.l.b16 %v5048
    %v5396 = vunpack.c.h.b16 %v5048
    %v5397 = vunpack.c.l.b16 %v5049
    %v5398 = vunpack.c.h.b16 %v5049
    %v5399 = vunpack.c.l.b16 %v5050
    %v5400 = vunpack.c.h.b16 %v5050
    %v5401 = vunpack.c.l.b16 %v5051
    %v5402 = vunpack.c.h.b16 %v5051
    %v5403 = vunpack.c.l.b16 %v5052
    %v5404 = vunpack.c.h.b16 %v5052
    %v5405 = vunpack.c.l.b16 %v5053
    %v5406 = vunpack.c.h.b16 %v5053
    %v5407 = vunpack.c.l.b16 %v5054
    %v5408 = vunpack.c.h.b16 %v5054
    %v5409 = vunpack.c.l.b16 %v5055
    %v5410 = vunpack.c.h.b16 %v5055
    %v5411 = vunpack.c.l.b16 %v5056
    %v5412 = vunpack.c.h.b16 %v5056
    %v5413 = vunpack.c.l.b16 %v5057
    %v5414 = vunpack.c.h.b16 %v5057
    %v5415 = vunpack.c.l.b16 %v5058
    %v5416 = vunpack.c.h.b16 %v5058
    %v5417 = vunpack.c.l.b16 %v5059
    %v5418 = vunpack.c.h.b16 %v5059
    %v5419 = vunpack.c.l.b16 %v5060
    %v5420 = vunpack.c.h.b16 %v5060
    %v5421 = vunpack.c.l.b16 %v5061
    %v5422 = vunpack.c.h.b16 %v5061
    %v5423 = vunpack.c.l.b16 %v5062
    %v5424 = vunpack.c.h.b16 %v5062
    %v5425 = vunpack.c.l.b16 %v5063
    %v5426 = vunpack.c.h.b16 %v5063
    %v5427 = vunpack.c.l.b16 %v5064
    %v5428 = vunpack.c.h.b16 %v5064
    %v5429 = vunpack.c.l.b16 %v5065
    %v5430 = vunpack.c.h.b16 %v5065
    %v5431 = vunpack.c.l.b16 %v5066
    %v5432 = vunpack.c.h.b16 %v5066
    %v5433 = vunpack.c.l.b16 %v5067
    %v5434 = vunpack.c.h.b16 %v5067
    %v5435 = vunpack.c.l.b16 %v5068
    %v5436 = vunpack.c.h.b16 %v5068
    %v5437 = vunpack.c.l.b16 %v5069
    %v5438 = vunpack.c.h.b16 %v5069
    %v5439 = vunpack.c.l.b16 %v5070
    %v5440 = vunpack.c.h.b16 %v5070
    %v5441 = vunpack.c.l.b16 %v5071
    %v5442 = vunpack.c.h.b16 %v5071
    %v5443 = vunpack.c.l.b16 %v5072
    %v5444 = vunpack.c.h.b16 %v5072
    %v5445 = vunpack.c.l.b16 %v5073
    %v5446 = vunpack.c.h.b16 %v5073
    %v5447 = vunpack.c.l.b16 %v5074
    %v5448 = vunpack.c.h.b16 %v5074
    %v5449 = vunpack.c.l.b16 %v5075
    %v5450 = vunpack.c.h.b16 %v5075
    %v5451 = vunpack.c.l.b16 %v5076
    %v5452 = vunpack.c.h.b16 %v5076
    %v5453 = vunpack.c.l.b16 %v5077
    %v5454 = vunpack.c.h.b16 %v5077
    %v5455 = vunpack.c.l.b16 %v5078
    %v5456 = vunpack.c.h.b16 %v5078
    %v5457 = vunpack.c.l.b16 %v5079
    %v5458 = vunpack.c.h.b16 %v5079
    %v5459 = vunpack.c.l.b16 %v5080
    %v5460 = vunpack.c.h.b16 %v5080
    %v5461 = vunpack.c.l.b16 %v5081
    %v5462 = vunpack.c.h.b16 %v5081
    %v5463 = vunpack.c.l.b16 %v5082
    %v5464 = vunpack.c.h.b16 %v5082
    %v5465 = vunpack.c.l.b16 %v5083
    %v5466 = vunpack.c.h.b16 %v5083
    %v5467 = vunpack.c.l.b16 %v5084
    %v5468 = vunpack.c.h.b16 %v5084
    %v5469 = vunpack.c.l.b16 %v5085
    %v5470 = vunpack.c.h.b16 %v5085
    %v5471 = vunpack.c.l.b16 %v5086
    %v5472 = vunpack.c.h.b16 %v5086
    %v5473 = vunpack.c.l.b16 %v5087
    %v5474 = vunpack.c.h.b16 %v5087
    %v5475 = vunpack.c.l.b16 %v5088
    %v5476 = vunpack.c.h.b16 %v5088
    %v5477 = vunpack.c.l.b16 %v5089
    %v5478 = vunpack.c.h.b16 %v5089
    %v5479 = vunpack.c.l.b16 %v5090
    %v5480 = vunpack.c.h.b16 %v5090
    %v5481 = vunpack.c.l.b16 %v5091
    %v5482 = vunpack.c.h.b16 %v5091
    %v5483 = vunpack.c.l.b16 %v5092
    %v5484 = vunpack.c.h.b16 %v5092
    %v5485 = vunpack.c.l.b16 %v5093
    %v5486 = vunpack.c.h.b16 %v5093
    %v5487 = vunpack.c.l.b16 %v5094
    %v5488 = vunpack.c.h.b16 %v5094
    %v5489 = vunpack.c.l.b16 %v5095
    %v5490 = vunpack.c.h.b16 %v5095
    %v5491 = vunpack.c.l.b16 %v5096
    %v5492 = vunpack.c.h.b16 %v5096
    %v5493 = vunpack.c.l.b16 %v5097
    %v5494 = vunpack.c.h.b16 %v5097
    %v5495 = vunpack.c.l.b16 %v5098
    %v5496 = vunpack.c.h.b16 %v5098
    %v5497 = vunpack.c.l.b16 %v5099
    %v5498 = vunpack.c.h.b16 %v5099
    %v5499 = vunpack.c.l.b16 %v5100
    %v5500 = vunpack.c.h.b16 %v5100
    %v5501 = vunpack.c.l.b16 %v5101
    %v5502 = vunpack.c.h.b16 %v5101
    %v5503 = vunpack.c.l.b16 %v5102
    %v5504 = vunpack.c.h.b16 %v5102
    %v5505 = vunpack.c.l.b16 %v5103
    %v5506 = vunpack.c.h.b16 %v5103
    %v5507 = vunpack.c.l.b16 %v5104
    %v5508 = vunpack.c.h.b16 %v5104
    %v5509 = vunpack.c.l.b16 %v5105
    %v5510 = vunpack.c.h.b16 %v5105
    %v5511 = vunpack.c.l.b16 %v5106
    %v5512 = vunpack.c.h.b16 %v5106
    %v5513 = vpack.c.b16 %v5261, %v5257
    %v5514 = vpack.c.b16 %v5262, %v5258
    %v5515 = vpack.c.b16 %v5263, %v5259
    %v5516 = vpack.c.b16 %v5264, %v5260
    %v5517 = vpack.c.b16 %v5269, %v5265
    %v5518 = vpack.c.b16 %v5270, %v5266
    %v5519 = vpack.c.b16 %v5271, %v5267
    %v5520 = vpack.c.b16 %v5272, %v5268
    %v5521 = vpack.c.b16 %v5277, %v5273
    %v5522 = vpack.c.b16 %v5278, %v5274
    %v5523 = vpack.c.b16 %v5279, %v5275
    %v5524 = vpack.c.b16 %v5280, %v5276
    %v5525 = vpack.c.b16 %v5285, %v5281
    %v5526 = vpack.c.b16 %v5286, %v5282
    %v5527 = vpack.c.b16 %v5287, %v5283
    %v5528 = vpack.c.b16 %v5288, %v5284
    %v5529 = vpack.c.b16 %v5293, %v5289
    %v5530 = vpack.c.b16 %v5294, %v5290
    %v5531 = vpack.c.b16 %v5295, %v5291
    %v5532 = vpack.c.b16 %v5296, %v5292
    %v5533 = vpack.c.b16 %v5301, %v5297
    %v5534 = vpack.c.b16 %v5302, %v5298
    %v5535 = vpack.c.b16 %v5303, %v5299
    %v5536 = vpack.c.b16 %v5304, %v5300
    %v5537 = vpack.c.b16 %v5309, %v5305
    %v5538 = vpack.c.b16 %v5310, %v5306
    %v5539 = vpack.c.b16 %v5311, %v5307
    %v5540 = vpack.c.b16 %v5312, %v5308
    %v5541 = vpack.c.b16 %v5317, %v5313
    %v5542 = vpack.c.b16 %v5318, %v5314
    %v5543 = vpack.c.b16 %v5319, %v5315
    %v5544 = vpack.c.b16 %v5320, %v5316
    %v5545 = vpack.c.b16 %v5325, %v5321
    %v5546 = vpack.c.b16 %v5326, %v5322
    %v5547 = vpack.c.b16 %v5327, %v5323
    %v5548 = vpack.c.b16 %v5328, %v5324
    %v5549 = vpack.c.b16 %v5333, %v5329
    %v5550 = vpack.c.b16 %v5334, %v5330
    %v5551 = vpack.c.b16 %v5335, %v5331
    %v5552 = vpack.c.b16 %v5336, %v5332
    %v5553 = vpack.c.b16 %v5341, %v5337
    %v5554 = vpack.c.b16 %v5342, %v5338
    %v5555 = vpack.c.b16 %v5343, %v5339
    %v5556 = vpack.c.b16 %v5344, %v5340
    %v5557 = vpack.c.b16 %v5349, %v5345
    %v5558 = vpack.c.b16 %v5350, %v5346
    %v5559 = vpack.c.b16 %v5351, %v5347
    %v5560 = vpack.c.b16 %v5352, %v5348
    %v5561 = vpack.c.b16 %v5357, %v5353
    %v5562 = vpack.c.b16 %v5358, %v5354
    %v5563 = vpack.c.b16 %v5359, %v5355
    %v5564 = vpack.c.b16 %v5360, %v5356
    %v5565 = vpack.c.b16 %v5365, %v5361
    %v5566 = vpack.c.b16 %v5366, %v5362
    %v5567 = vpack.c.b16 %v5367, %v5363
    %v5568 = vpack.c.b16 %v5368, %v5364
    %v5569 = vpack.c.b16 %v5373, %v5369
    %v5570 = vpack.c.b16 %v5374, %v5370
    %v5571 = vpack.c.b16 %v5375, %v5371
    %v5572 = vpack.c.b16 %v5376, %v5372
    %v5573 = vpack.c.b16 %v5381, %v5377
    %v5574 = vpack.c.b16 %v5382, %v5378
    %v5575 = vpack.c.b16 %v5383, %v5379
    %v5576 = vpack.c.b16 %v5384, %v5380
    %v5577 = vpack.c.b16 %v5389, %v5385
    %v5578 = vpack.c.b16 %v5390, %v5386
    %v5579 = vpack.c.b16 %v5391, %v5387
    %v5580 = vpack.c.b16 %v5392, %v5388
    %v5581 = vpack.c.b16 %v5397, %v5393
    %v5582 = vpack.c.b16 %v5398, %v5394
    %v5583 = vpack.c.b16 %v5399, %v5395
    %v5584 = vpack.c.b16 %v5400, %v5396
    %v5585 = vpack.c.b16 %v5405, %v5401
    %v5586 = vpack.c.b16 %v5406, %v5402
    %v5587 = vpack.c.b16 %v5407, %v5403
    %v5588 = vpack.c.b16 %v5408, %v5404
    %v5589 = vpack.c.b16 %v5413, %v5409
    %v5590 = vpack.c.b16 %v5414, %v5410
    %v5591 = vpack.c.b16 %v5415, %v5411
    %v5592 = vpack.c.b16 %v5416, %v5412
    %v5593 = vpack.c.b16 %v5421, %v5417
    %v5594 = vpack.c.b16 %v5422, %v5418
    %v5595 = vpack.c.b16 %v5423, %v5419
    %v5596 = vpack.c.b16 %v5424, %v5420
    %v5597 = vpack.c.b16 %v5429, %v5425
    %v5598 = vpack.c.b16 %v5430, %v5426
    %v5599 = vpack.c.b16 %v5431, %v5427
    %v5600 = vpack.c.b16 %v5432, %v5428
    %v5601 = vpack.c.b16 %v5437, %v5433
    %v5602 = vpack.c.b16 %v5438, %v5434
    %v5603 = vpack.c.b16 %v5439, %v5435
    %v5604 = vpack.c.b16 %v5440, %v5436
    %v5605 = vpack.c.b16 %v5445, %v5441
    %v5606 = vpack.c.b16 %v5446, %v5442
    %v5607 = vpack.c.b16 %v5447, %v5443
    %v5608 = vpack.c.b16 %v5448, %v5444
    %v5609 = vpack.c.b16 %v5453, %v5449
    %v5610 = vpack.c.b16 %v5454, %v5450
    %v5611 = vpack.c.b16 %v5455, %v5451
    %v5612 = vpack.c.b16 %v5456, %v5452
    %v5613 = vpack.c.b16 %v5461, %v5457
    %v5614 = vpack.c.b16 %v5462, %v5458
    %v5615 = vpack.c.b16 %v5463, %v5459
    %v5616 = vpack.c.b16 %v5464, %v5460
    %v5617 = vpack.c.b16 %v5469, %v5465
    %v5618 = vpack.c.b16 %v5470, %v5466
    %v5619 = vpack.c.b16 %v5471, %v5467
    %v5620 = vpack.c.b16 %v5472, %v5468
    %v5621 = vpack.c.b16 %v5477, %v5473
    %v5622 = vpack.c.b16 %v5478, %v5474
    %v5623 = vpack.c.b16 %v5479, %v5475
    %v5624 = vpack.c.b16 %v5480, %v5476
    %v5625 = vpack.c.b16 %v5485, %v5481
    %v5626 = vpack.c.b16 %v5486, %v5482
    %v5627 = vpack.c.b16 %v5487, %v5483
    %v5628 = vpack.c.b16 %v5488, %v5484
    %v5629 = vpack.c.b16 %v5493, %v5489
    %v5630 = vpack.c.b16 %v5494, %v5490
    %v5631 = vpack.c.b16 %v5495, %v5491
    %v5632 = vpack.c.b16 %v5496, %v5492
    %v5633 = vpack.c.b16 %v5501, %v5497
    %v5634 = vpack.c.b16 %v5502, %v5498
    %v5635 = vpack.c.b16 %v5503, %v5499
    %v5636 = vpack.c.b16 %v5504, %v5500
    %v5637 = vpack.c.b16 %v5509, %v5505
    %v5638 = vpack.c.b16 %v5510, %v5506
    %v5639 = vpack.c.b16 %v5511, %v5507
    %v5640 = vpack.c.b16 %v5512, %v5508
    %5769 = vmatprep.subr.bf16.mxu0 %v5514
    %5770 = vmatpush1.bf16.msra.mxu0 %v5513
    %5771 = vmatprep.subr.bf16.mxu0 %v5518
    %5772 = vmatpush1.bf16.msra.mxu0 %v5517
    %5773 = vmatprep.subr.bf16.mxu0 %v5522
    %5774 = vmatpush1.bf16.msra.mxu0 %v5521
    %5775 = vmatprep.subr.bf16.mxu0 %v5526
    %5776 = vmatpush1.bf16.msra.mxu0 %v5525
    %5777 = vmatprep.subr.bf16.mxu0 %v5530
    %5778 = vmatpush1.bf16.msra.mxu0 %v5529
    %5779 = vmatprep.subr.bf16.mxu0 %v5534
    %5780 = vmatpush1.bf16.msra.mxu0 %v5533
    %5781 = vmatprep.subr.bf16.mxu0 %v5538
    %5782 = vmatpush1.bf16.msra.mxu0 %v5537
    %5783 = vmatprep.subr.bf16.mxu0 %v5542
    %5784 = vmatpush1.bf16.msra.mxu0 %v5541
    %5785 = vmatprep.subr.bf16.mxu0 %v5546
    %5786 = vmatpush1.bf16.msra.mxu0 %v5545
    %5787 = vmatprep.subr.bf16.mxu0 %v5550
    %5788 = vmatpush1.bf16.msra.mxu0 %v5549
    %5789 = vmatprep.subr.bf16.mxu0 %v5554
    %5790 = vmatpush1.bf16.msra.mxu0 %v5553
    %5791 = vmatprep.subr.bf16.mxu0 %v5558
    %5792 = vmatpush1.bf16.msra.mxu0 %v5557
    %5793 = vmatprep.subr.bf16.mxu0 %v5562
    %5794 = vmatpush1.bf16.msra.mxu0 %v5561
    %5795 = vmatprep.subr.bf16.mxu0 %v5566
    %5796 = vmatpush1.bf16.msra.mxu0 %v5565
    %5797 = vmatprep.subr.bf16.mxu0 %v5570
    %5798 = vmatpush1.bf16.msra.mxu0 %v5569
    %5799 = vmatprep.subr.bf16.mxu0 %v5574
    %5800 = vmatpush1.bf16.msra.mxu0 %v5573
    %5801 = vmatprep.mubr.bf16.mxu0 %v4976
    %5802 = vmatmul.mubr.bf16.gmra.mrb[0].mxu0 %v4975
    %v5803 = vpop.f32.mrb[0].mxu0
    %v5804 = vadd.f32 %v5112, %v5803
    %v5805 = vpop.f32.mrb[0].mxu0
    %v5806 = vadd.f32 %v5116, %v5805
    %v5807 = vpop.f32.mrb[0].mxu0
    %v5808 = vadd.f32 %v5112, %v5807
    %v5809 = vpop.f32.mrb[0].mxu0
    %v5810 = vadd.f32 %v5116, %v5809
    %5811 = vdwg.mxu0
    %5812 = vmatprep.subr.bf16.mxu0 %v5578
    %5813 = vmatpush1.bf16.msra.mxu0 %v5577
    %5814 = vmatprep.subr.bf16.mxu0 %v5582
    %5815 = vmatpush1.bf16.msra.mxu0 %v5581
    %5816 = vmatprep.subr.bf16.mxu0 %v5586
    %5817 = vmatpush1.bf16.msra.mxu0 %v5585
    %5818 = vmatprep.subr.bf16.mxu0 %v5590
    %5819 = vmatpush1.bf16.msra.mxu0 %v5589
    %5820 = vmatprep.subr.bf16.mxu0 %v5594
    %5821 = vmatpush1.bf16.msra.mxu0 %v5593
    %5822 = vmatprep.subr.bf16.mxu0 %v5598
    %5823 = vmatpush1.bf16.msra.mxu0 %v5597
    %5824 = vmatprep.subr.bf16.mxu0 %v5602
    %5825 = vmatpush1.bf16.msra.mxu0 %v5601
    %5826 = vmatprep.subr.bf16.mxu0 %v5606
    %5827 = vmatpush1.bf16.msra.mxu0 %v5605
    %5828 = vmatprep.subr.bf16.mxu0 %v5610
    %5829 = vmatpush1.bf16.msra.mxu0 %v5609
    %5830 = vmatprep.subr.bf16.mxu0 %v5614
    %5831 = vmatpush1.bf16.msra.mxu0 %v5613
    %5832 = vmatprep.subr.bf16.mxu0 %v5618
    %5833 = vmatpush1.bf16.msra.mxu0 %v5617
    %5834 = vmatprep.subr.bf16.mxu0 %v5622
    %5835 = vmatpush1.bf16.msra.mxu0 %v5621
    %5836 = vmatprep.subr.bf16.mxu0 %v5626
    %5837 = vmatpush1.bf16.msra.mxu0 %v5625
    %5838 = vmatprep.subr.bf16.mxu0 %v5630
    %5839 = vmatpush1.bf16.msra.mxu0 %v5629
    %5840 = vmatprep.subr.bf16.mxu0 %v5634
    %5841 = vmatpush1.bf16.msra.mxu0 %v5633
    %5842 = vmatprep.subr.bf16.mxu0 %v5638
    %5843 = vmatpush1.bf16.msra.mxu0 %v5637
    %5844 = vmatprep.mubr.bf16.mxu0 %v4978
    %5845 = vmatmul.mubr.bf16.gmra.mrb[0].mxu0 %v4977
    %v5846 = vpop.f32.mrb[0].mxu0
    %v5847 = vadd.f32 %v5804, %v5846
    %v5848 = vpop.f32.mrb[0].mxu0
    %v5849 = vadd.f32 %v5806, %v5848
    %v5850 = vpop.f32.mrb[0].mxu0
    %v5851 = vadd.f32 %v5808, %v5850
    %v5852 = vpop.f32.mrb[0].mxu0
    %v5853 = vadd.f32 %v5810, %v5852
    %5854 = vdwg.mxu0
    %5855 = vmatprep.subr.bf16.mxu0 %v5516
    %5856 = vmatpush1.bf16.msra.mxu0 %v5515
    %5857 = vmatprep.subr.bf16.mxu0 %v5520
    %5858 = vmatpush1.bf16.msra.mxu0 %v5519
    %5859 = vmatprep.subr.bf16.mxu0 %v5524
    %5860 = vmatpush1.bf16.msra.mxu0 %v5523
    %5861 = vmatprep.subr.bf16.mxu0 %v5528
    %5862 = vmatpush1.bf16.msra.mxu0 %v5527
    %5863 = vmatprep.subr.bf16.mxu0 %v5532
    %5864 = vmatpush1.bf16.msra.mxu0 %v5531
    %5865 = vmatprep.subr.bf16.mxu0 %v5536
    %5866 = vmatpush1.bf16.msra.mxu0 %v5535
    %5867 = vmatprep.subr.bf16.mxu0 %v5540
    %5868 = vmatpush1.bf16.msra.mxu0 %v5539
    %5869 = vmatprep.subr.bf16.mxu0 %v5544
    %5870 = vmatpush1.bf16.msra.mxu0 %v5543
    %5871 = vmatprep.subr.bf16.mxu0 %v5548
    %5872 = vmatpush1.bf16.msra.mxu0 %v5547
    %5873 = vmatprep.subr.bf16.mxu0 %v5552
    %5874 = vmatpush1.bf16.msra.mxu0 %v5551
    %5875 = vmatprep.subr.bf16.mxu0 %v5556
    %5876 = vmatpush1.bf16.msra.mxu0 %v5555
    %5877 = vmatprep.subr.bf16.mxu0 %v5560
    %5878 = vmatpush1.bf16.msra.mxu0 %v5559
    %5879 = vmatprep.subr.bf16.mxu0 %v5564
    %5880 = vmatpush1.bf16.msra.mxu0 %v5563
    %5881 = vmatprep.subr.bf16.mxu0 %v5568
    %5882 = vmatpush1.bf16.msra.mxu0 %v5567
    %5883 = vmatprep.subr.bf16.mxu0 %v5572
    %5884 = vmatpush1.bf16.msra.mxu0 %v5571
    %5885 = vmatprep.subr.bf16.mxu0 %v5576
    %5886 = vmatpush1.bf16.msra.mxu0 %v5575
    %5887 = vmatprep.mubr.bf16.mxu0 %v4976
    %5888 = vmatmul.mubr.bf16.gmra.mrb[0].mxu0 %v4975
    %v5889 = vpop.f32.mrb[0].mxu0
    %v5890 = vadd.f32 %v5120, %v5889
    %v5891 = vpop.f32.mrb[0].mxu0
    %v5892 = vadd.f32 %v5124, %v5891
    %v5893 = vpop.f32.mrb[0].mxu0
    %v5894 = vadd.f32 %v5120, %v5893
    %v5895 = vpop.f32.mrb[0].mxu0
    %v5896 = vadd.f32 %v5124, %v5895
    %5897 = vdwg.mxu0
    %5898 = vmatprep.subr.bf16.mxu0 %v5580
    %5899 = vmatpush1.bf16.msra.mxu0 %v5579
    %5900 = vmatprep.subr.bf16.mxu0 %v5584
    %5901 = vmatpush1.bf16.msra.mxu0 %v5583
    %5902 = vmatprep.subr.bf16.mxu0 %v5588
    %5903 = vmatpush1.bf16.msra.mxu0 %v5587
    %5904 = vmatprep.subr.bf16.mxu0 %v5592
    %5905 = vmatpush1.bf16.msra.mxu0 %v5591
    %5906 = vmatprep.subr.bf16.mxu0 %v5596
    %5907 = vmatpush1.bf16.msra.mxu0 %v5595
    %5908 = vmatprep.subr.bf16.mxu0 %v5600
    %5909 = vmatpush1.bf16.msra.mxu0 %v5599
    %5910 = vmatprep.subr.bf16.mxu0 %v5604
    %5911 = vmatpush1.bf16.msra.mxu0 %v5603
    %5912 = vmatprep.subr.bf16.mxu0 %v5608
    %5913 = vmatpush1.bf16.msra.mxu0 %v5607
    %5914 = vmatprep.subr.bf16.mxu0 %v5612
    %5915 = vmatpush1.bf16.msra.mxu0 %v5611
    %5916 = vmatprep.subr.bf16.mxu0 %v5616
    %5917 = vmatpush1.bf16.msra.mxu0 %v5615
    %5918 = vmatprep.subr.bf16.mxu0 %v5620
    %5919 = vmatpush1.bf16.msra.mxu0 %v5619
    %5920 = vmatprep.subr.bf16.mxu0 %v5624
    %5921 = vmatpush1.bf16.msra.mxu0 %v5623
    %5922 = vmatprep.subr.bf16.mxu0 %v5628
    %5923 = vmatpush1.bf16.msra.mxu0 %v5627
    %5924 = vmatprep.subr.bf16.mxu0 %v5632
    %5925 = vmatpush1.bf16.msra.mxu0 %v5631
    %5926 = vmatprep.subr.bf16.mxu0 %v5636
    %5927 = vmatpush1.bf16.msra.mxu0 %v5635
    %5928 = vmatprep.subr.bf16.mxu0 %v5640
    %5929 = vmatpush1.bf16.msra.mxu0 %v5639
    %5930 = vmatprep.mubr.bf16.mxu0 %v4978
    %5931 = vmatmul.mubr.bf16.gmra.mrb[0].mxu0 %v4977
    %v5932 = vpop.f32.mrb[0].mxu0
    %v5933 = vadd.f32 %v5890, %v5932
    %v5934 = vpop.f32.mrb[0].mxu0
    %v5935 = vadd.f32 %v5892, %v5934
    %v5936 = vpop.f32.mrb[0].mxu0
    %v5937 = vadd.f32 %v5894, %v5936
    %v5938 = vpop.f32.mrb[0].mxu0
    %v5939 = vadd.f32 %v5896, %v5938
    %5940 = vdwg.mxu0
    %v5941 = vmax.f32 %v5847, 0.0
    %v5942 = vmax.f32 %v5849, 0.0
    %v5943 = vmax.f32 %v5933, 0.0
    %v5944 = vmax.f32 %v5935, 0.0
    %v5945 = vmax.f32 %v5851, 0.0
    %v5946 = vmax.f32 %v5853, 0.0
    %v5947 = vmax.f32 %v5937, 0.0
    %v5948 = vmax.f32 %v5939, 0.0
    %v5949 = vpack.c.bf16 %v5945, %v5941
    %v5950 = vpack.c.bf16 %v5946, %v5942
    %v5951 = vpack.c.bf16 %v5947, %v5943
    %v5952 = vpack.c.bf16 %v5948, %v5944
    %v5953 = vld [vmem:[#allocation13] sm:$0xf]
    %v5954 = vld [vmem:[#allocation13 + $0x4] sm:$0xf]
    %v5955 = vld [vmem:[#allocation13 + $0x8] sm:$0xf]
    %v5956 = vld [vmem:[#allocation13 + $0xc] sm:$0xf]
    %v5957 = vld [vmem:[#allocation13 + $0x10] sm:$0xf]
    %v5958 = vld [vmem:[#allocation13 + $0x14] sm:$0xf]
    %v5959 = vld [vmem:[#allocation13 + $0x18] sm:$0xf]
    %v5960 = vld [vmem:[#allocation13 + $0x1c] sm:$0xf]
    %v5961 = vld [vmem:[#allocation13 + $0x20] sm:$0xf]
    %v5962 = vld [vmem:[#allocation13 + $0x24] sm:$0xf]
    %v5963 = vld [vmem:[#allocation13 + $0x28] sm:$0xf]
    %v5964 = vld [vmem:[#allocation13 + $0x2c] sm:$0xf]
    %v5965 = vld [vmem:[#allocation13 + $0x30] sm:$0xf]
    %v5966 = vld [vmem:[#allocation13 + $0x34] sm:$0xf]
    %v5967 = vld [vmem:[#allocation13 + $0x38] sm:$0xf]
    %v5968 = vld [vmem:[#allocation13 + $0x3c] sm:$0xf]
    %v5969 = vld [vmem:[#allocation13 + $0x40] sm:$0xf]
    %v5970 = vld [vmem:[#allocation13 + $0x44] sm:$0xf]
    %v5971 = vld [vmem:[#allocation13 + $0x48] sm:$0xf]
    %v5972 = vld [vmem:[#allocation13 + $0x4c] sm:$0xf]
    %v5973 = vld [vmem:[#allocation13 + $0x50] sm:$0xf]
    %v5974 = vld [vmem:[#allocation13 + $0x54] sm:$0xf]
    %v5975 = vld [vmem:[#allocation13 + $0x58] sm:$0xf]
    %v5976 = vld [vmem:[#allocation13 + $0x5c] sm:$0xf]
    %v5977 = vld [vmem:[#allocation13 + $0x60] sm:$0xf]
    %v5978 = vld [vmem:[#allocation13 + $0x64] sm:$0xf]
    %v5979 = vld [vmem:[#allocation13 + $0x68] sm:$0xf]
    %v5980 = vld [vmem:[#allocation13 + $0x6c] sm:$0xf]
    %v5981 = vld [vmem:[#allocation13 + $0x70] sm:$0xf]
    %v5982 = vld [vmem:[#allocation13 + $0x74] sm:$0xf]
    %v5983 = vld [vmem:[#allocation13 + $0x78] sm:$0xf]
    %v5984 = vld [vmem:[#allocation13 + $0x7c] sm:$0xf]
    %v5985 = vld [vmem:[#allocation13 + $0x80] sm:$0xf]
    %v5986 = vld [vmem:[#allocation13 + $0x84] sm:$0xf]
    %v5987 = vld [vmem:[#allocation13 + $0x88] sm:$0xf]
    %v5988 = vld [vmem:[#allocation13 + $0x8c] sm:$0xf]
    %v5989 = vld [vmem:[#allocation13 + $0x90] sm:$0xf]
    %v5990 = vld [vmem:[#allocation13 + $0x94] sm:$0xf]
    %v5991 = vld [vmem:[#allocation13 + $0x98] sm:$0xf]
    %v5992 = vld [vmem:[#allocation13 + $0x9c] sm:$0xf]
    %v5993 = vld [vmem:[#allocation13 + $0xa0] sm:$0xf]
    %v5994 = vld [vmem:[#allocation13 + $0xa4] sm:$0xf]
    %v5995 = vld [vmem:[#allocation13 + $0xa8] sm:$0xf]
    %v5996 = vld [vmem:[#allocation13 + $0xac] sm:$0xf]
    %v5997 = vld [vmem:[#allocation13 + $0xb0] sm:$0xf]
    %v5998 = vld [vmem:[#allocation13 + $0xb4] sm:$0xf]
    %v5999 = vld [vmem:[#allocation13 + $0xb8] sm:$0xf]
    %v6000 = vld [vmem:[#allocation13 + $0xbc] sm:$0xf]
    %v6001 = vld [vmem:[#allocation13 + $0xc0] sm:$0xf]
    %v6002 = vld [vmem:[#allocation13 + $0xc4] sm:$0xf]
    %v6003 = vld [vmem:[#allocation13 + $0xc8] sm:$0xf]
    %v6004 = vld [vmem:[#allocation13 + $0xcc] sm:$0xf]
    %v6005 = vld [vmem:[#allocation13 + $0xd0] sm:$0xf]
    %v6006 = vld [vmem:[#allocation13 + $0xd4] sm:$0xf]
    %v6007 = vld [vmem:[#allocation13 + $0xd8] sm:$0xf]
    %v6008 = vld [vmem:[#allocation13 + $0xdc] sm:$0xf]
    %v6009 = vld [vmem:[#allocation13 + $0xe0] sm:$0xf]
    %v6010 = vld [vmem:[#allocation13 + $0xe4] sm:$0xf]
    %v6011 = vld [vmem:[#allocation13 + $0xe8] sm:$0xf]
    %v6012 = vld [vmem:[#allocation13 + $0xec] sm:$0xf]
    %v6013 = vld [vmem:[#allocation13 + $0xf0] sm:$0xf]
    %v6014 = vld [vmem:[#allocation13 + $0xf4] sm:$0xf]
    %v6015 = vld [vmem:[#allocation13 + $0xf8] sm:$0xf]
    %v6016 = vld [vmem:[#allocation13 + $0xfc] sm:$0xf]
    %v6017 = vld [vmem:[%s10] sm:$0x1]
    %v6019 = vlaneseq
    %v6020 = vshrl.u32 %v6019, 7
    %v6021 = vsub.s32 0, %v6020
    %v6022 = vrot.slane %v6017, %v6021
    %v6088 = vunpack.c.l.b16 %v5953
    %v6089 = vunpack.c.l.b16 %v5954
    %v6090 = vunpack.c.l.b16 %v5955
    %v6091 = vunpack.c.l.b16 %v5956
    %v6092 = vunpack.c.l.b16 %v5957
    %v6093 = vunpack.c.l.b16 %v5958
    %v6094 = vunpack.c.l.b16 %v5959
    %v6095 = vunpack.c.l.b16 %v5960
    %v6096 = vunpack.c.l.b16 %v5961
    %v6097 = vunpack.c.l.b16 %v5962
    %v6098 = vunpack.c.l.b16 %v5963
    %v6099 = vunpack.c.l.b16 %v5964
    %v6100 = vunpack.c.l.b16 %v5965
    %v6101 = vunpack.c.l.b16 %v5966
    %v6102 = vunpack.c.l.b16 %v5967
    %v6103 = vunpack.c.l.b16 %v5968
    %v6104 = vunpack.c.l.b16 %v5969
    %v6105 = vunpack.c.l.b16 %v5970
    %v6106 = vunpack.c.l.b16 %v5971
    %v6107 = vunpack.c.l.b16 %v5972
    %v6108 = vunpack.c.l.b16 %v5973
    %v6109 = vunpack.c.l.b16 %v5974
    %v6110 = vunpack.c.l.b16 %v5975
    %v6111 = vunpack.c.l.b16 %v5976
    %v6112 = vunpack.c.l.b16 %v5977
    %v6113 = vunpack.c.l.b16 %v5978
    %v6114 = vunpack.c.l.b16 %v5979
    %v6115 = vunpack.c.l.b16 %v5980
    %v6116 = vunpack.c.l.b16 %v5981
    %v6117 = vunpack.c.l.b16 %v5982
    %v6118 = vunpack.c.l.b16 %v5983
    %v6119 = vunpack.c.l.b16 %v5984
    %v6120 = vunpack.c.l.b16 %v5985
    %v6121 = vunpack.c.l.b16 %v5986
    %v6122 = vunpack.c.l.b16 %v5987
    %v6123 = vunpack.c.l.b16 %v5988
    %v6124 = vunpack.c.l.b16 %v5989
    %v6125 = vunpack.c.l.b16 %v5990
    %v6126 = vunpack.c.l.b16 %v5991
    %v6127 = vunpack.c.l.b16 %v5992
    %v6128 = vunpack.c.l.b16 %v5993
    %v6129 = vunpack.c.l.b16 %v5994
    %v6130 = vunpack.c.l.b16 %v5995
    %v6131 = vunpack.c.l.b16 %v5996
    %v6132 = vunpack.c.l.b16 %v5997
    %v6133 = vunpack.c.l.b16 %v5998
    %v6134 = vunpack.c.l.b16 %v5999
    %v6135 = vunpack.c.l.b16 %v6000
    %v6136 = vunpack.c.l.b16 %v6001
    %v6137 = vunpack.c.l.b16 %v6002
    %v6138 = vunpack.c.l.b16 %v6003
    %v6139 = vunpack.c.l.b16 %v6004
    %v6140 = vunpack.c.l.b16 %v6005
    %v6141 = vunpack.c.l.b16 %v6006
    %v6142 = vunpack.c.l.b16 %v6007
    %v6143 = vunpack.c.l.b16 %v6008
    %v6144 = vunpack.c.l.b16 %v6009
    %v6145 = vunpack.c.l.b16 %v6010
    %v6146 = vunpack.c.l.b16 %v6011
    %v6147 = vunpack.c.l.b16 %v6012
    %v6148 = vunpack.c.l.b16 %v6013
    %v6149 = vunpack.c.l.b16 %v6014
    %v6150 = vunpack.c.l.b16 %v6015
    %v6151 = vunpack.c.l.b16 %v6016
    %v6152 = vpack.c.b16 %v6089, %v6088
    %v6153 = vpack.c.b16 %v6091, %v6090
    %v6154 = vpack.c.b16 %v6093, %v6092
    %v6155 = vpack.c.b16 %v6095, %v6094
    %v6156 = vpack.c.b16 %v6097, %v6096
    %v6157 = vpack.c.b16 %v6099, %v6098
    %v6158 = vpack.c.b16 %v6101, %v6100
    %v6159 = vpack.c.b16 %v6103, %v6102
    %v6160 = vpack.c.b16 %v6105, %v6104
    %v6161 = vpack.c.b16 %v6107, %v6106
    %v6162 = vpack.c.b16 %v6109, %v6108
    %v6163 = vpack.c.b16 %v6111, %v6110
    %v6164 = vpack.c.b16 %v6113, %v6112
    %v6165 = vpack.c.b16 %v6115, %v6114
    %v6166 = vpack.c.b16 %v6117, %v6116
    %v6167 = vpack.c.b16 %v6119, %v6118
    %v6168 = vpack.c.b16 %v6121, %v6120
    %v6169 = vpack.c.b16 %v6123, %v6122
    %v6170 = vpack.c.b16 %v6125, %v6124
    %v6171 = vpack.c.b16 %v6127, %v6126
    %v6172 = vpack.c.b16 %v6129, %v6128
    %v6173 = vpack.c.b16 %v6131, %v6130
    %v6174 = vpack.c.b16 %v6133, %v6132
    %v6175 = vpack.c.b16 %v6135, %v6134
    %v6176 = vpack.c.b16 %v6137, %v6136
    %v6177 = vpack.c.b16 %v6139, %v6138
    %v6178 = vpack.c.b16 %v6141, %v6140
    %v6179 = vpack.c.b16 %v6143, %v6142
    %v6180 = vpack.c.b16 %v6145, %v6144
    %v6181 = vpack.c.b16 %v6147, %v6146
    %v6182 = vpack.c.b16 %v6149, %v6148
    %v6183 = vpack.c.b16 %v6151, %v6150
    %6216 = vmatprep.subr.bf16.mxu0 0
    %6217 = vmatpush1.bf16.msra.mxu0 %v6152
    %6218 = vmatprep.subr.bf16.mxu0 0
    %6219 = vmatpush1.bf16.msra.mxu0 %v6153
    %6220 = vmatprep.subr.bf16.mxu0 0
    %6221 = vmatpush1.bf16.msra.mxu0 %v6154
    %6222 = vmatprep.subr.bf16.mxu0 0
    %6223 = vmatpush1.bf16.msra.mxu0 %v6155
    %6224 = vmatprep.subr.bf16.mxu0 0
    %6225 = vmatpush1.bf16.msra.mxu0 %v6156
    %6226 = vmatprep.subr.bf16.mxu0 0
    %6227 = vmatpush1.bf16.msra.mxu0 %v6157
    %6228 = vmatprep.subr.bf16.mxu0 0
    %6229 = vmatpush1.bf16.msra.mxu0 %v6158
    %6230 = vmatprep.subr.bf16.mxu0 0
    %6231 = vmatpush1.bf16.msra.mxu0 %v6159
    %6232 = vmatprep.subr.bf16.mxu0 0
    %6233 = vmatpush1.bf16.msra.mxu0 %v6160
    %6234 = vmatprep.subr.bf16.mxu0 0
    %6235 = vmatpush1.bf16.msra.mxu0 %v6161
    %6236 = vmatprep.subr.bf16.mxu0 0
    %6237 = vmatpush1.bf16.msra.mxu0 %v6162
    %6238 = vmatprep.subr.bf16.mxu0 0
    %6239 = vmatpush1.bf16.msra.mxu0 %v6163
    %6240 = vmatprep.subr.bf16.mxu0 0
    %6241 = vmatpush1.bf16.msra.mxu0 %v6164
    %6242 = vmatprep.subr.bf16.mxu0 0
    %6243 = vmatpush1.bf16.msra.mxu0 %v6165
    %6244 = vmatprep.subr.bf16.mxu0 0
    %6245 = vmatpush1.bf16.msra.mxu0 %v6166
    %6246 = vmatprep.subr.bf16.mxu0 0
    %6247 = vmatpush1.bf16.msra.mxu0 %v6167
    %6248 = vmatprep.mubr.bf16.mxu0 %v5950
    %6249 = vmatmul.mubr.bf16.gmra.mrb[0].mxu0 %v5949
    %v6250 = vpop.f32.mrb[0].mxu0
    %v6251 = vadd.f32 %v6022, %v6250
    %v6252 = vpop.f32.mrb[0].mxu0
    %v6253 = vpop.f32.mrb[0].mxu0
    %v6254 = vadd.f32 %v6022, %v6253
    %v6255 = vpop.f32.mrb[0].mxu0
    %6256 = vdwg.mxu0
    %6257 = vmatprep.subr.bf16.mxu0 0
    %6258 = vmatpush1.bf16.msra.mxu0 %v6168
    %6259 = vmatprep.subr.bf16.mxu0 0
    %6260 = vmatpush1.bf16.msra.mxu0 %v6169
    %6261 = vmatprep.subr.bf16.mxu0 0
    %6262 = vmatpush1.bf16.msra.mxu0 %v6170
    %6263 = vmatprep.subr.bf16.mxu0 0
    %6264 = vmatpush1.bf16.msra.mxu0 %v6171
    %6265 = vmatprep.subr.bf16.mxu0 0
    %6266 = vmatpush1.bf16.msra.mxu0 %v6172
    %6267 = vmatprep.subr.bf16.mxu0 0
    %6268 = vmatpush1.bf16.msra.mxu0 %v6173
    %6269 = vmatprep.subr.bf16.mxu0 0
    %6270 = vmatpush1.bf16.msra.mxu0 %v6174
    %6271 = vmatprep.subr.bf16.mxu0 0
    %6272 = vmatpush1.bf16.msra.mxu0 %v6175
    %6273 = vmatprep.subr.bf16.mxu0 0
    %6274 = vmatpush1.bf16.msra.mxu0 %v6176
    %6275 = vmatprep.subr.bf16.mxu0 0
    %6276 = vmatpush1.bf16.msra.mxu0 %v6177
    %6277 = vmatprep.subr.bf16.mxu0 0
    %6278 = vmatpush1.bf16.msra.mxu0 %v6178
    %6279 = vmatprep.subr.bf16.mxu0 0
    %6280 = vmatpush1.bf16.msra.mxu0 %v6179
    %6281 = vmatprep.subr.bf16.mxu0 0
    %6282 = vmatpush1.bf16.msra.mxu0 %v6180
    %6283 = vmatprep.subr.bf16.mxu0 0
    %6284 = vmatpush1.bf16.msra.mxu0 %v6181
    %6285 = vmatprep.subr.bf16.mxu0 0
    %6286 = vmatpush1.bf16.msra.mxu0 %v6182
    %6287 = vmatprep.subr.bf16.mxu0 0
    %6288 = vmatpush1.bf16.msra.mxu0 %v6183
    %6289 = vmatprep.mubr.bf16.mxu0 %v5952
    %6290 = vmatmul.mubr.bf16.gmra.mrb[0].mxu0 %v5951
    %v6291 = vpop.f32.mrb[0].mxu0
    %v6292 = vadd.f32 %v6251, %v6291
    %v6293 = vpop.f32.mrb[0].mxu0
    %v6294 = vpop.f32.mrb[0].mxu0
    %v6295 = vadd.f32 %v6254, %v6294
    %v6296 = vpop.f32.mrb[0].mxu0
    %6297 = vdwg.mxu0
    %6298 = vst [vmem:[#allocation14] sm:$0xff] %v6292
    %6299 = vst [vmem:[#allocation14 + $0x8] sm:$0xff] %v6295
    // Predicated region
    $region74: #{tpu_custom_call.1} parent=1 // pred_check
      _
    $region75: #{tpu_custom_call.1} parent=1 // pred_check_branch
      %6301 = sbr.rel (0) target = $region77
    $region76: #{tpu_custom_call.1} parent=1 // pred_region
      %s6303 = ssub.s32 256, 256
      %6304 = vsyncadd [#allocation4], %s6303
      %s6305 = sshll.u32 [#allocation14], 4
      %s6306 = int_to_ptr.vmem [resolvable:$true] %s6305
      %6311 = dma.vmem_to_hbm [thread:$0]  %s6306, 256, %s11, [#allocation4], 128, 128, 8
    $region77: #{tpu_custom_call.1} parent=1 // pred_fallthru
      _
    // Predicated region
    $region78: #{tpu_custom_call.1} parent=1 // pred_check
      _
    $region79: #{tpu_custom_call.1} parent=1 // pred_check_branch
      %6313 = sbr.rel (0) target = $region81
    $region80: #{tpu_custom_call.1} parent=1 // pred_region
      %6314 = dma.done [#allocation4], 256
    $region81: #{tpu_custom_call.1} parent=1 // pred_fallthru
      _
    %6315 = vsyncpa [#allocation3], 1
    %6316 = vsyncpa [#allocation6], 1
    %6317 = vsyncpa [#allocation9], 1
    %6318 = vsyncpa [#allocation12], 1
    %6319 = vsyncpa [#allocation4], 1

// kernel: tpu_custom_call.1
$region0: #{tpu_custom_call.1}
  #allocation0 [shape = 'u32[]', space=smem, size = 0x4, offset = 0x4, fixed_abs, tag = 'smem constant byte address 0x4 - core index']
  #allocation1 [shape = 'u32[144,128]{1,0:T(1,128)}', space=vmem, size = 0x12000, scoped, tag = 'internal scratch']
  %s0 = inlined_call_operand.hbm [shape: f32[16,512], index: 0, kind: input, shape index: {}]
  %s1 = inlined_call_operand.hbm [shape: bf16[512,1024], index: 1, kind: input, shape index: {}]
  %s2 = inlined_call_operand.hbm [shape: f32[1,1024], index: 2, kind: input, shape index: {}]
  %s3 = inlined_call_operand.hbm [shape: bf16[1024,512], index: 3, kind: input, shape index: {}]
  %s4 = inlined_call_operand.vmem [shape: f32[1,512], index: 4, kind: input, shape index: {}]
  %s5 = inlined_call_operand.hbm [shape: bf16[512,512], index: 5, kind: input, shape index: {}]
  %s6 = inlined_call_operand.vmem [shape: f32[1,512], index: 6, kind: input, shape index: {}]
  %s7 = inlined_call_operand.hbm [shape: bf16[512,512], index: 7, kind: input, shape index: {}]
  %s8 = inlined_call_operand.vmem [shape: f32[1,512], index: 8, kind: input, shape index: {}]
  %s9 = inlined_call_operand.hbm [shape: bf16[512,128], index: 9, kind: input, shape index: {}]
  %s10 = inlined_call_operand.vmem [shape: f32[1,128], index: 10, kind: input, shape index: {}]
  %s11 = inlined_call_operand.hbm [shape: f32[16,128], index: 11, kind: output, shape index: {}]
  %s12 = sld [smem:[#allocation0]]
  $region82: #{tpu_custom_call.1} parent=0
    _
  %s14 = ssub.s32 1, %s12
  %s15 = scalar_select 0, %s14, %s12
  $region1: #{tpu_custom_call.1} parent=0
    #allocation2 [shape = 'u8[32768]{0}', space=vmem, size = 0x8000, scoped, tag = 'input window, operand 0, single buffered']
    #allocation3 [shape = 's32[1]{0}', space=sflag, size = 0x4, scoped, tag = 'scoped memory for tpu_custom_call.1']
    #allocation4 [shape = 's32[1]{0}', space=sflag, size = 0x4, scoped, tag = 'scoped memory for tpu_custom_call.1']
    #allocation5 [shape = 'u8[1048576]{0}', space=vmem, size = 0x100000, scoped, tag = 'input window, operand 1, single buffered']
    #allocation6 [shape = 's32[1]{0}', space=sflag, size = 0x4, scoped, tag = 'scoped memory for tpu_custom_call.1']
    #allocation7 [shape = 'u8[4096]{0}', space=vmem, size = 0x1000, scoped, tag = 'input window, operand 2, single buffered']
    #allocation8 [shape = 'u8[1048576]{0}', space=vmem, size = 0x100000, scoped, tag = 'input window, operand 3, single buffered']
    #allocation9 [shape = 's32[1]{0}', space=sflag, size = 0x4, scoped, tag = 'scoped memory for tpu_custom_call.1']
    #allocation10 [shape = 'u8[524288]{0}', space=vmem, size = 0x80000, scoped, tag = 'input window, operand 5, single buffered']
    #allocation11 [shape = 'u8[524288]{0}', space=vmem, size = 0x80000, scoped, tag = 'input window, operand 7, single buffered']
    #allocation12 [shape = 's32[1]{0}', space=sflag, size = 0x4, scoped, tag = 'scoped memory for tpu_custom_call.1']
    #allocation13 [shape = 'u8[131072]{0}', space=vmem, size = 0x20000, scoped, tag = 'input window, operand 9, single buffered']
    #allocation14 [shape = 'u8[8192]{0}', space=vmem, size = 0x2000, scoped, tag = 'output window, operand 0, single buffered']
    %16 = vsyncpa [#allocation3], 0
    %17 = vsyncpa [#allocation6], 0
    %18 = vsyncpa [#allocation9], 0
    %19 = vsyncpa [#allocation12], 0
    %20 = vsyncpa [#allocation4], 0
    // Predicated region
    $region2: #{tpu_custom_call.1} parent=1 // pred_check
      _
    $region3: #{tpu_custom_call.1} parent=1 // pred_check_branch
      %22 = sbr.rel (0) target = $region5
    $region4: #{tpu_custom_call.1} parent=1 // pred_region
      %s24 = ssub.s32 1024, 1024
      %25 = vsyncadd [#allocation3], %s24
      %s26 = sshll.u32 [#allocation2], 4
      %s27 = int_to_ptr.vmem [resolvable:$true] %s26
      %32 = dma.hbm_to_vmem [thread:$0]  %s0, 1024, %s27, [#allocation3], 512, 512, 32
    $region5: #{tpu_custom_call.1} parent=1 // pred_fallthru
      _
    // Predicated region
    $region6: #{tpu_custom_call.1} parent=1 // pred_check
      _
    $region7: #{tpu_custom_call.1} parent=1 // pred_check_branch
      %34 = sbr.rel (0) target = $region9
    $region8: #{tpu_custom_call.1} parent=1 // pred_region
      %s36 = ssub.s32 32768, 32768
      %37 = vsyncadd [#allocation6], %s36
      %s38 = sshll.u32 [#allocation5], 4
      %s39 = int_to_ptr.vmem [resolvable:$true] %s38
      %44 = dma.hbm_to_vmem [thread:$0]  %s1, 32768, %s39, [#allocation6], 512, 512, 32
    $region9: #{tpu_custom_call.1} parent=1 // pred_fallthru
      _
    // Predicated region
    $region10: #{tpu_custom_call.1} parent=1 // pred_check
      _
    $region11: #{tpu_custom_call.1} parent=1 // pred_check_branch
      %46 = sbr.rel (0) target = $region13
    $region12: #{tpu_custom_call.1} parent=1 // pred_region
      %s48 = ssub.s32 128, 128
      %49 = vsyncadd [#allocation6], %s48
      %s51 = sshll.u32 [#allocation7], 4
      %s52 = int_to_ptr.vmem [resolvable:$true] %s51
      %54 = dma.hbm_to_vmem [thread:$0]  %s2, 128, %s52, [#allocation6]
    $region13: #{tpu_custom_call.1} parent=1 // pred_fallthru
      _
    // Predicated region
    $region14: #{tpu_custom_call.1} parent=1 // pred_check
      _
    $region15: #{tpu_custom_call.1} parent=1 // pred_check_branch
      %56 = sbr.rel (0) target = $region17
    $region16: #{tpu_custom_call.1} parent=1 // pred_region
      %s58 = ssub.s32 32768, 32768
      %59 = vsyncadd [#allocation9], %s58
      %s60 = sshll.u32 [#allocation8], 4
      %s61 = int_to_ptr.vmem [resolvable:$true] %s60
      %66 = dma.hbm_to_vmem [thread:$0]  %s3, 32768, %s61, [#allocation9], 256, 256, 16
    $region17: #{tpu_custom_call.1} parent=1 // pred_fallthru
      _
    // Predicated region
    $region18: #{tpu_custom_call.1} parent=1 // pred_check
      _
    $region19: #{tpu_custom_call.1} parent=1 // pred_check_branch
      %68 = sbr.rel (0) target = $region21
    $region20: #{tpu_custom_call.1} parent=1 // pred_region
      _
    $region21: #{tpu_custom_call.1} parent=1 // pred_fallthru
      _
    // Predicated region
    $region22: #{tpu_custom_call.1} parent=1 // pred_check
      _
    $region23: #{tpu_custom_call.1} parent=1 // pred_check_branch
      %70 = sbr.rel (0) target = $region25
    $region24: #{tpu_custom_call.1} parent=1 // pred_region
      %s72 = ssub.s32 16384, 16384
      %73 = vsyncadd [#allocation9], %s72
      %s74 = sshll.u32 [#allocation10], 4
      %s75 = int_to_ptr.vmem [resolvable:$true] %s74
      %80 = dma.hbm_to_vmem [thread:$0]  %s5, 16384, %s75, [#allocation9], 256, 256, 16
    $region25: #{tpu_custom_call.1} parent=1 // pred_fallthru
      _
    // Predicated region
    $region26: #{tpu_custom_call.1} parent=1 // pred_check
      _
    $region27: #{tpu_custom_call.1} parent=1 // pred_check_branch
      %82 = sbr.rel (0) target = $region29
    $region28: #{tpu_custom_call.1} parent=1 // pred_region
      _
    $region29: #{tpu_custom_call.1} parent=1 // pred_fallthru
      _
    // Predicated region
    $region30: #{tpu_custom_call.1} parent=1 // pred_check
      _
    $region31: #{tpu_custom_call.1} parent=1 // pred_check_branch
      %84 = sbr.rel (0) target = $region33
    $region32: #{tpu_custom_call.1} parent=1 // pred_region
      %s86 = ssub.s32 16384, 16384
      %87 = vsyncadd [#allocation12], %s86
      %s88 = sshll.u32 [#allocation11], 4
      %s89 = int_to_ptr.vmem [resolvable:$true] %s88
      %94 = dma.hbm_to_vmem [thread:$0]  %s7, 16384, %s89, [#allocation12], 256, 256, 16
    $region33: #{tpu_custom_call.1} parent=1 // pred_fallthru
      _
    // Predicated region
    $region34: #{tpu_custom_call.1} parent=1 // pred_check
      _
    $region35: #{tpu_custom_call.1} parent=1 // pred_check_branch
      %96 = sbr.rel (0) target = $region37
    $region36: #{tpu_custom_call.1} parent=1 // pred_region
      _
    $region37: #{tpu_custom_call.1} parent=1 // pred_fallthru
      _
    // Predicated region
    $region38: #{tpu_custom_call.1} parent=1 // pred_check
      _
    $region39: #{tpu_custom_call.1} parent=1 // pred_check_branch
      %98 = sbr.rel (0) target = $region41
    $region40: #{tpu_custom_call.1} parent=1 // pred_region
      %s100 = ssub.s32 4096, 4096
      %101 = vsyncadd [#allocation12], %s100
      %s102 = sshll.u32 [#allocation13], 4
      %s103 = int_to_ptr.vmem [resolvable:$true] %s102
      %108 = dma.hbm_to_vmem [thread:$0]  %s9, 4096, %s103, [#allocation12], 64, 64, 4
    $region41: #{tpu_custom_call.1} parent=1 // pred_fallthru
      _
    // Predicated region
    $region42: #{tpu_custom_call.1} parent=1 // pred_check
      _
    $region43: #{tpu_custom_call.1} parent=1 // pred_check_branch
      %110 = sbr.rel (0) target = $region45
    $region44: #{tpu_custom_call.1} parent=1 // pred_region
      _
    $region45: #{tpu_custom_call.1} parent=1 // pred_fallthru
      _
    // Predicated region
    $region46: #{tpu_custom_call.1} parent=1 // pred_check
      _
    $region47: #{tpu_custom_call.1} parent=1 // pred_check_branch
      %112 = sbr.rel (0) target = $region49
    $region48: #{tpu_custom_call.1} parent=1 // pred_region
      %113 = dma.done [#allocation3], 1024
    $region49: #{tpu_custom_call.1} parent=1 // pred_fallthru
      _
    // Predicated region
    $region50: #{tpu_custom_call.1} parent=1 // pred_check
      _
    $region51: #{tpu_custom_call.1} parent=1 // pred_check_branch
      %115 = sbr.rel (0) target = $region53
    $region52: #{tpu_custom_call.1} parent=1 // pred_region
      %116 = dma.done [#allocation6], 32768
    $region53: #{tpu_custom_call.1} parent=1 // pred_fallthru
      _
    // Predicated region
    $region54: #{tpu_custom_call.1} parent=1 // pred_check
      _
    $region55: #{tpu_custom_call.1} parent=1 // pred_check_branch
      %118 = sbr.rel (0) target = $region57
    $region56: #{tpu_custom_call.1} parent=1 // pred_region
      %119 = dma.done [#allocation6], 128
    $region57: #{tpu_custom_call.1} parent=1 // pred_fallthru
      _
    // Predicated region
    $region58: #{tpu_custom_call.1} parent=1 // pred_check
      _
    $region59: #{tpu_custom_call.1} parent=1 // pred_check_branch
      %121 = sbr.rel (0) target = $region61
    $region60: #{tpu_custom_call.1} parent=1 // pred_region
      %122 = dma.done [#allocation9], 32768
    $region61: #{tpu_custom_call.1} parent=1 // pred_fallthru
      _
    // Predicated region
    $region62: #{tpu_custom_call.1} parent=1 // pred_check
      _
    $region63: #{tpu_custom_call.1} parent=1 // pred_check_branch
      %124 = sbr.rel (0) target = $region65
    $region64: #{tpu_custom_call.1} parent=1 // pred_region
      %125 = dma.done [#allocation9], 16384
    $region65: #{tpu_custom_call.1} parent=1 // pred_fallthru
      _
    // Predicated region
    $region66: #{tpu_custom_call.1} parent=1 // pred_check
      _
    $region67: #{tpu_custom_call.1} parent=1 // pred_check_branch
      %127 = sbr.rel (0) target = $region69
    $region68: #{tpu_custom_call.1} parent=1 // pred_region
      %128 = dma.done [#allocation12], 16384
    $region69: #{tpu_custom_call.1} parent=1 // pred_fallthru
      _
    // Predicated region
    $region70: #{tpu_custom_call.1} parent=1 // pred_check
      _
    $region71: #{tpu_custom_call.1} parent=1 // pred_check_branch
      %130 = sbr.rel (0) target = $region73
    $region72: #{tpu_custom_call.1} parent=1 // pred_region
      %131 = dma.done [#allocation12], 4096
    $region73: #{tpu_custom_call.1} parent=1 // pred_fallthru
      _
    %v133 = vld [vmem:[#allocation2] sm:$0xff]
    %v134 = vld [vmem:[#allocation2 + $0x8] sm:$0xff]
    %v135 = vld [vmem:[#allocation2 + $0x10] sm:$0xff]
    %v136 = vld [vmem:[#allocation2 + $0x18] sm:$0xff]
    %v137 = vld [vmem:[#allocation2 + $0x20] sm:$0xff]
    %v138 = vld [vmem:[#allocation2 + $0x28] sm:$0xff]
    %v139 = vld [vmem:[#allocation2 + $0x30] sm:$0xff]
    %v140 = vld [vmem:[#allocation2 + $0x38] sm:$0xff]
    %v141 = vpack.c.bf16 %v137, %v133
    %v142 = vpack.c.bf16 %v138, %v134
    %v143 = vpack.c.bf16 %v139, %v135
    %v144 = vpack.c.bf16 %v140, %v136
    %v145 = vld [vmem:[#allocation5] sm:$0xff]
    %v146 = vld [vmem:[#allocation5 + $0x8] sm:$0xff]
    %v147 = vld [vmem:[#allocation5 + $0x10] sm:$0xff]
    %v148 = vld [vmem:[#allocation5 + $0x18] sm:$0xff]
    %v149 = vld [vmem:[#allocation5 + $0x20] sm:$0xff]
    %v150 = vld [vmem:[#allocation5 + $0x28] sm:$0xff]
    %v151 = vld [vmem:[#allocation5 + $0x30] sm:$0xff]
    %v152 = vld [vmem:[#allocation5 + $0x38] sm:$0xff]
    %v153 = vld [vmem:[#allocation5 + $0x40] sm:$0xff]
    %v154 = vld [vmem:[#allocation5 + $0x48] sm:$0xff]
    %v155 = vld [vmem:[#allocation5 + $0x50] sm:$0xff]
    %v156 = vld [vmem:[#allocation5 + $0x58] sm:$0xff]
    %v157 = vld [vmem:[#allocation5 + $0x60] sm:$0xff]
    %v158 = vld [vmem:[#allocation5 + $0x68] sm:$0xff]
    %v159 = vld [vmem:[#allocation5 + $0x70] sm:$0xff]
    %v160 = vld [vmem:[#allocation5 + $0x78] sm:$0xff]
    %v161 = vld [vmem:[#allocation5 + $0x80] sm:$0xff]
    %v162 = vld [vmem:[#allocation5 + $0x88] sm:$0xff]
    %v163 = vld [vmem:[#allocation5 + $0x90] sm:$0xff]
    %v164 = vld [vmem:[#allocation5 + $0x98] sm:$0xff]
    %v165 = vld [vmem:[#allocation5 + $0xa0] sm:$0xff]
    %v166 = vld [vmem:[#allocation5 + $0xa8] sm:$0xff]
    %v167 = vld [vmem:[#allocation5 + $0xb0] sm:$0xff]
    %v168 = vld [vmem:[#allocation5 + $0xb8] sm:$0xff]
    %v169 = vld [vmem:[#allocation5 + $0xc0] sm:$0xff]
    %v170 = vld [vmem:[#allocation5 + $0xc8] sm:$0xff]
    %v171 = vld [vmem:[#allocation5 + $0xd0] sm:$0xff]
    %v172 = vld [vmem:[#allocation5 + $0xd8] sm:$0xff]
    %v173 = vld [vmem:[#allocation5 + $0xe0] sm:$0xff]
    %v174 = vld [vmem:[#allocation5 + $0xe8] sm:$0xff]
    %v175 = vld [vmem:[#allocation5 + $0xf0] sm:$0xff]
    %v176 = vld [vmem:[#allocation5 + $0xf8] sm:$0xff]
    %v177 = vld [vmem:[#allocation5 + $0x100] sm:$0xff]
    %v178 = vld [vmem:[#allocation5 + $0x108] sm:$0xff]
    %v179 = vld [vmem:[#allocation5 + $0x110] sm:$0xff]
    %v180 = vld [vmem:[#allocation5 + $0x118] sm:$0xff]
    %v181 = vld [vmem:[#allocation5 + $0x120] sm:$0xff]
    %v182 = vld [vmem:[#allocation5 + $0x128] sm:$0xff]
    %v183 = vld [vmem:[#allocation5 + $0x130] sm:$0xff]
    %v184 = vld [vmem:[#allocation5 + $0x138] sm:$0xff]
    %v185 = vld [vmem:[#allocation5 + $0x140] sm:$0xff]
    %v186 = vld [vmem:[#allocation5 + $0x148] sm:$0xff]
    %v187 = vld [vmem:[#allocation5 + $0x150] sm:$0xff]
    %v188 = vld [vmem:[#allocation5 + $0x158] sm:$0xff]
    %v189 = vld [vmem:[#allocation5 + $0x160] sm:$0xff]
    %v190 = vld [vmem:[#allocation5 + $0x168] sm:$0xff]
    %v191 = vld [vmem:[#allocation5 + $0x170] sm:$0xff]
    %v192 = vld [vmem:[#allocation5 + $0x178] sm:$0xff]
    %v193 = vld [vmem:[#allocation5 + $0x180] sm:$0xff]
    %v194 = vld [vmem:[#allocation5 + $0x188] sm:$0xff]
    %v195 = vld [vmem:[#allocation5 + $0x190] sm:$0xff]
    %v196 = vld [vmem:[#allocation5 + $0x198] sm:$0xff]
    %v197 = vld [vmem:[#allocation5 + $0x1a0] sm:$0xff]
    %v198 = vld [vmem:[#allocation5 + $0x1a8] sm:$0xff]
    %v199 = vld [vmem:[#allocation5 + $0x1b0] sm:$0xff]
    %v200 = vld [vmem:[#allocation5 + $0x1b8] sm:$0xff]
    %v201 = vld [vmem:[#allocation5 + $0x1c0] sm:$0xff]
    %v202 = vld [vmem:[#allocation5 + $0x1c8] sm:$0xff]
    %v203 = vld [vmem:[#allocation5 + $0x1d0] sm:$0xff]
    %v204 = vld [vmem:[#allocation5 + $0x1d8] sm:$0xff]
    %v205 = vld [vmem:[#allocation5 + $0x1e0] sm:$0xff]
    %v206 = vld [vmem:[#allocation5 + $0x1e8] sm:$0xff]
    %v207 = vld [vmem:[#allocation5 + $0x1f0] sm:$0xff]
    %v208 = vld [vmem:[#allocation5 + $0x1f8] sm:$0xff]
    %v209 = vld [vmem:[#allocation5 + $0x200] sm:$0xff]
    %v210 = vld [vmem:[#allocation5 + $0x208] sm:$0xff]
    %v211 = vld [vmem:[#allocation5 + $0x210] sm:$0xff]
    %v212 = vld [vmem:[#allocation5 + $0x218] sm:$0xff]
    %v213 = vld [vmem:[#allocation5 + $0x220] sm:$0xff]
    %v214 = vld [vmem:[#allocation5 + $0x228] sm:$0xff]
    %v215 = vld [vmem:[#allocation5 + $0x230] sm:$0xff]
    %v216 = vld [vmem:[#allocation5 + $0x238] sm:$0xff]
    %v217 = vld [vmem:[#allocation5 + $0x240] sm:$0xff]
    %v218 = vld [vmem:[#allocation5 + $0x248] sm:$0xff]
    %v219 = vld [vmem:[#allocation5 + $0x250] sm:$0xff]
    %v220 = vld [vmem:[#allocation5 + $0x258] sm:$0xff]
    %v221 = vld [vmem:[#allocation5 + $0x260] sm:$0xff]
    %v222 = vld [vmem:[#allocation5 + $0x268] sm:$0xff]
    %v223 = vld [vmem:[#allocation5 + $0x270] sm:$0xff]
    %v224 = vld [vmem:[#allocation5 + $0x278] sm:$0xff]
    %v225 = vld [vmem:[#allocation5 + $0x280] sm:$0xff]
    %v226 = vld [vmem:[#allocation5 + $0x288] sm:$0xff]
    %v227 = vld [vmem:[#allocation5 + $0x290] sm:$0xff]
    %v228 = vld [vmem:[#allocation5 + $0x298] sm:$0xff]
    %v229 = vld [vmem:[#allocation5 + $0x2a0] sm:$0xff]
    %v230 = vld [vmem:[#allocation5 + $0x2a8] sm:$0xff]
    %v231 = vld [vmem:[#allocation5 + $0x2b0] sm:$0xff]
    %v232 = vld [vmem:[#allocation5 + $0x2b8] sm:$0xff]
    %v233 = vld [vmem:[#allocation5 + $0x2c0] sm:$0xff]
    %v234 = vld [vmem:[#allocation5 + $0x2c8] sm:$0xff]
    %v235 = vld [vmem:[#allocation5 + $0x2d0] sm:$0xff]
    %v236 = vld [vmem:[#allocation5 + $0x2d8] sm:$0xff]
    %v237 = vld [vmem:[#allocation5 + $0x2e0] sm:$0xff]
    %v238 = vld [vmem:[#allocation5 + $0x2e8] sm:$0xff]
    %v239 = vld [vmem:[#allocation5 + $0x2f0] sm:$0xff]
    %v240 = vld [vmem:[#allocation5 + $0x2f8] sm:$0xff]
    %v241 = vld [vmem:[#allocation5 + $0x300] sm:$0xff]
    %v242 = vld [vmem:[#allocation5 + $0x308] sm:$0xff]
    %v243 = vld [vmem:[#allocation5 + $0x310] sm:$0xff]
    %v244 = vld [vmem:[#allocation5 + $0x318] sm:$0xff]
    %v245 = vld [vmem:[#allocation5 + $0x320] sm:$0xff]
    %v246 = vld [vmem:[#allocation5 + $0x328] sm:$0xff]
    %v247 = vld [vmem:[#allocation5 + $0x330] sm:$0xff]
    %v248 = vld [vmem:[#allocation5 + $0x338] sm:$0xff]
    %v249 = vld [vmem:[#allocation5 + $0x340] sm:$0xff]
    %v250 = vld [vmem:[#allocation5 + $0x348] sm:$0xff]
    %v251 = vld [vmem:[#allocation5 + $0x350] sm:$0xff]
    %v252 = vld [vmem:[#allocation5 + $0x358] sm:$0xff]
    %v253 = vld [vmem:[#allocation5 + $0x360] sm:$0xff]
    %v254 = vld [vmem:[#allocation5 + $0x368] sm:$0xff]
    %v255 = vld [vmem:[#allocation5 + $0x370] sm:$0xff]
    %v256 = vld [vmem:[#allocation5 + $0x378] sm:$0xff]
    %v257 = vld [vmem:[#allocation5 + $0x380] sm:$0xff]
    %v258 = vld [vmem:[#allocation5 + $0x388] sm:$0xff]
    %v259 = vld [vmem:[#allocation5 + $0x390] sm:$0xff]
    %v260 = vld [vmem:[#allocation5 + $0x398] sm:$0xff]
    %v261 = vld [vmem:[#allocation5 + $0x3a0] sm:$0xff]
    %v262 = vld [vmem:[#allocation5 + $0x3a8] sm:$0xff]
    %v263 = vld [vmem:[#allocation5 + $0x3b0] sm:$0xff]
    %v264 = vld [vmem:[#allocation5 + $0x3b8] sm:$0xff]
    %v265 = vld [vmem:[#allocation5 + $0x3c0] sm:$0xff]
    %v266 = vld [vmem:[#allocation5 + $0x3c8] sm:$0xff]
    %v267 = vld [vmem:[#allocation5 + $0x3d0] sm:$0xff]
    %v268 = vld [vmem:[#allocation5 + $0x3d8] sm:$0xff]
    %v269 = vld [vmem:[#allocation5 + $0x3e0] sm:$0xff]
    %v270 = vld [vmem:[#allocation5 + $0x3e8] sm:$0xff]
    %v271 = vld [vmem:[#allocation5 + $0x3f0] sm:$0xff]
    %v272 = vld [vmem:[#allocation5 + $0x3f8] sm:$0xff]
    %v273 = vld [vmem:[#allocation5 + $0x400] sm:$0xff]
    %v274 = vld [vmem:[#allocation5 + $0x408] sm:$0xff]
    %v275 = vld [vmem:[#allocation5 + $0x410] sm:$0xff]
    %v276 = vld [vmem:[#allocation5 + $0x418] sm:$0xff]
    %v277 = vld [vmem:[#allocation5 + $0x420] sm:$0xff]
    %v278 = vld [vmem:[#allocation5 + $0x428] sm:$0xff]
    %v279 = vld [vmem:[#allocation5 + $0x430] sm:$0xff]
    %v280 = vld [vmem:[#allocation5 + $0x438] sm:$0xff]
    %v281 = vld [vmem:[#allocation5 + $0x440] sm:$0xff]
    %v282 = vld [vmem:[#allocation5 + $0x448] sm:$0xff]
    %v283 = vld [vmem:[#allocation5 + $0x450] sm:$0xff]
    %v284 = vld [vmem:[#allocation5 + $0x458] sm:$0xff]
    %v285 = vld [vmem:[#allocation5 + $0x460] sm:$0xff]
    %v286 = vld [vmem:[#allocation5 + $0x468] sm:$0xff]
    %v287 = vld [vmem:[#allocation5 + $0x470] sm:$0xff]
    %v288 = vld [vmem:[#allocation5 + $0x478] sm:$0xff]
    %v289 = vld [vmem:[#allocation5 + $0x480] sm:$0xff]
    %v290 = vld [vmem:[#allocation5 + $0x488] sm:$0xff]
    %v291 = vld [vmem:[#allocation5 + $0x490] sm:$0xff]
    %v292 = vld [vmem:[#allocation5 + $0x498] sm:$0xff]
    %v293 = vld [vmem:[#allocation5 + $0x4a0] sm:$0xff]
    %v294 = vld [vmem:[#allocation5 + $0x4a8] sm:$0xff]
    %v295 = vld [vmem:[#allocation5 + $0x4b0] sm:$0xff]
    %v296 = vld [vmem:[#allocation5 + $0x4b8] sm:$0xff]
    %v297 = vld [vmem:[#allocation5 + $0x4c0] sm:$0xff]
    %v298 = vld [vmem:[#allocation5 + $0x4c8] sm:$0xff]
    %v299 = vld [vmem:[#allocation5 + $0x4d0] sm:$0xff]
    %v300 = vld [vmem:[#allocation5 + $0x4d8] sm:$0xff]
    %v301 = vld [vmem:[#allocation5 + $0x4e0] sm:$0xff]
    %v302 = vld [vmem:[#allocation5 + $0x4e8] sm:$0xff]
    %v303 = vld [vmem:[#allocation5 + $0x4f0] sm:$0xff]
    %v304 = vld [vmem:[#allocation5 + $0x4f8] sm:$0xff]
    %v305 = vld [vmem:[#allocation5 + $0x500] sm:$0xff]
    %v306 = vld [vmem:[#allocation5 + $0x508] sm:$0xff]
    %v307 = vld [vmem:[#allocation5 + $0x510] sm:$0xff]
    %v308 = vld [vmem:[#allocation5 + $0x518] sm:$0xff]
    %v309 = vld [vmem:[#allocation5 + $0x520] sm:$0xff]
    %v310 = vld [vmem:[#allocation5 + $0x528] sm:$0xff]
    %v311 = vld [vmem:[#allocation5 + $0x530] sm:$0xff]
    %v312 = vld [vmem:[#allocation5 + $0x538] sm:$0xff]
    %v313 = vld [vmem:[#allocation5 + $0x540] sm:$0xff]
    %v314 = vld [vmem:[#allocation5 + $0x548] sm:$0xff]
    %v315 = vld [vmem:[#allocation5 + $0x550] sm:$0xff]
    %v316 = vld [vmem:[#allocation5 + $0x558] sm:$0xff]
    %v317 = vld [vmem:[#allocation5 + $0x560] sm:$0xff]
    %v318 = vld [vmem:[#allocation5 + $0x568] sm:$0xff]
    %v319 = vld [vmem:[#allocation5 + $0x570] sm:$0xff]
    %v320 = vld [vmem:[#allocation5 + $0x578] sm:$0xff]
    %v321 = vld [vmem:[#allocation5 + $0x580] sm:$0xff]
    %v322 = vld [vmem:[#allocation5 + $0x588] sm:$0xff]
    %v323 = vld [vmem:[#allocation5 + $0x590] sm:$0xff]
    %v324 = vld [vmem:[#allocation5 + $0x598] sm:$0xff]
    %v325 = vld [vmem:[#allocation5 + $0x5a0] sm:$0xff]
    %v326 = vld [vmem:[#allocation5 + $0x5a8] sm:$0xff]
    %v327 = vld [vmem:[#allocation5 + $0x5b0] sm:$0xff]
    %v328 = vld [vmem:[#allocation5 + $0x5b8] sm:$0xff]
    %v329 = vld [vmem:[#allocation5 + $0x5c0] sm:$0xff]
    %v330 = vld [vmem:[#allocation5 + $0x5c8] sm:$0xff]
    %v331 = vld [vmem:[#allocation5 + $0x5d0] sm:$0xff]
    %v332 = vld [vmem:[#allocation5 + $0x5d8] sm:$0xff]
    %v333 = vld [vmem:[#allocation5 + $0x5e0] sm:$0xff]
    %v334 = vld [vmem:[#allocation5 + $0x5e8] sm:$0xff]
    %v335 = vld [vmem:[#allocation5 + $0x5f0] sm:$0xff]
    %v336 = vld [vmem:[#allocation5 + $0x5f8] sm:$0xff]
    %v337 = vld [vmem:[#allocation5 + $0x600] sm:$0xff]
    %v338 = vld [vmem:[#allocation5 + $0x608] sm:$0xff]
    %v339 = vld [vmem:[#allocation5 + $0x610] sm:$0xff]
    %v340 = vld [vmem:[#allocation5 + $0x618] sm:$0xff]
    %v341 = vld [vmem:[#allocation5 + $0x620] sm:$0xff]
    %v342 = vld [vmem:[#allocation5 + $0x628] sm:$0xff]
    %v343 = vld [vmem:[#allocation5 + $0x630] sm:$0xff]
    %v344 = vld [vmem:[#allocation5 + $0x638] sm:$0xff]
    %v345 = vld [vmem:[#allocation5 + $0x640] sm:$0xff]
    %v346 = vld [vmem:[#allocation5 + $0x648] sm:$0xff]
    %v347 = vld [vmem:[#allocation5 + $0x650] sm:$0xff]
    %v348 = vld [vmem:[#allocation5 + $0x658] sm:$0xff]
    %v349 = vld [vmem:[#allocation5 + $0x660] sm:$0xff]
    %v350 = vld [vmem:[#allocation5 + $0x668] sm:$0xff]
    %v351 = vld [vmem:[#allocation5 + $0x670] sm:$0xff]
    %v352 = vld [vmem:[#allocation5 + $0x678] sm:$0xff]
    %v353 = vld [vmem:[#allocation5 + $0x680] sm:$0xff]
    %v354 = vld [vmem:[#allocation5 + $0x688] sm:$0xff]
    %v355 = vld [vmem:[#allocation5 + $0x690] sm:$0xff]
    %v356 = vld [vmem:[#allocation5 + $0x698] sm:$0xff]
    %v357 = vld [vmem:[#allocation5 + $0x6a0] sm:$0xff]
    %v358 = vld [vmem:[#allocation5 + $0x6a8] sm:$0xff]
    %v359 = vld [vmem:[#allocation5 + $0x6b0] sm:$0xff]
    %v360 = vld [vmem:[#allocation5 + $0x6b8] sm:$0xff]
    %v361 = vld [vmem:[#allocation5 + $0x6c0] sm:$0xff]
    %v362 = vld [vmem:[#allocation5 + $0x6c8] sm:$0xff]
    %v363 = vld [vmem:[#allocation5 + $0x6d0] sm:$0xff]
    %v364 = vld [vmem:[#allocation5 + $0x6d8] sm:$0xff]
    %v365 = vld [vmem:[#allocation5 + $0x6e0] sm:$0xff]
    %v366 = vld [vmem:[#allocation5 + $0x6e8] sm:$0xff]
    %v367 = vld [vmem:[#allocation5 + $0x6f0] sm:$0xff]
    %v368 = vld [vmem:[#allocation5 + $0x6f8] sm:$0xff]
    %v369 = vld [vmem:[#allocation5 + $0x700] sm:$0xff]
    %v370 = vld [vmem:[#allocation5 + $0x708] sm:$0xff]
    %v371 = vld [vmem:[#allocation5 + $0x710] sm:$0xff]
    %v372 = vld [vmem:[#allocation5 + $0x718] sm:$0xff]
    %v373 = vld [vmem:[#allocation5 + $0x720] sm:$0xff]
    %v374 = vld [vmem:[#allocation5 + $0x728] sm:$0xff]
    %v375 = vld [vmem:[#allocation5 + $0x730] sm:$0xff]
    %v376 = vld [vmem:[#allocation5 + $0x738] sm:$0xff]
    %v377 = vld [vmem:[#allocation5 + $0x740] sm:$0xff]
    %v378 = vld [vmem:[#allocation5 + $0x748] sm:$0xff]
    %v379 = vld [vmem:[#allocation5 + $0x750] sm:$0xff]
    %v380 = vld [vmem:[#allocation5 + $0x758] sm:$0xff]
    %v381 = vld [vmem:[#allocation5 + $0x760] sm:$0xff]
    %v382 = vld [vmem:[#allocation5 + $0x768] sm:$0xff]
    %v383 = vld [vmem:[#allocation5 + $0x770] sm:$0xff]
    %v384 = vld [vmem:[#allocation5 + $0x778] sm:$0xff]
    %v385 = vld [vmem:[#allocation5 + $0x780] sm:$0xff]
    %v386 = vld [vmem:[#allocation5 + $0x788] sm:$0xff]
    %v387 = vld [vmem:[#allocation5 + $0x790] sm:$0xff]
    %v388 = vld [vmem:[#allocation5 + $0x798] sm:$0xff]
    %v389 = vld [vmem:[#allocation5 + $0x7a0] sm:$0xff]
    %v390 = vld [vmem:[#allocation5 + $0x7a8] sm:$0xff]
    %v391 = vld [vmem:[#allocation5 + $0x7b0] sm:$0xff]
    %v392 = vld [vmem:[#allocation5 + $0x7b8] sm:$0xff]
    %v393 = vld [vmem:[#allocation5 + $0x7c0] sm:$0xff]
    %v394 = vld [vmem:[#allocation5 + $0x7c8] sm:$0xff]
    %v395 = vld [vmem:[#allocation5 + $0x7d0] sm:$0xff]
    %v396 = vld [vmem:[#allocation5 + $0x7d8] sm:$0xff]
    %v397 = vld [vmem:[#allocation5 + $0x7e0] sm:$0xff]
    %v398 = vld [vmem:[#allocation5 + $0x7e8] sm:$0xff]
    %v399 = vld [vmem:[#allocation5 + $0x7f0] sm:$0xff]
    %v400 = vld [vmem:[#allocation5 + $0x7f8] sm:$0xff]
    %v401 = vld [vmem:[#allocation7] sm:$0xff]
    %v403 = vlaneseq
    %v404 = vshrl.u32 %v403, 7
    %v405 = vsub.s32 0, %v404
    %v406 = vrot.slane %v401, %v405
    %v407 = vlaneseq
    %v408 = vshrl.u32 %v407, 7
    %v409 = vsub.s32 1, %v408
    %v410 = vrot.slane %v401, %v409
    %v411 = vlaneseq
    %v412 = vshrl.u32 %v411, 7
    %v413 = vsub.s32 2, %v412
    %v414 = vrot.slane %v401, %v413
    %v415 = vlaneseq
    %v416 = vshrl.u32 %v415, 7
    %v417 = vsub.s32 3, %v416
    %v418 = vrot.slane %v401, %v417
    %v419 = vlaneseq
    %v420 = vshrl.u32 %v419, 7
    %v421 = vsub.s32 4, %v420
    %v422 = vrot.slane %v401, %v421
    %v423 = vlaneseq
    %v424 = vshrl.u32 %v423, 7
    %v425 = vsub.s32 5, %v424
    %v426 = vrot.slane %v401, %v425
    %v427 = vlaneseq
    %v428 = vshrl.u32 %v427, 7
    %v429 = vsub.s32 6, %v428
    %v430 = vrot.slane %v401, %v429
    %v431 = vlaneseq
    %v432 = vshrl.u32 %v431, 7
    %v433 = vsub.s32 7, %v432
    %v434 = vrot.slane %v401, %v433
    %v699 = vunpack.c.l.b16 %v145
    %v700 = vunpack.c.h.b16 %v145
    %v701 = vunpack.c.l.b16 %v146
    %v702 = vunpack.c.h.b16 %v146
    %v703 = vunpack.c.l.b16 %v147
    %v704 = vunpack.c.h.b16 %v147
    %v705 = vunpack.c.l.b16 %v148
    %v706 = vunpack.c.h.b16 %v148
    %v707 = vunpack.c.l.b16 %v149
    %v708 = vunpack.c.h.b16 %v149
    %v709 = vunpack.c.l.b16 %v150
    %v710 = vunpack.c.h.b16 %v150
    %v711 = vunpack.c.l.b16 %v151
    %v712 = vunpack.c.h.b16 %v151
    %v713 = vunpack.c.l.b16 %v152
    %v714 = vunpack.c.h.b16 %v152
    %v715 = vunpack.c.l.b16 %v153
    %v716 = vunpack.c.h.b16 %v153
    %v717 = vunpack.c.l.b16 %v154
    %v718 = vunpack.c.h.b16 %v154
    %v719 = vunpack.c.l.b16 %v155
    %v720 = vunpack.c.h.b16 %v155
    %v721 = vunpack.c.l.b16 %v156
    %v722 = vunpack.c.h.b16 %v156
    %v723 = vunpack.c.l.b16 %v157
    %v724 = vunpack.c.h.b16 %v157
    %v725 = vunpack.c.l.b16 %v158
    %v726 = vunpack.c.h.b16 %v158
    %v727 = vunpack.c.l.b16 %v159
    %v728 = vunpack.c.h.b16 %v159
    %v729 = vunpack.c.l.b16 %v160
    %v730 = vunpack.c.h.b16 %v160
    %v731 = vunpack.c.l.b16 %v161
    %v732 = vunpack.c.h.b16 %v161
    %v733 = vunpack.c.l.b16 %v162
    %v734 = vunpack.c.h.b16 %v162
    %v735 = vunpack.c.l.b16 %v163
    %v736 = vunpack.c.h.b16 %v163
    %v737 = vunpack.c.l.b16 %v164
    %v738 = vunpack.c.h.b16 %v164
    %v739 = vunpack.c.l.b16 %v165
    %v740 = vunpack.c.h.b16 %v165
    %v741 = vunpack.c.l.b16 %v166
    %v742 = vunpack.c.h.b16 %v166
    %v743 = vunpack.c.l.b16 %v167
    %v744 = vunpack.c.h.b16 %v167
    %v745 = vunpack.c.l.b16 %v168
    %v746 = vunpack.c.h.b16 %v168
    %v747 = vunpack.c.l.b16 %v169
    %v748 = vunpack.c.h.b16 %v169
    %v749 = vunpack.c.l.b16 %v170
    %v750 = vunpack.c.h.b16 %v170
    %v751 = vunpack.c.l.b16 %v171
    %v752 = vunpack.c.h.b16 %v171
    %v753 = vunpack.c.l.b16 %v172
    %v754 = vunpack.c.h.b16 %v172
    %v755 = vunpack.c.l.b16 %v173
    %v756 = vunpack.c.h.b16 %v173
    %v757 = vunpack.c.l.b16 %v174
    %v758 = vunpack.c.h.b16 %v174
    %v759 = vunpack.c.l.b16 %v175
    %v760 = vunpack.c.h.b16 %v175
    %v761 = vunpack.c.l.b16 %v176
    %v762 = vunpack.c.h.b16 %v176
    %v763 = vunpack.c.l.b16 %v177
    %v764 = vunpack.c.h.b16 %v177
    %v765 = vunpack.c.l.b16 %v178
    %v766 = vunpack.c.h.b16 %v178
    %v767 = vunpack.c.l.b16 %v179
    %v768 = vunpack.c.h.b16 %v179
    %v769 = vunpack.c.l.b16 %v180
    %v770 = vunpack.c.h.b16 %v180
    %v771 = vunpack.c.l.b16 %v181
    %v772 = vunpack.c.h.b16 %v181
    %v773 = vunpack.c.l.b16 %v182
    %v774 = vunpack.c.h.b16 %v182
    %v775 = vunpack.c.l.b16 %v183
    %v776 = vunpack.c.h.b16 %v183
    %v777 = vunpack.c.l.b16 %v184
    %v778 = vunpack.c.h.b16 %v184
    %v779 = vunpack.c.l.b16 %v185
    %v780 = vunpack.c.h.b16 %v185
    %v781 = vunpack.c.l.b16 %v186
    %v782 = vunpack.c.h.b16 %v186
    %v783 = vunpack.c.l.b16 %v187
    %v784 = vunpack.c.h.b16 %v187
    %v785 = vunpack.c.l.b16 %v188
    %v786 = vunpack.c.h.b16 %v188
    %v787 = vunpack.c.l.b16 %v189
    %v788 = vunpack.c.h.b16 %v189
    %v789 = vunpack.c.l.b16 %v190
    %v790 = vunpack.c.h.b16 %v190
    %v791 = vunpack.c.l.b16 %v191
    %v792 = vunpack.c.h.b16 %v191
    %v793 = vunpack.c.l.b16 %v192
    %v794 = vunpack.c.h.b16 %v192
    %v795 = vunpack.c.l.b16 %v193
    %v796 = vunpack.c.h.b16 %v193
    %v797 = vunpack.c.l.b16 %v194
    %v798 = vunpack.c.h.b16 %v194
    %v799 = vunpack.c.l.b16 %v195
    %v800 = vunpack.c.h.b16 %v195
    %v801 = vunpack.c.l.b16 %v196
    %v802 = vunpack.c.h.b16 %v196
    %v803 = vunpack.c.l.b16 %v197
    %v804 = vunpack.c.h.b16 %v197
    %v805 = vunpack.c.l.b16 %v198
    %v806 = vunpack.c.h.b16 %v198
    %v807 = vunpack.c.l.b16 %v199
    %v808 = vunpack.c.h.b16 %v199
    %v809 = vunpack.c.l.b16 %v200
    %v810 = vunpack.c.h.b16 %v200
    %v811 = vunpack.c.l.b16 %v201
    %v812 = vunpack.c.h.b16 %v201
    %v813 = vunpack.c.l.b16 %v202
    %v814 = vunpack.c.h.b16 %v202
    %v815 = vunpack.c.l.b16 %v203
    %v816 = vunpack.c.h.b16 %v203
    %v817 = vunpack.c.l.b16 %v204
    %v818 = vunpack.c.h.b16 %v204
    %v819 = vunpack.c.l.b16 %v205
    %v820 = vunpack.c.h.b16 %v205
    %v821 = vunpack.c.l.b16 %v206
    %v822 = vunpack.c.h.b16 %v206
    %v823 = vunpack.c.l.b16 %v207
    %v824 = vunpack.c.h.b16 %v207
    %v825 = vunpack.c.l.b16 %v208
    %v826 = vunpack.c.h.b16 %v208
    %v827 = vunpack.c.l.b16 %v209
    %v828 = vunpack.c.h.b16 %v209
    %v829 = vunpack.c.l.b16 %v210
    %v830 = vunpack.c.h.b16 %v210
    %v831 = vunpack.c.l.b16 %v211
    %v832 = vunpack.c.h.b16 %v211
    %v833 = vunpack.c.l.b16 %v212
    %v834 = vunpack.c.h.b16 %v212
    %v835 = vunpack.c.l.b16 %v213
    %v836 = vunpack.c.h.b16 %v213
    %v837 = vunpack.c.l.b16 %v214
    %v838 = vunpack.c.h.b16 %v214
    %v839 = vunpack.c.l.b16 %v215
    %v840 = vunpack.c.h.b16 %v215
    %v841 = vunpack.c.l.b16 %v216
    %v842 = vunpack.c.h.b16 %v216
    %v843 = vunpack.c.l.b16 %v217
    %v844 = vunpack.c.h.b16 %v217
    %v845 = vunpack.c.l.b16 %v218
    %v846 = vunpack.c.h.b16 %v218
    %v847 = vunpack.c.l.b16 %v219
    %v848 = vunpack.c.h.b16 %v219
    %v849 = vunpack.c.l.b16 %v220
    %v850 = vunpack.c.h.b16 %v220
    %v851 = vunpack.c.l.b16 %v221
    %v852 = vunpack.c.h.b16 %v221
    %v853 = vunpack.c.l.b16 %v222
    %v854 = vunpack.c.h.b16 %v222
    %v855 = vunpack.c.l.b16 %v223
    %v856 = vunpack.c.h.b16 %v223
    %v857 = vunpack.c.l.b16 %v224
    %v858 = vunpack.c.h.b16 %v224
    %v859 = vunpack.c.l.b16 %v225
    %v860 = vunpack.c.h.b16 %v225
    %v861 = vunpack.c.l.b16 %v226
    %v862 = vunpack.c.h.b16 %v226
    %v863 = vunpack.c.l.b16 %v227
    %v864 = vunpack.c.h.b16 %v227
    %v865 = vunpack.c.l.b16 %v228
    %v866 = vunpack.c.h.b16 %v228
    %v867 = vunpack.c.l.b16 %v229
    %v868 = vunpack.c.h.b16 %v229
    %v869 = vunpack.c.l.b16 %v230
    %v870 = vunpack.c.h.b16 %v230
    %v871 = vunpack.c.l.b16 %v231
    %v872 = vunpack.c.h.b16 %v231
    %v873 = vunpack.c.l.b16 %v232
    %v874 = vunpack.c.h.b16 %v232
    %v875 = vunpack.c.l.b16 %v233
    %v876 = vunpack.c.h.b16 %v233
    %v877 = vunpack.c.l.b16 %v234
    %v878 = vunpack.c.h.b16 %v234
    %v879 = vunpack.c.l.b16 %v235
    %v880 = vunpack.c.h.b16 %v235
    %v881 = vunpack.c.l.b16 %v236
    %v882 = vunpack.c.h.b16 %v236
    %v883 = vunpack.c.l.b16 %v237
    %v884 = vunpack.c.h.b16 %v237
    %v885 = vunpack.c.l.b16 %v238
    %v886 = vunpack.c.h.b16 %v238
    %v887 = vunpack.c.l.b16 %v239
    %v888 = vunpack.c.h.b16 %v239
    %v889 = vunpack.c.l.b16 %v240
    %v890 = vunpack.c.h.b16 %v240
    %v891 = vunpack.c.l.b16 %v241
    %v892 = vunpack.c.h.b16 %v241
    %v893 = vunpack.c.l.b16 %v242
    %v894 = vunpack.c.h.b16 %v242
    %v895 = vunpack.c.l.b16 %v243
    %v896 = vunpack.c.h.b16 %v243
    %v897 = vunpack.c.l.b16 %v244
    %v898 = vunpack.c.h.b16 %v244
    %v899 = vunpack.c.l.b16 %v245
    %v900 = vunpack.c.h.b16 %v245
    %v901 = vunpack.c.l.b16 %v246
    %v902 = vunpack.c.h.b16 %v246
    %v903 = vunpack.c.l.b16 %v247
    %v904 = vunpack.c.h.b16 %v247
    %v905 = vunpack.c.l.b16 %v248
    %v906 = vunpack.c.h.b16 %v248
    %v907 = vunpack.c.l.b16 %v249
    %v908 = vunpack.c.h.b16 %v249
    %v909 = vunpack.c.l.b16 %v250
    %v910 = vunpack.c.h.b16 %v250
    %v911 = vunpack.c.l.b16 %v251
    %v912 = vunpack.c.h.b16 %v251
    %v913 = vunpack.c.l.b16 %v252
    %v914 = vunpack.c.h.b16 %v252
    %v915 = vunpack.c.l.b16 %v253
    %v916 = vunpack.c.h.b16 %v253
    %v917 = vunpack.c.l.b16 %v254
    %v918 = vunpack.c.h.b16 %v254
    %v919 = vunpack.c.l.b16 %v255
    %v920 = vunpack.c.h.b16 %v255
    %v921 = vunpack.c.l.b16 %v256
    %v922 = vunpack.c.h.b16 %v256
    %v923 = vunpack.c.l.b16 %v257
    %v924 = vunpack.c.h.b16 %v257
    %v925 = vunpack.c.l.b16 %v258
    %v926 = vunpack.c.h.b16 %v258
    %v927 = vunpack.c.l.b16 %v259
    %v928 = vunpack.c.h.b16 %v259
    %v929 = vunpack.c.l.b16 %v260
    %v930 = vunpack.c.h.b16 %v260
    %v931 = vunpack.c.l.b16 %v261
    %v932 = vunpack.c.h.b16 %v261
    %v933 = vunpack.c.l.b16 %v262
    %v934 = vunpack.c.h.b16 %v262
    %v935 = vunpack.c.l.b16 %v263
    %v936 = vunpack.c.h.b16 %v263
    %v937 = vunpack.c.l.b16 %v264
    %v938 = vunpack.c.h.b16 %v264
    %v939 = vunpack.c.l.b16 %v265
    %v940 = vunpack.c.h.b16 %v265
    %v941 = vunpack.c.l.b16 %v266
    %v942 = vunpack.c.h.b16 %v266
    %v943 = vunpack.c.l.b16 %v267
    %v944 = vunpack.c.h.b16 %v267
    %v945 = vunpack.c.l.b16 %v268
    %v946 = vunpack.c.h.b16 %v268
    %v947 = vunpack.c.l.b16 %v269
    %v948 = vunpack.c.h.b16 %v269
    %v949 = vunpack.c.l.b16 %v270
    %v950 = vunpack.c.h.b16 %v270
    %v951 = vunpack.c.l.b16 %v271
    %v952 = vunpack.c.h.b16 %v271
    %v953 = vunpack.c.l.b16 %v272
    %v954 = vunpack.c.h.b16 %v272
    %v955 = vunpack.c.l.b16 %v273
    %v956 = vunpack.c.h.b16 %v273
    %v957 = vunpack.c.l.b16 %v274
    %v958 = vunpack.c.h.b16 %v274
    %v959 = vunpack.c.l.b16 %v275
    %v960 = vunpack.c.h.b16 %v275
    %v961 = vunpack.c.l.b16 %v276
    %v962 = vunpack.c.h.b16 %v276
    %v963 = vunpack.c.l.b16 %v277
    %v964 = vunpack.c.h.b16 %v277
    %v965 = vunpack.c.l.b16 %v278
    %v966 = vunpack.c.h.b16 %v278
    %v967 = vunpack.c.l.b16 %v279
    %v968 = vunpack.c.h.b16 %v279
    %v969 = vunpack.c.l.b16 %v280
    %v970 = vunpack.c.h.b16 %v280
    %v971 = vunpack.c.l.b16 %v281
    %v972 = vunpack.c.h.b16 %v281
    %v973 = vunpack.c.l.b16 %v282
    %v974 = vunpack.c.h.b16 %v282
    %v975 = vunpack.c.l.b16 %v283
    %v976 = vunpack.c.h.b16 %v283
    %v977 = vunpack.c.l.b16 %v284
    %v978 = vunpack.c.h.b16 %v284
    %v979 = vunpack.c.l.b16 %v285
    %v980 = vunpack.c.h.b16 %v285
    %v981 = vunpack.c.l.b16 %v286
    %v982 = vunpack.c.h.b16 %v286
    %v983 = vunpack.c.l.b16 %v287
    %v984 = vunpack.c.h.b16 %v287
    %v985 = vunpack.c.l.b16 %v288
    %v986 = vunpack.c.h.b16 %v288
    %v987 = vunpack.c.l.b16 %v289
    %v988 = vunpack.c.h.b16 %v289
    %v989 = vunpack.c.l.b16 %v290
    %v990 = vunpack.c.h.b16 %v290
    %v991 = vunpack.c.l.b16 %v291
    %v992 = vunpack.c.h.b16 %v291
    %v993 = vunpack.c.l.b16 %v292
    %v994 = vunpack.c.h.b16 %v292
    %v995 = vunpack.c.l.b16 %v293
    %v996 = vunpack.c.h.b16 %v293
    %v997 = vunpack.c.l.b16 %v294
    %v998 = vunpack.c.h.b16 %v294
    %v999 = vunpack.c.l.b16 %v295
    %v1000 = vunpack.c.h.b16 %v295
    %v1001 = vunpack.c.l.b16 %v296
    %v1002 = vunpack.c.h.b16 %v296
    %v1003 = vunpack.c.l.b16 %v297
    %v1004 = vunpack.c.h.b16 %v297
    %v1005 = vunpack.c.l.b16 %v298
    %v1006 = vunpack.c.h.b16 %v298
    %v1007 = vunpack.c.l.b16 %v299
    %v1008 = vunpack.c.h.b16 %v299
    %v1009 = vunpack.c.l.b16 %v300
    %v1010 = vunpack.c.h.b16 %v300
    %v1011 = vunpack.c.l.b16 %v301
    %v1012 = vunpack.c.h.b16 %v301
    %v1013 = vunpack.c.l.b16 %v302
    %v1014 = vunpack.c.h.b16 %v302
    %v1015 = vunpack.c.l.b16 %v303
    %v1016 = vunpack.c.h.b16 %v303
    %v1017 = vunpack.c.l.b16 %v304
    %v1018 = vunpack.c.h.b16 %v304
    %v1019 = vunpack.c.l.b16 %v305
    %v1020 = vunpack.c.h.b16 %v305
    %v1021 = vunpack.c.l.b16 %v306
    %v1022 = vunpack.c.h.b16 %v306
    %v1023 = vunpack.c.l.b16 %v307
    %v1024 = vunpack.c.h.b16 %v307
    %v1025 = vunpack.c.l.b16 %v308
    %v1026 = vunpack.c.h.b16 %v308
    %v1027 = vunpack.c.l.b16 %v309
    %v1028 = vunpack.c.h.b16 %v309
    %v1029 = vunpack.c.l.b16 %v310
    %v1030 = vunpack.c.h.b16 %v310
    %v1031 = vunpack.c.l.b16 %v311
    %v1032 = vunpack.c.h.b16 %v311
    %v1033 = vunpack.c.l.b16 %v312
    %v1034 = vunpack.c.h.b16 %v312
    %v1035 = vunpack.c.l.b16 %v313
    %v1036 = vunpack.c.h.b16 %v313
    %v1037 = vunpack.c.l.b16 %v314
    %v1038 = vunpack.c.h.b16 %v314
    %v1039 = vunpack.c.l.b16 %v315
    %v1040 = vunpack.c.h.b16 %v315
    %v1041 = vunpack.c.l.b16 %v316
    %v1042 = vunpack.c.h.b16 %v316
    %v1043 = vunpack.c.l.b16 %v317
    %v1044 = vunpack.c.h.b16 %v317
    %v1045 = vunpack.c.l.b16 %v318
    %v1046 = vunpack.c.h.b16 %v318
    %v1047 = vunpack.c.l.b16 %v319
    %v1048 = vunpack.c.h.b16 %v319
    %v1049 = vunpack.c.l.b16 %v320
    %v1050 = vunpack.c.h.b16 %v320
    %v1051 = vunpack.c.l.b16 %v321
    %v1052 = vunpack.c.h.b16 %v321
    %v1053 = vunpack.c.l.b16 %v322
    %v1054 = vunpack.c.h.b16 %v322
    %v1055 = vunpack.c.l.b16 %v323
    %v1056 = vunpack.c.h.b16 %v323
    %v1057 = vunpack.c.l.b16 %v324
    %v1058 = vunpack.c.h.b16 %v324
    %v1059 = vunpack.c.l.b16 %v325
    %v1060 = vunpack.c.h.b16 %v325
    %v1061 = vunpack.c.l.b16 %v326
    %v1062 = vunpack.c.h.b16 %v326
    %v1063 = vunpack.c.l.b16 %v327
    %v1064 = vunpack.c.h.b16 %v327
    %v1065 = vunpack.c.l.b16 %v328
    %v1066 = vunpack.c.h.b16 %v328
    %v1067 = vunpack.c.l.b16 %v329
    %v1068 = vunpack.c.h.b16 %v329
    %v1069 = vunpack.c.l.b16 %v330
    %v1070 = vunpack.c.h.b16 %v330
    %v1071 = vunpack.c.l.b16 %v331
    %v1072 = vunpack.c.h.b16 %v331
    %v1073 = vunpack.c.l.b16 %v332
    %v1074 = vunpack.c.h.b16 %v332
    %v1075 = vunpack.c.l.b16 %v333
    %v1076 = vunpack.c.h.b16 %v333
    %v1077 = vunpack.c.l.b16 %v334
    %v1078 = vunpack.c.h.b16 %v334
    %v1079 = vunpack.c.l.b16 %v335
    %v1080 = vunpack.c.h.b16 %v335
    %v1081 = vunpack.c.l.b16 %v336
    %v1082 = vunpack.c.h.b16 %v336
    %v1083 = vunpack.c.l.b16 %v337
    %v1084 = vunpack.c.h.b16 %v337
    %v1085 = vunpack.c.l.b16 %v338
    %v1086 = vunpack.c.h.b16 %v338
    %v1087 = vunpack.c.l.b16 %v339
    %v1088 = vunpack.c.h.b16 %v339
    %v1089 = vunpack.c.l.b16 %v340
    %v1090 = vunpack.c.h.b16 %v340
    %v1091 = vunpack.c.l.b16 %v341
    %v1092 = vunpack.c.h.b16 %v341
    %v1093 = vunpack.c.l.b16 %v342
    %v1094 = vunpack.c.h.b16 %v342
    %v1095 = vunpack.c.l.b16 %v343
    %v1096 = vunpack.c.h.b16 %v343
    %v1097 = vunpack.c.l.b16 %v344
    %v1098 = vunpack.c.h.b16 %v344
    %v1099 = vunpack.c.l.b16 %v345
    %v1100 = vunpack.c.h.b16 %v345
    %v1101 = vunpack.c.l.b16 %v346
    %v1102 = vunpack.c.h.b16 %v346
    %v1103 = vunpack.c.l.b16 %v347
    %v1104 = vunpack.c.h.b16 %v347
    %v1105 = vunpack.c.l.b16 %v348
    %v1106 = vunpack.c.h.b16 %v348
    %v1107 = vunpack.c.l.b16 %v349
    %v1108 = vunpack.c.h.b16 %v349
    %v1109 = vunpack.c.l.b16 %v350
    %v1110 = vunpack.c.h.b16 %v350
    %v1111 = vunpack.c.l.b16 %v351
    %v1112 = vunpack.c.h.b16 %v351
    %v1113 = vunpack.c.l.b16 %v352
    %v1114 = vunpack.c.h.b16 %v352
    %v1115 = vunpack.c.l.b16 %v353
    %v1116 = vunpack.c.h.b16 %v353
    %v1117 = vunpack.c.l.b16 %v354
    %v1118 = vunpack.c.h.b16 %v354
    %v1119 = vunpack.c.l.b16 %v355
    %v1120 = vunpack.c.h.b16 %v355
    %v1121 = vunpack.c.l.b16 %v356
    %v1122 = vunpack.c.h.b16 %v356
    %v1123 = vunpack.c.l.b16 %v357
    %v1124 = vunpack.c.h.b16 %v357
    %v1125 = vunpack.c.l.b16 %v358
    %v1126 = vunpack.c.h.b16 %v358
    %v1127 = vunpack.c.l.b16 %v359
    %v1128 = vunpack.c.h.b16 %v359
    %v1129 = vunpack.c.l.b16 %v360
    %v1130 = vunpack.c.h.b16 %v360
    %v1131 = vunpack.c.l.b16 %v361
    %v1132 = vunpack.c.h.b16 %v361
    %v1133 = vunpack.c.l.b16 %v362
    %v1134 = vunpack.c.h.b16 %v362
    %v1135 = vunpack.c.l.b16 %v363
    %v1136 = vunpack.c.h.b16 %v363
    %v1137 = vunpack.c.l.b16 %v364
    %v1138 = vunpack.c.h.b16 %v364
    %v1139 = vunpack.c.l.b16 %v365
    %v1140 = vunpack.c.h.b16 %v365
    %v1141 = vunpack.c.l.b16 %v366
    %v1142 = vunpack.c.h.b16 %v366
    %v1143 = vunpack.c.l.b16 %v367
    %v1144 = vunpack.c.h.b16 %v367
    %v1145 = vunpack.c.l.b16 %v368
    %v1146 = vunpack.c.h.b16 %v368
    %v1147 = vunpack.c.l.b16 %v369
    %v1148 = vunpack.c.h.b16 %v369
    %v1149 = vunpack.c.l.b16 %v370
    %v1150 = vunpack.c.h.b16 %v370
    %v1151 = vunpack.c.l.b16 %v371
    %v1152 = vunpack.c.h.b16 %v371
    %v1153 = vunpack.c.l.b16 %v372
    %v1154 = vunpack.c.h.b16 %v372
    %v1155 = vunpack.c.l.b16 %v373
    %v1156 = vunpack.c.h.b16 %v373
    %v1157 = vunpack.c.l.b16 %v374
    %v1158 = vunpack.c.h.b16 %v374
    %v1159 = vunpack.c.l.b16 %v375
    %v1160 = vunpack.c.h.b16 %v375
    %v1161 = vunpack.c.l.b16 %v376
    %v1162 = vunpack.c.h.b16 %v376
    %v1163 = vunpack.c.l.b16 %v377
    %v1164 = vunpack.c.h.b16 %v377
    %v1165 = vunpack.c.l.b16 %v378
    %v1166 = vunpack.c.h.b16 %v378
    %v1167 = vunpack.c.l.b16 %v379
    %v1168 = vunpack.c.h.b16 %v379
    %v1169 = vunpack.c.l.b16 %v380
    %v1170 = vunpack.c.h.b16 %v380
    %v1171 = vunpack.c.l.b16 %v381
    %v1172 = vunpack.c.h.b16 %v381
    %v1173 = vunpack.c.l.b16 %v382
    %v1174 = vunpack.c.h.b16 %v382
    %v1175 = vunpack.c.l.b16 %v383
    %v1176 = vunpack.c.h.b16 %v383
    %v1177 = vunpack.c.l.b16 %v384
    %v1178 = vunpack.c.h.b16 %v384
    %v1179 = vunpack.c.l.b16 %v385
    %v1180 = vunpack.c.h.b16 %v385
    %v1181 = vunpack.c.l.b16 %v386
    %v1182 = vunpack.c.h.b16 %v386
    %v1183 = vunpack.c.l.b16 %v387
    %v1184 = vunpack.c.h.b16 %v387
    %v1185 = vunpack.c.l.b16 %v388
    %v1186 = vunpack.c.h.b16 %v388
    %v1187 = vunpack.c.l.b16 %v389
    %v1188 = vunpack.c.h.b16 %v389
    %v1189 = vunpack.c.l.b16 %v390
    %v1190 = vunpack.c.h.b16 %v390
    %v1191 = vunpack.c.l.b16 %v391
    %v1192 = vunpack.c.h.b16 %v391
    %v1193 = vunpack.c.l.b16 %v392
    %v1194 = vunpack.c.h.b16 %v392
    %v1195 = vunpack.c.l.b16 %v393
    %v1196 = vunpack.c.h.b16 %v393
    %v1197 = vunpack.c.l.b16 %v394
    %v1198 = vunpack.c.h.b16 %v394
    %v1199 = vunpack.c.l.b16 %v395
    %v1200 = vunpack.c.h.b16 %v395
    %v1201 = vunpack.c.l.b16 %v396
    %v1202 = vunpack.c.h.b16 %v396
    %v1203 = vunpack.c.l.b16 %v397
    %v1204 = vunpack.c.h.b16 %v397
    %v1205 = vunpack.c.l.b16 %v398
    %v1206 = vunpack.c.h.b16 %v398
    %v1207 = vunpack.c.l.b16 %v399
    %v1208 = vunpack.c.h.b16 %v399
    %v1209 = vunpack.c.l.b16 %v400
    %v1210 = vunpack.c.h.b16 %v400
    %v1211 = vpack.c.b16 %v707, %v699
    %v1212 = vpack.c.b16 %v708, %v700
    %v1213 = vpack.c.b16 %v709, %v701
    %v1214 = vpack.c.b16 %v710, %v702
    %v1215 = vpack.c.b16 %v711, %v703
    %v1216 = vpack.c.b16 %v712, %v704
    %v1217 = vpack.c.b16 %v713, %v705
    %v1218 = vpack.c.b16 %v714, %v706
    %v1219 = vpack.c.b16 %v723, %v715
    %v1220 = vpack.c.b16 %v724, %v716
    %v1221 = vpack.c.b16 %v725, %v717
    %v1222 = vpack.c.b16 %v726, %v718
    %v1223 = vpack.c.b16 %v727, %v719
    %v1224 = vpack.c.b16 %v728, %v720
    %v1225 = vpack.c.b16 %v729, %v721
    %v1226 = vpack.c.b16 %v730, %v722
    %v1227 = vpack.c.b16 %v739, %v731
    %v1228 = vpack.c.b16 %v740, %v732
    %v1229 = vpack.c.b16 %v741, %v733
    %v1230 = vpack.c.b16 %v742, %v734
    %v1231 = vpack.c.b16 %v743, %v735
    %v1232 = vpack.c.b16 %v744, %v736
    %v1233 = vpack.c.b16 %v745, %v737
    %v1234 = vpack.c.b16 %v746, %v738
    %v1235 = vpack.c.b16 %v755, %v747
    %v1236 = vpack.c.b16 %v756, %v748
    %v1237 = vpack.c.b16 %v757, %v749
    %v1238 = vpack.c.b16 %v758, %v750
    %v1239 = vpack.c.b16 %v759, %v751
    %v1240 = vpack.c.b16 %v760, %v752
    %v1241 = vpack.c.b16 %v761, %v753
    %v1242 = vpack.c.b16 %v762, %v754
    %v1243 = vpack.c.b16 %v771, %v763
    %v1244 = vpack.c.b16 %v772, %v764
    %v1245 = vpack.c.b16 %v773, %v765
    %v1246 = vpack.c.b16 %v774, %v766
    %v1247 = vpack.c.b16 %v775, %v767
    %v1248 = vpack.c.b16 %v776, %v768
    %v1249 = vpack.c.b16 %v777, %v769
    %v1250 = vpack.c.b16 %v778, %v770
    %v1251 = vpack.c.b16 %v787, %v779
    %v1252 = vpack.c.b16 %v788, %v780
    %v1253 = vpack.c.b16 %v789, %v781
    %v1254 = vpack.c.b16 %v790, %v782
    %v1255 = vpack.c.b16 %v791, %v783
    %v1256 = vpack.c.b16 %v792, %v784
    %v1257 = vpack.c.b16 %v793, %v785
    %v1258 = vpack.c.b16 %v794, %v786
    %v1259 = vpack.c.b16 %v803, %v795
    %v1260 = vpack.c.b16 %v804, %v796
    %v1261 = vpack.c.b16 %v805, %v797
    %v1262 = vpack.c.b16 %v806, %v798
    %v1263 = vpack.c.b16 %v807, %v799
    %v1264 = vpack.c.b16 %v808, %v800
    %v1265 = vpack.c.b16 %v809, %v801
    %v1266 = vpack.c.b16 %v810, %v802
    %v1267 = vpack.c.b16 %v819, %v811
    %v1268 = vpack.c.b16 %v820, %v812
    %v1269 = vpack.c.b16 %v821, %v813
    %v1270 = vpack.c.b16 %v822, %v814
    %v1271 = vpack.c.b16 %v823, %v815
    %v1272 = vpack.c.b16 %v824, %v816
    %v1273 = vpack.c.b16 %v825, %v817
    %v1274 = vpack.c.b16 %v826, %v818
    %v1275 = vpack.c.b16 %v835, %v827
    %v1276 = vpack.c.b16 %v836, %v828
    %v1277 = vpack.c.b16 %v837, %v829
    %v1278 = vpack.c.b16 %v838, %v830
    %v1279 = vpack.c.b16 %v839, %v831
    %v1280 = vpack.c.b16 %v840, %v832
    %v1281 = vpack.c.b16 %v841, %v833
    %v1282 = vpack.c.b16 %v842, %v834
    %v1283 = vpack.c.b16 %v851, %v843
    %v1284 = vpack.c.b16 %v852, %v844
    %v1285 = vpack.c.b16 %v853, %v845
    %v1286 = vpack.c.b16 %v854, %v846
    %v1287 = vpack.c.b16 %v855, %v847
    %v1288 = vpack.c.b16 %v856, %v848
    %v1289 = vpack.c.b16 %v857, %v849
    %v1290 = vpack.c.b16 %v858, %v850
    %v1291 = vpack.c.b16 %v867, %v859
    %v1292 = vpack.c.b16 %v868, %v860
    %v1293 = vpack.c.b16 %v869, %v861
    %v1294 = vpack.c.b16 %v870, %v862
    %v1295 = vpack.c.b16 %v871, %v863
    %v1296 = vpack.c.b16 %v872, %v864
    %v1297 = vpack.c.b16 %v873, %v865
    %v1298 = vpack.c.b16 %v874, %v866
    %v1299 = vpack.c.b16 %v883, %v875
    %v1300 = vpack.c.b16 %v884, %v876
    %v1301 = vpack.c.b16 %v885, %v877
    %v1302 = vpack.c.b16 %v886, %v878
    %v1303 = vpack.c.b16 %v887, %v879
    %v1304 = vpack.c.b16 %v888, %v880
    %v1305 = vpack.c.b16 %v889, %v881
    %v1306 = vpack.c.b16 %v890, %v882
    %v1307 = vpack.c.b16 %v899, %v891
    %v1308 = vpack.c.b16 %v900, %v892
    %v1309 = vpack.c.b16 %v901, %v893
    %v1310 = vpack.c.b16 %v902, %v894
    %v1311 = vpack.c.b16 %v903, %v895
    %v1312 = vpack.c.b16 %v904, %v896
    %v1313 = vpack.c.b16 %v905, %v897
    %v1314 = vpack.c.b16 %v906, %v898
    %v1315 = vpack.c.b16 %v915, %v907
    %v1316 = vpack.c.b16 %v916, %v908
    %v1317 = vpack.c.b16 %v917, %v909
    %v1318 = vpack.c.b16 %v918, %v910
    %v1319 = vpack.c.b16 %v919, %v911
    %v1320 = vpack.c.b16 %v920, %v912
    %v1321 = vpack.c.b16 %v921, %v913
    %v1322 = vpack.c.b16 %v922, %v914
    %v1323 = vpack.c.b16 %v931, %v923
    %v1324 = vpack.c.b16 %v932, %v924
    %v1325 = vpack.c.b16 %v933, %v925
    %v1326 = vpack.c.b16 %v934, %v926
    %v1327 = vpack.c.b16 %v935, %v927
    %v1328 = vpack.c.b16 %v936, %v928
    %v1329 = vpack.c.b16 %v937, %v929
    %v1330 = vpack.c.b16 %v938, %v930
    %v1331 = vpack.c.b16 %v947, %v939
    %v1332 = vpack.c.b16 %v948, %v940
    %v1333 = vpack.c.b16 %v949, %v941
    %v1334 = vpack.c.b16 %v950, %v942
    %v1335 = vpack.c.b16 %v951, %v943
    %v1336 = vpack.c.b16 %v952, %v944
    %v1337 = vpack.c.b16 %v953, %v945
    %v1338 = vpack.c.b16 %v954, %v946
    %v1339 = vpack.c.b16 %v963, %v955
    %v1340 = vpack.c.b16 %v964, %v956
    %v1341 = vpack.c.b16 %v965, %v957
    %v1342 = vpack.c.b16 %v966, %v958
    %v1343 = vpack.c.b16 %v967, %v959
    %v1344 = vpack.c.b16 %v968, %v960
    %v1345 = vpack.c.b16 %v969, %v961
    %v1346 = vpack.c.b16 %v970, %v962
    %v1347 = vpack.c.b16 %v979, %v971
    %v1348 = vpack.c.b16 %v980, %v972
    %v1349 = vpack.c.b16 %v981, %v973
    %v1350 = vpack.c.b16 %v982, %v974
    %v1351 = vpack.c.b16 %v983, %v975
    %v1352 = vpack.c.b16 %v984, %v976
    %v1353 = vpack.c.b16 %v985, %v977
    %v1354 = vpack.c.b16 %v986, %v978
    %v1355 = vpack.c.b16 %v995, %v987
    %v1356 = vpack.c.b16 %v996, %v988
    %v1357 = vpack.c.b16 %v997, %v989
    %v1358 = vpack.c.b16 %v998, %v990
    %v1359 = vpack.c.b16 %v999, %v991
    %v1360 = vpack.c.b16 %v1000, %v992
    %v1361 = vpack.c.b16 %v1001, %v993
    %v1362 = vpack.c.b16 %v1002, %v994
    %v1363 = vpack.c.b16 %v1011, %v1003
    %v1364 = vpack.c.b16 %v1012, %v1004
    %v1365 = vpack.c.b16 %v1013, %v1005
    %v1366 = vpack.c.b16 %v1014, %v1006
    %v1367 = vpack.c.b16 %v1015, %v1007
    %v1368 = vpack.c.b16 %v1016, %v1008
    %v1369 = vpack.c.b16 %v1017, %v1009
    %v1370 = vpack.c.b16 %v1018, %v1010
    %v1371 = vpack.c.b16 %v1027, %v1019
    %v1372 = vpack.c.b16 %v1028, %v1020
    %v1373 = vpack.c.b16 %v1029, %v1021
    %v1374 = vpack.c.b16 %v1030, %v1022
    %v1375 = vpack.c.b16 %v1031, %v1023
    %v1376 = vpack.c.b16 %v1032, %v1024
    %v1377 = vpack.c.b16 %v1033, %v1025
    %v1378 = vpack.c.b16 %v1034, %v1026
    %v1379 = vpack.c.b16 %v1043, %v1035
    %v1380 = vpack.c.b16 %v1044, %v1036
    %v1381 = vpack.c.b16 %v1045, %v1037
    %v1382 = vpack.c.b16 %v1046, %v1038
    %v1383 = vpack.c.b16 %v1047, %v1039
    %v1384 = vpack.c.b16 %v1048, %v1040
    %v1385 = vpack.c.b16 %v1049, %v1041
    %v1386 = vpack.c.b16 %v1050, %v1042
    %v1387 = vpack.c.b16 %v1059, %v1051
    %v1388 = vpack.c.b16 %v1060, %v1052
    %v1389 = vpack.c.b16 %v1061, %v1053
    %v1390 = vpack.c.b16 %v1062, %v1054
    %v1391 = vpack.c.b16 %v1063, %v1055
    %v1392 = vpack.c.b16 %v1064, %v1056
    %v1393 = vpack.c.b16 %v1065, %v1057
    %v1394 = vpack.c.b16 %v1066, %v1058
    %v1395 = vpack.c.b16 %v1075, %v1067
    %v1396 = vpack.c.b16 %v1076, %v1068
    %v1397 = vpack.c.b16 %v1077, %v1069
    %v1398 = vpack.c.b16 %v1078, %v1070
    %v1399 = vpack.c.b16 %v1079, %v1071
    %v1400 = vpack.c.b16 %v1080, %v1072
    %v1401 = vpack.c.b16 %v1081, %v1073
    %v1402 = vpack.c.b16 %v1082, %v1074
    %v1403 = vpack.c.b16 %v1091, %v1083
    %v1404 = vpack.c.b16 %v1092, %v1084
    %v1405 = vpack.c.b16 %v1093, %v1085
    %v1406 = vpack.c.b16 %v1094, %v1086
    %v1407 = vpack.c.b16 %v1095, %v1087
    %v1408 = vpack.c.b16 %v1096, %v1088
    %v1409 = vpack.c.b16 %v1097, %v1089
    %v1410 = vpack.c.b16 %v1098, %v1090
    %v1411 = vpack.c.b16 %v1107, %v1099
    %v1412 = vpack.c.b16 %v1108, %v1100
    %v1413 = vpack.c.b16 %v1109, %v1101
    %v1414 = vpack.c.b16 %v1110, %v1102
    %v1415 = vpack.c.b16 %v1111, %v1103
    %v1416 = vpack.c.b16 %v1112, %v1104
    %v1417 = vpack.c.b16 %v1113, %v1105
    %v1418 = vpack.c.b16 %v1114, %v1106
    %v1419 = vpack.c.b16 %v1123, %v1115
    %v1420 = vpack.c.b16 %v1124, %v1116
    %v1421 = vpack.c.b16 %v1125, %v1117
    %v1422 = vpack.c.b16 %v1126, %v1118
    %v1423 = vpack.c.b16 %v1127, %v1119
    %v1424 = vpack.c.b16 %v1128, %v1120
    %v1425 = vpack.c.b16 %v1129, %v1121
    %v1426 = vpack.c.b16 %v1130, %v1122
    %v1427 = vpack.c.b16 %v1139, %v1131
    %v1428 = vpack.c.b16 %v1140, %v1132
    %v1429 = vpack.c.b16 %v1141, %v1133
    %v1430 = vpack.c.b16 %v1142, %v1134
    %v1431 = vpack.c.b16 %v1143, %v1135
    %v1432 = vpack.c.b16 %v1144, %v1136
    %v1433 = vpack.c.b16 %v1145, %v1137
    %v1434 = vpack.c.b16 %v1146, %v1138
    %v1435 = vpack.c.b16 %v1155, %v1147
    %v1436 = vpack.c.b16 %v1156, %v1148
    %v1437 = vpack.c.b16 %v1157, %v1149
    %v1438 = vpack.c.b16 %v1158, %v1150
    %v1439 = vpack.c.b16 %v1159, %v1151
    %v1440 = vpack.c.b16 %v1160, %v1152
    %v1441 = vpack.c.b16 %v1161, %v1153
    %v1442 = vpack.c.b16 %v1162, %v1154
    %v1443 = vpack.c.b16 %v1171, %v1163
    %v1444 = vpack.c.b16 %v1172, %v1164
    %v1445 = vpack.c.b16 %v1173, %v1165
    %v1446 = vpack.c.b16 %v1174, %v1166
    %v1447 = vpack.c.b16 %v1175, %v1167
    %v1448 = vpack.c.b16 %v1176, %v1168
    %v1449 = vpack.c.b16 %v1177, %v1169
    %v1450 = vpack.c.b16 %v1178, %v1170
    %v1451 = vpack.c.b16 %v1187, %v1179
    %v1452 = vpack.c.b16 %v1188, %v1180
    %v1453 = vpack.c.b16 %v1189, %v1181
    %v1454 = vpack.c.b16 %v1190, %v1182
    %v1455 = vpack.c.b16 %v1191, %v1183
    %v1456 = vpack.c.b16 %v1192, %v1184
    %v1457 = vpack.c.b16 %v1193, %v1185
    %v1458 = vpack.c.b16 %v1194, %v1186
    %v1459 = vpack.c.b16 %v1203, %v1195
    %v1460 = vpack.c.b16 %v1204, %v1196
    %v1461 = vpack.c.b16 %v1205, %v1197
    %v1462 = vpack.c.b16 %v1206, %v1198
    %v1463 = vpack.c.b16 %v1207, %v1199
    %v1464 = vpack.c.b16 %v1208, %v1200
    %v1465 = vpack.c.b16 %v1209, %v1201
    %v1466 = vpack.c.b16 %v1210, %v1202
    %1723 = vmatprep.subr.bf16.mxu0 %v1212
    %1724 = vmatpush1.bf16.msra.mxu0 %v1211
    %1725 = vmatprep.subr.bf16.mxu0 %v1220
    %1726 = vmatpush1.bf16.msra.mxu0 %v1219
    %1727 = vmatprep.subr.bf16.mxu0 %v1228
    %1728 = vmatpush1.bf16.msra.mxu0 %v1227
    %1729 = vmatprep.subr.bf16.mxu0 %v1236
    %1730 = vmatpush1.bf16.msra.mxu0 %v1235
    %1731 = vmatprep.subr.bf16.mxu0 %v1244
    %1732 = vmatpush1.bf16.msra.mxu0 %v1243
    %1733 = vmatprep.subr.bf16.mxu0 %v1252
    %1734 = vmatpush1.bf16.msra.mxu0 %v1251
    %1735 = vmatprep.subr.bf16.mxu0 %v1260
    %1736 = vmatpush1.bf16.msra.mxu0 %v1259
    %1737 = vmatprep.subr.bf16.mxu0 %v1268
    %1738 = vmatpush1.bf16.msra.mxu0 %v1267
    %1739 = vmatprep.subr.bf16.mxu0 %v1276
    %1740 = vmatpush1.bf16.msra.mxu0 %v1275
    %1741 = vmatprep.subr.bf16.mxu0 %v1284
    %1742 = vmatpush1.bf16.msra.mxu0 %v1283
    %1743 = vmatprep.subr.bf16.mxu0 %v1292
    %1744 = vmatpush1.bf16.msra.mxu0 %v1291
    %1745 = vmatprep.subr.bf16.mxu0 %v1300
    %1746 = vmatpush1.bf16.msra.mxu0 %v1299
    %1747 = vmatprep.subr.bf16.mxu0 %v1308
    %1748 = vmatpush1.bf16.msra.mxu0 %v1307
    %1749 = vmatprep.subr.bf16.mxu0 %v1316
    %1750 = vmatpush1.bf16.msra.mxu0 %v1315
    %1751 = vmatprep.subr.bf16.mxu0 %v1324
    %1752 = vmatpush1.bf16.msra.mxu0 %v1323
    %1753 = vmatprep.subr.bf16.mxu0 %v1332
    %1754 = vmatpush1.bf16.msra.mxu0 %v1331
    %1755 = vmatprep.mubr.bf16.mxu0 %v142
    %1756 = vmatmul.mubr.bf16.gmra.mrb[0].mxu0 %v141
    %v1757 = vpop.f32.mrb[0].mxu0
    %v1758 = vadd.f32 %v406, %v1757
    %v1759 = vpop.f32.mrb[0].mxu0
    %v1760 = vadd.f32 %v410, %v1759
    %v1761 = vpop.f32.mrb[0].mxu0
    %v1762 = vadd.f32 %v406, %v1761
    %v1763 = vpop.f32.mrb[0].mxu0
    %v1764 = vadd.f32 %v410, %v1763
    %1765 = vdwg.mxu0
    %1766 = vmatprep.subr.bf16.mxu0 %v1340
    %1767 = vmatpush1.bf16.msra.mxu0 %v1339
    %1768 = vmatprep.subr.bf16.mxu0 %v1348
    %1769 = vmatpush1.bf16.msra.mxu0 %v1347
    %1770 = vmatprep.subr.bf16.mxu0 %v1356
    %1771 = vmatpush1.bf16.msra.mxu0 %v1355
    %1772 = vmatprep.subr.bf16.mxu0 %v1364
    %1773 = vmatpush1.bf16.msra.mxu0 %v1363
    %1774 = vmatprep.subr.bf16.mxu0 %v1372
    %1775 = vmatpush1.bf16.msra.mxu0 %v1371
    %1776 = vmatprep.subr.bf16.mxu0 %v1380
    %1777 = vmatpush1.bf16.msra.mxu0 %v1379
    %1778 = vmatprep.subr.bf16.mxu0 %v1388
    %1779 = vmatpush1.bf16.msra.mxu0 %v1387
    %1780 = vmatprep.subr.bf16.mxu0 %v1396
    %1781 = vmatpush1.bf16.msra.mxu0 %v1395
    %1782 = vmatprep.subr.bf16.mxu0 %v1404
    %1783 = vmatpush1.bf16.msra.mxu0 %v1403
    %1784 = vmatprep.subr.bf16.mxu0 %v1412
    %1785 = vmatpush1.bf16.msra.mxu0 %v1411
    %1786 = vmatprep.subr.bf16.mxu0 %v1420
    %1787 = vmatpush1.bf16.msra.mxu0 %v1419
    %1788 = vmatprep.subr.bf16.mxu0 %v1428
    %1789 = vmatpush1.bf16.msra.mxu0 %v1427
    %1790 = vmatprep.subr.bf16.mxu0 %v1436
    %1791 = vmatpush1.bf16.msra.mxu0 %v1435
    %1792 = vmatprep.subr.bf16.mxu0 %v1444
    %1793 = vmatpush1.bf16.msra.mxu0 %v1443
    %1794 = vmatprep.subr.bf16.mxu0 %v1452
    %1795 = vmatpush1.bf16.msra.mxu0 %v1451
    %1796 = vmatprep.subr.bf16.mxu0 %v1460
    %1797 = vmatpush1.bf16.msra.mxu0 %v1459
    %1798 = vmatprep.mubr.bf16.mxu0 %v144
    %1799 = vmatmul.mubr.bf16.gmra.mrb[0].mxu0 %v143
    %v1800 = vpop.f32.mrb[0].mxu0
    %v1801 = vadd.f32 %v1758, %v1800
    %v1802 = vpop.f32.mrb[0].mxu0
    %v1803 = vadd.f32 %v1760, %v1802
    %v1804 = vpop.f32.mrb[0].mxu0
    %v1805 = vadd.f32 %v1762, %v1804
    %v1806 = vpop.f32.mrb[0].mxu0
    %v1807 = vadd.f32 %v1764, %v1806
    %1808 = vdwg.mxu0
    %1809 = vmatprep.subr.bf16.mxu0 %v1214
    %1810 = vmatpush1.bf16.msra.mxu0 %v1213
    %1811 = vmatprep.subr.bf16.mxu0 %v1222
    %1812 = vmatpush1.bf16.msra.mxu0 %v1221
    %1813 = vmatprep.subr.bf16.mxu0 %v1230
    %1814 = vmatpush1.bf16.msra.mxu0 %v1229
    %1815 = vmatprep.subr.bf16.mxu0 %v1238
    %1816 = vmatpush1.bf16.msra.mxu0 %v1237
    %1817 = vmatprep.subr.bf16.mxu0 %v1246
    %1818 = vmatpush1.bf16.msra.mxu0 %v1245
    %1819 = vmatprep.subr.bf16.mxu0 %v1254
    %1820 = vmatpush1.bf16.msra.mxu0 %v1253
    %1821 = vmatprep.subr.bf16.mxu0 %v1262
    %1822 = vmatpush1.bf16.msra.mxu0 %v1261
    %1823 = vmatprep.subr.bf16.mxu0 %v1270
    %1824 = vmatpush1.bf16.msra.mxu0 %v1269
    %1825 = vmatprep.subr.bf16.mxu0 %v1278
    %1826 = vmatpush1.bf16.msra.mxu0 %v1277
    %1827 = vmatprep.subr.bf16.mxu0 %v1286
    %1828 = vmatpush1.bf16.msra.mxu0 %v1285
    %1829 = vmatprep.subr.bf16.mxu0 %v1294
    %1830 = vmatpush1.bf16.msra.mxu0 %v1293
    %1831 = vmatprep.subr.bf16.mxu0 %v1302
    %1832 = vmatpush1.bf16.msra.mxu0 %v1301
    %1833 = vmatprep.subr.bf16.mxu0 %v1310
    %1834 = vmatpush1.bf16.msra.mxu0 %v1309
    %1835 = vmatprep.subr.bf16.mxu0 %v1318
    %1836 = vmatpush1.bf16.msra.mxu0 %v1317
    %1837 = vmatprep.subr.bf16.mxu0 %v1326
    %1838 = vmatpush1.bf16.msra.mxu0 %v1325
    %1839 = vmatprep.subr.bf16.mxu0 %v1334
    %1840 = vmatpush1.bf16.msra.mxu0 %v1333
    %1841 = vmatprep.mubr.bf16.mxu0 %v142
    %1842 = vmatmul.mubr.bf16.gmra.mrb[0].mxu0 %v141
    %v1843 = vpop.f32.mrb[0].mxu0
    %v1844 = vadd.f32 %v414, %v1843
    %v1845 = vpop.f32.mrb[0].mxu0
    %v1846 = vadd.f32 %v418, %v1845
    %v1847 = vpop.f32.mrb[0].mxu0
    %v1848 = vadd.f32 %v414, %v1847
    %v1849 = vpop.f32.mrb[0].mxu0
    %v1850 = vadd.f32 %v418, %v1849
    %1851 = vdwg.mxu0
    %1852 = vmatprep.subr.bf16.mxu0 %v1342
    %1853 = vmatpush1.bf16.msra.mxu0 %v1341
    %1854 = vmatprep.subr.bf16.mxu0 %v1350
    %1855 = vmatpush1.bf16.msra.mxu0 %v1349
    %1856 = vmatprep.subr.bf16.mxu0 %v1358
    %1857 = vmatpush1.bf16.msra.mxu0 %v1357
    %1858 = vmatprep.subr.bf16.mxu0 %v1366
    %1859 = vmatpush1.bf16.msra.mxu0 %v1365
    %1860 = vmatprep.subr.bf16.mxu0 %v1374
    %1861 = vmatpush1.bf16.msra.mxu0 %v1373
    %1862 = vmatprep.subr.bf16.mxu0 %v1382
    %1863 = vmatpush1.bf16.msra.mxu0 %v1381
    %1864 = vmatprep.subr.bf16.mxu0 %v1390
    %1865 = vmatpush1.bf16.msra.mxu0 %v1389
    %1866 = vmatprep.subr.bf16.mxu0 %v1398
    %1867 = vmatpush1.bf16.msra.mxu0 %v1397
    %1868 = vmatprep.subr.bf16.mxu0 %v1406
    %1869 = vmatpush1.bf16.msra.mxu0 %v1405
    %1870 = vmatprep.subr.bf16.mxu0 %v1414
    %1871 = vmatpush1.bf16.msra.mxu0 %v1413
    %1872 = vmatprep.subr.bf16.mxu0 %v1422
    %1873 = vmatpush1.bf16.msra.mxu0 %v1421
    %1874 = vmatprep.subr.bf16.mxu0 %v1430
    %1875 = vmatpush1.bf16.msra.mxu0 %v1429
    %1876 = vmatprep.subr.bf16.mxu0 %v1438
    %1877 = vmatpush1.bf16.msra.mxu0 %v1437
    %1878 = vmatprep.subr.bf16.mxu0 %v1446
    %1879 = vmatpush1.bf16.msra.mxu0 %v1445
    %1880 = vmatprep.subr.bf16.mxu0 %v1454
    %1881 = vmatpush1.bf16.msra.mxu0 %v1453
    %1882 = vmatprep.subr.bf16.mxu0 %v1462
    %1883 = vmatpush1.bf16.msra.mxu0 %v1461
    %1884 = vmatprep.mubr.bf16.mxu0 %v144
    %1885 = vmatmul.mubr.bf16.gmra.mrb[0].mxu0 %v143
    %v1886 = vpop.f32.mrb[0].mxu0
    %v1887 = vadd.f32 %v1844, %v1886
    %v1888 = vpop.f32.mrb[0].mxu0
    %v1889 = vadd.f32 %v1846, %v1888
    %v1890 = vpop.f32.mrb[0].mxu0
    %v1891 = vadd.f32 %v1848, %v1890
    %v1892 = vpop.f32.mrb[0].mxu0
    %v1893 = vadd.f32 %v1850, %v1892
    %1894 = vdwg.mxu0
    %1895 = vmatprep.subr.bf16.mxu0 %v1216
    %1896 = vmatpush1.bf16.msra.mxu0 %v1215
    %1897 = vmatprep.subr.bf16.mxu0 %v1224
    %1898 = vmatpush1.bf16.msra.mxu0 %v1223
    %1899 = vmatprep.subr.bf16.mxu0 %v1232
    %1900 = vmatpush1.bf16.msra.mxu0 %v1231
    %1901 = vmatprep.subr.bf16.mxu0 %v1240
    %1902 = vmatpush1.bf16.msra.mxu0 %v1239
    %1903 = vmatprep.subr.bf16.mxu0 %v1248
    %1904 = vmatpush1.bf16.msra.mxu0 %v1247
    %1905 = vmatprep.subr.bf16.mxu0 %v1256
    %1906 = vmatpush1.bf16.msra.mxu0 %v1255
    %1907 = vmatprep.subr.bf16.mxu0 %v1264
    %1908 = vmatpush1.bf16.msra.mxu0 %v1263
    %1909 = vmatprep.subr.bf16.mxu0 %v1272
    %1910 = vmatpush1.bf16.msra.mxu0 %v1271
    %1911 = vmatprep.subr.bf16.mxu0 %v1280
    %1912 = vmatpush1.bf16.msra.mxu0 %v1279
    %1913 = vmatprep.subr.bf16.mxu0 %v1288
    %1914 = vmatpush1.bf16.msra.mxu0 %v1287
    %1915 = vmatprep.subr.bf16.mxu0 %v1296
    %1916 = vmatpush1.bf16.msra.mxu0 %v1295
    %1917 = vmatprep.subr.bf16.mxu0 %v1304
    %1918 = vmatpush1.bf16.msra.mxu0 %v1303
    %1919 = vmatprep.subr.bf16.mxu0 %v1312
    %1920 = vmatpush1.bf16.msra.mxu0 %v1311
    %1921 = vmatprep.subr.bf16.mxu0 %v1320
    %1922 = vmatpush1.bf16.msra.mxu0 %v1319
    %1923 = vmatprep.subr.bf16.mxu0 %v1328
    %1924 = vmatpush1.bf16.msra.mxu0 %v1327
    %1925 = vmatprep.subr.bf16.mxu0 %v1336
    %1926 = vmatpush1.bf16.msra.mxu0 %v1335
    %1927 = vmatprep.mubr.bf16.mxu0 %v142
    %1928 = vmatmul.mubr.bf16.gmra.mrb[0].mxu0 %v141
    %v1929 = vpop.f32.mrb[0].mxu0
    %v1930 = vadd.f32 %v422, %v1929
    %v1931 = vpop.f32.mrb[0].mxu0
    %v1932 = vadd.f32 %v426, %v1931
    %v1933 = vpop.f32.mrb[0].mxu0
    %v1934 = vadd.f32 %v422, %v1933
    %v1935 = vpop.f32.mrb[0].mxu0
    %v1936 = vadd.f32 %v426, %v1935
    %1937 = vdwg.mxu0
    %1938 = vmatprep.subr.bf16.mxu0 %v1344
    %1939 = vmatpush1.bf16.msra.mxu0 %v1343
    %1940 = vmatprep.subr.bf16.mxu0 %v1352
    %1941 = vmatpush1.bf16.msra.mxu0 %v1351
    %1942 = vmatprep.subr.bf16.mxu0 %v1360
    %1943 = vmatpush1.bf16.msra.mxu0 %v1359
    %1944 = vmatprep.subr.bf16.mxu0 %v1368
    %1945 = vmatpush1.bf16.msra.mxu0 %v1367
    %1946 = vmatprep.subr.bf16.mxu0 %v1376
    %1947 = vmatpush1.bf16.msra.mxu0 %v1375
    %1948 = vmatprep.subr.bf16.mxu0 %v1384
    %1949 = vmatpush1.bf16.msra.mxu0 %v1383
    %1950 = vmatprep.subr.bf16.mxu0 %v1392
    %1951 = vmatpush1.bf16.msra.mxu0 %v1391
    %1952 = vmatprep.subr.bf16.mxu0 %v1400
    %1953 = vmatpush1.bf16.msra.mxu0 %v1399
    %1954 = vmatprep.subr.bf16.mxu0 %v1408
    %1955 = vmatpush1.bf16.msra.mxu0 %v1407
    %1956 = vmatprep.subr.bf16.mxu0 %v1416
    %1957 = vmatpush1.bf16.msra.mxu0 %v1415
    %1958 = vmatprep.subr.bf16.mxu0 %v1424
    %1959 = vmatpush1.bf16.msra.mxu0 %v1423
    %1960 = vmatprep.subr.bf16.mxu0 %v1432
    %1961 = vmatpush1.bf16.msra.mxu0 %v1431
    %1962 = vmatprep.subr.bf16.mxu0 %v1440
    %1963 = vmatpush1.bf16.msra.mxu0 %v1439
    %1964 = vmatprep.subr.bf16.mxu0 %v1448
    %1965 = vmatpush1.bf16.msra.mxu0 %v1447
    %1966 = vmatprep.subr.bf16.mxu0 %v1456
    %1967 = vmatpush1.bf16.msra.mxu0 %v1455
    %1968 = vmatprep.subr.bf16.mxu0 %v1464
    %1969 = vmatpush1.bf16.msra.mxu0 %v1463
    %1970 = vmatprep.mubr.bf16.mxu0 %v144
    %1971 = vmatmul.mubr.bf16.gmra.mrb[0].mxu0 %v143
    %v1972 = vpop.f32.mrb[0].mxu0
    %v1973 = vadd.f32 %v1930, %v1972
    %v1974 = vpop.f32.mrb[0].mxu0
    %v1975 = vadd.f32 %v1932, %v1974
    %v1976 = vpop.f32.mrb[0].mxu0
    %v1977 = vadd.f32 %v1934, %v1976
    %v1978 = vpop.f32.mrb[0].mxu0
    %v1979 = vadd.f32 %v1936, %v1978
    %1980 = vdwg.mxu0
    %1981 = vmatprep.subr.bf16.mxu0 %v1218
    %1982 = vmatpush1.bf16.msra.mxu0 %v1217
    %1983 = vmatprep.subr.bf16.mxu0 %v1226
    %1984 = vmatpush1.bf16.msra.mxu0 %v1225
    %1985 = vmatprep.subr.bf16.mxu0 %v1234
    %1986 = vmatpush1.bf16.msra.mxu0 %v1233
    %1987 = vmatprep.subr.bf16.mxu0 %v1242
    %1988 = vmatpush1.bf16.msra.mxu0 %v1241
    %1989 = vmatprep.subr.bf16.mxu0 %v1250
    %1990 = vmatpush1.bf16.msra.mxu0 %v1249
    %1991 = vmatprep.subr.bf16.mxu0 %v1258
    %1992 = vmatpush1.bf16.msra.mxu0 %v1257
    %1993 = vmatprep.subr.bf16.mxu0 %v1266
    %1994 = vmatpush1.bf16.msra.mxu0 %v1265
    %1995 = vmatprep.subr.bf16.mxu0 %v1274
    %1996 = vmatpush1.bf16.msra.mxu0 %v1273
    %1997 = vmatprep.subr.bf16.mxu0 %v1282
    %1998 = vmatpush1.bf16.msra.mxu0 %v1281
    %1999 = vmatprep.subr.bf16.mxu0 %v1290
    %2000 = vmatpush1.bf16.msra.mxu0 %v1289
    %2001 = vmatprep.subr.bf16.mxu0 %v1298
    %2002 = vmatpush1.bf16.msra.mxu0 %v1297
    %2003 = vmatprep.subr.bf16.mxu0 %v1306
    %2004 = vmatpush1.bf16.msra.mxu0 %v1305
    %2005 = vmatprep.subr.bf16.mxu0 %v1314
    %2006 = vmatpush1.bf16.msra.mxu0 %v1313
    %2007 = vmatprep.subr.bf16.mxu0 %v1322
    %2008 = vmatpush1.bf16.msra.mxu0 %v1321
    %2009 = vmatprep.subr.bf16.mxu0 %v1330
    %2010 = vmatpush1.bf16.msra.mxu0 %v1329
    %2011 = vmatprep.subr.bf16.mxu0 %v1338
    %2012 = vmatpush1.bf16.msra.mxu0 %v1337
    %2013 = vmatprep.mubr.bf16.mxu0 %v142
    %2014 = vmatmul.mubr.bf16.gmra.mrb[0].mxu0 %v141
    %v2015 = vpop.f32.mrb[0].mxu0
    %v2016 = vadd.f32 %v430, %v2015
    %v2017 = vpop.f32.mrb[0].mxu0
    %v2018 = vadd.f32 %v434, %v2017
    %v2019 = vpop.f32.mrb[0].mxu0
    %v2020 = vadd.f32 %v430, %v2019
    %v2021 = vpop.f32.mrb[0].mxu0
    %v2022 = vadd.f32 %v434, %v2021
    %2023 = vdwg.mxu0
    %2024 = vmatprep.subr.bf16.mxu0 %v1346
    %2025 = vmatpush1.bf16.msra.mxu0 %v1345
    %2026 = vmatprep.subr.bf16.mxu0 %v1354
    %2027 = vmatpush1.bf16.msra.mxu0 %v1353
    %2028 = vmatprep.subr.bf16.mxu0 %v1362
    %2029 = vmatpush1.bf16.msra.mxu0 %v1361
    %2030 = vmatprep.subr.bf16.mxu0 %v1370
    %2031 = vmatpush1.bf16.msra.mxu0 %v1369
    %2032 = vmatprep.subr.bf16.mxu0 %v1378
    %2033 = vmatpush1.bf16.msra.mxu0 %v1377
    %2034 = vmatprep.subr.bf16.mxu0 %v1386
    %2035 = vmatpush1.bf16.msra.mxu0 %v1385
    %2036 = vmatprep.subr.bf16.mxu0 %v1394
    %2037 = vmatpush1.bf16.msra.mxu0 %v1393
    %2038 = vmatprep.subr.bf16.mxu0 %v1402
    %2039 = vmatpush1.bf16.msra.mxu0 %v1401
    %2040 = vmatprep.subr.bf16.mxu0 %v1410
    %2041 = vmatpush1.bf16.msra.mxu0 %v1409
    %2042 = vmatprep.subr.bf16.mxu0 %v1418
    %2043 = vmatpush1.bf16.msra.mxu0 %v1417
    %2044 = vmatprep.subr.bf16.mxu0 %v1426
    %2045 = vmatpush1.bf16.msra.mxu0 %v1425
    %2046 = vmatprep.subr.bf16.mxu0 %v1434
    %2047 = vmatpush1.bf16.msra.mxu0 %v1433
    %2048 = vmatprep.subr.bf16.mxu0 %v1442
    %2049 = vmatpush1.bf16.msra.mxu0 %v1441
    %2050 = vmatprep.subr.bf16.mxu0 %v1450
    %2051 = vmatpush1.bf16.msra.mxu0 %v1449
    %2052 = vmatprep.subr.bf16.mxu0 %v1458
    %2053 = vmatpush1.bf16.msra.mxu0 %v1457
    %2054 = vmatprep.subr.bf16.mxu0 %v1466
    %2055 = vmatpush1.bf16.msra.mxu0 %v1465
    %2056 = vmatprep.mubr.bf16.mxu0 %v144
    %2057 = vmatmul.mubr.bf16.gmra.mrb[0].mxu0 %v143
    %v2058 = vpop.f32.mrb[0].mxu0
    %v2059 = vadd.f32 %v2016, %v2058
    %v2060 = vpop.f32.mrb[0].mxu0
    %v2061 = vadd.f32 %v2018, %v2060
    %v2062 = vpop.f32.mrb[0].mxu0
    %v2063 = vadd.f32 %v2020, %v2062
    %v2064 = vpop.f32.mrb[0].mxu0
    %v2065 = vadd.f32 %v2022, %v2064
    %2066 = vdwg.mxu0
    %v2067 = vmax.f32 %v1801, 0.0
    %v2068 = vmax.f32 %v1803, 0.0
    %v2069 = vmax.f32 %v1887, 0.0
    %v2070 = vmax.f32 %v1889, 0.0
    %v2071 = vmax.f32 %v1973, 0.0
    %v2072 = vmax.f32 %v1975, 0.0
    %v2073 = vmax.f32 %v2059, 0.0
    %v2074 = vmax.f32 %v2061, 0.0
    %v2075 = vmax.f32 %v1805, 0.0
    %v2076 = vmax.f32 %v1807, 0.0
    %v2077 = vmax.f32 %v1891, 0.0
    %v2078 = vmax.f32 %v1893, 0.0
    %v2079 = vmax.f32 %v1977, 0.0
    %v2080 = vmax.f32 %v1979, 0.0
    %v2081 = vmax.f32 %v2063, 0.0
    %v2082 = vmax.f32 %v2065, 0.0
    %v2083 = vpack.c.bf16 %v2075, %v2067
    %v2084 = vpack.c.bf16 %v2076, %v2068
    %v2085 = vpack.c.bf16 %v2077, %v2069
    %v2086 = vpack.c.bf16 %v2078, %v2070
    %v2087 = vpack.c.bf16 %v2079, %v2071
    %v2088 = vpack.c.bf16 %v2080, %v2072
    %v2089 = vpack.c.bf16 %v2081, %v2073
    %v2090 = vpack.c.bf16 %v2082, %v2074
    %v2091 = vld [vmem:[#allocation8] sm:$0xff]
    %v2092 = vld [vmem:[#allocation8 + $0x8] sm:$0xff]
    %v2093 = vld [vmem:[#allocation8 + $0x10] sm:$0xff]
    %v2094 = vld [vmem:[#allocation8 + $0x18] sm:$0xff]
    %v2095 = vld [vmem:[#allocation8 + $0x20] sm:$0xff]
    %v2096 = vld [vmem:[#allocation8 + $0x28] sm:$0xff]
    %v2097 = vld [vmem:[#allocation8 + $0x30] sm:$0xff]
    %v2098 = vld [vmem:[#allocation8 + $0x38] sm:$0xff]
    %v2099 = vld [vmem:[#allocation8 + $0x40] sm:$0xff]
    %v2100 = vld [vmem:[#allocation8 + $0x48] sm:$0xff]
    %v2101 = vld [vmem:[#allocation8 + $0x50] sm:$0xff]
    %v2102 = vld [vmem:[#allocation8 + $0x58] sm:$0xff]
    %v2103 = vld [vmem:[#allocation8 + $0x60] sm:$0xff]
    %v2104 = vld [vmem:[#allocation8 + $0x68] sm:$0xff]
    %v2105 = vld [vmem:[#allocation8 + $0x70] sm:$0xff]
    %v2106 = vld [vmem:[#allocation8 + $0x78] sm:$0xff]
    %v2107 = vld [vmem:[#allocation8 + $0x80] sm:$0xff]
    %v2108 = vld [vmem:[#allocation8 + $0x88] sm:$0xff]
    %v2109 = vld [vmem:[#allocation8 + $0x90] sm:$0xff]
    %v2110 = vld [vmem:[#allocation8 + $0x98] sm:$0xff]
    %v2111 = vld [vmem:[#allocation8 + $0xa0] sm:$0xff]
    %v2112 = vld [vmem:[#allocation8 + $0xa8] sm:$0xff]
    %v2113 = vld [vmem:[#allocation8 + $0xb0] sm:$0xff]
    %v2114 = vld [vmem:[#allocation8 + $0xb8] sm:$0xff]
    %v2115 = vld [vmem:[#allocation8 + $0xc0] sm:$0xff]
    %v2116 = vld [vmem:[#allocation8 + $0xc8] sm:$0xff]
    %v2117 = vld [vmem:[#allocation8 + $0xd0] sm:$0xff]
    %v2118 = vld [vmem:[#allocation8 + $0xd8] sm:$0xff]
    %v2119 = vld [vmem:[#allocation8 + $0xe0] sm:$0xff]
    %v2120 = vld [vmem:[#allocation8 + $0xe8] sm:$0xff]
    %v2121 = vld [vmem:[#allocation8 + $0xf0] sm:$0xff]
    %v2122 = vld [vmem:[#allocation8 + $0xf8] sm:$0xff]
    %v2123 = vld [vmem:[#allocation8 + $0x100] sm:$0xff]
    %v2124 = vld [vmem:[#allocation8 + $0x108] sm:$0xff]
    %v2125 = vld [vmem:[#allocation8 + $0x110] sm:$0xff]
    %v2126 = vld [vmem:[#allocation8 + $0x118] sm:$0xff]
    %v2127 = vld [vmem:[#allocation8 + $0x120] sm:$0xff]
    %v2128 = vld [vmem:[#allocation8 + $0x128] sm:$0xff]
    %v2129 = vld [vmem:[#allocation8 + $0x130] sm:$0xff]
    %v2130 = vld [vmem:[#allocation8 + $0x138] sm:$0xff]
    %v2131 = vld [vmem:[#allocation8 + $0x140] sm:$0xff]
    %v2132 = vld [vmem:[#allocation8 + $0x148] sm:$0xff]
    %v2133 = vld [vmem:[#allocation8 + $0x150] sm:$0xff]
    %v2134 = vld [vmem:[#allocation8 + $0x158] sm:$0xff]
    %v2135 = vld [vmem:[#allocation8 + $0x160] sm:$0xff]
    %v2136 = vld [vmem:[#allocation8 + $0x168] sm:$0xff]
    %v2137 = vld [vmem:[#allocation8 + $0x170] sm:$0xff]
    %v2138 = vld [vmem:[#allocation8 + $0x178] sm:$0xff]
    %v2139 = vld [vmem:[#allocation8 + $0x180] sm:$0xff]
    %v2140 = vld [vmem:[#allocation8 + $0x188] sm:$0xff]
    %v2141 = vld [vmem:[#allocation8 + $0x190] sm:$0xff]
    %v2142 = vld [vmem:[#allocation8 + $0x198] sm:$0xff]
    %v2143 = vld [vmem:[#allocation8 + $0x1a0] sm:$0xff]
    %v2144 = vld [vmem:[#allocation8 + $0x1a8] sm:$0xff]
    %v2145 = vld [vmem:[#allocation8 + $0x1b0] sm:$0xff]
    %v2146 = vld [vmem:[#allocation8 + $0x1b8] sm:$0xff]
    %v2147 = vld [vmem:[#allocation8 + $0x1c0] sm:$0xff]
    %v2148 = vld [vmem:[#allocation8 + $0x1c8] sm:$0xff]
    %v2149 = vld [vmem:[#allocation8 + $0x1d0] sm:$0xff]
    %v2150 = vld [vmem:[#allocation8 + $0x1d8] sm:$0xff]
    %v2151 = vld [vmem:[#allocation8 + $0x1e0] sm:$0xff]
    %v2152 = vld [vmem:[#allocation8 + $0x1e8] sm:$0xff]
    %v2153 = vld [vmem:[#allocation8 + $0x1f0] sm:$0xff]
    %v2154 = vld [vmem:[#allocation8 + $0x1f8] sm:$0xff]
    %v2155 = vld [vmem:[#allocation8 + $0x200] sm:$0xff]
    %v2156 = vld [vmem:[#allocation8 + $0x208] sm:$0xff]
    %v2157 = vld [vmem:[#allocation8 + $0x210] sm:$0xff]
    %v2158 = vld [vmem:[#allocation8 + $0x218] sm:$0xff]
    %v2159 = vld [vmem:[#allocation8 + $0x220] sm:$0xff]
    %v2160 = vld [vmem:[#allocation8 + $0x228] sm:$0xff]
    %v2161 = vld [vmem:[#allocation8 + $0x230] sm:$0xff]
    %v2162 = vld [vmem:[#allocation8 + $0x238] sm:$0xff]
    %v2163 = vld [vmem:[#allocation8 + $0x240] sm:$0xff]
    %v2164 = vld [vmem:[#allocation8 + $0x248] sm:$0xff]
    %v2165 = vld [vmem:[#allocation8 + $0x250] sm:$0xff]
    %v2166 = vld [vmem:[#allocation8 + $0x258] sm:$0xff]
    %v2167 = vld [vmem:[#allocation8 + $0x260] sm:$0xff]
    %v2168 = vld [vmem:[#allocation8 + $0x268] sm:$0xff]
    %v2169 = vld [vmem:[#allocation8 + $0x270] sm:$0xff]
    %v2170 = vld [vmem:[#allocation8 + $0x278] sm:$0xff]
    %v2171 = vld [vmem:[#allocation8 + $0x280] sm:$0xff]
    %v2172 = vld [vmem:[#allocation8 + $0x288] sm:$0xff]
    %v2173 = vld [vmem:[#allocation8 + $0x290] sm:$0xff]
    %v2174 = vld [vmem:[#allocation8 + $0x298] sm:$0xff]
    %v2175 = vld [vmem:[#allocation8 + $0x2a0] sm:$0xff]
    %v2176 = vld [vmem:[#allocation8 + $0x2a8] sm:$0xff]
    %v2177 = vld [vmem:[#allocation8 + $0x2b0] sm:$0xff]
    %v2178 = vld [vmem:[#allocation8 + $0x2b8] sm:$0xff]
    %v2179 = vld [vmem:[#allocation8 + $0x2c0] sm:$0xff]
    %v2180 = vld [vmem:[#allocation8 + $0x2c8] sm:$0xff]
    %v2181 = vld [vmem:[#allocation8 + $0x2d0] sm:$0xff]
    %v2182 = vld [vmem:[#allocation8 + $0x2d8] sm:$0xff]
    %v2183 = vld [vmem:[#allocation8 + $0x2e0] sm:$0xff]
    %v2184 = vld [vmem:[#allocation8 + $0x2e8] sm:$0xff]
    %v2185 = vld [vmem:[#allocation8 + $0x2f0] sm:$0xff]
    %v2186 = vld [vmem:[#allocation8 + $0x2f8] sm:$0xff]
    %v2187 = vld [vmem:[#allocation8 + $0x300] sm:$0xff]
    %v2188 = vld [vmem:[#allocation8 + $0x308] sm:$0xff]
    %v2189 = vld [vmem:[#allocation8 + $0x310] sm:$0xff]
    %v2190 = vld [vmem:[#allocation8 + $0x318] sm:$0xff]
    %v2191 = vld [vmem:[#allocation8 + $0x320] sm:$0xff]
    %v2192 = vld [vmem:[#allocation8 + $0x328] sm:$0xff]
    %v2193 = vld [vmem:[#allocation8 + $0x330] sm:$0xff]
    %v2194 = vld [vmem:[#allocation8 + $0x338] sm:$0xff]
    %v2195 = vld [vmem:[#allocation8 + $0x340] sm:$0xff]
    %v2196 = vld [vmem:[#allocation8 + $0x348] sm:$0xff]
    %v2197 = vld [vmem:[#allocation8 + $0x350] sm:$0xff]
    %v2198 = vld [vmem:[#allocation8 + $0x358] sm:$0xff]
    %v2199 = vld [vmem:[#allocation8 + $0x360] sm:$0xff]
    %v2200 = vld [vmem:[#allocation8 + $0x368] sm:$0xff]
    %v2201 = vld [vmem:[#allocation8 + $0x370] sm:$0xff]
    %v2202 = vld [vmem:[#allocation8 + $0x378] sm:$0xff]
    %v2203 = vld [vmem:[#allocation8 + $0x380] sm:$0xff]
    %v2204 = vld [vmem:[#allocation8 + $0x388] sm:$0xff]
    %v2205 = vld [vmem:[#allocation8 + $0x390] sm:$0xff]
    %v2206 = vld [vmem:[#allocation8 + $0x398] sm:$0xff]
    %v2207 = vld [vmem:[#allocation8 + $0x3a0] sm:$0xff]
    %v2208 = vld [vmem:[#allocation8 + $0x3a8] sm:$0xff]
    %v2209 = vld [vmem:[#allocation8 + $0x3b0] sm:$0xff]
    %v2210 = vld [vmem:[#allocation8 + $0x3b8] sm:$0xff]
    %v2211 = vld [vmem:[#allocation8 + $0x3c0] sm:$0xff]
    %v2212 = vld [vmem:[#allocation8 + $0x3c8] sm:$0xff]
    %v2213 = vld [vmem:[#allocation8 + $0x3d0] sm:$0xff]
    %v2214 = vld [vmem:[#allocation8 + $0x3d8] sm:$0xff]
    %v2215 = vld [vmem:[#allocation8 + $0x3e0] sm:$0xff]
    %v2216 = vld [vmem:[#allocation8 + $0x3e8] sm:$0xff]
    %v2217 = vld [vmem:[#allocation8 + $0x3f0] sm:$0xff]
    %v2218 = vld [vmem:[#allocation8 + $0x3f8] sm:$0xff]
    %v2219 = vld [vmem:[#allocation8 + $0x400] sm:$0xff]
    %v2220 = vld [vmem:[#allocation8 + $0x408] sm:$0xff]
    %v2221 = vld [vmem:[#allocation8 + $0x410] sm:$0xff]
    %v2222 = vld [vmem:[#allocation8 + $0x418] sm:$0xff]
    %v2223 = vld [vmem:[#allocation8 + $0x420] sm:$0xff]
    %v2224 = vld [vmem:[#allocation8 + $0x428] sm:$0xff]
    %v2225 = vld [vmem:[#allocation8 + $0x430] sm:$0xff]
    %v2226 = vld [vmem:[#allocation8 + $0x438] sm:$0xff]
    %v2227 = vld [vmem:[#allocation8 + $0x440] sm:$0xff]
    %v2228 = vld [vmem:[#allocation8 + $0x448] sm:$0xff]
    %v2229 = vld [vmem:[#allocation8 + $0x450] sm:$0xff]
    %v2230 = vld [vmem:[#allocation8 + $0x458] sm:$0xff]
    %v2231 = vld [vmem:[#allocation8 + $0x460] sm:$0xff]
    %v2232 = vld [vmem:[#allocation8 + $0x468] sm:$0xff]
    %v2233 = vld [vmem:[#allocation8 + $0x470] sm:$0xff]
    %v2234 = vld [vmem:[#allocation8 + $0x478] sm:$0xff]
    %v2235 = vld [vmem:[#allocation8 + $0x480] sm:$0xff]
    %v2236 = vld [vmem:[#allocation8 + $0x488] sm:$0xff]
    %v2237 = vld [vmem:[#allocation8 + $0x490] sm:$0xff]
    %v2238 = vld [vmem:[#allocation8 + $0x498] sm:$0xff]
    %v2239 = vld [vmem:[#allocation8 + $0x4a0] sm:$0xff]
    %v2240 = vld [vmem:[#allocation8 + $0x4a8] sm:$0xff]
    %v2241 = vld [vmem:[#allocation8 + $0x4b0] sm:$0xff]
    %v2242 = vld [vmem:[#allocation8 + $0x4b8] sm:$0xff]
    %v2243 = vld [vmem:[#allocation8 + $0x4c0] sm:$0xff]
    %v2244 = vld [vmem:[#allocation8 + $0x4c8] sm:$0xff]
    %v2245 = vld [vmem:[#allocation8 + $0x4d0] sm:$0xff]
    %v2246 = vld [vmem:[#allocation8 + $0x4d8] sm:$0xff]
    %v2247 = vld [vmem:[#allocation8 + $0x4e0] sm:$0xff]
    %v2248 = vld [vmem:[#allocation8 + $0x4e8] sm:$0xff]
    %v2249 = vld [vmem:[#allocation8 + $0x4f0] sm:$0xff]
    %v2250 = vld [vmem:[#allocation8 + $0x4f8] sm:$0xff]
    %v2251 = vld [vmem:[#allocation8 + $0x500] sm:$0xff]
    %v2252 = vld [vmem:[#allocation8 + $0x508] sm:$0xff]
    %v2253 = vld [vmem:[#allocation8 + $0x510] sm:$0xff]
    %v2254 = vld [vmem:[#allocation8 + $0x518] sm:$0xff]
    %v2255 = vld [vmem:[#allocation8 + $0x520] sm:$0xff]
    %v2256 = vld [vmem:[#allocation8 + $0x528] sm:$0xff]
    %v2257 = vld [vmem:[#allocation8 + $0x530] sm:$0xff]
    %v2258 = vld [vmem:[#allocation8 + $0x538] sm:$0xff]
    %v2259 = vld [vmem:[#allocation8 + $0x540] sm:$0xff]
    %v2260 = vld [vmem:[#allocation8 + $0x548] sm:$0xff]
    %v2261 = vld [vmem:[#allocation8 + $0x550] sm:$0xff]
    %v2262 = vld [vmem:[#allocation8 + $0x558] sm:$0xff]
    %v2263 = vld [vmem:[#allocation8 + $0x560] sm:$0xff]
    %v2264 = vld [vmem:[#allocation8 + $0x568] sm:$0xff]
    %v2265 = vld [vmem:[#allocation8 + $0x570] sm:$0xff]
    %v2266 = vld [vmem:[#allocation8 + $0x578] sm:$0xff]
    %v2267 = vld [vmem:[#allocation8 + $0x580] sm:$0xff]
    %v2268 = vld [vmem:[#allocation8 + $0x588] sm:$0xff]
    %v2269 = vld [vmem:[#allocation8 + $0x590] sm:$0xff]
    %v2270 = vld [vmem:[#allocation8 + $0x598] sm:$0xff]
    %v2271 = vld [vmem:[#allocation8 + $0x5a0] sm:$0xff]
    %v2272 = vld [vmem:[#allocation8 + $0x5a8] sm:$0xff]
    %v2273 = vld [vmem:[#allocation8 + $0x5b0] sm:$0xff]
    %v2274 = vld [vmem:[#allocation8 + $0x5b8] sm:$0xff]
    %v2275 = vld [vmem:[#allocation8 + $0x5c0] sm:$0xff]
    %v2276 = vld [vmem:[#allocation8 + $0x5c8] sm:$0xff]
    %v2277 = vld [vmem:[#allocation8 + $0x5d0] sm:$0xff]
    %v2278 = vld [vmem:[#allocation8 + $0x5d8] sm:$0xff]
    %v2279 = vld [vmem:[#allocation8 + $0x5e0] sm:$0xff]
    %v2280 = vld [vmem:[#allocation8 + $0x5e8] sm:$0xff]
    %v2281 = vld [vmem:[#allocation8 + $0x5f0] sm:$0xff]
    %v2282 = vld [vmem:[#allocation8 + $0x5f8] sm:$0xff]
    %v2283 = vld [vmem:[#allocation8 + $0x600] sm:$0xff]
    %v2284 = vld [vmem:[#allocation8 + $0x608] sm:$0xff]
    %v2285 = vld [vmem:[#allocation8 + $0x610] sm:$0xff]
    %v2286 = vld [vmem:[#allocation8 + $0x618] sm:$0xff]
    %v2287 = vld [vmem:[#allocation8 + $0x620] sm:$0xff]
    %v2288 = vld [vmem:[#allocation8 + $0x628] sm:$0xff]
    %v2289 = vld [vmem:[#allocation8 + $0x630] sm:$0xff]
    %v2290 = vld [vmem:[#allocation8 + $0x638] sm:$0xff]
    %v2291 = vld [vmem:[#allocation8 + $0x640] sm:$0xff]
    %v2292 = vld [vmem:[#allocation8 + $0x648] sm:$0xff]
    %v2293 = vld [vmem:[#allocation8 + $0x650] sm:$0xff]
    %v2294 = vld [vmem:[#allocation8 + $0x658] sm:$0xff]
    %v2295 = vld [vmem:[#allocation8 + $0x660] sm:$0xff]
    %v2296 = vld [vmem:[#allocation8 + $0x668] sm:$0xff]
    %v2297 = vld [vmem:[#allocation8 + $0x670] sm:$0xff]
    %v2298 = vld [vmem:[#allocation8 + $0x678] sm:$0xff]
    %v2299 = vld [vmem:[#allocation8 + $0x680] sm:$0xff]
    %v2300 = vld [vmem:[#allocation8 + $0x688] sm:$0xff]
    %v2301 = vld [vmem:[#allocation8 + $0x690] sm:$0xff]
    %v2302 = vld [vmem:[#allocation8 + $0x698] sm:$0xff]
    %v2303 = vld [vmem:[#allocation8 + $0x6a0] sm:$0xff]
    %v2304 = vld [vmem:[#allocation8 + $0x6a8] sm:$0xff]
    %v2305 = vld [vmem:[#allocation8 + $0x6b0] sm:$0xff]
    %v2306 = vld [vmem:[#allocation8 + $0x6b8] sm:$0xff]
    %v2307 = vld [vmem:[#allocation8 + $0x6c0] sm:$0xff]
    %v2308 = vld [vmem:[#allocation8 + $0x6c8] sm:$0xff]
    %v2309 = vld [vmem:[#allocation8 + $0x6d0] sm:$0xff]
    %v2310 = vld [vmem:[#allocation8 + $0x6d8] sm:$0xff]
    %v2311 = vld [vmem:[#allocation8 + $0x6e0] sm:$0xff]
    %v2312 = vld [vmem:[#allocation8 + $0x6e8] sm:$0xff]
    %v2313 = vld [vmem:[#allocation8 + $0x6f0] sm:$0xff]
    %v2314 = vld [vmem:[#allocation8 + $0x6f8] sm:$0xff]
    %v2315 = vld [vmem:[#allocation8 + $0x700] sm:$0xff]
    %v2316 = vld [vmem:[#allocation8 + $0x708] sm:$0xff]
    %v2317 = vld [vmem:[#allocation8 + $0x710] sm:$0xff]
    %v2318 = vld [vmem:[#allocation8 + $0x718] sm:$0xff]
    %v2319 = vld [vmem:[#allocation8 + $0x720] sm:$0xff]
    %v2320 = vld [vmem:[#allocation8 + $0x728] sm:$0xff]
    %v2321 = vld [vmem:[#allocation8 + $0x730] sm:$0xff]
    %v2322 = vld [vmem:[#allocation8 + $0x738] sm:$0xff]
    %v2323 = vld [vmem:[#allocation8 + $0x740] sm:$0xff]
    %v2324 = vld [vmem:[#allocation8 + $0x748] sm:$0xff]
    %v2325 = vld [vmem:[#allocation8 + $0x750] sm:$0xff]
    %v2326 = vld [vmem:[#allocation8 + $0x758] sm:$0xff]
    %v2327 = vld [vmem:[#allocation8 + $0x760] sm:$0xff]
    %v2328 = vld [vmem:[#allocation8 + $0x768] sm:$0xff]
    %v2329 = vld [vmem:[#allocation8 + $0x770] sm:$0xff]
    %v2330 = vld [vmem:[#allocation8 + $0x778] sm:$0xff]
    %v2331 = vld [vmem:[#allocation8 + $0x780] sm:$0xff]
    %v2332 = vld [vmem:[#allocation8 + $0x788] sm:$0xff]
    %v2333 = vld [vmem:[#allocation8 + $0x790] sm:$0xff]
    %v2334 = vld [vmem:[#allocation8 + $0x798] sm:$0xff]
    %v2335 = vld [vmem:[#allocation8 + $0x7a0] sm:$0xff]
    %v2336 = vld [vmem:[#allocation8 + $0x7a8] sm:$0xff]
    %v2337 = vld [vmem:[#allocation8 + $0x7b0] sm:$0xff]
    %v2338 = vld [vmem:[#allocation8 + $0x7b8] sm:$0xff]
    %v2339 = vld [vmem:[#allocation8 + $0x7c0] sm:$0xff]
    %v2340 = vld [vmem:[#allocation8 + $0x7c8] sm:$0xff]
    %v2341 = vld [vmem:[#allocation8 + $0x7d0] sm:$0xff]
    %v2342 = vld [vmem:[#allocation8 + $0x7d8] sm:$0xff]
    %v2343 = vld [vmem:[#allocation8 + $0x7e0] sm:$0xff]
    %v2344 = vld [vmem:[#allocation8 + $0x7e8] sm:$0xff]
    %v2345 = vld [vmem:[#allocation8 + $0x7f0] sm:$0xff]
    %v2346 = vld [vmem:[#allocation8 + $0x7f8] sm:$0xff]
    %v2347 = vld [vmem:[%s4] sm:$0xf]
    %v2349 = vlaneseq
    %v2350 = vshrl.u32 %v2349, 7
    %v2351 = vsub.s32 0, %v2350
    %v2352 = vrot.slane %v2347, %v2351
    %v2353 = vlaneseq
    %v2354 = vshrl.u32 %v2353, 7
    %v2355 = vsub.s32 1, %v2354
    %v2356 = vrot.slane %v2347, %v2355
    %v2357 = vlaneseq
    %v2358 = vshrl.u32 %v2357, 7
    %v2359 = vsub.s32 2, %v2358
    %v2360 = vrot.slane %v2347, %v2359
    %v2361 = vlaneseq
    %v2362 = vshrl.u32 %v2361, 7
    %v2363 = vsub.s32 3, %v2362
    %v2364 = vrot.slane %v2347, %v2363
    %v2625 = vunpack.c.l.b16 %v2091
    %v2626 = vunpack.c.h.b16 %v2091
    %v2627 = vunpack.c.l.b16 %v2092
    %v2628 = vunpack.c.h.b16 %v2092
    %v2629 = vunpack.c.l.b16 %v2093
    %v2630 = vunpack.c.h.b16 %v2093
    %v2631 = vunpack.c.l.b16 %v2094
    %v2632 = vunpack.c.h.b16 %v2094
    %v2633 = vunpack.c.l.b16 %v2095
    %v2634 = vunpack.c.h.b16 %v2095
    %v2635 = vunpack.c.l.b16 %v2096
    %v2636 = vunpack.c.h.b16 %v2096
    %v2637 = vunpack.c.l.b16 %v2097
    %v2638 = vunpack.c.h.b16 %v2097
    %v2639 = vunpack.c.l.b16 %v2098
    %v2640 = vunpack.c.h.b16 %v2098
    %v2641 = vunpack.c.l.b16 %v2099
    %v2642 = vunpack.c.h.b16 %v2099
    %v2643 = vunpack.c.l.b16 %v2100
    %v2644 = vunpack.c.h.b16 %v2100
    %v2645 = vunpack.c.l.b16 %v2101
    %v2646 = vunpack.c.h.b16 %v2101
    %v2647 = vunpack.c.l.b16 %v2102
    %v2648 = vunpack.c.h.b16 %v2102
    %v2649 = vunpack.c.l.b16 %v2103
    %v2650 = vunpack.c.h.b16 %v2103
    %v2651 = vunpack.c.l.b16 %v2104
    %v2652 = vunpack.c.h.b16 %v2104
    %v2653 = vunpack.c.l.b16 %v2105
    %v2654 = vunpack.c.h.b16 %v2105
    %v2655 = vunpack.c.l.b16 %v2106
    %v2656 = vunpack.c.h.b16 %v2106
    %v2657 = vunpack.c.l.b16 %v2107
    %v2658 = vunpack.c.h.b16 %v2107
    %v2659 = vunpack.c.l.b16 %v2108
    %v2660 = vunpack.c.h.b16 %v2108
    %v2661 = vunpack.c.l.b16 %v2109
    %v2662 = vunpack.c.h.b16 %v2109
    %v2663 = vunpack.c.l.b16 %v2110
    %v2664 = vunpack.c.h.b16 %v2110
    %v2665 = vunpack.c.l.b16 %v2111
    %v2666 = vunpack.c.h.b16 %v2111
    %v2667 = vunpack.c.l.b16 %v2112
    %v2668 = vunpack.c.h.b16 %v2112
    %v2669 = vunpack.c.l.b16 %v2113
    %v2670 = vunpack.c.h.b16 %v2113
    %v2671 = vunpack.c.l.b16 %v2114
    %v2672 = vunpack.c.h.b16 %v2114
    %v2673 = vunpack.c.l.b16 %v2115
    %v2674 = vunpack.c.h.b16 %v2115
    %v2675 = vunpack.c.l.b16 %v2116
    %v2676 = vunpack.c.h.b16 %v2116
    %v2677 = vunpack.c.l.b16 %v2117
    %v2678 = vunpack.c.h.b16 %v2117
    %v2679 = vunpack.c.l.b16 %v2118
    %v2680 = vunpack.c.h.b16 %v2118
    %v2681 = vunpack.c.l.b16 %v2119
    %v2682 = vunpack.c.h.b16 %v2119
    %v2683 = vunpack.c.l.b16 %v2120
    %v2684 = vunpack.c.h.b16 %v2120
    %v2685 = vunpack.c.l.b16 %v2121
    %v2686 = vunpack.c.h.b16 %v2121
    %v2687 = vunpack.c.l.b16 %v2122
    %v2688 = vunpack.c.h.b16 %v2122
    %v2689 = vunpack.c.l.b16 %v2123
    %v2690 = vunpack.c.h.b16 %v2123
    %v2691 = vunpack.c.l.b16 %v2124
    %v2692 = vunpack.c.h.b16 %v2124
    %v2693 = vunpack.c.l.b16 %v2125
    %v2694 = vunpack.c.h.b16 %v2125
    %v2695 = vunpack.c.l.b16 %v2126
    %v2696 = vunpack.c.h.b16 %v2126
    %v2697 = vunpack.c.l.b16 %v2127
    %v2698 = vunpack.c.h.b16 %v2127
    %v2699 = vunpack.c.l.b16 %v2128
    %v2700 = vunpack.c.h.b16 %v2128
    %v2701 = vunpack.c.l.b16 %v2129
    %v2702 = vunpack.c.h.b16 %v2129
    %v2703 = vunpack.c.l.b16 %v2130
    %v2704 = vunpack.c.h.b16 %v2130
    %v2705 = vunpack.c.l.b16 %v2131
    %v2706 = vunpack.c.h.b16 %v2131
    %v2707 = vunpack.c.l.b16 %v2132
    %v2708 = vunpack.c.h.b16 %v2132
    %v2709 = vunpack.c.l.b16 %v2133
    %v2710 = vunpack.c.h.b16 %v2133
    %v2711 = vunpack.c.l.b16 %v2134
    %v2712 = vunpack.c.h.b16 %v2134
    %v2713 = vunpack.c.l.b16 %v2135
    %v2714 = vunpack.c.h.b16 %v2135
    %v2715 = vunpack.c.l.b16 %v2136
    %v2716 = vunpack.c.h.b16 %v2136
    %v2717 = vunpack.c.l.b16 %v2137
    %v2718 = vunpack.c.h.b16 %v2137
    %v2719 = vunpack.c.l.b16 %v2138
    %v2720 = vunpack.c.h.b16 %v2138
    %v2721 = vunpack.c.l.b16 %v2139
    %v2722 = vunpack.c.h.b16 %v2139
    %v2723 = vunpack.c.l.b16 %v2140
    %v2724 = vunpack.c.h.b16 %v2140
    %v2725 = vunpack.c.l.b16 %v2141
    %v2726 = vunpack.c.h.b16 %v2141
    %v2727 = vunpack.c.l.b16 %v2142
    %v2728 = vunpack.c.h.b16 %v2142
    %v2729 = vunpack.c.l.b16 %v2143
    %v2730 = vunpack.c.h.b16 %v2143
    %v2731 = vunpack.c.l.b16 %v2144
    %v2732 = vunpack.c.h.b16 %v2144
    %v2733 = vunpack.c.l.b16 %v2145
    %v2734 = vunpack.c.h.b16 %v2145
    %v2735 = vunpack.c.l.b16 %v2146
    %v2736 = vunpack.c.h.b16 %v2146
    %v2737 = vunpack.c.l.b16 %v2147
    %v2738 = vunpack.c.h.b16 %v2147
    %v2739 = vunpack.c.l.b16 %v2148
    %v2740 = vunpack.c.h.b16 %v2148
    %v2741 = vunpack.c.l.b16 %v2149
    %v2742 = vunpack.c.h.b16 %v2149
    %v2743 = vunpack.c.l.b16 %v2150
    %v2744 = vunpack.c.h.b16 %v2150
    %v2745 = vunpack.c.l.b16 %v2151
    %v2746 = vunpack.c.h.b16 %v2151
    %v2747 = vunpack.c.l.b16 %v2152
    %v2748 = vunpack.c.h.b16 %v2152
    %v2749 = vunpack.c.l.b16 %v2153
    %v2750 = vunpack.c.h.b16 %v2153
    %v2751 = vunpack.c.l.b16 %v2154
    %v2752 = vunpack.c.h.b16 %v2154
    %v2753 = vunpack.c.l.b16 %v2155
    %v2754 = vunpack.c.h.b16 %v2155
    %v2755 = vunpack.c.l.b16 %v2156
    %v2756 = vunpack.c.h.b16 %v2156
    %v2757 = vunpack.c.l.b16 %v2157
    %v2758 = vunpack.c.h.b16 %v2157
    %v2759 = vunpack.c.l.b16 %v2158
    %v2760 = vunpack.c.h.b16 %v2158
    %v2761 = vunpack.c.l.b16 %v2159
    %v2762 = vunpack.c.h.b16 %v2159
    %v2763 = vunpack.c.l.b16 %v2160
    %v2764 = vunpack.c.h.b16 %v2160
    %v2765 = vunpack.c.l.b16 %v2161
    %v2766 = vunpack.c.h.b16 %v2161
    %v2767 = vunpack.c.l.b16 %v2162
    %v2768 = vunpack.c.h.b16 %v2162
    %v2769 = vunpack.c.l.b16 %v2163
    %v2770 = vunpack.c.h.b16 %v2163
    %v2771 = vunpack.c.l.b16 %v2164
    %v2772 = vunpack.c.h.b16 %v2164
    %v2773 = vunpack.c.l.b16 %v2165
    %v2774 = vunpack.c.h.b16 %v2165
    %v2775 = vunpack.c.l.b16 %v2166
    %v2776 = vunpack.c.h.b16 %v2166
    %v2777 = vunpack.c.l.b16 %v2167
    %v2778 = vunpack.c.h.b16 %v2167
    %v2779 = vunpack.c.l.b16 %v2168
    %v2780 = vunpack.c.h.b16 %v2168
    %v2781 = vunpack.c.l.b16 %v2169
    %v2782 = vunpack.c.h.b16 %v2169
    %v2783 = vunpack.c.l.b16 %v2170
    %v2784 = vunpack.c.h.b16 %v2170
    %v2785 = vunpack.c.l.b16 %v2171
    %v2786 = vunpack.c.h.b16 %v2171
    %v2787 = vunpack.c.l.b16 %v2172
    %v2788 = vunpack.c.h.b16 %v2172
    %v2789 = vunpack.c.l.b16 %v2173
    %v2790 = vunpack.c.h.b16 %v2173
    %v2791 = vunpack.c.l.b16 %v2174
    %v2792 = vunpack.c.h.b16 %v2174
    %v2793 = vunpack.c.l.b16 %v2175
    %v2794 = vunpack.c.h.b16 %v2175
    %v2795 = vunpack.c.l.b16 %v2176
    %v2796 = vunpack.c.h.b16 %v2176
    %v2797 = vunpack.c.l.b16 %v2177
    %v2798 = vunpack.c.h.b16 %v2177
    %v2799 = vunpack.c.l.b16 %v2178
    %v2800 = vunpack.c.h.b16 %v2178
    %v2801 = vunpack.c.l.b16 %v2179
    %v2802 = vunpack.c.h.b16 %v2179
    %v2803 = vunpack.c.l.b16 %v2180
    %v2804 = vunpack.c.h.b16 %v2180
    %v2805 = vunpack.c.l.b16 %v2181
    %v2806 = vunpack.c.h.b16 %v2181
    %v2807 = vunpack.c.l.b16 %v2182
    %v2808 = vunpack.c.h.b16 %v2182
    %v2809 = vunpack.c.l.b16 %v2183
    %v2810 = vunpack.c.h.b16 %v2183
    %v2811 = vunpack.c.l.b16 %v2184
    %v2812 = vunpack.c.h.b16 %v2184
    %v2813 = vunpack.c.l.b16 %v2185
    %v2814 = vunpack.c.h.b16 %v2185
    %v2815 = vunpack.c.l.b16 %v2186
    %v2816 = vunpack.c.h.b16 %v2186
    %v2817 = vunpack.c.l.b16 %v2187
    %v2818 = vunpack.c.h.b16 %v2187
    %v2819 = vunpack.c.l.b16 %v2188
    %v2820 = vunpack.c.h.b16 %v2188
    %v2821 = vunpack.c.l.b16 %v2189
    %v2822 = vunpack.c.h.b16 %v2189
    %v2823 = vunpack.c.l.b16 %v2190
    %v2824 = vunpack.c.h.b16 %v2190
    %v2825 = vunpack.c.l.b16 %v2191
    %v2826 = vunpack.c.h.b16 %v2191
    %v2827 = vunpack.c.l.b16 %v2192
    %v2828 = vunpack.c.h.b16 %v2192
    %v2829 = vunpack.c.l.b16 %v2193
    %v2830 = vunpack.c.h.b16 %v2193
    %v2831 = vunpack.c.l.b16 %v2194
    %v2832 = vunpack.c.h.b16 %v2194
    %v2833 = vunpack.c.l.b16 %v2195
    %v2834 = vunpack.c.h.b16 %v2195
    %v2835 = vunpack.c.l.b16 %v2196
    %v2836 = vunpack.c.h.b16 %v2196
    %v2837 = vunpack.c.l.b16 %v2197
    %v2838 = vunpack.c.h.b16 %v2197
    %v2839 = vunpack.c.l.b16 %v2198
    %v2840 = vunpack.c.h.b16 %v2198
    %v2841 = vunpack.c.l.b16 %v2199
    %v2842 = vunpack.c.h.b16 %v2199
    %v2843 = vunpack.c.l.b16 %v2200
    %v2844 = vunpack.c.h.b16 %v2200
    %v2845 = vunpack.c.l.b16 %v2201
    %v2846 = vunpack.c.h.b16 %v2201
    %v2847 = vunpack.c.l.b16 %v2202
    %v2848 = vunpack.c.h.b16 %v2202
    %v2849 = vunpack.c.l.b16 %v2203
    %v2850 = vunpack.c.h.b16 %v2203
    %v2851 = vunpack.c.l.b16 %v2204
    %v2852 = vunpack.c.h.b16 %v2204
    %v2853 = vunpack.c.l.b16 %v2205
    %v2854 = vunpack.c.h.b16 %v2205
    %v2855 = vunpack.c.l.b16 %v2206
    %v2856 = vunpack.c.h.b16 %v2206
    %v2857 = vunpack.c.l.b16 %v2207
    %v2858 = vunpack.c.h.b16 %v2207
    %v2859 = vunpack.c.l.b16 %v2208
    %v2860 = vunpack.c.h.b16 %v2208
    %v2861 = vunpack.c.l.b16 %v2209
    %v2862 = vunpack.c.h.b16 %v2209
    %v2863 = vunpack.c.l.b16 %v2210
    %v2864 = vunpack.c.h.b16 %v2210
    %v2865 = vunpack.c.l.b16 %v2211
    %v2866 = vunpack.c.h.b16 %v2211
    %v2867 = vunpack.c.l.b16 %v2212
    %v2868 = vunpack.c.h.b16 %v2212
    %v2869 = vunpack.c.l.b16 %v2213
    %v2870 = vunpack.c.h.b16 %v2213
    %v2871 = vunpack.c.l.b16 %v2214
    %v2872 = vunpack.c.h.b16 %v2214
    %v2873 = vunpack.c.l.b16 %v2215
    %v2874 = vunpack.c.h.b16 %v2215
    %v2875 = vunpack.c.l.b16 %v2216
    %v2876 = vunpack.c.h.b16 %v2216
    %v2877 = vunpack.c.l.b16 %v2217
    %v2878 = vunpack.c.h.b16 %v2217
    %v2879 = vunpack.c.l.b16 %v2218
    %v2880 = vunpack.c.h.b16 %v2218
    %v2881 = vunpack.c.l.b16 %v2219
    %v2882 = vunpack.c.h.b16 %v2219
    %v2883 = vunpack.c.l.b16 %v2220
    %v2884 = vunpack.c.h.b16 %v2220
    %v2885 = vunpack.c.l.b16 %v2221
    %v2886 = vunpack.c.h.b16 %v2221
    %v2887 = vunpack.c.l.b16 %v2222
    %v2888 = vunpack.c.h.b16 %v2222
    %v2889 = vunpack.c.l.b16 %v2223
    %v2890 = vunpack.c.h.b16 %v2223
    %v2891 = vunpack.c.l.b16 %v2224
    %v2892 = vunpack.c.h.b16 %v2224
    %v2893 = vunpack.c.l.b16 %v2225
    %v2894 = vunpack.c.h.b16 %v2225
    %v2895 = vunpack.c.l.b16 %v2226
    %v2896 = vunpack.c.h.b16 %v2226
    %v2897 = vunpack.c.l.b16 %v2227
    %v2898 = vunpack.c.h.b16 %v2227
    %v2899 = vunpack.c.l.b16 %v2228
    %v2900 = vunpack.c.h.b16 %v2228
    %v2901 = vunpack.c.l.b16 %v2229
    %v2902 = vunpack.c.h.b16 %v2229
    %v2903 = vunpack.c.l.b16 %v2230
    %v2904 = vunpack.c.h.b16 %v2230
    %v2905 = vunpack.c.l.b16 %v2231
    %v2906 = vunpack.c.h.b16 %v2231
    %v2907 = vunpack.c.l.b16 %v2232
    %v2908 = vunpack.c.h.b16 %v2232
    %v2909 = vunpack.c.l.b16 %v2233
    %v2910 = vunpack.c.h.b16 %v2233
    %v2911 = vunpack.c.l.b16 %v2234
    %v2912 = vunpack.c.h.b16 %v2234
    %v2913 = vunpack.c.l.b16 %v2235
    %v2914 = vunpack.c.h.b16 %v2235
    %v2915 = vunpack.c.l.b16 %v2236
    %v2916 = vunpack.c.h.b16 %v2236
    %v2917 = vunpack.c.l.b16 %v2237
    %v2918 = vunpack.c.h.b16 %v2237
    %v2919 = vunpack.c.l.b16 %v2238
    %v2920 = vunpack.c.h.b16 %v2238
    %v2921 = vunpack.c.l.b16 %v2239
    %v2922 = vunpack.c.h.b16 %v2239
    %v2923 = vunpack.c.l.b16 %v2240
    %v2924 = vunpack.c.h.b16 %v2240
    %v2925 = vunpack.c.l.b16 %v2241
    %v2926 = vunpack.c.h.b16 %v2241
    %v2927 = vunpack.c.l.b16 %v2242
    %v2928 = vunpack.c.h.b16 %v2242
    %v2929 = vunpack.c.l.b16 %v2243
    %v2930 = vunpack.c.h.b16 %v2243
    %v2931 = vunpack.c.l.b16 %v2244
    %v2932 = vunpack.c.h.b16 %v2244
    %v2933 = vunpack.c.l.b16 %v2245
    %v2934 = vunpack.c.h.b16 %v2245
    %v2935 = vunpack.c.l.b16 %v2246
    %v2936 = vunpack.c.h.b16 %v2246
    %v2937 = vunpack.c.l.b16 %v2247
    %v2938 = vunpack.c.h.b16 %v2247
    %v2939 = vunpack.c.l.b16 %v2248
    %v2940 = vunpack.c.h.b16 %v2248
    %v2941 = vunpack.c.l.b16 %v2249
    %v2942 = vunpack.c.h.b16 %v2249
    %v2943 = vunpack.c.l.b16 %v2250
    %v2944 = vunpack.c.h.b16 %v2250
    %v2945 = vunpack.c.l.b16 %v2251
    %v2946 = vunpack.c.h.b16 %v2251
    %v2947 = vunpack.c.l.b16 %v2252
    %v2948 = vunpack.c.h.b16 %v2252
    %v2949 = vunpack.c.l.b16 %v2253
    %v2950 = vunpack.c.h.b16 %v2253
    %v2951 = vunpack.c.l.b16 %v2254
    %v2952 = vunpack.c.h.b16 %v2254
    %v2953 = vunpack.c.l.b16 %v2255
    %v2954 = vunpack.c.h.b16 %v2255
    %v2955 = vunpack.c.l.b16 %v2256
    %v2956 = vunpack.c.h.b16 %v2256
    %v2957 = vunpack.c.l.b16 %v2257
    %v2958 = vunpack.c.h.b16 %v2257
    %v2959 = vunpack.c.l.b16 %v2258
    %v2960 = vunpack.c.h.b16 %v2258
    %v2961 = vunpack.c.l.b16 %v2259
    %v2962 = vunpack.c.h.b16 %v2259
    %v2963 = vunpack.c.l.b16 %v2260
    %v2964 = vunpack.c.h.b16 %v2260
    %v2965 = vunpack.c.l.b16 %v2261
    %v2966 = vunpack.c.h.b16 %v2261
    %v2967 = vunpack.c.l.b16 %v2262
    %v2968 = vunpack.c.h.b16 %v2262
    %v2969 = vunpack.c.l.b16 %v2263
    %v2970 = vunpack.c.h.b16 %v2263
    %v2971 = vunpack.c.l.b16 %v2264
    %v2972 = vunpack.c.h.b16 %v2264
    %v2973 = vunpack.c.l.b16 %v2265
    %v2974 = vunpack.c.h.b16 %v2265
    %v2975 = vunpack.c.l.b16 %v2266
    %v2976 = vunpack.c.h.b16 %v2266
    %v2977 = vunpack.c.l.b16 %v2267
    %v2978 = vunpack.c.h.b16 %v2267
    %v2979 = vunpack.c.l.b16 %v2268
    %v2980 = vunpack.c.h.b16 %v2268
    %v2981 = vunpack.c.l.b16 %v2269
    %v2982 = vunpack.c.h.b16 %v2269
    %v2983 = vunpack.c.l.b16 %v2270
    %v2984 = vunpack.c.h.b16 %v2270
    %v2985 = vunpack.c.l.b16 %v2271
    %v2986 = vunpack.c.h.b16 %v2271
    %v2987 = vunpack.c.l.b16 %v2272
    %v2988 = vunpack.c.h.b16 %v2272
    %v2989 = vunpack.c.l.b16 %v2273
    %v2990 = vunpack.c.h.b16 %v2273
    %v2991 = vunpack.c.l.b16 %v2274
    %v2992 = vunpack.c.h.b16 %v2274
    %v2993 = vunpack.c.l.b16 %v2275
    %v2994 = vunpack.c.h.b16 %v2275
    %v2995 = vunpack.c.l.b16 %v2276
    %v2996 = vunpack.c.h.b16 %v2276
    %v2997 = vunpack.c.l.b16 %v2277
    %v2998 = vunpack.c.h.b16 %v2277
    %v2999 = vunpack.c.l.b16 %v2278
    %v3000 = vunpack.c.h.b16 %v2278
    %v3001 = vunpack.c.l.b16 %v2279
    %v3002 = vunpack.c.h.b16 %v2279
    %v3003 = vunpack.c.l.b16 %v2280
    %v3004 = vunpack.c.h.b16 %v2280
    %v3005 = vunpack.c.l.b16 %v2281
    %v3006 = vunpack.c.h.b16 %v2281
    %v3007 = vunpack.c.l.b16 %v2282
    %v3008 = vunpack.c.h.b16 %v2282
    %v3009 = vunpack.c.l.b16 %v2283
    %v3010 = vunpack.c.h.b16 %v2283
    %v3011 = vunpack.c.l.b16 %v2284
    %v3012 = vunpack.c.h.b16 %v2284
    %v3013 = vunpack.c.l.b16 %v2285
    %v3014 = vunpack.c.h.b16 %v2285
    %v3015 = vunpack.c.l.b16 %v2286
    %v3016 = vunpack.c.h.b16 %v2286
    %v3017 = vunpack.c.l.b16 %v2287
    %v3018 = vunpack.c.h.b16 %v2287
    %v3019 = vunpack.c.l.b16 %v2288
    %v3020 = vunpack.c.h.b16 %v2288
    %v3021 = vunpack.c.l.b16 %v2289
    %v3022 = vunpack.c.h.b16 %v2289
    %v3023 = vunpack.c.l.b16 %v2290
    %v3024 = vunpack.c.h.b16 %v2290
    %v3025 = vunpack.c.l.b16 %v2291
    %v3026 = vunpack.c.h.b16 %v2291
    %v3027 = vunpack.c.l.b16 %v2292
    %v3028 = vunpack.c.h.b16 %v2292
    %v3029 = vunpack.c.l.b16 %v2293
    %v3030 = vunpack.c.h.b16 %v2293
    %v3031 = vunpack.c.l.b16 %v2294
    %v3032 = vunpack.c.h.b16 %v2294
    %v3033 = vunpack.c.l.b16 %v2295
    %v3034 = vunpack.c.h.b16 %v2295
    %v3035 = vunpack.c.l.b16 %v2296
    %v3036 = vunpack.c.h.b16 %v2296
    %v3037 = vunpack.c.l.b16 %v2297
    %v3038 = vunpack.c.h.b16 %v2297
    %v3039 = vunpack.c.l.b16 %v2298
    %v3040 = vunpack.c.h.b16 %v2298
    %v3041 = vunpack.c.l.b16 %v2299
    %v3042 = vunpack.c.h.b16 %v2299
    %v3043 = vunpack.c.l.b16 %v2300
    %v3044 = vunpack.c.h.b16 %v2300
    %v3045 = vunpack.c.l.b16 %v2301
    %v3046 = vunpack.c.h.b16 %v2301
    %v3047 = vunpack.c.l.b16 %v2302
    %v3048 = vunpack.c.h.b16 %v2302
    %v3049 = vunpack.c.l.b16 %v2303
    %v3050 = vunpack.c.h.b16 %v2303
    %v3051 = vunpack.c.l.b16 %v2304
    %v3052 = vunpack.c.h.b16 %v2304
    %v3053 = vunpack.c.l.b16 %v2305
    %v3054 = vunpack.c.h.b16 %v2305
    %v3055 = vunpack.c.l.b16 %v2306
    %v3056 = vunpack.c.h.b16 %v2306
    %v3057 = vunpack.c.l.b16 %v2307
    %v3058 = vunpack.c.h.b16 %v2307
    %v3059 = vunpack.c.l.b16 %v2308
    %v3060 = vunpack.c.h.b16 %v2308
    %v3061 = vunpack.c.l.b16 %v2309
    %v3062 = vunpack.c.h.b16 %v2309
    %v3063 = vunpack.c.l.b16 %v2310
    %v3064 = vunpack.c.h.b16 %v2310
    %v3065 = vunpack.c.l.b16 %v2311
    %v3066 = vunpack.c.h.b16 %v2311
    %v3067 = vunpack.c.l.b16 %v2312
    %v3068 = vunpack.c.h.b16 %v2312
    %v3069 = vunpack.c.l.b16 %v2313
    %v3070 = vunpack.c.h.b16 %v2313
    %v3071 = vunpack.c.l.b16 %v2314
    %v3072 = vunpack.c.h.b16 %v2314
    %v3073 = vunpack.c.l.b16 %v2315
    %v3074 = vunpack.c.h.b16 %v2315
    %v3075 = vunpack.c.l.b16 %v2316
    %v3076 = vunpack.c.h.b16 %v2316
    %v3077 = vunpack.c.l.b16 %v2317
    %v3078 = vunpack.c.h.b16 %v2317
    %v3079 = vunpack.c.l.b16 %v2318
    %v3080 = vunpack.c.h.b16 %v2318
    %v3081 = vunpack.c.l.b16 %v2319
    %v3082 = vunpack.c.h.b16 %v2319
    %v3083 = vunpack.c.l.b16 %v2320
    %v3084 = vunpack.c.h.b16 %v2320
    %v3085 = vunpack.c.l.b16 %v2321
    %v3086 = vunpack.c.h.b16 %v2321
    %v3087 = vunpack.c.l.b16 %v2322
    %v3088 = vunpack.c.h.b16 %v2322
    %v3089 = vunpack.c.l.b16 %v2323
    %v3090 = vunpack.c.h.b16 %v2323
    %v3091 = vunpack.c.l.b16 %v2324
    %v3092 = vunpack.c.h.b16 %v2324
    %v3093 = vunpack.c.l.b16 %v2325
    %v3094 = vunpack.c.h.b16 %v2325
    %v3095 = vunpack.c.l.b16 %v2326
    %v3096 = vunpack.c.h.b16 %v2326
    %v3097 = vunpack.c.l.b16 %v2327
    %v3098 = vunpack.c.h.b16 %v2327
    %v3099 = vunpack.c.l.b16 %v2328
    %v3100 = vunpack.c.h.b16 %v2328
    %v3101 = vunpack.c.l.b16 %v2329
    %v3102 = vunpack.c.h.b16 %v2329
    %v3103 = vunpack.c.l.b16 %v2330
    %v3104 = vunpack.c.h.b16 %v2330
    %v3105 = vunpack.c.l.b16 %v2331
    %v3106 = vunpack.c.h.b16 %v2331
    %v3107 = vunpack.c.l.b16 %v2332
    %v3108 = vunpack.c.h.b16 %v2332
    %v3109 = vunpack.c.l.b16 %v2333
    %v3110 = vunpack.c.h.b16 %v2333
    %v3111 = vunpack.c.l.b16 %v2334
    %v3112 = vunpack.c.h.b16 %v2334
    %v3113 = vunpack.c.l.b16 %v2335
    %v3114 = vunpack.c.h.b16 %v2335
    %v3115 = vunpack.c.l.b16 %v2336
    %v3116 = vunpack.c.h.b16 %v2336
    %v3117 = vunpack.c.l.b16 %v2337
    %v3118 = vunpack.c.h.b16 %v2337
    %v3119 = vunpack.c.l.b16 %v2338
    %v3120 = vunpack.c.h.b16 %v2338
    %v3121 = vunpack.c.l.b16 %v2339
    %v3122 = vunpack.c.h.b16 %v2339
    %v3123 = vunpack.c.l.b16 %v2340
    %v3124 = vunpack.c.h.b16 %v2340
    %v3125 = vunpack.c.l.b16 %v2341
    %v3126 = vunpack.c.h.b16 %v2341
    %v3127 = vunpack.c.l.b16 %v2342
    %v3128 = vunpack.c.h.b16 %v2342
    %v3129 = vunpack.c.l.b16 %v2343
    %v3130 = vunpack.c.h.b16 %v2343
    %v3131 = vunpack.c.l.b16 %v2344
    %v3132 = vunpack.c.h.b16 %v2344
    %v3133 = vunpack.c.l.b16 %v2345
    %v3134 = vunpack.c.h.b16 %v2345
    %v3135 = vunpack.c.l.b16 %v2346
    %v3136 = vunpack.c.h.b16 %v2346
    %v3137 = vpack.c.b16 %v2629, %v2625
    %v3138 = vpack.c.b16 %v2630, %v2626
    %v3139 = vpack.c.b16 %v2631, %v2627
    %v3140 = vpack.c.b16 %v2632, %v2628
    %v3141 = vpack.c.b16 %v2637, %v2633
    %v3142 = vpack.c.b16 %v2638, %v2634
    %v3143 = vpack.c.b16 %v2639, %v2635
    %v3144 = vpack.c.b16 %v2640, %v2636
    %v3145 = vpack.c.b16 %v2645, %v2641
    %v3146 = vpack.c.b16 %v2646, %v2642
    %v3147 = vpack.c.b16 %v2647, %v2643
    %v3148 = vpack.c.b16 %v2648, %v2644
    %v3149 = vpack.c.b16 %v2653, %v2649
    %v3150 = vpack.c.b16 %v2654, %v2650
    %v3151 = vpack.c.b16 %v2655, %v2651
    %v3152 = vpack.c.b16 %v2656, %v2652
    %v3153 = vpack.c.b16 %v2661, %v2657
    %v3154 = vpack.c.b16 %v2662, %v2658
    %v3155 = vpack.c.b16 %v2663, %v2659
    %v3156 = vpack.c.b16 %v2664, %v2660
    %v3157 = vpack.c.b16 %v2669, %v2665
    %v3158 = vpack.c.b16 %v2670, %v2666
    %v3159 = vpack.c.b16 %v2671, %v2667
    %v3160 = vpack.c.b16 %v2672, %v2668
    %v3161 = vpack.c.b16 %v2677, %v2673
    %v3162 = vpack.c.b16 %v2678, %v2674
    %v3163 = vpack.c.b16 %v2679, %v2675
    %v3164 = vpack.c.b16 %v2680, %v2676
    %v3165 = vpack.c.b16 %v2685, %v2681
    %v3166 = vpack.c.b16 %v2686, %v2682
    %v3167 = vpack.c.b16 %v2687, %v2683
    %v3168 = vpack.c.b16 %v2688, %v2684
    %v3169 = vpack.c.b16 %v2693, %v2689
    %v3170 = vpack.c.b16 %v2694, %v2690
    %v3171 = vpack.c.b16 %v2695, %v2691
    %v3172 = vpack.c.b16 %v2696, %v2692
    %v3173 = vpack.c.b16 %v2701, %v2697
    %v3174 = vpack.c.b16 %v2702, %v2698
    %v3175 = vpack.c.b16 %v2703, %v2699
    %v3176 = vpack.c.b16 %v2704, %v2700
    %v3177 = vpack.c.b16 %v2709, %v2705
    %v3178 = vpack.c.b16 %v2710, %v2706
    %v3179 = vpack.c.b16 %v2711, %v2707
    %v3180 = vpack.c.b16 %v2712, %v2708
    %v3181 = vpack.c.b16 %v2717, %v2713
    %v3182 = vpack.c.b16 %v2718, %v2714
    %v3183 = vpack.c.b16 %v2719, %v2715
    %v3184 = vpack.c.b16 %v2720, %v2716
    %v3185 = vpack.c.b16 %v2725, %v2721
    %v3186 = vpack.c.b16 %v2726, %v2722
    %v3187 = vpack.c.b16 %v2727, %v2723
    %v3188 = vpack.c.b16 %v2728, %v2724
    %v3189 = vpack.c.b16 %v2733, %v2729
    %v3190 = vpack.c.b16 %v2734, %v2730
    %v3191 = vpack.c.b16 %v2735, %v2731
    %v3192 = vpack.c.b16 %v2736, %v2732
    %v3193 = vpack.c.b16 %v2741, %v2737
    %v3194 = vpack.c.b16 %v2742, %v2738
    %v3195 = vpack.c.b16 %v2743, %v2739
    %v3196 = vpack.c.b16 %v2744, %v2740
    %v3197 = vpack.c.b16 %v2749, %v2745
    %v3198 = vpack.c.b16 %v2750, %v2746
    %v3199 = vpack.c.b16 %v2751, %v2747
    %v3200 = vpack.c.b16 %v2752, %v2748
    %v3201 = vpack.c.b16 %v2757, %v2753
    %v3202 = vpack.c.b16 %v2758, %v2754
    %v3203 = vpack.c.b16 %v2759, %v2755
    %v3204 = vpack.c.b16 %v2760, %v2756
    %v3205 = vpack.c.b16 %v2765, %v2761
    %v3206 = vpack.c.b16 %v2766, %v2762
    %v3207 = vpack.c.b16 %v2767, %v2763
    %v3208 = vpack.c.b16 %v2768, %v2764
    %v3209 = vpack.c.b16 %v2773, %v2769
    %v3210 = vpack.c.b16 %v2774, %v2770
    %v3211 = vpack.c.b16 %v2775, %v2771
    %v3212 = vpack.c.b16 %v2776, %v2772
    %v3213 = vpack.c.b16 %v2781, %v2777
    %v3214 = vpack.c.b16 %v2782, %v2778
    %v3215 = vpack.c.b16 %v2783, %v2779
    %v3216 = vpack.c.b16 %v2784, %v2780
    %v3217 = vpack.c.b16 %v2789, %v2785
    %v3218 = vpack.c.b16 %v2790, %v2786
    %v3219 = vpack.c.b16 %v2791, %v2787
    %v3220 = vpack.c.b16 %v2792, %v2788
    %v3221 = vpack.c.b16 %v2797, %v2793
    %v3222 = vpack.c.b16 %v2798, %v2794
    %v3223 = vpack.c.b16 %v2799, %v2795
    %v3224 = vpack.c.b16 %v2800, %v2796
    %v3225 = vpack.c.b16 %v2805, %v2801
    %v3226 = vpack.c.b16 %v2806, %v2802
    %v3227 = vpack.c.b16 %v2807, %v2803
    %v3228 = vpack.c.b16 %v2808, %v2804
    %v3229 = vpack.c.b16 %v2813, %v2809
    %v3230 = vpack.c.b16 %v2814, %v2810
    %v3231 = vpack.c.b16 %v2815, %v2811
    %v3232 = vpack.c.b16 %v2816, %v2812
    %v3233 = vpack.c.b16 %v2821, %v2817
    %v3234 = vpack.c.b16 %v2822, %v2818
    %v3235 = vpack.c.b16 %v2823, %v2819
    %v3236 = vpack.c.b16 %v2824, %v2820
    %v3237 = vpack.c.b16 %v2829, %v2825
    %v3238 = vpack.c.b16 %v2830, %v2826
    %v3239 = vpack.c.b16 %v2831, %v2827
    %v3240 = vpack.c.b16 %v2832, %v2828
    %v3241 = vpack.c.b16 %v2837, %v2833
    %v3242 = vpack.c.b16 %v2838, %v2834
    %v3243 = vpack.c.b16 %v2839, %v2835
    %v3244 = vpack.c.b16 %v2840, %v2836
    %v3245 = vpack.c.b16 %v2845, %v2841
    %v3246 = vpack.c.b16 %v2846, %v2842
    %v3247 = vpack.c.b16 %v2847, %v2843
    %v3248 = vpack.c.b16 %v2848, %v2844
    %v3249 = vpack.c.b16 %v2853, %v2849
    %v3250 = vpack.c.b16 %v2854, %v2850
    %v3251 = vpack.c.b16 %v2855, %v2851
    %v3252 = vpack.c.b16 %v2856, %v2852
    %v3253 = vpack.c.b16 %v2861, %v2857
    %v3254 = vpack.c.b16 %v2862, %v2858
    %v3255 = vpack.c.b16 %v2863, %v2859
    %v3256 = vpack.c.b16 %v2864, %v2860
    %v3257 = vpack.c.b16 %v2869, %v2865
    %v3258 = vpack.c.b16 %v2870, %v2866
    %v3259 = vpack.c.b16 %v2871, %v2867
    %v3260 = vpack.c.b16 %v2872, %v2868
    %v3261 = vpack.c.b16 %v2877, %v2873
    %v3262 = vpack.c.b16 %v2878, %v2874
    %v3263 = vpack.c.b16 %v2879, %v2875
    %v3264 = vpack.c.b16 %v2880, %v2876
    %v3265 = vpack.c.b16 %v2885, %v2881
    %v3266 = vpack.c.b16 %v2886, %v2882
    %v3267 = vpack.c.b16 %v2887, %v2883
    %v3268 = vpack.c.b16 %v2888, %v2884
    %v3269 = vpack.c.b16 %v2893, %v2889
    %v3270 = vpack.c.b16 %v2894, %v2890
    %v3271 = vpack.c.b16 %v2895, %v2891
    %v3272 = vpack.c.b16 %v2896, %v2892
    %v3273 = vpack.c.b16 %v2901, %v2897
    %v3274 = vpack.c.b16 %v2902, %v2898
    %v3275 = vpack.c.b16 %v2903, %v2899
    %v3276 = vpack.c.b16 %v2904, %v2900
    %v3277 = vpack.c.b16 %v2909, %v2905
    %v3278 = vpack.c.b16 %v2910, %v2906
    %v3279 = vpack.c.b16 %v2911, %v2907
    %v3280 = vpack.c.b16 %v2912, %v2908
    %v3281 = vpack.c.b16 %v2917, %v2913
    %v3282 = vpack.c.b16 %v2918, %v2914
    %v3283 = vpack.c.b16 %v2919, %v2915
    %v3284 = vpack.c.b16 %v2920, %v2916
    %v3285 = vpack.c.b16 %v2925, %v2921
    %v3286 = vpack.c.b16 %v2926, %v2922
    %v3287 = vpack.c.b16 %v2927, %v2923
    %v3288 = vpack.c.b16 %v2928, %v2924
    %v3289 = vpack.c.b16 %v2933, %v2929
    %v3290 = vpack.c.b16 %v2934, %v2930
    %v3291 = vpack.c.b16 %v2935, %v2931
    %v3292 = vpack.c.b16 %v2936, %v2932
    %v3293 = vpack.c.b16 %v2941, %v2937
    %v3294 = vpack.c.b16 %v2942, %v2938
    %v3295 = vpack.c.b16 %v2943, %v2939
    %v3296 = vpack.c.b16 %v2944, %v2940
    %v3297 = vpack.c.b16 %v2949, %v2945
    %v3298 = vpack.c.b16 %v2950, %v2946
    %v3299 = vpack.c.b16 %v2951, %v2947
    %v3300 = vpack.c.b16 %v2952, %v2948
    %v3301 = vpack.c.b16 %v2957, %v2953
    %v3302 = vpack.c.b16 %v2958, %v2954
    %v3303 = vpack.c.b16 %v2959, %v2955
    %v3304 = vpack.c.b16 %v2960, %v2956
    %v3305 = vpack.c.b16 %v2965, %v2961
    %v3306 = vpack.c.b16 %v2966, %v2962
    %v3307 = vpack.c.b16 %v2967, %v2963
    %v3308 = vpack.c.b16 %v2968, %v2964
    %v3309 = vpack.c.b16 %v2973, %v2969
    %v3310 = vpack.c.b16 %v2974, %v2970
    %v3311 = vpack.c.b16 %v2975, %v2971
    %v3312 = vpack.c.b16 %v2976, %v2972
    %v3313 = vpack.c.b16 %v2981, %v2977
    %v3314 = vpack.c.b16 %v2982, %v2978
    %v3315 = vpack.c.b16 %v2983, %v2979
    %v3316 = vpack.c.b16 %v2984, %v2980
    %v3317 = vpack.c.b16 %v2989, %v2985
    %v3318 = vpack.c.b16 %v2990, %v2986
    %v3319 = vpack.c.b16 %v2991, %v2987
    %v3320 = vpack.c.b16 %v2992, %v2988
    %v3321 = vpack.c.b16 %v2997, %v2993
    %v3322 = vpack.c.b16 %v2998, %v2994
    %v3323 = vpack.c.b16 %v2999, %v2995
    %v3324 = vpack.c.b16 %v3000, %v2996
    %v3325 = vpack.c.b16 %v3005, %v3001
    %v3326 = vpack.c.b16 %v3006, %v3002
    %v3327 = vpack.c.b16 %v3007, %v3003
    %v3328 = vpack.c.b16 %v3008, %v3004
    %v3329 = vpack.c.b16 %v3013, %v3009
    %v3330 = vpack.c.b16 %v3014, %v3010
    %v3331 = vpack.c.b16 %v3015, %v3011
    %v3332 = vpack.c.b16 %v3016, %v3012
    %v3333 = vpack.c.b16 %v3021, %v3017
    %v3334 = vpack.c.b16 %v3022, %v3018
    %v3335 = vpack.c.b16 %v3023, %v3019
    %v3336 = vpack.c.b16 %v3024, %v3020
    %v3337 = vpack.c.b16 %v3029, %v3025
    %v3338 = vpack.c.b16 %v3030, %v3026
    %v3339 = vpack.c.b16 %v3031, %v3027
    %v3340 = vpack.c.b16 %v3032, %v3028
    %v3341 = vpack.c.b16 %v3037, %v3033
    %v3342 = vpack.c.b16 %v3038, %v3034
    %v3343 = vpack.c.b16 %v3039, %v3035
    %v3344 = vpack.c.b16 %v3040, %v3036
    %v3345 = vpack.c.b16 %v3045, %v3041
    %v3346 = vpack.c.b16 %v3046, %v3042
    %v3347 = vpack.c.b16 %v3047, %v3043
    %v3348 = vpack.c.b16 %v3048, %v3044
    %v3349 = vpack.c.b16 %v3053, %v3049
    %v3350 = vpack.c.b16 %v3054, %v3050
    %v3351 = vpack.c.b16 %v3055, %v3051
    %v3352 = vpack.c.b16 %v3056, %v3052
    %v3353 = vpack.c.b16 %v3061, %v3057
    %v3354 = vpack.c.b16 %v3062, %v3058
    %v3355 = vpack.c.b16 %v3063, %v3059
    %v3356 = vpack.c.b16 %v3064, %v3060
    %v3357 = vpack.c.b16 %v3069, %v3065
    %v3358 = vpack.c.b16 %v3070, %v3066
    %v3359 = vpack.c.b16 %v3071, %v3067
    %v3360 = vpack.c.b16 %v3072, %v3068
    %v3361 = vpack.c.b16 %v3077, %v3073
    %v3362 = vpack.c.b16 %v3078, %v3074
    %v3363 = vpack.c.b16 %v3079, %v3075
    %v3364 = vpack.c.b16 %v3080, %v3076
    %v3365 = vpack.c.b16 %v3085, %v3081
    %v3366 = vpack.c.b16 %v3086, %v3082
    %v3367 = vpack.c.b16 %v3087, %v3083
    %v3368 = vpack.c.b16 %v3088, %v3084
    %v3369 = vpack.c.b16 %v3093, %v3089
    %v3370 = vpack.c.b16 %v3094, %v3090
    %v3371 = vpack.c.b16 %v3095, %v3091
    %v3372 = vpack.c.b16 %v3096, %v3092
    %v3373 = vpack.c.b16 %v3101, %v3097
    %v3374 = vpack.c.b16 %v3102, %v3098
    %v3375 = vpack.c.b16 %v3103, %v3099
    %v3376 = vpack.c.b16 %v3104, %v3100
    %v3377 = vpack.c.b16 %v3109, %v3105
    %v3378 = vpack.c.b16 %v3110, %v3106
    %v3379 = vpack.c.b16 %v3111, %v3107
    %v3380 = vpack.c.b16 %v3112, %v3108
    %v3381 = vpack.c.b16 %v3117, %v3113
    %v3382 = vpack.c.b16 %v3118, %v3114
    %v3383 = vpack.c.b16 %v3119, %v3115
    %v3384 = vpack.c.b16 %v3120, %v3116
    %v3385 = vpack.c.b16 %v3125, %v3121
    %v3386 = vpack.c.b16 %v3126, %v3122
    %v3387 = vpack.c.b16 %v3127, %v3123
    %v3388 = vpack.c.b16 %v3128, %v3124
    %v3389 = vpack.c.b16 %v3133, %v3129
    %v3390 = vpack.c.b16 %v3134, %v3130
    %v3391 = vpack.c.b16 %v3135, %v3131
    %v3392 = vpack.c.b16 %v3136, %v3132
    %3649 = vmatprep.subr.bf16.mxu0 %v3138
    %3650 = vmatpush1.bf16.msra.mxu0 %v3137
    %3651 = vmatprep.subr.bf16.mxu0 %v3142
    %3652 = vmatpush1.bf16.msra.mxu0 %v3141
    %3653 = vmatprep.subr.bf16.mxu0 %v3146
    %3654 = vmatpush1.bf16.msra.mxu0 %v3145
    %3655 = vmatprep.subr.bf16.mxu0 %v3150
    %3656 = vmatpush1.bf16.msra.mxu0 %v3149
    %3657 = vmatprep.subr.bf16.mxu0 %v3154
    %3658 = vmatpush1.bf16.msra.mxu0 %v3153
    %3659 = vmatprep.subr.bf16.mxu0 %v3158
    %3660 = vmatpush1.bf16.msra.mxu0 %v3157
    %3661 = vmatprep.subr.bf16.mxu0 %v3162
    %3662 = vmatpush1.bf16.msra.mxu0 %v3161
    %3663 = vmatprep.subr.bf16.mxu0 %v3166
    %3664 = vmatpush1.bf16.msra.mxu0 %v3165
    %3665 = vmatprep.subr.bf16.mxu0 %v3170
    %3666 = vmatpush1.bf16.msra.mxu0 %v3169
    %3667 = vmatprep.subr.bf16.mxu0 %v3174
    %3668 = vmatpush1.bf16.msra.mxu0 %v3173
    %3669 = vmatprep.subr.bf16.mxu0 %v3178
    %3670 = vmatpush1.bf16.msra.mxu0 %v3177
    %3671 = vmatprep.subr.bf16.mxu0 %v3182
    %3672 = vmatpush1.bf16.msra.mxu0 %v3181
    %3673 = vmatprep.subr.bf16.mxu0 %v3186
    %3674 = vmatpush1.bf16.msra.mxu0 %v3185
    %3675 = vmatprep.subr.bf16.mxu0 %v3190
    %3676 = vmatpush1.bf16.msra.mxu0 %v3189
    %3677 = vmatprep.subr.bf16.mxu0 %v3194
    %3678 = vmatpush1.bf16.msra.mxu0 %v3193
    %3679 = vmatprep.subr.bf16.mxu0 %v3198
    %3680 = vmatpush1.bf16.msra.mxu0 %v3197
    %3681 = vmatprep.mubr.bf16.mxu0 %v2084
    %3682 = vmatmul.mubr.bf16.gmra.mrb[0].mxu0 %v2083
    %v3683 = vpop.f32.mrb[0].mxu0
    %v3684 = vadd.f32 %v2352, %v3683
    %v3685 = vpop.f32.mrb[0].mxu0
    %v3686 = vadd.f32 %v2356, %v3685
    %v3687 = vpop.f32.mrb[0].mxu0
    %v3688 = vadd.f32 %v2352, %v3687
    %v3689 = vpop.f32.mrb[0].mxu0
    %v3690 = vadd.f32 %v2356, %v3689
    %3691 = vdwg.mxu0
    %3692 = vmatprep.subr.bf16.mxu0 %v3202
    %3693 = vmatpush1.bf16.msra.mxu0 %v3201
    %3694 = vmatprep.subr.bf16.mxu0 %v3206
    %3695 = vmatpush1.bf16.msra.mxu0 %v3205
    %3696 = vmatprep.subr.bf16.mxu0 %v3210
    %3697 = vmatpush1.bf16.msra.mxu0 %v3209
    %3698 = vmatprep.subr.bf16.mxu0 %v3214
    %3699 = vmatpush1.bf16.msra.mxu0 %v3213
    %3700 = vmatprep.subr.bf16.mxu0 %v3218
    %3701 = vmatpush1.bf16.msra.mxu0 %v3217
    %3702 = vmatprep.subr.bf16.mxu0 %v3222
    %3703 = vmatpush1.bf16.msra.mxu0 %v3221
    %3704 = vmatprep.subr.bf16.mxu0 %v3226
    %3705 = vmatpush1.bf16.msra.mxu0 %v3225
    %3706 = vmatprep.subr.bf16.mxu0 %v3230
    %3707 = vmatpush1.bf16.msra.mxu0 %v3229
    %3708 = vmatprep.subr.bf16.mxu0 %v3234
    %3709 = vmatpush1.bf16.msra.mxu0 %v3233
    %3710 = vmatprep.subr.bf16.mxu0 %v3238
    %3711 = vmatpush1.bf16.msra.mxu0 %v3237
    %3712 = vmatprep.subr.bf16.mxu0 %v3242
    %3713 = vmatpush1.bf16.msra.mxu0 %v3241
    %3714 = vmatprep.subr.bf16.mxu0 %v3246
    %3715 = vmatpush1.bf16.msra.mxu0 %v3245
    %3716 = vmatprep.subr.bf16.mxu0 %v3250
    %3717 = vmatpush1.bf16.msra.mxu0 %v3249
    %3718 = vmatprep.subr.bf16.mxu0 %v3254
    %3719 = vmatpush1.bf16.msra.mxu0 %v3253
    %3720 = vmatprep.subr.bf16.mxu0 %v3258
    %3721 = vmatpush1.bf16.msra.mxu0 %v3257
    %3722 = vmatprep.subr.bf16.mxu0 %v3262
    %3723 = vmatpush1.bf16.msra.mxu0 %v3261
    %3724 = vmatprep.mubr.bf16.mxu0 %v2086
    %3725 = vmatmul.mubr.bf16.gmra.mrb[0].mxu0 %v2085
    %v3726 = vpop.f32.mrb[0].mxu0
    %v3727 = vadd.f32 %v3684, %v3726
    %v3728 = vpop.f32.mrb[0].mxu0
    %v3729 = vadd.f32 %v3686, %v3728
    %v3730 = vpop.f32.mrb[0].mxu0
    %v3731 = vadd.f32 %v3688, %v3730
    %v3732 = vpop.f32.mrb[0].mxu0
    %v3733 = vadd.f32 %v3690, %v3732
    %3734 = vdwg.mxu0
    %3735 = vmatprep.subr.bf16.mxu0 %v3266
    %3736 = vmatpush1.bf16.msra.mxu0 %v3265
    %3737 = vmatprep.subr.bf16.mxu0 %v3270
    %3738 = vmatpush1.bf16.msra.mxu0 %v3269
    %3739 = vmatprep.subr.bf16.mxu0 %v3274
    %3740 = vmatpush1.bf16.msra.mxu0 %v3273
    %3741 = vmatprep.subr.bf16.mxu0 %v3278
    %3742 = vmatpush1.bf16.msra.mxu0 %v3277
    %3743 = vmatprep.subr.bf16.mxu0 %v3282
    %3744 = vmatpush1.bf16.msra.mxu0 %v3281
    %3745 = vmatprep.subr.bf16.mxu0 %v3286
    %3746 = vmatpush1.bf16.msra.mxu0 %v3285
    %3747 = vmatprep.subr.bf16.mxu0 %v3290
    %3748 = vmatpush1.bf16.msra.mxu0 %v3289
    %3749 = vmatprep.subr.bf16.mxu0 %v3294
    %3750 = vmatpush1.bf16.msra.mxu0 %v3293
    %3751 = vmatprep.subr.bf16.mxu0 %v3298
    %3752 = vmatpush1.bf16.msra.mxu0 %v3297
    %3753 = vmatprep.subr.bf16.mxu0 %v3302
    %3754 = vmatpush1.bf16.msra.mxu0 %v3301
    %3755 = vmatprep.subr.bf16.mxu0 %v3306
    %3756 = vmatpush1.bf16.msra.mxu0 %v3305
    %3757 = vmatprep.subr.bf16.mxu0 %v3310
    %3758 = vmatpush1.bf16.msra.mxu0 %v3309
    %3759 = vmatprep.subr.bf16.mxu0 %v3314
    %3760 = vmatpush1.bf16.msra.mxu0 %v3313
    %3761 = vmatprep.subr.bf16.mxu0 %v3318
    %3762 = vmatpush1.bf16.msra.mxu0 %v3317
    %3763 = vmatprep.subr.bf16.mxu0 %v3322
    %3764 = vmatpush1.bf16.msra.mxu0 %v3321
    %3765 = vmatprep.subr.bf16.mxu0 %v3326
    %3766 = vmatpush1.bf16.msra.mxu0 %v3325
    %3767 = vmatprep.mubr.bf16.mxu0 %v2088
    %3768 = vmatmul.mubr.bf16.gmra.mrb[0].mxu0 %v2087
    %v3769 = vpop.f32.mrb[0].mxu0
    %v3770 = vadd.f32 %v3727, %v3769
    %v3771 = vpop.f32.mrb[0].mxu0
    %v3772 = vadd.f32 %v3729, %v3771
    %v3773 = vpop.f32.mrb[0].mxu0
    %v3774 = vadd.f32 %v3731, %v3773
    %v3775 = vpop.f32.mrb[0].mxu0
    %v3776 = vadd.f32 %v3733, %v3775
    %3777 = vdwg.mxu0
    %3778 = vmatprep.subr.bf16.mxu0 %v3330
    %3779 = vmatpush1.bf16.msra.mxu0 %v3329
    %3780 = vmatprep.subr.bf16.mxu0 %v3334
    %3781 = vmatpush1.bf16.msra.mxu0 %v3333
    %3782 = vmatprep.subr.bf16.mxu0 %v3338
    %3783 = vmatpush1.bf16.msra.mxu0 %v3337
    %3784 = vmatprep.subr.bf16.mxu0 %v3342
    %3785 = vmatpush1.bf16.msra.mxu0 %v3341
    %3786 = vmatprep.subr.bf16.mxu0 %v3346
    %3787 = vmatpush1.bf16.msra.mxu0 %v3345
    %3788 = vmatprep.subr.bf16.mxu0 %v3350
    %3789 = vmatpush1.bf16.msra.mxu0 %v3349
    %3790 = vmatprep.subr.bf16.mxu0 %v3354
    %3791 = vmatpush1.bf16.msra.mxu0 %v3353
    %3792 = vmatprep.subr.bf16.mxu0 %v3358
    %3793 = vmatpush1.bf16.msra.mxu0 %v3357
    %3794 = vmatprep.subr.bf16.mxu0 %v3362
    %3795 = vmatpush1.bf16.msra.mxu0 %v3361
    %3796 = vmatprep.subr.bf16.mxu0 %v3366
    %3797 = vmatpush1.bf16.msra.mxu0 %v3365
    %3798 = vmatprep.subr.bf16.mxu0 %v3370
    %3799 = vmatpush1.bf16.msra.mxu0 %v3369
    %3800 = vmatprep.subr.bf16.mxu0 %v3374
    %3801 = vmatpush1.bf16.msra.mxu0 %v3373
    %3802 = vmatprep.subr.bf16.mxu0 %v3378
    %3803 = vmatpush1.bf16.msra.mxu0 %v3377
    %3804 = vmatprep.subr.bf16.mxu0 %v3382
    %3805 = vmatpush1.bf16.msra.mxu0 %v3381
    %3806 = vmatprep.subr.bf16.mxu0 %v3386
    %3807 = vmatpush1.bf16.msra.mxu0 %v3385
    %3808 = vmatprep.subr.bf16.mxu0 %v3390
    %3809 = vmatpush1.bf16.msra.mxu0 %v3389
    %3810 = vmatprep.mubr.bf16.mxu0 %v2090
    %3811 = vmatmul.mubr.bf16.gmra.mrb[0].mxu0 %v2089
    %v3812 = vpop.f32.mrb[0].mxu0
    %v3813 = vadd.f32 %v3770, %v3812
    %v3814 = vpop.f32.mrb[0].mxu0
    %v3815 = vadd.f32 %v3772, %v3814
    %v3816 = vpop.f32.mrb[0].mxu0
    %v3817 = vadd.f32 %v3774, %v3816
    %v3818 = vpop.f32.mrb[0].mxu0
    %v3819 = vadd.f32 %v3776, %v3818
    %3820 = vdwg.mxu0
    %3821 = vmatprep.subr.bf16.mxu0 %v3140
    %3822 = vmatpush1.bf16.msra.mxu0 %v3139
    %3823 = vmatprep.subr.bf16.mxu0 %v3144
    %3824 = vmatpush1.bf16.msra.mxu0 %v3143
    %3825 = vmatprep.subr.bf16.mxu0 %v3148
    %3826 = vmatpush1.bf16.msra.mxu0 %v3147
    %3827 = vmatprep.subr.bf16.mxu0 %v3152
    %3828 = vmatpush1.bf16.msra.mxu0 %v3151
    %3829 = vmatprep.subr.bf16.mxu0 %v3156
    %3830 = vmatpush1.bf16.msra.mxu0 %v3155
    %3831 = vmatprep.subr.bf16.mxu0 %v3160
    %3832 = vmatpush1.bf16.msra.mxu0 %v3159
    %3833 = vmatprep.subr.bf16.mxu0 %v3164
    %3834 = vmatpush1.bf16.msra.mxu0 %v3163
    %3835 = vmatprep.subr.bf16.mxu0 %v3168
    %3836 = vmatpush1.bf16.msra.mxu0 %v3167
    %3837 = vmatprep.subr.bf16.mxu0 %v3172
    %3838 = vmatpush1.bf16.msra.mxu0 %v3171
    %3839 = vmatprep.subr.bf16.mxu0 %v3176
    %3840 = vmatpush1.bf16.msra.mxu0 %v3175
    %3841 = vmatprep.subr.bf16.mxu0 %v3180
    %3842 = vmatpush1.bf16.msra.mxu0 %v3179
    %3843 = vmatprep.subr.bf16.mxu0 %v3184
    %3844 = vmatpush1.bf16.msra.mxu0 %v3183
    %3845 = vmatprep.subr.bf16.mxu0 %v3188
    %3846 = vmatpush1.bf16.msra.mxu0 %v3187
    %3847 = vmatprep.subr.bf16.mxu0 %v3192
    %3848 = vmatpush1.bf16.msra.mxu0 %v3191
    %3849 = vmatprep.subr.bf16.mxu0 %v3196
    %3850 = vmatpush1.bf16.msra.mxu0 %v3195
    %3851 = vmatprep.subr.bf16.mxu0 %v3200
    %3852 = vmatpush1.bf16.msra.mxu0 %v3199
    %3853 = vmatprep.mubr.bf16.mxu0 %v2084
    %3854 = vmatmul.mubr.bf16.gmra.mrb[0].mxu0 %v2083
    %v3855 = vpop.f32.mrb[0].mxu0
    %v3856 = vadd.f32 %v2360, %v3855
    %v3857 = vpop.f32.mrb[0].mxu0
    %v3858 = vadd.f32 %v2364, %v3857
    %v3859 = vpop.f32.mrb[0].mxu0
    %v3860 = vadd.f32 %v2360, %v3859
    %v3861 = vpop.f32.mrb[0].mxu0
    %v3862 = vadd.f32 %v2364, %v3861
    %3863 = vdwg.mxu0
    %3864 = vmatprep.subr.bf16.mxu0 %v3204
    %3865 = vmatpush1.bf16.msra.mxu0 %v3203
    %3866 = vmatprep.subr.bf16.mxu0 %v3208
    %3867 = vmatpush1.bf16.msra.mxu0 %v3207
    %3868 = vmatprep.subr.bf16.mxu0 %v3212
    %3869 = vmatpush1.bf16.msra.mxu0 %v3211
    %3870 = vmatprep.subr.bf16.mxu0 %v3216
    %3871 = vmatpush1.bf16.msra.mxu0 %v3215
    %3872 = vmatprep.subr.bf16.mxu0 %v3220
    %3873 = vmatpush1.bf16.msra.mxu0 %v3219
    %3874 = vmatprep.subr.bf16.mxu0 %v3224
    %3875 = vmatpush1.bf16.msra.mxu0 %v3223
    %3876 = vmatprep.subr.bf16.mxu0 %v3228
    %3877 = vmatpush1.bf16.msra.mxu0 %v3227
    %3878 = vmatprep.subr.bf16.mxu0 %v3232
    %3879 = vmatpush1.bf16.msra.mxu0 %v3231
    %3880 = vmatprep.subr.bf16.mxu0 %v3236
    %3881 = vmatpush1.bf16.msra.mxu0 %v3235
    %3882 = vmatprep.subr.bf16.mxu0 %v3240
    %3883 = vmatpush1.bf16.msra.mxu0 %v3239
    %3884 = vmatprep.subr.bf16.mxu0 %v3244
    %3885 = vmatpush1.bf16.msra.mxu0 %v3243
    %3886 = vmatprep.subr.bf16.mxu0 %v3248
    %3887 = vmatpush1.bf16.msra.mxu0 %v3247
    %3888 = vmatprep.subr.bf16.mxu0 %v3252
    %3889 = vmatpush1.bf16.msra.mxu0 %v3251
    %3890 = vmatprep.subr.bf16.mxu0 %v3256
    %3891 = vmatpush1.bf16.msra.mxu0 %v3255
    %3892 = vmatprep.subr.bf16.mxu0 %v3260
    %3893 = vmatpush1.bf16.msra.mxu0 %v3259
    %3894 = vmatprep.subr.bf16.mxu0 %v3264
    %3895 = vmatpush1.bf16.msra.mxu0 %v3263
    %3896 = vmatprep.mubr.bf16.mxu0 %v2086
    %3897 = vmatmul.mubr.bf16.gmra.mrb[0].mxu0 %v2085
    %v3898 = vpop.f32.mrb[0].mxu0
    %v3899 = vadd.f32 %v3856, %v3898
    %v3900 = vpop.f32.mrb[0].mxu0
    %v3901 = vadd.f32 %v3858, %v3900
    %v3902 = vpop.f32.mrb[0].mxu0
    %v3903 = vadd.f32 %v3860, %v3902
    %v3904 = vpop.f32.mrb[0].mxu0
    %v3905 = vadd.f32 %v3862, %v3904
    %3906 = vdwg.mxu0
    %3907 = vmatprep.subr.bf16.mxu0 %v3268
    %3908 = vmatpush1.bf16.msra.mxu0 %v3267
    %3909 = vmatprep.subr.bf16.mxu0 %v3272
    %3910 = vmatpush1.bf16.msra.mxu0 %v3271
    %3911 = vmatprep.subr.bf16.mxu0 %v3276
    %3912 = vmatpush1.bf16.msra.mxu0 %v3275
    %3913 = vmatprep.subr.bf16.mxu0 %v3280
    %3914 = vmatpush1.bf16.msra.mxu0 %v3279
    %3915 = vmatprep.subr.bf16.mxu0 %v3284
    %3916 = vmatpush1.bf16.msra.mxu0 %v3283
    %3917 = vmatprep.subr.bf16.mxu0 %v3288
    %3918 = vmatpush1.bf16.msra.mxu0 %v3287
    %3919 = vmatprep.subr.bf16.mxu0 %v3292
    %3920 = vmatpush1.bf16.msra.mxu0 %v3291
    %3921 = vmatprep.subr.bf16.mxu0 %v3296
    %3922 = vmatpush1.bf16.msra.mxu0 %v3295
    %3923 = vmatprep.subr.bf16.mxu0 %v3300
    %3924 = vmatpush1.bf16.msra.mxu0 %v3299
    %3925 = vmatprep.subr.bf16.mxu0 %v3304
    %3926 = vmatpush1.bf16.msra.mxu0 %v3303
    %3927 = vmatprep.subr.bf16.mxu0 %v3308
    %3928 = vmatpush1.bf16.msra.mxu0 %v3307
    %3929 = vmatprep.subr.bf16.mxu0 %v3312
    %3930 = vmatpush1.bf16.msra.mxu0 %v3311
    %3931 = vmatprep.subr.bf16.mxu0 %v3316
    %3932 = vmatpush1.bf16.msra.mxu0 %v3315
    %3933 = vmatprep.subr.bf16.mxu0 %v3320
    %3934 = vmatpush1.bf16.msra.mxu0 %v3319
    %3935 = vmatprep.subr.bf16.mxu0 %v3324
    %3936 = vmatpush1.bf16.msra.mxu0 %v3323
    %3937 = vmatprep.subr.bf16.mxu0 %v3328
    %3938 = vmatpush1.bf16.msra.mxu0 %v3327
    %3939 = vmatprep.mubr.bf16.mxu0 %v2088
    %3940 = vmatmul.mubr.bf16.gmra.mrb[0].mxu0 %v2087
    %v3941 = vpop.f32.mrb[0].mxu0
    %v3942 = vadd.f32 %v3899, %v3941
    %v3943 = vpop.f32.mrb[0].mxu0
    %v3944 = vadd.f32 %v3901, %v3943
    %v3945 = vpop.f32.mrb[0].mxu0
    %v3946 = vadd.f32 %v3903, %v3945
    %v3947 = vpop.f32.mrb[0].mxu0
    %v3948 = vadd.f32 %v3905, %v3947
    %3949 = vdwg.mxu0
    %3950 = vmatprep.subr.bf16.mxu0 %v3332
    %3951 = vmatpush1.bf16.msra.mxu0 %v3331
    %3952 = vmatprep.subr.bf16.mxu0 %v3336
    %3953 = vmatpush1.bf16.msra.mxu0 %v3335
    %3954 = vmatprep.subr.bf16.mxu0 %v3340
    %3955 = vmatpush1.bf16.msra.mxu0 %v3339
    %3956 = vmatprep.subr.bf16.mxu0 %v3344
    %3957 = vmatpush1.bf16.msra.mxu0 %v3343
    %3958 = vmatprep.subr.bf16.mxu0 %v3348
    %3959 = vmatpush1.bf16.msra.mxu0 %v3347
    %3960 = vmatprep.subr.bf16.mxu0 %v3352
    %3961 = vmatpush1.bf16.msra.mxu0 %v3351
    %3962 = vmatprep.subr.bf16.mxu0 %v3356
    %3963 = vmatpush1.bf16.msra.mxu0 %v3355
    %3964 = vmatprep.subr.bf16.mxu0 %v3360
    %3965 = vmatpush1.bf16.msra.mxu0 %v3359
    %3966 = vmatprep.subr.bf16.mxu0 %v3364
    %3967 = vmatpush1.bf16.msra.mxu0 %v3363
    %3968 = vmatprep.subr.bf16.mxu0 %v3368
    %3969 = vmatpush1.bf16.msra.mxu0 %v3367
    %3970 = vmatprep.subr.bf16.mxu0 %v3372
    %3971 = vmatpush1.bf16.msra.mxu0 %v3371
    %3972 = vmatprep.subr.bf16.mxu0 %v3376
    %3973 = vmatpush1.bf16.msra.mxu0 %v3375
    %3974 = vmatprep.subr.bf16.mxu0 %v3380
    %3975 = vmatpush1.bf16.msra.mxu0 %v3379
    %3976 = vmatprep.subr.bf16.mxu0 %v3384
    %3977 = vmatpush1.bf16.msra.mxu0 %v3383
    %3978 = vmatprep.subr.bf16.mxu0 %v3388
    %3979 = vmatpush1.bf16.msra.mxu0 %v3387
    %3980 = vmatprep.subr.bf16.mxu0 %v3392
    %3981 = vmatpush1.bf16.msra.mxu0 %v3391
    %3982 = vmatprep.mubr.bf16.mxu0 %v2090
    %3983 = vmatmul.mubr.bf16.gmra.mrb[0].mxu0 %v2089
    %v3984 = vpop.f32.mrb[0].mxu0
    %v3985 = vadd.f32 %v3942, %v3984
    %v3986 = vpop.f32.mrb[0].mxu0
    %v3987 = vadd.f32 %v3944, %v3986
    %v3988 = vpop.f32.mrb[0].mxu0
    %v3989 = vadd.f32 %v3946, %v3988
    %v3990 = vpop.f32.mrb[0].mxu0
    %v3991 = vadd.f32 %v3948, %v3990
    %3992 = vdwg.mxu0
    %v3993 = vmax.f32 %v3813, 0.0
    %v3994 = vmax.f32 %v3815, 0.0
    %v3995 = vmax.f32 %v3985, 0.0
    %v3996 = vmax.f32 %v3987, 0.0
    %v3997 = vmax.f32 %v3817, 0.0
    %v3998 = vmax.f32 %v3819, 0.0
    %v3999 = vmax.f32 %v3989, 0.0
    %v4000 = vmax.f32 %v3991, 0.0
    %v4001 = vpack.c.bf16 %v3997, %v3993
    %v4002 = vpack.c.bf16 %v3998, %v3994
    %v4003 = vpack.c.bf16 %v3999, %v3995
    %v4004 = vpack.c.bf16 %v4000, %v3996
    %v4005 = vld [vmem:[#allocation10] sm:$0xff]
    %v4006 = vld [vmem:[#allocation10 + $0x8] sm:$0xff]
    %v4007 = vld [vmem:[#allocation10 + $0x10] sm:$0xff]
    %v4008 = vld [vmem:[#allocation10 + $0x18] sm:$0xff]
    %v4009 = vld [vmem:[#allocation10 + $0x20] sm:$0xff]
    %v4010 = vld [vmem:[#allocation10 + $0x28] sm:$0xff]
    %v4011 = vld [vmem:[#allocation10 + $0x30] sm:$0xff]
    %v4012 = vld [vmem:[#allocation10 + $0x38] sm:$0xff]
    %v4013 = vld [vmem:[#allocation10 + $0x40] sm:$0xff]
    %v4014 = vld [vmem:[#allocation10 + $0x48] sm:$0xff]
    %v4015 = vld [vmem:[#allocation10 + $0x50] sm:$0xff]
    %v4016 = vld [vmem:[#allocation10 + $0x58] sm:$0xff]
    %v4017 = vld [vmem:[#allocation10 + $0x60] sm:$0xff]
    %v4018 = vld [vmem:[#allocation10 + $0x68] sm:$0xff]
    %v4019 = vld [vmem:[#allocation10 + $0x70] sm:$0xff]
    %v4020 = vld [vmem:[#allocation10 + $0x78] sm:$0xff]
    %v4021 = vld [vmem:[#allocation10 + $0x80] sm:$0xff]
    %v4022 = vld [vmem:[#allocation10 + $0x88] sm:$0xff]
    %v4023 = vld [vmem:[#allocation10 + $0x90] sm:$0xff]
    %v4024 = vld [vmem:[#allocation10 + $0x98] sm:$0xff]
    %v4025 = vld [vmem:[#allocation10 + $0xa0] sm:$0xff]
    %v4026 = vld [vmem:[#allocation10 + $0xa8] sm:$0xff]
    %v4027 = vld [vmem:[#allocation10 + $0xb0] sm:$0xff]
    %v4028 = vld [vmem:[#allocation10 + $0xb8] sm:$0xff]
    %v4029 = vld [vmem:[#allocation10 + $0xc0] sm:$0xff]
    %v4030 = vld [vmem:[#allocation10 + $0xc8] sm:$0xff]
    %v4031 = vld [vmem:[#allocation10 + $0xd0] sm:$0xff]
    %v4032 = vld [vmem:[#allocation10 + $0xd8] sm:$0xff]
    %v4033 = vld [vmem:[#allocation10 + $0xe0] sm:$0xff]
    %v4034 = vld [vmem:[#allocation10 + $0xe8] sm:$0xff]
    %v4035 = vld [vmem:[#allocation10 + $0xf0] sm:$0xff]
    %v4036 = vld [vmem:[#allocation10 + $0xf8] sm:$0xff]
    %v4037 = vld [vmem:[#allocation10 + $0x100] sm:$0xff]
    %v4038 = vld [vmem:[#allocation10 + $0x108] sm:$0xff]
    %v4039 = vld [vmem:[#allocation10 + $0x110] sm:$0xff]
    %v4040 = vld [vmem:[#allocation10 + $0x118] sm:$0xff]
    %v4041 = vld [vmem:[#allocation10 + $0x120] sm:$0xff]
    %v4042 = vld [vmem:[#allocation10 + $0x128] sm:$0xff]
    %v4043 = vld [vmem:[#allocation10 + $0x130] sm:$0xff]
    %v4044 = vld [vmem:[#allocation10 + $0x138] sm:$0xff]
    %v4045 = vld [vmem:[#allocation10 + $0x140] sm:$0xff]
    %v4046 = vld [vmem:[#allocation10 + $0x148] sm:$0xff]
    %v4047 = vld [vmem:[#allocation10 + $0x150] sm:$0xff]
    %v4048 = vld [vmem:[#allocation10 + $0x158] sm:$0xff]
    %v4049 = vld [vmem:[#allocation10 + $0x160] sm:$0xff]
    %v4050 = vld [vmem:[#allocation10 + $0x168] sm:$0xff]
    %v4051 = vld [vmem:[#allocation10 + $0x170] sm:$0xff]
    %v4052 = vld [vmem:[#allocation10 + $0x178] sm:$0xff]
    %v4053 = vld [vmem:[#allocation10 + $0x180] sm:$0xff]
    %v4054 = vld [vmem:[#allocation10 + $0x188] sm:$0xff]
    %v4055 = vld [vmem:[#allocation10 + $0x190] sm:$0xff]
    %v4056 = vld [vmem:[#allocation10 + $0x198] sm:$0xff]
    %v4057 = vld [vmem:[#allocation10 + $0x1a0] sm:$0xff]
    %v4058 = vld [vmem:[#allocation10 + $0x1a8] sm:$0xff]
    %v4059 = vld [vmem:[#allocation10 + $0x1b0] sm:$0xff]
    %v4060 = vld [vmem:[#allocation10 + $0x1b8] sm:$0xff]
    %v4061 = vld [vmem:[#allocation10 + $0x1c0] sm:$0xff]
    %v4062 = vld [vmem:[#allocation10 + $0x1c8] sm:$0xff]
    %v4063 = vld [vmem:[#allocation10 + $0x1d0] sm:$0xff]
    %v4064 = vld [vmem:[#allocation10 + $0x1d8] sm:$0xff]
    %v4065 = vld [vmem:[#allocation10 + $0x1e0] sm:$0xff]
    %v4066 = vld [vmem:[#allocation10 + $0x1e8] sm:$0xff]
    %v4067 = vld [vmem:[#allocation10 + $0x1f0] sm:$0xff]
    %v4068 = vld [vmem:[#allocation10 + $0x1f8] sm:$0xff]
    %v4069 = vld [vmem:[#allocation10 + $0x200] sm:$0xff]
    %v4070 = vld [vmem:[#allocation10 + $0x208] sm:$0xff]
    %v4071 = vld [vmem:[#allocation10 + $0x210] sm:$0xff]
    %v4072 = vld [vmem:[#allocation10 + $0x218] sm:$0xff]
    %v4073 = vld [vmem:[#allocation10 + $0x220] sm:$0xff]
    %v4074 = vld [vmem:[#allocation10 + $0x228] sm:$0xff]
    %v4075 = vld [vmem:[#allocation10 + $0x230] sm:$0xff]
    %v4076 = vld [vmem:[#allocation10 + $0x238] sm:$0xff]
    %v4077 = vld [vmem:[#allocation10 + $0x240] sm:$0xff]
    %v4078 = vld [vmem:[#allocation10 + $0x248] sm:$0xff]
    %v4079 = vld [vmem:[#allocation10 + $0x250] sm:$0xff]
    %v4080 = vld [vmem:[#allocation10 + $0x258] sm:$0xff]
    %v4081 = vld [vmem:[#allocation10 + $0x260] sm:$0xff]
    %v4082 = vld [vmem:[#allocation10 + $0x268] sm:$0xff]
    %v4083 = vld [vmem:[#allocation10 + $0x270] sm:$0xff]
    %v4084 = vld [vmem:[#allocation10 + $0x278] sm:$0xff]
    %v4085 = vld [vmem:[#allocation10 + $0x280] sm:$0xff]
    %v4086 = vld [vmem:[#allocation10 + $0x288] sm:$0xff]
    %v4087 = vld [vmem:[#allocation10 + $0x290] sm:$0xff]
    %v4088 = vld [vmem:[#allocation10 + $0x298] sm:$0xff]
    %v4089 = vld [vmem:[#allocation10 + $0x2a0] sm:$0xff]
    %v4090 = vld [vmem:[#allocation10 + $0x2a8] sm:$0xff]
    %v4091 = vld [vmem:[#allocation10 + $0x2b0] sm:$0xff]
    %v4092 = vld [vmem:[#allocation10 + $0x2b8] sm:$0xff]
    %v4093 = vld [vmem:[#allocation10 + $0x2c0] sm:$0xff]
    %v4094 = vld [vmem:[#allocation10 + $0x2c8] sm:$0xff]
    %v4095 = vld [vmem:[#allocation10 + $0x2d0] sm:$0xff]
    %v4096 = vld [vmem:[#allocation10 + $0x2d8] sm:$0xff]
    %v4097 = vld [vmem:[#allocation10 + $0x2e0] sm:$0xff]
    %v4098 = vld [vmem:[#allocation10 + $0x2e8] sm:$0xff]
    %v4099 = vld [vmem:[#allocation10 + $0x2f0] sm:$0xff]
    %v4100 = vld [vmem:[#allocation10 + $0x2f8] sm:$0xff]
    %v4101 = vld [vmem:[#allocation10 + $0x300] sm:$0xff]
    %v4102 = vld [vmem:[#allocation10 + $0x308] sm:$0xff]
    %v4103 = vld [vmem:[#allocation10 + $0x310] sm:$0xff]
    %v4104 = vld [vmem:[#allocation10 + $0x318] sm:$0xff]
    %v4105 = vld [vmem:[#allocation10 + $0x320] sm:$0xff]
    %v4106 = vld [vmem:[#allocation10 + $0x328] sm:$0xff]
    %v4107 = vld [vmem:[#allocation10 + $0x330] sm:$0xff]
    %v4108 = vld [vmem:[#allocation10 + $0x338] sm:$0xff]
    %v4109 = vld [vmem:[#allocation10 + $0x340] sm:$0xff]
    %v4110 = vld [vmem:[#allocation10 + $0x348] sm:$0xff]
    %v4111 = vld [vmem:[#allocation10 + $0x350] sm:$0xff]
    %v4112 = vld [vmem:[#allocation10 + $0x358] sm:$0xff]
    %v4113 = vld [vmem:[#allocation10 + $0x360] sm:$0xff]
    %v4114 = vld [vmem:[#allocation10 + $0x368] sm:$0xff]
    %v4115 = vld [vmem:[#allocation10 + $0x370] sm:$0xff]
    %v4116 = vld [vmem:[#allocation10 + $0x378] sm:$0xff]
    %v4117 = vld [vmem:[#allocation10 + $0x380] sm:$0xff]
    %v4118 = vld [vmem:[#allocation10 + $0x388] sm:$0xff]
    %v4119 = vld [vmem:[#allocation10 + $0x390] sm:$0xff]
    %v4120 = vld [vmem:[#allocation10 + $0x398] sm:$0xff]
    %v4121 = vld [vmem:[#allocation10 + $0x3a0] sm:$0xff]
    %v4122 = vld [vmem:[#allocation10 + $0x3a8] sm:$0xff]
    %v4123 = vld [vmem:[#allocation10 + $0x3b0] sm:$0xff]
    %v4124 = vld [vmem:[#allocation10 + $0x3b8] sm:$0xff]
    %v4125 = vld [vmem:[#allocation10 + $0x3c0] sm:$0xff]
    %v4126 = vld [vmem:[#allocation10 + $0x3c8] sm:$0xff]
    %v4127 = vld [vmem:[#allocation10 + $0x3d0] sm:$0xff]
    %v4128 = vld [vmem:[#allocation10 + $0x3d8] sm:$0xff]
    %v4129 = vld [vmem:[#allocation10 + $0x3e0] sm:$0xff]
    %v4130 = vld [vmem:[#allocation10 + $0x3e8] sm:$0xff]
    %v4131 = vld [vmem:[#allocation10 + $0x3f0] sm:$0xff]
    %v4132 = vld [vmem:[#allocation10 + $0x3f8] sm:$0xff]
    %v4133 = vld [vmem:[%s6] sm:$0xf]
    %v4135 = vlaneseq
    %v4136 = vshrl.u32 %v4135, 7
    %v4137 = vsub.s32 0, %v4136
    %v4138 = vrot.slane %v4133, %v4137
    %v4139 = vlaneseq
    %v4140 = vshrl.u32 %v4139, 7
    %v4141 = vsub.s32 1, %v4140
    %v4142 = vrot.slane %v4133, %v4141
    %v4143 = vlaneseq
    %v4144 = vshrl.u32 %v4143, 7
    %v4145 = vsub.s32 2, %v4144
    %v4146 = vrot.slane %v4133, %v4145
    %v4147 = vlaneseq
    %v4148 = vshrl.u32 %v4147, 7
    %v4149 = vsub.s32 3, %v4148
    %v4150 = vrot.slane %v4133, %v4149
    %v4283 = vunpack.c.l.b16 %v4005
    %v4284 = vunpack.c.h.b16 %v4005
    %v4285 = vunpack.c.l.b16 %v4006
    %v4286 = vunpack.c.h.b16 %v4006
    %v4287 = vunpack.c.l.b16 %v4007
    %v4288 = vunpack.c.h.b16 %v4007
    %v4289 = vunpack.c.l.b16 %v4008
    %v4290 = vunpack.c.h.b16 %v4008
    %v4291 = vunpack.c.l.b16 %v4009
    %v4292 = vunpack.c.h.b16 %v4009
    %v4293 = vunpack.c.l.b16 %v4010
    %v4294 = vunpack.c.h.b16 %v4010
    %v4295 = vunpack.c.l.b16 %v4011
    %v4296 = vunpack.c.h.b16 %v4011
    %v4297 = vunpack.c.l.b16 %v4012
    %v4298 = vunpack.c.h.b16 %v4012
    %v4299 = vunpack.c.l.b16 %v4013
    %v4300 = vunpack.c.h.b16 %v4013
    %v4301 = vunpack.c.l.b16 %v4014
    %v4302 = vunpack.c.h.b16 %v4014
    %v4303 = vunpack.c.l.b16 %v4015
    %v4304 = vunpack.c.h.b16 %v4015
    %v4305 = vunpack.c.l.b16 %v4016
    %v4306 = vunpack.c.h.b16 %v4016
    %v4307 = vunpack.c.l.b16 %v4017
    %v4308 = vunpack.c.h.b16 %v4017
    %v4309 = vunpack.c.l.b16 %v4018
    %v4310 = vunpack.c.h.b16 %v4018
    %v4311 = vunpack.c.l.b16 %v4019
    %v4312 = vunpack.c.h.b16 %v4019
    %v4313 = vunpack.c.l.b16 %v4020
    %v4314 = vunpack.c.h.b16 %v4020
    %v4315 = vunpack.c.l.b16 %v4021
    %v4316 = vunpack.c.h.b16 %v4021
    %v4317 = vunpack.c.l.b16 %v4022
    %v4318 = vunpack.c.h.b16 %v4022
    %v4319 = vunpack.c.l.b16 %v4023
    %v4320 = vunpack.c.h.b16 %v4023
    %v4321 = vunpack.c.l.b16 %v4024
    %v4322 = vunpack.c.h.b16 %v4024
    %v4323 = vunpack.c.l.b16 %v4025
    %v4324 = vunpack.c.h.b16 %v4025
    %v4325 = vunpack.c.l.b16 %v4026
    %v4326 = vunpack.c.h.b16 %v4026
    %v4327 = vunpack.c.l.b16 %v4027
    %v4328 = vunpack.c.h.b16 %v4027
    %v4329 = vunpack.c.l.b16 %v4028
    %v4330 = vunpack.c.h.b16 %v4028
    %v4331 = vunpack.c.l.b16 %v4029
    %v4332 = vunpack.c.h.b16 %v4029
    %v4333 = vunpack.c.l.b16 %v4030
    %v4334 = vunpack.c.h.b16 %v4030
    %v4335 = vunpack.c.l.b16 %v4031
    %v4336 = vunpack.c.h.b16 %v4031
    %v4337 = vunpack.c.l.b16 %v4032
    %v4338 = vunpack.c.h.b16 %v4032
    %v4339 = vunpack.c.l.b16 %v4033
    %v4340 = vunpack.c.h.b16 %v4033
    %v4341 = vunpack.c.l.b16 %v4034
    %v4342 = vunpack.c.h.b16 %v4034
    %v4343 = vunpack.c.l.b16 %v4035
    %v4344 = vunpack.c.h.b16 %v4035
    %v4345 = vunpack.c.l.b16 %v4036
    %v4346 = vunpack.c.h.b16 %v4036
    %v4347 = vunpack.c.l.b16 %v4037
    %v4348 = vunpack.c.h.b16 %v4037
    %v4349 = vunpack.c.l.b16 %v4038
    %v4350 = vunpack.c.h.b16 %v4038
    %v4351 = vunpack.c.l.b16 %v4039
    %v4352 = vunpack.c.h.b16 %v4039
    %v4353 = vunpack.c.l.b16 %v4040
    %v4354 = vunpack.c.h.b16 %v4040
    %v4355 = vunpack.c.l.b16 %v4041
    %v4356 = vunpack.c.h.b16 %v4041
    %v4357 = vunpack.c.l.b16 %v4042
    %v4358 = vunpack.c.h.b16 %v4042
    %v4359 = vunpack.c.l.b16 %v4043
    %v4360 = vunpack.c.h.b16 %v4043
    %v4361 = vunpack.c.l.b16 %v4044
    %v4362 = vunpack.c.h.b16 %v4044
    %v4363 = vunpack.c.l.b16 %v4045
    %v4364 = vunpack.c.h.b16 %v4045
    %v4365 = vunpack.c.l.b16 %v4046
    %v4366 = vunpack.c.h.b16 %v4046
    %v4367 = vunpack.c.l.b16 %v4047
    %v4368 = vunpack.c.h.b16 %v4047
    %v4369 = vunpack.c.l.b16 %v4048
    %v4370 = vunpack.c.h.b16 %v4048
    %v4371 = vunpack.c.l.b16 %v4049
    %v4372 = vunpack.c.h.b16 %v4049
    %v4373 = vunpack.c.l.b16 %v4050
    %v4374 = vunpack.c.h.b16 %v4050
    %v4375 = vunpack.c.l.b16 %v4051
    %v4376 = vunpack.c.h.b16 %v4051
    %v4377 = vunpack.c.l.b16 %v4052
    %v4378 = vunpack.c.h.b16 %v4052
    %v4379 = vunpack.c.l.b16 %v4053
    %v4380 = vunpack.c.h.b16 %v4053
    %v4381 = vunpack.c.l.b16 %v4054
    %v4382 = vunpack.c.h.b16 %v4054
    %v4383 = vunpack.c.l.b16 %v4055
    %v4384 = vunpack.c.h.b16 %v4055
    %v4385 = vunpack.c.l.b16 %v4056
    %v4386 = vunpack.c.h.b16 %v4056
    %v4387 = vunpack.c.l.b16 %v4057
    %v4388 = vunpack.c.h.b16 %v4057
    %v4389 = vunpack.c.l.b16 %v4058
    %v4390 = vunpack.c.h.b16 %v4058
    %v4391 = vunpack.c.l.b16 %v4059
    %v4392 = vunpack.c.h.b16 %v4059
    %v4393 = vunpack.c.l.b16 %v4060
    %v4394 = vunpack.c.h.b16 %v4060
    %v4395 = vunpack.c.l.b16 %v4061
    %v4396 = vunpack.c.h.b16 %v4061
    %v4397 = vunpack.c.l.b16 %v4062
    %v4398 = vunpack.c.h.b16 %v4062
    %v4399 = vunpack.c.l.b16 %v4063
    %v4400 = vunpack.c.h.b16 %v4063
    %v4401 = vunpack.c.l.b16 %v4064
    %v4402 = vunpack.c.h.b16 %v4064
    %v4403 = vunpack.c.l.b16 %v4065
    %v4404 = vunpack.c.h.b16 %v4065
    %v4405 = vunpack.c.l.b16 %v4066
    %v4406 = vunpack.c.h.b16 %v4066
    %v4407 = vunpack.c.l.b16 %v4067
    %v4408 = vunpack.c.h.b16 %v4067
    %v4409 = vunpack.c.l.b16 %v4068
    %v4410 = vunpack.c.h.b16 %v4068
    %v4411 = vunpack.c.l.b16 %v4069
    %v4412 = vunpack.c.h.b16 %v4069
    %v4413 = vunpack.c.l.b16 %v4070
    %v4414 = vunpack.c.h.b16 %v4070
    %v4415 = vunpack.c.l.b16 %v4071
    %v4416 = vunpack.c.h.b16 %v4071
    %v4417 = vunpack.c.l.b16 %v4072
    %v4418 = vunpack.c.h.b16 %v4072
    %v4419 = vunpack.c.l.b16 %v4073
    %v4420 = vunpack.c.h.b16 %v4073
    %v4421 = vunpack.c.l.b16 %v4074
    %v4422 = vunpack.c.h.b16 %v4074
    %v4423 = vunpack.c.l.b16 %v4075
    %v4424 = vunpack.c.h.b16 %v4075
    %v4425 = vunpack.c.l.b16 %v4076
    %v4426 = vunpack.c.h.b16 %v4076
    %v4427 = vunpack.c.l.b16 %v4077
    %v4428 = vunpack.c.h.b16 %v4077
    %v4429 = vunpack.c.l.b16 %v4078
    %v4430 = vunpack.c.h.b16 %v4078
    %v4431 = vunpack.c.l.b16 %v4079
    %v4432 = vunpack.c.h.b16 %v4079
    %v4433 = vunpack.c.l.b16 %v4080
    %v4434 = vunpack.c.h.b16 %v4080
    %v4435 = vunpack.c.l.b16 %v4081
    %v4436 = vunpack.c.h.b16 %v4081
    %v4437 = vunpack.c.l.b16 %v4082
    %v4438 = vunpack.c.h.b16 %v4082
    %v4439 = vunpack.c.l.b16 %v4083
    %v4440 = vunpack.c.h.b16 %v4083
    %v4441 = vunpack.c.l.b16 %v4084
    %v4442 = vunpack.c.h.b16 %v4084
    %v4443 = vunpack.c.l.b16 %v4085
    %v4444 = vunpack.c.h.b16 %v4085
    %v4445 = vunpack.c.l.b16 %v4086
    %v4446 = vunpack.c.h.b16 %v4086
    %v4447 = vunpack.c.l.b16 %v4087
    %v4448 = vunpack.c.h.b16 %v4087
    %v4449 = vunpack.c.l.b16 %v4088
    %v4450 = vunpack.c.h.b16 %v4088
    %v4451 = vunpack.c.l.b16 %v4089
    %v4452 = vunpack.c.h.b16 %v4089
    %v4453 = vunpack.c.l.b16 %v4090
    %v4454 = vunpack.c.h.b16 %v4090
    %v4455 = vunpack.c.l.b16 %v4091
    %v4456 = vunpack.c.h.b16 %v4091
    %v4457 = vunpack.c.l.b16 %v4092
    %v4458 = vunpack.c.h.b16 %v4092
    %v4459 = vunpack.c.l.b16 %v4093
    %v4460 = vunpack.c.h.b16 %v4093
    %v4461 = vunpack.c.l.b16 %v4094
    %v4462 = vunpack.c.h.b16 %v4094
    %v4463 = vunpack.c.l.b16 %v4095
    %v4464 = vunpack.c.h.b16 %v4095
    %v4465 = vunpack.c.l.b16 %v4096
    %v4466 = vunpack.c.h.b16 %v4096
    %v4467 = vunpack.c.l.b16 %v4097
    %v4468 = vunpack.c.h.b16 %v4097
    %v4469 = vunpack.c.l.b16 %v4098
    %v4470 = vunpack.c.h.b16 %v4098
    %v4471 = vunpack.c.l.b16 %v4099
    %v4472 = vunpack.c.h.b16 %v4099
    %v4473 = vunpack.c.l.b16 %v4100
    %v4474 = vunpack.c.h.b16 %v4100
    %v4475 = vunpack.c.l.b16 %v4101
    %v4476 = vunpack.c.h.b16 %v4101
    %v4477 = vunpack.c.l.b16 %v4102
    %v4478 = vunpack.c.h.b16 %v4102
    %v4479 = vunpack.c.l.b16 %v4103
    %v4480 = vunpack.c.h.b16 %v4103
    %v4481 = vunpack.c.l.b16 %v4104
    %v4482 = vunpack.c.h.b16 %v4104
    %v4483 = vunpack.c.l.b16 %v4105
    %v4484 = vunpack.c.h.b16 %v4105
    %v4485 = vunpack.c.l.b16 %v4106
    %v4486 = vunpack.c.h.b16 %v4106
    %v4487 = vunpack.c.l.b16 %v4107
    %v4488 = vunpack.c.h.b16 %v4107
    %v4489 = vunpack.c.l.b16 %v4108
    %v4490 = vunpack.c.h.b16 %v4108
    %v4491 = vunpack.c.l.b16 %v4109
    %v4492 = vunpack.c.h.b16 %v4109
    %v4493 = vunpack.c.l.b16 %v4110
    %v4494 = vunpack.c.h.b16 %v4110
    %v4495 = vunpack.c.l.b16 %v4111
    %v4496 = vunpack.c.h.b16 %v4111
    %v4497 = vunpack.c.l.b16 %v4112
    %v4498 = vunpack.c.h.b16 %v4112
    %v4499 = vunpack.c.l.b16 %v4113
    %v4500 = vunpack.c.h.b16 %v4113
    %v4501 = vunpack.c.l.b16 %v4114
    %v4502 = vunpack.c.h.b16 %v4114
    %v4503 = vunpack.c.l.b16 %v4115
    %v4504 = vunpack.c.h.b16 %v4115
    %v4505 = vunpack.c.l.b16 %v4116
    %v4506 = vunpack.c.h.b16 %v4116
    %v4507 = vunpack.c.l.b16 %v4117
    %v4508 = vunpack.c.h.b16 %v4117
    %v4509 = vunpack.c.l.b16 %v4118
    %v4510 = vunpack.c.h.b16 %v4118
    %v4511 = vunpack.c.l.b16 %v4119
    %v4512 = vunpack.c.h.b16 %v4119
    %v4513 = vunpack.c.l.b16 %v4120
    %v4514 = vunpack.c.h.b16 %v4120
    %v4515 = vunpack.c.l.b16 %v4121
    %v4516 = vunpack.c.h.b16 %v4121
    %v4517 = vunpack.c.l.b16 %v4122
    %v4518 = vunpack.c.h.b16 %v4122
    %v4519 = vunpack.c.l.b16 %v4123
    %v4520 = vunpack.c.h.b16 %v4123
    %v4521 = vunpack.c.l.b16 %v4124
    %v4522 = vunpack.c.h.b16 %v4124
    %v4523 = vunpack.c.l.b16 %v4125
    %v4524 = vunpack.c.h.b16 %v4125
    %v4525 = vunpack.c.l.b16 %v4126
    %v4526 = vunpack.c.h.b16 %v4126
    %v4527 = vunpack.c.l.b16 %v4127
    %v4528 = vunpack.c.h.b16 %v4127
    %v4529 = vunpack.c.l.b16 %v4128
    %v4530 = vunpack.c.h.b16 %v4128
    %v4531 = vunpack.c.l.b16 %v4129
    %v4532 = vunpack.c.h.b16 %v4129
    %v4533 = vunpack.c.l.b16 %v4130
    %v4534 = vunpack.c.h.b16 %v4130
    %v4535 = vunpack.c.l.b16 %v4131
    %v4536 = vunpack.c.h.b16 %v4131
    %v4537 = vunpack.c.l.b16 %v4132
    %v4538 = vunpack.c.h.b16 %v4132
    %v4539 = vpack.c.b16 %v4287, %v4283
    %v4540 = vpack.c.b16 %v4288, %v4284
    %v4541 = vpack.c.b16 %v4289, %v4285
    %v4542 = vpack.c.b16 %v4290, %v4286
    %v4543 = vpack.c.b16 %v4295, %v4291
    %v4544 = vpack.c.b16 %v4296, %v4292
    %v4545 = vpack.c.b16 %v4297, %v4293
    %v4546 = vpack.c.b16 %v4298, %v4294
    %v4547 = vpack.c.b16 %v4303, %v4299
    %v4548 = vpack.c.b16 %v4304, %v4300
    %v4549 = vpack.c.b16 %v4305, %v4301
    %v4550 = vpack.c.b16 %v4306, %v4302
    %v4551 = vpack.c.b16 %v4311, %v4307
    %v4552 = vpack.c.b16 %v4312, %v4308
    %v4553 = vpack.c.b16 %v4313, %v4309
    %v4554 = vpack.c.b16 %v4314, %v4310
    %v4555 = vpack.c.b16 %v4319, %v4315
    %v4556 = vpack.c.b16 %v4320, %v4316
    %v4557 = vpack.c.b16 %v4321, %v4317
    %v4558 = vpack.c.b16 %v4322, %v4318
    %v4559 = vpack.c.b16 %v4327, %v4323
    %v4560 = vpack.c.b16 %v4328, %v4324
    %v4561 = vpack.c.b16 %v4329, %v4325
    %v4562 = vpack.c.b16 %v4330, %v4326
    %v4563 = vpack.c.b16 %v4335, %v4331
    %v4564 = vpack.c.b16 %v4336, %v4332
    %v4565 = vpack.c.b16 %v4337, %v4333
    %v4566 = vpack.c.b16 %v4338, %v4334
    %v4567 = vpack.c.b16 %v4343, %v4339
    %v4568 = vpack.c.b16 %v4344, %v4340
    %v4569 = vpack.c.b16 %v4345, %v4341
    %v4570 = vpack.c.b16 %v4346, %v4342
    %v4571 = vpack.c.b16 %v4351, %v4347
    %v4572 = vpack.c.b16 %v4352, %v4348
    %v4573 = vpack.c.b16 %v4353, %v4349
    %v4574 = vpack.c.b16 %v4354, %v4350
    %v4575 = vpack.c.b16 %v4359, %v4355
    %v4576 = vpack.c.b16 %v4360, %v4356
    %v4577 = vpack.c.b16 %v4361, %v4357
    %v4578 = vpack.c.b16 %v4362, %v4358
    %v4579 = vpack.c.b16 %v4367, %v4363
    %v4580 = vpack.c.b16 %v4368, %v4364
    %v4581 = vpack.c.b16 %v4369, %v4365
    %v4582 = vpack.c.b16 %v4370, %v4366
    %v4583 = vpack.c.b16 %v4375, %v4371
    %v4584 = vpack.c.b16 %v4376, %v4372
    %v4585 = vpack.c.b16 %v4377, %v4373
    %v4586 = vpack.c.b16 %v4378, %v4374
    %v4587 = vpack.c.b16 %v4383, %v4379
    %v4588 = vpack.c.b16 %v4384, %v4380
    %v4589 = vpack.c.b16 %v4385, %v4381
    %v4590 = vpack.c.b16 %v4386, %v4382
    %v4591 = vpack.c.b16 %v4391, %v4387
    %v4592 = vpack.c.b16 %v4392, %v4388
    %v4593 = vpack.c.b16 %v4393, %v4389
    %v4594 = vpack.c.b16 %v4394, %v4390
    %v4595 = vpack.c.b16 %v4399, %v4395
    %v4596 = vpack.c.b16 %v4400, %v4396
    %v4597 = vpack.c.b16 %v4401, %v4397
    %v4598 = vpack.c.b16 %v4402, %v4398
    %v4599 = vpack.c.b16 %v4407, %v4403
    %v4600 = vpack.c.b16 %v4408, %v4404
    %v4601 = vpack.c.b16 %v4409, %v4405
    %v4602 = vpack.c.b16 %v4410, %v4406
    %v4603 = vpack.c.b16 %v4415, %v4411
    %v4604 = vpack.c.b16 %v4416, %v4412
    %v4605 = vpack.c.b16 %v4417, %v4413
    %v4606 = vpack.c.b16 %v4418, %v4414
    %v4607 = vpack.c.b16 %v4423, %v4419
    %v4608 = vpack.c.b16 %v4424, %v4420
    %v4609 = vpack.c.b16 %v4425, %v4421
    %v4610 = vpack.c.b16 %v4426, %v4422
    %v4611 = vpack.c.b16 %v4431, %v4427
    %v4612 = vpack.c.b16 %v4432, %v4428
    %v4613 = vpack.c.b16 %v4433, %v4429
    %v4614 = vpack.c.b16 %v4434, %v4430
    %v4615 = vpack.c.b16 %v4439, %v4435
    %v4616 = vpack.c.b16 %v4440, %v4436
    %v4617 = vpack.c.b16 %v4441, %v4437
    %v4618 = vpack.c.b16 %v4442, %v4438
    %v4619 = vpack.c.b16 %v4447, %v4443
    %v4620 = vpack.c.b16 %v4448, %v4444
    %v4621 = vpack.c.b16 %v4449, %v4445
    %v4622 = vpack.c.b16 %v4450, %v4446
    %v4623 = vpack.c.b16 %v4455, %v4451
    %v4624 = vpack.c.b16 %v4456, %v4452
    %v4625 = vpack.c.b16 %v4457, %v4453
    %v4626 = vpack.c.b16 %v4458, %v4454
    %v4627 = vpack.c.b16 %v4463, %v4459
    %v4628 = vpack.c.b16 %v4464, %v4460
    %v4629 = vpack.c.b16 %v4465, %v4461
    %v4630 = vpack.c.b16 %v4466, %v4462
    %v4631 = vpack.c.b16 %v4471, %v4467
    %v4632 = vpack.c.b16 %v4472, %v4468
    %v4633 = vpack.c.b16 %v4473, %v4469
    %v4634 = vpack.c.b16 %v4474, %v4470
    %v4635 = vpack.c.b16 %v4479, %v4475
    %v4636 = vpack.c.b16 %v4480, %v4476
    %v4637 = vpack.c.b16 %v4481, %v4477
    %v4638 = vpack.c.b16 %v4482, %v4478
    %v4639 = vpack.c.b16 %v4487, %v4483
    %v4640 = vpack.c.b16 %v4488, %v4484
    %v4641 = vpack.c.b16 %v4489, %v4485
    %v4642 = vpack.c.b16 %v4490, %v4486
    %v4643 = vpack.c.b16 %v4495, %v4491
    %v4644 = vpack.c.b16 %v4496, %v4492
    %v4645 = vpack.c.b16 %v4497, %v4493
    %v4646 = vpack.c.b16 %v4498, %v4494
    %v4647 = vpack.c.b16 %v4503, %v4499
    %v4648 = vpack.c.b16 %v4504, %v4500
    %v4649 = vpack.c.b16 %v4505, %v4501
    %v4650 = vpack.c.b16 %v4506, %v4502
    %v4651 = vpack.c.b16 %v4511, %v4507
    %v4652 = vpack.c.b16 %v4512, %v4508
    %v4653 = vpack.c.b16 %v4513, %v4509
    %v4654 = vpack.c.b16 %v4514, %v4510
    %v4655 = vpack.c.b16 %v4519, %v4515
    %v4656 = vpack.c.b16 %v4520, %v4516
    %v4657 = vpack.c.b16 %v4521, %v4517
    %v4658 = vpack.c.b16 %v4522, %v4518
    %v4659 = vpack.c.b16 %v4527, %v4523
    %v4660 = vpack.c.b16 %v4528, %v4524
    %v4661 = vpack.c.b16 %v4529, %v4525
    %v4662 = vpack.c.b16 %v4530, %v4526
    %v4663 = vpack.c.b16 %v4535, %v4531
    %v4664 = vpack.c.b16 %v4536, %v4532
    %v4665 = vpack.c.b16 %v4537, %v4533
    %v4666 = vpack.c.b16 %v4538, %v4534
    %4795 = vmatprep.subr.bf16.mxu0 %v4540
    %4796 = vmatpush1.bf16.msra.mxu0 %v4539
    %4797 = vmatprep.subr.bf16.mxu0 %v4544
    %4798 = vmatpush1.bf16.msra.mxu0 %v4543
    %4799 = vmatprep.subr.bf16.mxu0 %v4548
    %4800 = vmatpush1.bf16.msra.mxu0 %v4547
    %4801 = vmatprep.subr.bf16.mxu0 %v4552
    %4802 = vmatpush1.bf16.msra.mxu0 %v4551
    %4803 = vmatprep.subr.bf16.mxu0 %v4556
    %4804 = vmatpush1.bf16.msra.mxu0 %v4555
    %4805 = vmatprep.subr.bf16.mxu0 %v4560
    %4806 = vmatpush1.bf16.msra.mxu0 %v4559
    %4807 = vmatprep.subr.bf16.mxu0 %v4564
    %4808 = vmatpush1.bf16.msra.mxu0 %v4563
    %4809 = vmatprep.subr.bf16.mxu0 %v4568
    %4810 = vmatpush1.bf16.msra.mxu0 %v4567
    %4811 = vmatprep.subr.bf16.mxu0 %v4572
    %4812 = vmatpush1.bf16.msra.mxu0 %v4571
    %4813 = vmatprep.subr.bf16.mxu0 %v4576
    %4814 = vmatpush1.bf16.msra.mxu0 %v4575
    %4815 = vmatprep.subr.bf16.mxu0 %v4580
    %4816 = vmatpush1.bf16.msra.mxu0 %v4579
    %4817 = vmatprep.subr.bf16.mxu0 %v4584
    %4818 = vmatpush1.bf16.msra.mxu0 %v4583
    %4819 = vmatprep.subr.bf16.mxu0 %v4588
    %4820 = vmatpush1.bf16.msra.mxu0 %v4587
    %4821 = vmatprep.subr.bf16.mxu0 %v4592
    %4822 = vmatpush1.bf16.msra.mxu0 %v4591
    %4823 = vmatprep.subr.bf16.mxu0 %v4596
    %4824 = vmatpush1.bf16.msra.mxu0 %v4595
    %4825 = vmatprep.subr.bf16.mxu0 %v4600
    %4826 = vmatpush1.bf16.msra.mxu0 %v4599
    %4827 = vmatprep.mubr.bf16.mxu0 %v4002
    %4828 = vmatmul.mubr.bf16.gmra.mrb[0].mxu0 %v4001
    %v4829 = vpop.f32.mrb[0].mxu0
    %v4830 = vadd.f32 %v4138, %v4829
    %v4831 = vpop.f32.mrb[0].mxu0
    %v4832 = vadd.f32 %v4142, %v4831
    %v4833 = vpop.f32.mrb[0].mxu0
    %v4834 = vadd.f32 %v4138, %v4833
    %v4835 = vpop.f32.mrb[0].mxu0
    %v4836 = vadd.f32 %v4142, %v4835
    %4837 = vdwg.mxu0
    %4838 = vmatprep.subr.bf16.mxu0 %v4604
    %4839 = vmatpush1.bf16.msra.mxu0 %v4603
    %4840 = vmatprep.subr.bf16.mxu0 %v4608
    %4841 = vmatpush1.bf16.msra.mxu0 %v4607
    %4842 = vmatprep.subr.bf16.mxu0 %v4612
    %4843 = vmatpush1.bf16.msra.mxu0 %v4611
    %4844 = vmatprep.subr.bf16.mxu0 %v4616
    %4845 = vmatpush1.bf16.msra.mxu0 %v4615
    %4846 = vmatprep.subr.bf16.mxu0 %v4620
    %4847 = vmatpush1.bf16.msra.mxu0 %v4619
    %4848 = vmatprep.subr.bf16.mxu0 %v4624
    %4849 = vmatpush1.bf16.msra.mxu0 %v4623
    %4850 = vmatprep.subr.bf16.mxu0 %v4628
    %4851 = vmatpush1.bf16.msra.mxu0 %v4627
    %4852 = vmatprep.subr.bf16.mxu0 %v4632
    %4853 = vmatpush1.bf16.msra.mxu0 %v4631
    %4854 = vmatprep.subr.bf16.mxu0 %v4636
    %4855 = vmatpush1.bf16.msra.mxu0 %v4635
    %4856 = vmatprep.subr.bf16.mxu0 %v4640
    %4857 = vmatpush1.bf16.msra.mxu0 %v4639
    %4858 = vmatprep.subr.bf16.mxu0 %v4644
    %4859 = vmatpush1.bf16.msra.mxu0 %v4643
    %4860 = vmatprep.subr.bf16.mxu0 %v4648
    %4861 = vmatpush1.bf16.msra.mxu0 %v4647
    %4862 = vmatprep.subr.bf16.mxu0 %v4652
    %4863 = vmatpush1.bf16.msra.mxu0 %v4651
    %4864 = vmatprep.subr.bf16.mxu0 %v4656
    %4865 = vmatpush1.bf16.msra.mxu0 %v4655
    %4866 = vmatprep.subr.bf16.mxu0 %v4660
    %4867 = vmatpush1.bf16.msra.mxu0 %v4659
    %4868 = vmatprep.subr.bf16.mxu0 %v4664
    %4869 = vmatpush1.bf16.msra.mxu0 %v4663
    %4870 = vmatprep.mubr.bf16.mxu0 %v4004
    %4871 = vmatmul.mubr.bf16.gmra.mrb[0].mxu0 %v4003
    %v4872 = vpop.f32.mrb[0].mxu0
    %v4873 = vadd.f32 %v4830, %v4872
    %v4874 = vpop.f32.mrb[0].mxu0
    %v4875 = vadd.f32 %v4832, %v4874
    %v4876 = vpop.f32.mrb[0].mxu0
    %v4877 = vadd.f32 %v4834, %v4876
    %v4878 = vpop.f32.mrb[0].mxu0
    %v4879 = vadd.f32 %v4836, %v4878
    %4880 = vdwg.mxu0
    %4881 = vmatprep.subr.bf16.mxu0 %v4542
    %4882 = vmatpush1.bf16.msra.mxu0 %v4541
    %4883 = vmatprep.subr.bf16.mxu0 %v4546
    %4884 = vmatpush1.bf16.msra.mxu0 %v4545
    %4885 = vmatprep.subr.bf16.mxu0 %v4550
    %4886 = vmatpush1.bf16.msra.mxu0 %v4549
    %4887 = vmatprep.subr.bf16.mxu0 %v4554
    %4888 = vmatpush1.bf16.msra.mxu0 %v4553
    %4889 = vmatprep.subr.bf16.mxu0 %v4558
    %4890 = vmatpush1.bf16.msra.mxu0 %v4557
    %4891 = vmatprep.subr.bf16.mxu0 %v4562
    %4892 = vmatpush1.bf16.msra.mxu0 %v4561
    %4893 = vmatprep.subr.bf16.mxu0 %v4566
    %4894 = vmatpush1.bf16.msra.mxu0 %v4565
    %4895 = vmatprep.subr.bf16.mxu0 %v4570
    %4896 = vmatpush1.bf16.msra.mxu0 %v4569
    %4897 = vmatprep.subr.bf16.mxu0 %v4574
    %4898 = vmatpush1.bf16.msra.mxu0 %v4573
    %4899 = vmatprep.subr.bf16.mxu0 %v4578
    %4900 = vmatpush1.bf16.msra.mxu0 %v4577
    %4901 = vmatprep.subr.bf16.mxu0 %v4582
    %4902 = vmatpush1.bf16.msra.mxu0 %v4581
    %4903 = vmatprep.subr.bf16.mxu0 %v4586
    %4904 = vmatpush1.bf16.msra.mxu0 %v4585
    %4905 = vmatprep.subr.bf16.mxu0 %v4590
    %4906 = vmatpush1.bf16.msra.mxu0 %v4589
    %4907 = vmatprep.subr.bf16.mxu0 %v4594
    %4908 = vmatpush1.bf16.msra.mxu0 %v4593
    %4909 = vmatprep.subr.bf16.mxu0 %v4598
    %4910 = vmatpush1.bf16.msra.mxu0 %v4597
    %4911 = vmatprep.subr.bf16.mxu0 %v4602
    %4912 = vmatpush1.bf16.msra.mxu0 %v4601
    %4913 = vmatprep.mubr.bf16.mxu0 %v4002
    %4914 = vmatmul.mubr.bf16.gmra.mrb[0].mxu0 %v4001
    %v4915 = vpop.f32.mrb[0].mxu0
    %v4916 = vadd.f32 %v4146, %v4915
    %v4917 = vpop.f32.mrb[0].mxu0
    %v4918 = vadd.f32 %v4150, %v4917
    %v4919 = vpop.f32.mrb[0].mxu0
    %v4920 = vadd.f32 %v4146, %v4919
    %v4921 = vpop.f32.mrb[0].mxu0
    %v4922 = vadd.f32 %v4150, %v4921
    %4923 = vdwg.mxu0
    %4924 = vmatprep.subr.bf16.mxu0 %v4606
    %4925 = vmatpush1.bf16.msra.mxu0 %v4605
    %4926 = vmatprep.subr.bf16.mxu0 %v4610
    %4927 = vmatpush1.bf16.msra.mxu0 %v4609
    %4928 = vmatprep.subr.bf16.mxu0 %v4614
    %4929 = vmatpush1.bf16.msra.mxu0 %v4613
    %4930 = vmatprep.subr.bf16.mxu0 %v4618
    %4931 = vmatpush1.bf16.msra.mxu0 %v4617
    %4932 = vmatprep.subr.bf16.mxu0 %v4622
    %4933 = vmatpush1.bf16.msra.mxu0 %v4621
    %4934 = vmatprep.subr.bf16.mxu0 %v4626
    %4935 = vmatpush1.bf16.msra.mxu0 %v4625
    %4936 = vmatprep.subr.bf16.mxu0 %v4630
    %4937 = vmatpush1.bf16.msra.mxu0 %v4629
    %4938 = vmatprep.subr.bf16.mxu0 %v4634
    %4939 = vmatpush1.bf16.msra.mxu0 %v4633
    %4940 = vmatprep.subr.bf16.mxu0 %v4638
    %4941 = vmatpush1.bf16.msra.mxu0 %v4637
    %4942 = vmatprep.subr.bf16.mxu0 %v4642
    %4943 = vmatpush1.bf16.msra.mxu0 %v4641
    %4944 = vmatprep.subr.bf16.mxu0 %v4646
    %4945 = vmatpush1.bf16.msra.mxu0 %v4645
    %4946 = vmatprep.subr.bf16.mxu0 %v4650
    %4947 = vmatpush1.bf16.msra.mxu0 %v4649
    %4948 = vmatprep.subr.bf16.mxu0 %v4654
    %4949 = vmatpush1.bf16.msra.mxu0 %v4653
    %4950 = vmatprep.subr.bf16.mxu0 %v4658
    %4951 = vmatpush1.bf16.msra.mxu0 %v4657
    %4952 = vmatprep.subr.bf16.mxu0 %v4662
    %4953 = vmatpush1.bf16.msra.mxu0 %v4661
    %4954 = vmatprep.subr.bf16.mxu0 %v4666
    %4955 = vmatpush1.bf16.msra.mxu0 %v4665
    %4956 = vmatprep.mubr.bf16.mxu0 %v4004
    %4957 = vmatmul.mubr.bf16.gmra.mrb[0].mxu0 %v4003
    %v4958 = vpop.f32.mrb[0].mxu0
    %v4959 = vadd.f32 %v4916, %v4958
    %v4960 = vpop.f32.mrb[0].mxu0
    %v4961 = vadd.f32 %v4918, %v4960
    %v4962 = vpop.f32.mrb[0].mxu0
    %v4963 = vadd.f32 %v4920, %v4962
    %v4964 = vpop.f32.mrb[0].mxu0
    %v4965 = vadd.f32 %v4922, %v4964
    %4966 = vdwg.mxu0
    %v4967 = vmax.f32 %v4873, 0.0
    %v4968 = vmax.f32 %v4875, 0.0
    %v4969 = vmax.f32 %v4959, 0.0
    %v4970 = vmax.f32 %v4961, 0.0
    %v4971 = vmax.f32 %v4877, 0.0
    %v4972 = vmax.f32 %v4879, 0.0
    %v4973 = vmax.f32 %v4963, 0.0
    %v4974 = vmax.f32 %v4965, 0.0
    %v4975 = vpack.c.bf16 %v4971, %v4967
    %v4976 = vpack.c.bf16 %v4972, %v4968
    %v4977 = vpack.c.bf16 %v4973, %v4969
    %v4978 = vpack.c.bf16 %v4974, %v4970
    %v4979 = vld [vmem:[#allocation11] sm:$0xff]
    %v4980 = vld [vmem:[#allocation11 + $0x8] sm:$0xff]
    %v4981 = vld [vmem:[#allocation11 + $0x10] sm:$0xff]
    %v4982 = vld [vmem:[#allocation11 + $0x18] sm:$0xff]
    %v4983 = vld [vmem:[#allocation11 + $0x20] sm:$0xff]
    %v4984 = vld [vmem:[#allocation11 + $0x28] sm:$0xff]
    %v4985 = vld [vmem:[#allocation11 + $0x30] sm:$0xff]
    %v4986 = vld [vmem:[#allocation11 + $0x38] sm:$0xff]
    %v4987 = vld [vmem:[#allocation11 + $0x40] sm:$0xff]
    %v4988 = vld [vmem:[#allocation11 + $0x48] sm:$0xff]
    %v4989 = vld [vmem:[#allocation11 + $0x50] sm:$0xff]
    %v4990 = vld [vmem:[#allocation11 + $0x58] sm:$0xff]
    %v4991 = vld [vmem:[#allocation11 + $0x60] sm:$0xff]
    %v4992 = vld [vmem:[#allocation11 + $0x68] sm:$0xff]
    %v4993 = vld [vmem:[#allocation11 + $0x70] sm:$0xff]
    %v4994 = vld [vmem:[#allocation11 + $0x78] sm:$0xff]
    %v4995 = vld [vmem:[#allocation11 + $0x80] sm:$0xff]
    %v4996 = vld [vmem:[#allocation11 + $0x88] sm:$0xff]
    %v4997 = vld [vmem:[#allocation11 + $0x90] sm:$0xff]
    %v4998 = vld [vmem:[#allocation11 + $0x98] sm:$0xff]
    %v4999 = vld [vmem:[#allocation11 + $0xa0] sm:$0xff]
    %v5000 = vld [vmem:[#allocation11 + $0xa8] sm:$0xff]
    %v5001 = vld [vmem:[#allocation11 + $0xb0] sm:$0xff]
    %v5002 = vld [vmem:[#allocation11 + $0xb8] sm:$0xff]
    %v5003 = vld [vmem:[#allocation11 + $0xc0] sm:$0xff]
    %v5004 = vld [vmem:[#allocation11 + $0xc8] sm:$0xff]
    %v5005 = vld [vmem:[#allocation11 + $0xd0] sm:$0xff]
    %v5006 = vld [vmem:[#allocation11 + $0xd8] sm:$0xff]
    %v5007 = vld [vmem:[#allocation11 + $0xe0] sm:$0xff]
    %v5008 = vld [vmem:[#allocation11 + $0xe8] sm:$0xff]
    %v5009 = vld [vmem:[#allocation11 + $0xf0] sm:$0xff]
    %v5010 = vld [vmem:[#allocation11 + $0xf8] sm:$0xff]
    %v5011 = vld [vmem:[#allocation11 + $0x100] sm:$0xff]
    %v5012 = vld [vmem:[#allocation11 + $0x108] sm:$0xff]
    %v5013 = vld [vmem:[#allocation11 + $0x110] sm:$0xff]
    %v5014 = vld [vmem:[#allocation11 + $0x118] sm:$0xff]
    %v5015 = vld [vmem:[#allocation11 + $0x120] sm:$0xff]
    %v5016 = vld [vmem:[#allocation11 + $0x128] sm:$0xff]
    %v5017 = vld [vmem:[#allocation11 + $0x130] sm:$0xff]
    %v5018 = vld [vmem:[#allocation11 + $0x138] sm:$0xff]
    %v5019 = vld [vmem:[#allocation11 + $0x140] sm:$0xff]
    %v5020 = vld [vmem:[#allocation11 + $0x148] sm:$0xff]
    %v5021 = vld [vmem:[#allocation11 + $0x150] sm:$0xff]
    %v5022 = vld [vmem:[#allocation11 + $0x158] sm:$0xff]
    %v5023 = vld [vmem:[#allocation11 + $0x160] sm:$0xff]
    %v5024 = vld [vmem:[#allocation11 + $0x168] sm:$0xff]
    %v5025 = vld [vmem:[#allocation11 + $0x170] sm:$0xff]
    %v5026 = vld [vmem:[#allocation11 + $0x178] sm:$0xff]
    %v5027 = vld [vmem:[#allocation11 + $0x180] sm:$0xff]
    %v5028 = vld [vmem:[#allocation11 + $0x188] sm:$0xff]
    %v5029 = vld [vmem:[#allocation11 + $0x190] sm:$0xff]
    %v5030 = vld [vmem:[#allocation11 + $0x198] sm:$0xff]
    %v5031 = vld [vmem:[#allocation11 + $0x1a0] sm:$0xff]
    %v5032 = vld [vmem:[#allocation11 + $0x1a8] sm:$0xff]
    %v5033 = vld [vmem:[#allocation11 + $0x1b0] sm:$0xff]
    %v5034 = vld [vmem:[#allocation11 + $0x1b8] sm:$0xff]
    %v5035 = vld [vmem:[#allocation11 + $0x1c0] sm:$0xff]
    %v5036 = vld [vmem:[#allocation11 + $0x1c8] sm:$0xff]
    %v5037 = vld [vmem:[#allocation11 + $0x1d0] sm:$0xff]
    %v5038 = vld [vmem:[#allocation11 + $0x1d8] sm:$0xff]
    %v5039 = vld [vmem:[#allocation11 + $0x1e0] sm:$0xff]
    %v5040 = vld [vmem:[#allocation11 + $0x1e8] sm:$0xff]
    %v5041 = vld [vmem:[#allocation11 + $0x1f0] sm:$0xff]
    %v5042 = vld [vmem:[#allocation11 + $0x1f8] sm:$0xff]
    %v5043 = vld [vmem:[#allocation11 + $0x200] sm:$0xff]
    %v5044 = vld [vmem:[#allocation11 + $0x208] sm:$0xff]
    %v5045 = vld [vmem:[#allocation11 + $0x210] sm:$0xff]
    %v5046 = vld [vmem:[#allocation11 + $0x218] sm:$0xff]
    %v5047 = vld [vmem:[#allocation11 + $0x220] sm:$0xff]
    %v5048 = vld [vmem:[#allocation11 + $0x228] sm:$0xff]
    %v5049 = vld [vmem:[#allocation11 + $0x230] sm:$0xff]
    %v5050 = vld [vmem:[#allocation11 + $0x238] sm:$0xff]
    %v5051 = vld [vmem:[#allocation11 + $0x240] sm:$0xff]
    %v5052 = vld [vmem:[#allocation11 + $0x248] sm:$0xff]
    %v5053 = vld [vmem:[#allocation11 + $0x250] sm:$0xff]
    %v5054 = vld [vmem:[#allocation11 + $0x258] sm:$0xff]
    %v5055 = vld [vmem:[#allocation11 + $0x260] sm:$0xff]
    %v5056 = vld [vmem:[#allocation11 + $0x268] sm:$0xff]
    %v5057 = vld [vmem:[#allocation11 + $0x270] sm:$0xff]
    %v5058 = vld [vmem:[#allocation11 + $0x278] sm:$0xff]
    %v5059 = vld [vmem:[#allocation11 + $0x280] sm:$0xff]
    %v5060 = vld [vmem:[#allocation11 + $0x288] sm:$0xff]
    %v5061 = vld [vmem:[#allocation11 + $0x290] sm:$0xff]
    %v5062 = vld [vmem:[#allocation11 + $0x298] sm:$0xff]
    %v5063 = vld [vmem:[#allocation11 + $0x2a0] sm:$0xff]
    %v5064 = vld [vmem:[#allocation11 + $0x2a8] sm:$0xff]
    %v5065 = vld [vmem:[#allocation11 + $0x2b0] sm:$0xff]
    %v5066 = vld [vmem:[#allocation11 + $0x2b8] sm:$0xff]
    %v5067 = vld [vmem:[#allocation11 + $0x2c0] sm:$0xff]
    %v5068 = vld [vmem:[#allocation11 + $0x2c8] sm:$0xff]
    %v5069 = vld [vmem:[#allocation11 + $0x2d0] sm:$0xff]
    %v5070 = vld [vmem:[#allocation11 + $0x2d8] sm:$0xff]
    %v5071 = vld [vmem:[#allocation11 + $0x2e0] sm:$0xff]
    %v5072 = vld [vmem:[#allocation11 + $0x2e8] sm:$0xff]
    %v5073 = vld [vmem:[#allocation11 + $0x2f0] sm:$0xff]
    %v5074 = vld [vmem:[#allocation11 + $0x2f8] sm:$0xff]
    %v5075 = vld [vmem:[#allocation11 + $0x300] sm:$0xff]
    %v5076 = vld [vmem:[#allocation11 + $0x308] sm:$0xff]
    %v5077 = vld [vmem:[#allocation11 + $0x310] sm:$0xff]
    %v5078 = vld [vmem:[#allocation11 + $0x318] sm:$0xff]
    %v5079 = vld [vmem:[#allocation11 + $0x320] sm:$0xff]
    %v5080 = vld [vmem:[#allocation11 + $0x328] sm:$0xff]
    %v5081 = vld [vmem:[#allocation11 + $0x330] sm:$0xff]
    %v5082 = vld [vmem:[#allocation11 + $0x338] sm:$0xff]
    %v5083 = vld [vmem:[#allocation11 + $0x340] sm:$0xff]
    %v5084 = vld [vmem:[#allocation11 + $0x348] sm:$0xff]
    %v5085 = vld [vmem:[#allocation11 + $0x350] sm:$0xff]
    %v5086 = vld [vmem:[#allocation11 + $0x358] sm:$0xff]
    %v5087 = vld [vmem:[#allocation11 + $0x360] sm:$0xff]
    %v5088 = vld [vmem:[#allocation11 + $0x368] sm:$0xff]
    %v5089 = vld [vmem:[#allocation11 + $0x370] sm:$0xff]
    %v5090 = vld [vmem:[#allocation11 + $0x378] sm:$0xff]
    %v5091 = vld [vmem:[#allocation11 + $0x380] sm:$0xff]
    %v5092 = vld [vmem:[#allocation11 + $0x388] sm:$0xff]
    %v5093 = vld [vmem:[#allocation11 + $0x390] sm:$0xff]
    %v5094 = vld [vmem:[#allocation11 + $0x398] sm:$0xff]
    %v5095 = vld [vmem:[#allocation11 + $0x3a0] sm:$0xff]
    %v5096 = vld [vmem:[#allocation11 + $0x3a8] sm:$0xff]
    %v5097 = vld [vmem:[#allocation11 + $0x3b0] sm:$0xff]
    %v5098 = vld [vmem:[#allocation11 + $0x3b8] sm:$0xff]
    %v5099 = vld [vmem:[#allocation11 + $0x3c0] sm:$0xff]
    %v5100 = vld [vmem:[#allocation11 + $0x3c8] sm:$0xff]
    %v5101 = vld [vmem:[#allocation11 + $0x3d0] sm:$0xff]
    %v5102 = vld [vmem:[#allocation11 + $0x3d8] sm:$0xff]
    %v5103 = vld [vmem:[#allocation11 + $0x3e0] sm:$0xff]
    %v5104 = vld [vmem:[#allocation11 + $0x3e8] sm:$0xff]
    %v5105 = vld [vmem:[#allocation11 + $0x3f0] sm:$0xff]
    %v5106 = vld [vmem:[#allocation11 + $0x3f8] sm:$0xff]
    %v5107 = vld [vmem:[%s8] sm:$0xf]
    %v5109 = vlaneseq
    %v5110 = vshrl.u32 %v5109, 7
    %v5111 = vsub.s32 0, %v5110
    %v5112 = vrot.slane %v5107, %v5111
    %v5113 = vlaneseq
    %v5114 = vshrl.u32 %v5113, 7
    %v5115 = vsub.s32 1, %v5114
    %v5116 = vrot.slane %v5107, %v5115
    %v5117 = vlaneseq
    %v5118 = vshrl.u32 %v5117, 7
    %v5119 = vsub.s32 2, %v5118
    %v5120 = vrot.slane %v5107, %v5119
    %v5121 = vlaneseq
    %v5122 = vshrl.u32 %v5121, 7
    %v5123 = vsub.s32 3, %v5122
    %v5124 = vrot.slane %v5107, %v5123
    %v5257 = vunpack.c.l.b16 %v4979
    %v5258 = vunpack.c.h.b16 %v4979
    %v5259 = vunpack.c.l.b16 %v4980
    %v5260 = vunpack.c.h.b16 %v4980
    %v5261 = vunpack.c.l.b16 %v4981
    %v5262 = vunpack.c.h.b16 %v4981
    %v5263 = vunpack.c.l.b16 %v4982
    %v5264 = vunpack.c.h.b16 %v4982
    %v5265 = vunpack.c.l.b16 %v4983
    %v5266 = vunpack.c.h.b16 %v4983
    %v5267 = vunpack.c.l.b16 %v4984
    %v5268 = vunpack.c.h.b16 %v4984
    %v5269 = vunpack.c.l.b16 %v4985
    %v5270 = vunpack.c.h.b16 %v4985
    %v5271 = vunpack.c.l.b16 %v4986
    %v5272 = vunpack.c.h.b16 %v4986
    %v5273 = vunpack.c.l.b16 %v4987
    %v5274 = vunpack.c.h.b16 %v4987
    %v5275 = vunpack.c.l.b16 %v4988
    %v5276 = vunpack.c.h.b16 %v4988
    %v5277 = vunpack.c.l.b16 %v4989
    %v5278 = vunpack.c.h.b16 %v4989
    %v5279 = vunpack.c.l.b16 %v4990
    %v5280 = vunpack.c.h.b16 %v4990
    %v5281 = vunpack.c.l.b16 %v4991
    %v5282 = vunpack.c.h.b16 %v4991
    %v5283 = vunpack.c.l.b16 %v4992
    %v5284 = vunpack.c.h.b16 %v4992
    %v5285 = vunpack.c.l.b16 %v4993
    %v5286 = vunpack.c.h.b16 %v4993
    %v5287 = vunpack.c.l.b16 %v4994
    %v5288 = vunpack.c.h.b16 %v4994
    %v5289 = vunpack.c.l.b16 %v4995
    %v5290 = vunpack.c.h.b16 %v4995
    %v5291 = vunpack.c.l.b16 %v4996
    %v5292 = vunpack.c.h.b16 %v4996
    %v5293 = vunpack.c.l.b16 %v4997
    %v5294 = vunpack.c.h.b16 %v4997
    %v5295 = vunpack.c.l.b16 %v4998
    %v5296 = vunpack.c.h.b16 %v4998
    %v5297 = vunpack.c.l.b16 %v4999
    %v5298 = vunpack.c.h.b16 %v4999
    %v5299 = vunpack.c.l.b16 %v5000
    %v5300 = vunpack.c.h.b16 %v5000
    %v5301 = vunpack.c.l.b16 %v5001
    %v5302 = vunpack.c.h.b16 %v5001
    %v5303 = vunpack.c.l.b16 %v5002
    %v5304 = vunpack.c.h.b16 %v5002
    %v5305 = vunpack.c.l.b16 %v5003
    %v5306 = vunpack.c.h.b16 %v5003
    %v5307 = vunpack.c.l.b16 %v5004
    %v5308 = vunpack.c.h.b16 %v5004
    %v5309 = vunpack.c.l.b16 %v5005
    %v5310 = vunpack.c.h.b16 %v5005
    %v5311 = vunpack.c.l.b16 %v5006
    %v5312 = vunpack.c.h.b16 %v5006
    %v5313 = vunpack.c.l.b16 %v5007
    %v5314 = vunpack.c.h.b16 %v5007
    %v5315 = vunpack.c.l.b16 %v5008
    %v5316 = vunpack.c.h.b16 %v5008
    %v5317 = vunpack.c.l.b16 %v5009
    %v5318 = vunpack.c.h.b16 %v5009
    %v5319 = vunpack.c.l.b16 %v5010
    %v5320 = vunpack.c.h.b16 %v5010
    %v5321 = vunpack.c.l.b16 %v5011
    %v5322 = vunpack.c.h.b16 %v5011
    %v5323 = vunpack.c.l.b16 %v5012
    %v5324 = vunpack.c.h.b16 %v5012
    %v5325 = vunpack.c.l.b16 %v5013
    %v5326 = vunpack.c.h.b16 %v5013
    %v5327 = vunpack.c.l.b16 %v5014
    %v5328 = vunpack.c.h.b16 %v5014
    %v5329 = vunpack.c.l.b16 %v5015
    %v5330 = vunpack.c.h.b16 %v5015
    %v5331 = vunpack.c.l.b16 %v5016
    %v5332 = vunpack.c.h.b16 %v5016
    %v5333 = vunpack.c.l.b16 %v5017
    %v5334 = vunpack.c.h.b16 %v5017
    %v5335 = vunpack.c.l.b16 %v5018
    %v5336 = vunpack.c.h.b16 %v5018
    %v5337 = vunpack.c.l.b16 %v5019
    %v5338 = vunpack.c.h.b16 %v5019
    %v5339 = vunpack.c.l.b16 %v5020
    %v5340 = vunpack.c.h.b16 %v5020
    %v5341 = vunpack.c.l.b16 %v5021
    %v5342 = vunpack.c.h.b16 %v5021
    %v5343 = vunpack.c.l.b16 %v5022
    %v5344 = vunpack.c.h.b16 %v5022
    %v5345 = vunpack.c.l.b16 %v5023
    %v5346 = vunpack.c.h.b16 %v5023
    %v5347 = vunpack.c.l.b16 %v5024
    %v5348 = vunpack.c.h.b16 %v5024
    %v5349 = vunpack.c.l.b16 %v5025
    %v5350 = vunpack.c.h.b16 %v5025
    %v5351 = vunpack.c.l.b16 %v5026
    %v5352 = vunpack.c.h.b16 %v5026
    %v5353 = vunpack.c.l.b16 %v5027
    %v5354 = vunpack.c.h.b16 %v5027
    %v5355 = vunpack.c.l.b16 %v5028
    %v5356 = vunpack.c.h.b16 %v5028
    %v5357 = vunpack.c.l.b16 %v5029
    %v5358 = vunpack.c.h.b16 %v5029
    %v5359 = vunpack.c.l.b16 %v5030
    %v5360 = vunpack.c.h.b16 %v5030
    %v5361 = vunpack.c.l.b16 %v5031
    %v5362 = vunpack.c.h.b16 %v5031
    %v5363 = vunpack.c.l.b16 %v5032
    %v5364 = vunpack.c.h.b16 %v5032
    %v5365 = vunpack.c.l.b16 %v5033
    %v5366 = vunpack.c.h.b16 %v5033
    %v5367 = vunpack.c.l.b16 %v5034
    %v5368 = vunpack.c.h.b16 %v5034
    %v5369 = vunpack.c.l.b16 %v5035
    %v5370 = vunpack.c.h.b16 %v5035
    %v5371 = vunpack.c.l.b16 %v5036
    %v5372 = vunpack.c.h.b16 %v5036
    %v5373 = vunpack.c.l.b16 %v5037
    %v5374 = vunpack.c.h.b16 %v5037
    %v5375 = vunpack.c.l.b16 %v5038
    %v5376 = vunpack.c.h.b16 %v5038
    %v5377 = vunpack.c.l.b16 %v5039
    %v5378 = vunpack.c.h.b16 %v5039
    %v5379 = vunpack.c.l.b16 %v5040
    %v5380 = vunpack.c.h.b16 %v5040
    %v5381 = vunpack.c.l.b16 %v5041
    %v5382 = vunpack.c.h.b16 %v5041
    %v5383 = vunpack.c.l.b16 %v5042
    %v5384 = vunpack.c.h.b16 %v5042
    %v5385 = vunpack.c.l.b16 %v5043
    %v5386 = vunpack.c.h.b16 %v5043
    %v5387 = vunpack.c.l.b16 %v5044
    %v5388 = vunpack.c.h.b16 %v5044
    %v5389 = vunpack.c.l.b16 %v5045
    %v5390 = vunpack.c.h.b16 %v5045
    %v5391 = vunpack.c.l.b16 %v5046
    %v5392 = vunpack.c.h.b16 %v5046
    %v5393 = vunpack.c.l.b16 %v5047
    %v5394 = vunpack.c.h.b16 %v5047
    %v5395 = vunpack.c.l.b16 %v5048
    %v5396 = vunpack.c.h.b16 %v5048
    %v5397 = vunpack.c.l.b16 %v5049
    %v5398 = vunpack.c.h.b16 %v5049
    %v5399 = vunpack.c.l.b16 %v5050
    %v5400 = vunpack.c.h.b16 %v5050
    %v5401 = vunpack.c.l.b16 %v5051
    %v5402 = vunpack.c.h.b16 %v5051
    %v5403 = vunpack.c.l.b16 %v5052
    %v5404 = vunpack.c.h.b16 %v5052
    %v5405 = vunpack.c.l.b16 %v5053
    %v5406 = vunpack.c.h.b16 %v5053
    %v5407 = vunpack.c.l.b16 %v5054
    %v5408 = vunpack.c.h.b16 %v5054
    %v5409 = vunpack.c.l.b16 %v5055
    %v5410 = vunpack.c.h.b16 %v5055
    %v5411 = vunpack.c.l.b16 %v5056
    %v5412 = vunpack.c.h.b16 %v5056
    %v5413 = vunpack.c.l.b16 %v5057
    %v5414 = vunpack.c.h.b16 %v5057
    %v5415 = vunpack.c.l.b16 %v5058
    %v5416 = vunpack.c.h.b16 %v5058
    %v5417 = vunpack.c.l.b16 %v5059
    %v5418 = vunpack.c.h.b16 %v5059
    %v5419 = vunpack.c.l.b16 %v5060
    %v5420 = vunpack.c.h.b16 %v5060
    %v5421 = vunpack.c.l.b16 %v5061
    %v5422 = vunpack.c.h.b16 %v5061
    %v5423 = vunpack.c.l.b16 %v5062
    %v5424 = vunpack.c.h.b16 %v5062
    %v5425 = vunpack.c.l.b16 %v5063
    %v5426 = vunpack.c.h.b16 %v5063
    %v5427 = vunpack.c.l.b16 %v5064
    %v5428 = vunpack.c.h.b16 %v5064
    %v5429 = vunpack.c.l.b16 %v5065
    %v5430 = vunpack.c.h.b16 %v5065
    %v5431 = vunpack.c.l.b16 %v5066
    %v5432 = vunpack.c.h.b16 %v5066
    %v5433 = vunpack.c.l.b16 %v5067
    %v5434 = vunpack.c.h.b16 %v5067
    %v5435 = vunpack.c.l.b16 %v5068
    %v5436 = vunpack.c.h.b16 %v5068
    %v5437 = vunpack.c.l.b16 %v5069
    %v5438 = vunpack.c.h.b16 %v5069
    %v5439 = vunpack.c.l.b16 %v5070
    %v5440 = vunpack.c.h.b16 %v5070
    %v5441 = vunpack.c.l.b16 %v5071
    %v5442 = vunpack.c.h.b16 %v5071
    %v5443 = vunpack.c.l.b16 %v5072
    %v5444 = vunpack.c.h.b16 %v5072
    %v5445 = vunpack.c.l.b16 %v5073
    %v5446 = vunpack.c.h.b16 %v5073
    %v5447 = vunpack.c.l.b16 %v5074
    %v5448 = vunpack.c.h.b16 %v5074
    %v5449 = vunpack.c.l.b16 %v5075
    %v5450 = vunpack.c.h.b16 %v5075
    %v5451 = vunpack.c.l.b16 %v5076
    %v5452 = vunpack.c.h.b16 %v5076
    %v5453 = vunpack.c.l.b16 %v5077
    %v5454 = vunpack.c.h.b16 %v5077
    %v5455 = vunpack.c.l.b16 %v5078
    %v5456 = vunpack.c.h.b16 %v5078
    %v5457 = vunpack.c.l.b16 %v5079
    %v5458 = vunpack.c.h.b16 %v5079
    %v5459 = vunpack.c.l.b16 %v5080
    %v5460 = vunpack.c.h.b16 %v5080
    %v5461 = vunpack.c.l.b16 %v5081
    %v5462 = vunpack.c.h.b16 %v5081
    %v5463 = vunpack.c.l.b16 %v5082
    %v5464 = vunpack.c.h.b16 %v5082
    %v5465 = vunpack.c.l.b16 %v5083
    %v5466 = vunpack.c.h.b16 %v5083
    %v5467 = vunpack.c.l.b16 %v5084
    %v5468 = vunpack.c.h.b16 %v5084
    %v5469 = vunpack.c.l.b16 %v5085
    %v5470 = vunpack.c.h.b16 %v5085
    %v5471 = vunpack.c.l.b16 %v5086
    %v5472 = vunpack.c.h.b16 %v5086
    %v5473 = vunpack.c.l.b16 %v5087
    %v5474 = vunpack.c.h.b16 %v5087
    %v5475 = vunpack.c.l.b16 %v5088
    %v5476 = vunpack.c.h.b16 %v5088
    %v5477 = vunpack.c.l.b16 %v5089
    %v5478 = vunpack.c.h.b16 %v5089
    %v5479 = vunpack.c.l.b16 %v5090
    %v5480 = vunpack.c.h.b16 %v5090
    %v5481 = vunpack.c.l.b16 %v5091
    %v5482 = vunpack.c.h.b16 %v5091
    %v5483 = vunpack.c.l.b16 %v5092
    %v5484 = vunpack.c.h.b16 %v5092
    %v5485 = vunpack.c.l.b16 %v5093
    %v5486 = vunpack.c.h.b16 %v5093
    %v5487 = vunpack.c.l.b16 %v5094
    %v5488 = vunpack.c.h.b16 %v5094
    %v5489 = vunpack.c.l.b16 %v5095
    %v5490 = vunpack.c.h.b16 %v5095
    %v5491 = vunpack.c.l.b16 %v5096
    %v5492 = vunpack.c.h.b16 %v5096
    %v5493 = vunpack.c.l.b16 %v5097
    %v5494 = vunpack.c.h.b16 %v5097
    %v5495 = vunpack.c.l.b16 %v5098
    %v5496 = vunpack.c.h.b16 %v5098
    %v5497 = vunpack.c.l.b16 %v5099
    %v5498 = vunpack.c.h.b16 %v5099
    %v5499 = vunpack.c.l.b16 %v5100
    %v5500 = vunpack.c.h.b16 %v5100
    %v5501 = vunpack.c.l.b16 %v5101
    %v5502 = vunpack.c.h.b16 %v5101
    %v5503 = vunpack.c.l.b16 %v5102
    %v5504 = vunpack.c.h.b16 %v5102
    %v5505 = vunpack.c.l.b16 %v5103
    %v5506 = vunpack.c.h.b16 %v5103
    %v5507 = vunpack.c.l.b16 %v5104
    %v5508 = vunpack.c.h.b16 %v5104
    %v5509 = vunpack.c.l.b16 %v5105
    %v5510 = vunpack.c.h.b16 %v5105
    %v5511 = vunpack.c.l.b16 %v5106
    %v5512 = vunpack.c.h.b16 %v5106
    %v5513 = vpack.c.b16 %v5261, %v5257
    %v5514 = vpack.c.b16 %v5262, %v5258
    %v5515 = vpack.c.b16 %v5263, %v5259
    %v5516 = vpack.c.b16 %v5264, %v5260
    %v5517 = vpack.c.b16 %v5269, %v5265
    %v5518 = vpack.c.b16 %v5270, %v5266
    %v5519 = vpack.c.b16 %v5271, %v5267
    %v5520 = vpack.c.b16 %v5272, %v5268
    %v5521 = vpack.c.b16 %v5277, %v5273
    %v5522 = vpack.c.b16 %v5278, %v5274
    %v5523 = vpack.c.b16 %v5279, %v5275
    %v5524 = vpack.c.b16 %v5280, %v5276
    %v5525 = vpack.c.b16 %v5285, %v5281
    %v5526 = vpack.c.b16 %v5286, %v5282
    %v5527 = vpack.c.b16 %v5287, %v5283
    %v5528 = vpack.c.b16 %v5288, %v5284
    %v5529 = vpack.c.b16 %v5293, %v5289
    %v5530 = vpack.c.b16 %v5294, %v5290
    %v5531 = vpack.c.b16 %v5295, %v5291
    %v5532 = vpack.c.b16 %v5296, %v5292
    %v5533 = vpack.c.b16 %v5301, %v5297
    %v5534 = vpack.c.b16 %v5302, %v5298
    %v5535 = vpack.c.b16 %v5303, %v5299
    %v5536 = vpack.c.b16 %v5304, %v5300
    %v5537 = vpack.c.b16 %v5309, %v5305
    %v5538 = vpack.c.b16 %v5310, %v5306
    %v5539 = vpack.c.b16 %v5311, %v5307
    %v5540 = vpack.c.b16 %v5312, %v5308
    %v5541 = vpack.c.b16 %v5317, %v5313
    %v5542 = vpack.c.b16 %v5318, %v5314
    %v5543 = vpack.c.b16 %v5319, %v5315
    %v5544 = vpack.c.b16 %v5320, %v5316
    %v5545 = vpack.c.b16 %v5325, %v5321
    %v5546 = vpack.c.b16 %v5326, %v5322
    %v5547 = vpack.c.b16 %v5327, %v5323
    %v5548 = vpack.c.b16 %v5328, %v5324
    %v5549 = vpack.c.b16 %v5333, %v5329
    %v5550 = vpack.c.b16 %v5334, %v5330
    %v5551 = vpack.c.b16 %v5335, %v5331
    %v5552 = vpack.c.b16 %v5336, %v5332
    %v5553 = vpack.c.b16 %v5341, %v5337
    %v5554 = vpack.c.b16 %v5342, %v5338
    %v5555 = vpack.c.b16 %v5343, %v5339
    %v5556 = vpack.c.b16 %v5344, %v5340
    %v5557 = vpack.c.b16 %v5349, %v5345
    %v5558 = vpack.c.b16 %v5350, %v5346
    %v5559 = vpack.c.b16 %v5351, %v5347
    %v5560 = vpack.c.b16 %v5352, %v5348
    %v5561 = vpack.c.b16 %v5357, %v5353
    %v5562 = vpack.c.b16 %v5358, %v5354
    %v5563 = vpack.c.b16 %v5359, %v5355
    %v5564 = vpack.c.b16 %v5360, %v5356
    %v5565 = vpack.c.b16 %v5365, %v5361
    %v5566 = vpack.c.b16 %v5366, %v5362
    %v5567 = vpack.c.b16 %v5367, %v5363
    %v5568 = vpack.c.b16 %v5368, %v5364
    %v5569 = vpack.c.b16 %v5373, %v5369
    %v5570 = vpack.c.b16 %v5374, %v5370
    %v5571 = vpack.c.b16 %v5375, %v5371
    %v5572 = vpack.c.b16 %v5376, %v5372
    %v5573 = vpack.c.b16 %v5381, %v5377
    %v5574 = vpack.c.b16 %v5382, %v5378
    %v5575 = vpack.c.b16 %v5383, %v5379
    %v5576 = vpack.c.b16 %v5384, %v5380
    %v5577 = vpack.c.b16 %v5389, %v5385
    %v5578 = vpack.c.b16 %v5390, %v5386
    %v5579 = vpack.c.b16 %v5391, %v5387
    %v5580 = vpack.c.b16 %v5392, %v5388
    %v5581 = vpack.c.b16 %v5397, %v5393
    %v5582 = vpack.c.b16 %v5398, %v5394
    %v5583 = vpack.c.b16 %v5399, %v5395
    %v5584 = vpack.c.b16 %v5400, %v5396
    %v5585 = vpack.c.b16 %v5405, %v5401
    %v5586 = vpack.c.b16 %v5406, %v5402
    %v5587 = vpack.c.b16 %v5407, %v5403
    %v5588 = vpack.c.b16 %v5408, %v5404
    %v5589 = vpack.c.b16 %v5413, %v5409
    %v5590 = vpack.c.b16 %v5414, %v5410
    %v5591 = vpack.c.b16 %v5415, %v5411
    %v5592 = vpack.c.b16 %v5416, %v5412
    %v5593 = vpack.c.b16 %v5421, %v5417
    %v5594 = vpack.c.b16 %v5422, %v5418
    %v5595 = vpack.c.b16 %v5423, %v5419
    %v5596 = vpack.c.b16 %v5424, %v5420
    %v5597 = vpack.c.b16 %v5429, %v5425
    %v5598 = vpack.c.b16 %v5430, %v5426
    %v5599 = vpack.c.b16 %v5431, %v5427
    %v5600 = vpack.c.b16 %v5432, %v5428
    %v5601 = vpack.c.b16 %v5437, %v5433
    %v5602 = vpack.c.b16 %v5438, %v5434
    %v5603 = vpack.c.b16 %v5439, %v5435
    %v5604 = vpack.c.b16 %v5440, %v5436
    %v5605 = vpack.c.b16 %v5445, %v5441
    %v5606 = vpack.c.b16 %v5446, %v5442
    %v5607 = vpack.c.b16 %v5447, %v5443
    %v5608 = vpack.c.b16 %v5448, %v5444
    %v5609 = vpack.c.b16 %v5453, %v5449
    %v5610 = vpack.c.b16 %v5454, %v5450
    %v5611 = vpack.c.b16 %v5455, %v5451
    %v5612 = vpack.c.b16 %v5456, %v5452
    %v5613 = vpack.c.b16 %v5461, %v5457
    %v5614 = vpack.c.b16 %v5462, %v5458
    %v5615 = vpack.c.b16 %v5463, %v5459
    %v5616 = vpack.c.b16 %v5464, %v5460
    %v5617 = vpack.c.b16 %v5469, %v5465
    %v5618 = vpack.c.b16 %v5470, %v5466
    %v5619 = vpack.c.b16 %v5471, %v5467
    %v5620 = vpack.c.b16 %v5472, %v5468
    %v5621 = vpack.c.b16 %v5477, %v5473
    %v5622 = vpack.c.b16 %v5478, %v5474
    %v5623 = vpack.c.b16 %v5479, %v5475
    %v5624 = vpack.c.b16 %v5480, %v5476
    %v5625 = vpack.c.b16 %v5485, %v5481
    %v5626 = vpack.c.b16 %v5486, %v5482
    %v5627 = vpack.c.b16 %v5487, %v5483
    %v5628 = vpack.c.b16 %v5488, %v5484
    %v5629 = vpack.c.b16 %v5493, %v5489
    %v5630 = vpack.c.b16 %v5494, %v5490
    %v5631 = vpack.c.b16 %v5495, %v5491
    %v5632 = vpack.c.b16 %v5496, %v5492
    %v5633 = vpack.c.b16 %v5501, %v5497
    %v5634 = vpack.c.b16 %v5502, %v5498
    %v5635 = vpack.c.b16 %v5503, %v5499
    %v5636 = vpack.c.b16 %v5504, %v5500
    %v5637 = vpack.c.b16 %v5509, %v5505
    %v5638 = vpack.c.b16 %v5510, %v5506
    %v5639 = vpack.c.b16 %v5511, %v5507
    %v5640 = vpack.c.b16 %v5512, %v5508
    %5769 = vmatprep.subr.bf16.mxu0 %v5514
    %5770 = vmatpush1.bf16.msra.mxu0 %v5513
    %5771 = vmatprep.subr.bf16.mxu0 %v5518
    %5772 = vmatpush1.bf16.msra.mxu0 %v5517
    %5773 = vmatprep.subr.bf16.mxu0 %v5522
    %5774 = vmatpush1.bf16.msra.mxu0 %v5521
    %5775 = vmatprep.subr.bf16.mxu0 %v5526
    %5776 = vmatpush1.bf16.msra.mxu0 %v5525
    %5777 = vmatprep.subr.bf16.mxu0 %v5530
    %5778 = vmatpush1.bf16.msra.mxu0 %v5529
    %5779 = vmatprep.subr.bf16.mxu0 %v5534
    %5780 = vmatpush1.bf16.msra.mxu0 %v5533
    %5781 = vmatprep.subr.bf16.mxu0 %v5538
    %5782 = vmatpush1.bf16.msra.mxu0 %v5537
    %5783 = vmatprep.subr.bf16.mxu0 %v5542
    %5784 = vmatpush1.bf16.msra.mxu0 %v5541
    %5785 = vmatprep.subr.bf16.mxu0 %v5546
    %5786 = vmatpush1.bf16.msra.mxu0 %v5545
    %5787 = vmatprep.subr.bf16.mxu0 %v5550
    %5788 = vmatpush1.bf16.msra.mxu0 %v5549
    %5789 = vmatprep.subr.bf16.mxu0 %v5554
    %5790 = vmatpush1.bf16.msra.mxu0 %v5553
    %5791 = vmatprep.subr.bf16.mxu0 %v5558
    %5792 = vmatpush1.bf16.msra.mxu0 %v5557
    %5793 = vmatprep.subr.bf16.mxu0 %v5562
    %5794 = vmatpush1.bf16.msra.mxu0 %v5561
    %5795 = vmatprep.subr.bf16.mxu0 %v5566
    %5796 = vmatpush1.bf16.msra.mxu0 %v5565
    %5797 = vmatprep.subr.bf16.mxu0 %v5570
    %5798 = vmatpush1.bf16.msra.mxu0 %v5569
    %5799 = vmatprep.subr.bf16.mxu0 %v5574
    %5800 = vmatpush1.bf16.msra.mxu0 %v5573
    %5801 = vmatprep.mubr.bf16.mxu0 %v4976
    %5802 = vmatmul.mubr.bf16.gmra.mrb[0].mxu0 %v4975
    %v5803 = vpop.f32.mrb[0].mxu0
    %v5804 = vadd.f32 %v5112, %v5803
    %v5805 = vpop.f32.mrb[0].mxu0
    %v5806 = vadd.f32 %v5116, %v5805
    %v5807 = vpop.f32.mrb[0].mxu0
    %v5808 = vadd.f32 %v5112, %v5807
    %v5809 = vpop.f32.mrb[0].mxu0
    %v5810 = vadd.f32 %v5116, %v5809
    %5811 = vdwg.mxu0
    %5812 = vmatprep.subr.bf16.mxu0 %v5578
    %5813 = vmatpush1.bf16.msra.mxu0 %v5577
    %5814 = vmatprep.subr.bf16.mxu0 %v5582
    %5815 = vmatpush1.bf16.msra.mxu0 %v5581
    %5816 = vmatprep.subr.bf16.mxu0 %v5586
    %5817 = vmatpush1.bf16.msra.mxu0 %v5585
    %5818 = vmatprep.subr.bf16.mxu0 %v5590
    %5819 = vmatpush1.bf16.msra.mxu0 %v5589
    %5820 = vmatprep.subr.bf16.mxu0 %v5594
    %5821 = vmatpush1.bf16.msra.mxu0 %v5593
    %5822 = vmatprep.subr.bf16.mxu0 %v5598
    %5823 = vmatpush1.bf16.msra.mxu0 %v5597
    %5824 = vmatprep.subr.bf16.mxu0 %v5602
    %5825 = vmatpush1.bf16.msra.mxu0 %v5601
    %5826 = vmatprep.subr.bf16.mxu0 %v5606
    %5827 = vmatpush1.bf16.msra.mxu0 %v5605
    %5828 = vmatprep.subr.bf16.mxu0 %v5610
    %5829 = vmatpush1.bf16.msra.mxu0 %v5609
    %5830 = vmatprep.subr.bf16.mxu0 %v5614
    %5831 = vmatpush1.bf16.msra.mxu0 %v5613
    %5832 = vmatprep.subr.bf16.mxu0 %v5618
    %5833 = vmatpush1.bf16.msra.mxu0 %v5617
    %5834 = vmatprep.subr.bf16.mxu0 %v5622
    %5835 = vmatpush1.bf16.msra.mxu0 %v5621
    %5836 = vmatprep.subr.bf16.mxu0 %v5626
    %5837 = vmatpush1.bf16.msra.mxu0 %v5625
    %5838 = vmatprep.subr.bf16.mxu0 %v5630
    %5839 = vmatpush1.bf16.msra.mxu0 %v5629
    %5840 = vmatprep.subr.bf16.mxu0 %v5634
    %5841 = vmatpush1.bf16.msra.mxu0 %v5633
    %5842 = vmatprep.subr.bf16.mxu0 %v5638
    %5843 = vmatpush1.bf16.msra.mxu0 %v5637
    %5844 = vmatprep.mubr.bf16.mxu0 %v4978
    %5845 = vmatmul.mubr.bf16.gmra.mrb[0].mxu0 %v4977
    %v5846 = vpop.f32.mrb[0].mxu0
    %v5847 = vadd.f32 %v5804, %v5846
    %v5848 = vpop.f32.mrb[0].mxu0
    %v5849 = vadd.f32 %v5806, %v5848
    %v5850 = vpop.f32.mrb[0].mxu0
    %v5851 = vadd.f32 %v5808, %v5850
    %v5852 = vpop.f32.mrb[0].mxu0
    %v5853 = vadd.f32 %v5810, %v5852
    %5854 = vdwg.mxu0
    %5855 = vmatprep.subr.bf16.mxu0 %v5516
    %5856 = vmatpush1.bf16.msra.mxu0 %v5515
    %5857 = vmatprep.subr.bf16.mxu0 %v5520
    %5858 = vmatpush1.bf16.msra.mxu0 %v5519
    %5859 = vmatprep.subr.bf16.mxu0 %v5524
    %5860 = vmatpush1.bf16.msra.mxu0 %v5523
    %5861 = vmatprep.subr.bf16.mxu0 %v5528
    %5862 = vmatpush1.bf16.msra.mxu0 %v5527
    %5863 = vmatprep.subr.bf16.mxu0 %v5532
    %5864 = vmatpush1.bf16.msra.mxu0 %v5531
    %5865 = vmatprep.subr.bf16.mxu0 %v5536
    %5866 = vmatpush1.bf16.msra.mxu0 %v5535
    %5867 = vmatprep.subr.bf16.mxu0 %v5540
    %5868 = vmatpush1.bf16.msra.mxu0 %v5539
    %5869 = vmatprep.subr.bf16.mxu0 %v5544
    %5870 = vmatpush1.bf16.msra.mxu0 %v5543
    %5871 = vmatprep.subr.bf16.mxu0 %v5548
    %5872 = vmatpush1.bf16.msra.mxu0 %v5547
    %5873 = vmatprep.subr.bf16.mxu0 %v5552
    %5874 = vmatpush1.bf16.msra.mxu0 %v5551
    %5875 = vmatprep.subr.bf16.mxu0 %v5556
    %5876 = vmatpush1.bf16.msra.mxu0 %v5555
    %5877 = vmatprep.subr.bf16.mxu0 %v5560
    %5878 = vmatpush1.bf16.msra.mxu0 %v5559
    %5879 = vmatprep.subr.bf16.mxu0 %v5564
    %5880 = vmatpush1.bf16.msra.mxu0 %v5563
    %5881 = vmatprep.subr.bf16.mxu0 %v5568
    %5882 = vmatpush1.bf16.msra.mxu0 %v5567
    %5883 = vmatprep.subr.bf16.mxu0 %v5572
    %5884 = vmatpush1.bf16.msra.mxu0 %v5571
    %5885 = vmatprep.subr.bf16.mxu0 %v5576
    %5886 = vmatpush1.bf16.msra.mxu0 %v5575
    %5887 = vmatprep.mubr.bf16.mxu0 %v4976
    %5888 = vmatmul.mubr.bf16.gmra.mrb[0].mxu0 %v4975
    %v5889 = vpop.f32.mrb[0].mxu0
    %v5890 = vadd.f32 %v5120, %v5889
    %v5891 = vpop.f32.mrb[0].mxu0
    %v5892 = vadd.f32 %v5124, %v5891
    %v5893 = vpop.f32.mrb[0].mxu0
    %v5894 = vadd.f32 %v5120, %v5893
    %v5895 = vpop.f32.mrb[0].mxu0
    %v5896 = vadd.f32 %v5124, %v5895
    %5897 = vdwg.mxu0
    %5898 = vmatprep.subr.bf16.mxu0 %v5580
    %5899 = vmatpush1.bf16.msra.mxu0 %v5579
    %5900 = vmatprep.subr.bf16.mxu0 %v5584
    %5901 = vmatpush1.bf16.msra.mxu0 %v5583
    %5902 = vmatprep.subr.bf16.mxu0 %v5588
    %5903 = vmatpush1.bf16.msra.mxu0 %v5587
    %5904 = vmatprep.subr.bf16.mxu0 %v5592
    %5905 = vmatpush1.bf16.msra.mxu0 %v5591
    %5906 = vmatprep.subr.bf16.mxu0 %v5596
    %5907 = vmatpush1.bf16.msra.mxu0 %v5595
    %5908 = vmatprep.subr.bf16.mxu0 %v5600
    %5909 = vmatpush1.bf16.msra.mxu0 %v5599
    %5910 = vmatprep.subr.bf16.mxu0 %v5604
    %5911 = vmatpush1.bf16.msra.mxu0 %v5603
    %5912 = vmatprep.subr.bf16.mxu0 %v5608
    %5913 = vmatpush1.bf16.msra.mxu0 %v5607
    %5914 = vmatprep.subr.bf16.mxu0 %v5612
    %5915 = vmatpush1.bf16.msra.mxu0 %v5611
    %5916 = vmatprep.subr.bf16.mxu0 %v5616
    %5917 = vmatpush1.bf16.msra.mxu0 %v5615
    %5918 = vmatprep.subr.bf16.mxu0 %v5620
    %5919 = vmatpush1.bf16.msra.mxu0 %v5619
    %5920 = vmatprep.subr.bf16.mxu0 %v5624
    %5921 = vmatpush1.bf16.msra.mxu0 %v5623
    %5922 = vmatprep.subr.bf16.mxu0 %v5628
    %5923 = vmatpush1.bf16.msra.mxu0 %v5627
    %5924 = vmatprep.subr.bf16.mxu0 %v5632
    %5925 = vmatpush1.bf16.msra.mxu0 %v5631
    %5926 = vmatprep.subr.bf16.mxu0 %v5636
    %5927 = vmatpush1.bf16.msra.mxu0 %v5635
    %5928 = vmatprep.subr.bf16.mxu0 %v5640
    %5929 = vmatpush1.bf16.msra.mxu0 %v5639
    %5930 = vmatprep.mubr.bf16.mxu0 %v4978
    %5931 = vmatmul.mubr.bf16.gmra.mrb[0].mxu0 %v4977
    %v5932 = vpop.f32.mrb[0].mxu0
    %v5933 = vadd.f32 %v5890, %v5932
    %v5934 = vpop.f32.mrb[0].mxu0
    %v5935 = vadd.f32 %v5892, %v5934
    %v5936 = vpop.f32.mrb[0].mxu0
    %v5937 = vadd.f32 %v5894, %v5936
    %v5938 = vpop.f32.mrb[0].mxu0
    %v5939 = vadd.f32 %v5896, %v5938
    %5940 = vdwg.mxu0
    %v5941 = vmax.f32 %v5847, 0.0
    %v5942 = vmax.f32 %v5849, 0.0
    %v5943 = vmax.f32 %v5933, 0.0
    %v5944 = vmax.f32 %v5935, 0.0
    %v5945 = vmax.f32 %v5851, 0.0
    %v5946 = vmax.f32 %v5853, 0.0
    %v5947 = vmax.f32 %v5937, 0.0
    %v5948 = vmax.f32 %v5939, 0.0
    %v5949 = vpack.c.bf16 %v5945, %v5941
    %v5950 = vpack.c.bf16 %v5946, %v5942
    %v5951 = vpack.c.bf16 %v5947, %v5943
    %v5952 = vpack.c.bf16 %v5948, %v5944
    %v5953 = vld [vmem:[#allocation13] sm:$0xf]
    %v5954 = vld [vmem:[#allocation13 + $0x4] sm:$0xf]
    %v5955 = vld [vmem:[#allocation13 + $0x8] sm:$0xf]
    %v5956 = vld [vmem:[#allocation13 + $0xc] sm:$0xf]
    %v5957 = vld [vmem:[#allocation13 + $0x10] sm:$0xf]
    %v5958 = vld [vmem:[#allocation13 + $0x14] sm:$0xf]
    %v5959 = vld [vmem:[#allocation13 + $0x18] sm:$0xf]
    %v5960 = vld [vmem:[#allocation13 + $0x1c] sm:$0xf]
    %v5961 = vld [vmem:[#allocation13 + $0x20] sm:$0xf]
    %v5962 = vld [vmem:[#allocation13 + $0x24] sm:$0xf]
    %v5963 = vld [vmem:[#allocation13 + $0x28] sm:$0xf]
    %v5964 = vld [vmem:[#allocation13 + $0x2c] sm:$0xf]
    %v5965 = vld [vmem:[#allocation13 + $0x30] sm:$0xf]
    %v5966 = vld [vmem:[#allocation13 + $0x34] sm:$0xf]
    %v5967 = vld [vmem:[#allocation13 + $0x38] sm:$0xf]
    %v5968 = vld [vmem:[#allocation13 + $0x3c] sm:$0xf]
    %v5969 = vld [vmem:[#allocation13 + $0x40] sm:$0xf]
    %v5970 = vld [vmem:[#allocation13 + $0x44] sm:$0xf]
    %v5971 = vld [vmem:[#allocation13 + $0x48] sm:$0xf]
    %v5972 = vld [vmem:[#allocation13 + $0x4c] sm:$0xf]
    %v5973 = vld [vmem:[#allocation13 + $0x50] sm:$0xf]
    %v5974 = vld [vmem:[#allocation13 + $0x54] sm:$0xf]
    %v5975 = vld [vmem:[#allocation13 + $0x58] sm:$0xf]
    %v5976 = vld [vmem:[#allocation13 + $0x5c] sm:$0xf]
    %v5977 = vld [vmem:[#allocation13 + $0x60] sm:$0xf]
    %v5978 = vld [vmem:[#allocation13 + $0x64] sm:$0xf]
    %v5979 = vld [vmem:[#allocation13 + $0x68] sm:$0xf]
    %v5980 = vld [vmem:[#allocation13 + $0x6c] sm:$0xf]
    %v5981 = vld [vmem:[#allocation13 + $0x70] sm:$0xf]
    %v5982 = vld [vmem:[#allocation13 + $0x74] sm:$0xf]
    %v5983 = vld [vmem:[#allocation13 + $0x78] sm:$0xf]
    %v5984 = vld [vmem:[#allocation13 + $0x7c] sm:$0xf]
    %v5985 = vld [vmem:[#allocation13 + $0x80] sm:$0xf]
    %v5986 = vld [vmem:[#allocation13 + $0x84] sm:$0xf]
    %v5987 = vld [vmem:[#allocation13 + $0x88] sm:$0xf]
    %v5988 = vld [vmem:[#allocation13 + $0x8c] sm:$0xf]
    %v5989 = vld [vmem:[#allocation13 + $0x90] sm:$0xf]
    %v5990 = vld [vmem:[#allocation13 + $0x94] sm:$0xf]
    %v5991 = vld [vmem:[#allocation13 + $0x98] sm:$0xf]
    %v5992 = vld [vmem:[#allocation13 + $0x9c] sm:$0xf]
    %v5993 = vld [vmem:[#allocation13 + $0xa0] sm:$0xf]
    %v5994 = vld [vmem:[#allocation13 + $0xa4] sm:$0xf]
    %v5995 = vld [vmem:[#allocation13 + $0xa8] sm:$0xf]
    %v5996 = vld [vmem:[#allocation13 + $0xac] sm:$0xf]
    %v5997 = vld [vmem:[#allocation13 + $0xb0] sm:$0xf]
    %v5998 = vld [vmem:[#allocation13 + $0xb4] sm:$0xf]
    %v5999 = vld [vmem:[#allocation13 + $0xb8] sm:$0xf]
    %v6000 = vld [vmem:[#allocation13 + $0xbc] sm:$0xf]
    %v6001 = vld [vmem:[#allocation13 + $0xc0] sm:$0xf]
    %v6002 = vld [vmem:[#allocation13 + $0xc4] sm:$0xf]
    %v6003 = vld [vmem:[#allocation13 + $0xc8] sm:$0xf]
    %v6004 = vld [vmem:[#allocation13 + $0xcc] sm:$0xf]
    %v6005 = vld [vmem:[#allocation13 + $0xd0] sm:$0xf]
    %v6006 = vld [vmem:[#allocation13 + $0xd4] sm:$0xf]
    %v6007 = vld [vmem:[#allocation13 + $0xd8] sm:$0xf]
    %v6008 = vld [vmem:[#allocation13 + $0xdc] sm:$0xf]
    %v6009 = vld [vmem:[#allocation13 + $0xe0] sm:$0xf]
    %v6010 = vld [vmem:[#allocation13 + $0xe4] sm:$0xf]
    %v6011 = vld [vmem:[#allocation13 + $0xe8] sm:$0xf]
    %v6012 = vld [vmem:[#allocation13 + $0xec] sm:$0xf]
    %v6013 = vld [vmem:[#allocation13 + $0xf0] sm:$0xf]
    %v6014 = vld [vmem:[#allocation13 + $0xf4] sm:$0xf]
    %v6015 = vld [vmem:[#allocation13 + $0xf8] sm:$0xf]
    %v6016 = vld [vmem:[#allocation13 + $0xfc] sm:$0xf]
    %v6017 = vld [vmem:[%s10] sm:$0x1]
    %v6019 = vlaneseq
    %v6020 = vshrl.u32 %v6019, 7
    %v6021 = vsub.s32 0, %v6020
    %v6022 = vrot.slane %v6017, %v6021
    %v6088 = vunpack.c.l.b16 %v5953
    %v6089 = vunpack.c.l.b16 %v5954
    %v6090 = vunpack.c.l.b16 %v5955
    %v6091 = vunpack.c.l.b16 %v5956
    %v6092 = vunpack.c.l.b16 %v5957
    %v6093 = vunpack.c.l.b16 %v5958
    %v6094 = vunpack.c.l.b16 %v5959
    %v6095 = vunpack.c.l.b16 %v5960
    %v6096 = vunpack.c.l.b16 %v5961
    %v6097 = vunpack.c.l.b16 %v5962
    %v6098 = vunpack.c.l.b16 %v5963
    %v6099 = vunpack.c.l.b16 %v5964
    %v6100 = vunpack.c.l.b16 %v5965
    %v6101 = vunpack.c.l.b16 %v5966
    %v6102 = vunpack.c.l.b16 %v5967
    %v6103 = vunpack.c.l.b16 %v5968
    %v6104 = vunpack.c.l.b16 %v5969
    %v6105 = vunpack.c.l.b16 %v5970
    %v6106 = vunpack.c.l.b16 %v5971
    %v6107 = vunpack.c.l.b16 %v5972
    %v6108 = vunpack.c.l.b16 %v5973
    %v6109 = vunpack.c.l.b16 %v5974
    %v6110 = vunpack.c.l.b16 %v5975
    %v6111 = vunpack.c.l.b16 %v5976
    %v6112 = vunpack.c.l.b16 %v5977
    %v6113 = vunpack.c.l.b16 %v5978
    %v6114 = vunpack.c.l.b16 %v5979
    %v6115 = vunpack.c.l.b16 %v5980
    %v6116 = vunpack.c.l.b16 %v5981
    %v6117 = vunpack.c.l.b16 %v5982
    %v6118 = vunpack.c.l.b16 %v5983
    %v6119 = vunpack.c.l.b16 %v5984
    %v6120 = vunpack.c.l.b16 %v5985
    %v6121 = vunpack.c.l.b16 %v5986
    %v6122 = vunpack.c.l.b16 %v5987
    %v6123 = vunpack.c.l.b16 %v5988
    %v6124 = vunpack.c.l.b16 %v5989
    %v6125 = vunpack.c.l.b16 %v5990
    %v6126 = vunpack.c.l.b16 %v5991
    %v6127 = vunpack.c.l.b16 %v5992
    %v6128 = vunpack.c.l.b16 %v5993
    %v6129 = vunpack.c.l.b16 %v5994
    %v6130 = vunpack.c.l.b16 %v5995
    %v6131 = vunpack.c.l.b16 %v5996
    %v6132 = vunpack.c.l.b16 %v5997
    %v6133 = vunpack.c.l.b16 %v5998
    %v6134 = vunpack.c.l.b16 %v5999
    %v6135 = vunpack.c.l.b16 %v6000
    %v6136 = vunpack.c.l.b16 %v6001
    %v6137 = vunpack.c.l.b16 %v6002
    %v6138 = vunpack.c.l.b16 %v6003
    %v6139 = vunpack.c.l.b16 %v6004
    %v6140 = vunpack.c.l.b16 %v6005
    %v6141 = vunpack.c.l.b16 %v6006
    %v6142 = vunpack.c.l.b16 %v6007
    %v6143 = vunpack.c.l.b16 %v6008
    %v6144 = vunpack.c.l.b16 %v6009
    %v6145 = vunpack.c.l.b16 %v6010
    %v6146 = vunpack.c.l.b16 %v6011
    %v6147 = vunpack.c.l.b16 %v6012
    %v6148 = vunpack.c.l.b16 %v6013
    %v6149 = vunpack.c.l.b16 %v6014
    %v6150 = vunpack.c.l.b16 %v6015
    %v6151 = vunpack.c.l.b16 %v6016
    %v6152 = vpack.c.b16 %v6089, %v6088
    %v6153 = vpack.c.b16 %v6091, %v6090
    %v6154 = vpack.c.b16 %v6093, %v6092
    %v6155 = vpack.c.b16 %v6095, %v6094
    %v6156 = vpack.c.b16 %v6097, %v6096
    %v6157 = vpack.c.b16 %v6099, %v6098
    %v6158 = vpack.c.b16 %v6101, %v6100
    %v6159 = vpack.c.b16 %v6103, %v6102
    %v6160 = vpack.c.b16 %v6105, %v6104
    %v6161 = vpack.c.b16 %v6107, %v6106
    %v6162 = vpack.c.b16 %v6109, %v6108
    %v6163 = vpack.c.b16 %v6111, %v6110
    %v6164 = vpack.c.b16 %v6113, %v6112
    %v6165 = vpack.c.b16 %v6115, %v6114
    %v6166 = vpack.c.b16 %v6117, %v6116
    %v6167 = vpack.c.b16 %v6119, %v6118
    %v6168 = vpack.c.b16 %v6121, %v6120
    %v6169 = vpack.c.b16 %v6123, %v6122
    %v6170 = vpack.c.b16 %v6125, %v6124
    %v6171 = vpack.c.b16 %v6127, %v6126
    %v6172 = vpack.c.b16 %v6129, %v6128
    %v6173 = vpack.c.b16 %v6131, %v6130
    %v6174 = vpack.c.b16 %v6133, %v6132
    %v6175 = vpack.c.b16 %v6135, %v6134
    %v6176 = vpack.c.b16 %v6137, %v6136
    %v6177 = vpack.c.b16 %v6139, %v6138
    %v6178 = vpack.c.b16 %v6141, %v6140
    %v6179 = vpack.c.b16 %v6143, %v6142
    %v6180 = vpack.c.b16 %v6145, %v6144
    %v6181 = vpack.c.b16 %v6147, %v6146
    %v6182 = vpack.c.b16 %v6149, %v6148
    %v6183 = vpack.c.b16 %v6151, %v6150
    %6216 = vmatprep.subr.bf16.mxu0 0
    %6217 = vmatpush1.bf16.msra.mxu0 %v6152
    %6218 = vmatprep.subr.bf16.mxu0 0
    %6219 = vmatpush1.bf16.msra.mxu0 %v6153
    %6220 = vmatprep.subr.bf16.mxu0 0
    %6221 = vmatpush1.bf16.msra.mxu0 %v6154
    %6222 = vmatprep.subr.bf16.mxu0 0
    %6223 = vmatpush1.bf16.msra.mxu0 %v6155
    %6224 = vmatprep.subr.bf16.mxu0 0
    %6225 = vmatpush1.bf16.msra.mxu0 %v6156
    %6226 = vmatprep.subr.bf16.mxu0 0
    %6227 = vmatpush1.bf16.msra.mxu0 %v6157
    %6228 = vmatprep.subr.bf16.mxu0 0
    %6229 = vmatpush1.bf16.msra.mxu0 %v6158
    %6230 = vmatprep.subr.bf16.mxu0 0
    %6231 = vmatpush1.bf16.msra.mxu0 %v6159
    %6232 = vmatprep.subr.bf16.mxu0 0
    %6233 = vmatpush1.bf16.msra.mxu0 %v6160
    %6234 = vmatprep.subr.bf16.mxu0 0
    %6235 = vmatpush1.bf16.msra.mxu0 %v6161
    %6236 = vmatprep.subr.bf16.mxu0 0
    %6237 = vmatpush1.bf16.msra.mxu0 %v6162
    %6238 = vmatprep.subr.bf16.mxu0 0
    %6239 = vmatpush1.bf16.msra.mxu0 %v6163
    %6240 = vmatprep.subr.bf16.mxu0 0
    %6241 = vmatpush1.bf16.msra.mxu0 %v6164
    %6242 = vmatprep.subr.bf16.mxu0 0
    %6243 = vmatpush1.bf16.msra.mxu0 %v6165
    %6244 = vmatprep.subr.bf16.mxu0 0
    %6245 = vmatpush1.bf16.msra.mxu0 %v6166
    %6246 = vmatprep.subr.bf16.mxu0 0
    %6247 = vmatpush1.bf16.msra.mxu0 %v6167
    %6248 = vmatprep.mubr.bf16.mxu0 %v5950
    %6249 = vmatmul.mubr.bf16.gmra.mrb[0].mxu0 %v5949
    %v6250 = vpop.f32.mrb[0].mxu0
    %v6251 = vadd.f32 %v6022, %v6250
    %v6252 = vpop.f32.mrb[0].mxu0
    %v6253 = vpop.f32.mrb[0].mxu0
    %v6254 = vadd.f32 %v6022, %v6253
    %v6255 = vpop.f32.mrb[0].mxu0
    %6256 = vdwg.mxu0
    %6257 = vmatprep.subr.bf16.mxu0 0
    %6258 = vmatpush1.bf16.msra.mxu0 %v6168
    %6259 = vmatprep.subr.bf16.mxu0 0
    %6260 = vmatpush1.bf16.msra.mxu0 %v6169
    %6261 = vmatprep.subr.bf16.mxu0 0
    %6262 = vmatpush1.bf16.msra.mxu0 %v6170
    %6263 = vmatprep.subr.bf16.mxu0 0
    %6264 = vmatpush1.bf16.msra.mxu0 %v6171
    %6265 = vmatprep.subr.bf16.mxu0 0
    %6266 = vmatpush1.bf16.msra.mxu0 %v6172
    %6267 = vmatprep.subr.bf16.mxu0 0
    %6268 = vmatpush1.bf16.msra.mxu0 %v6173
    %6269 = vmatprep.subr.bf16.mxu0 0
    %6270 = vmatpush1.bf16.msra.mxu0 %v6174
    %6271 = vmatprep.subr.bf16.mxu0 0
    %6272 = vmatpush1.bf16.msra.mxu0 %v6175
    %6273 = vmatprep.subr.bf16.mxu0 0
    %6274 = vmatpush1.bf16.msra.mxu0 %v6176
    %6275 = vmatprep.subr.bf16.mxu0 0
    %6276 = vmatpush1.bf16.msra.mxu0 %v6177
    %6277 = vmatprep.subr.bf16.mxu0 0
    %6278 = vmatpush1.bf16.msra.mxu0 %v6178
    %6279 = vmatprep.subr.bf16.mxu0 0
    %6280 = vmatpush1.bf16.msra.mxu0 %v6179
    %6281 = vmatprep.subr.bf16.mxu0 0
    %6282 = vmatpush1.bf16.msra.mxu0 %v6180
    %6283 = vmatprep.subr.bf16.mxu0 0
    %6284 = vmatpush1.bf16.msra.mxu0 %v6181
    %6285 = vmatprep.subr.bf16.mxu0 0
    %6286 = vmatpush1.bf16.msra.mxu0 %v6182
    %6287 = vmatprep.subr.bf16.mxu0 0
    %6288 = vmatpush1.bf16.msra.mxu0 %v6183
    %6289 = vmatprep.mubr.bf16.mxu0 %v5952
    %6290 = vmatmul.mubr.bf16.gmra.mrb[0].mxu0 %v5951
    %v6291 = vpop.f32.mrb[0].mxu0
    %v6292 = vadd.f32 %v6251, %v6291
    %v6293 = vpop.f32.mrb[0].mxu0
    %v6294 = vpop.f32.mrb[0].mxu0
    %v6295 = vadd.f32 %v6254, %v6294
    %v6296 = vpop.f32.mrb[0].mxu0
    %6297 = vdwg.mxu0
    %6298 = vst [vmem:[#allocation14] sm:$0xff] %v6292
    %6299 = vst [vmem:[#allocation14 + $0x8] sm:$0xff] %v6295
    // Predicated region
    $region74: #{tpu_custom_call.1} parent=1 // pred_check
      _
    $region75: #{tpu_custom_call.1} parent=1 // pred_check_branch
      %6301 = sbr.rel (0) target = $region77
    $region76: #{tpu_custom_call.1} parent=1 // pred_region
      %s6303 = ssub.s32 256, 256
      %6304 = vsyncadd [#allocation4], %s6303
      %s6305 = sshll.u32 [#allocation14], 4
      %s6306 = int_to_ptr.vmem [resolvable:$true] %s6305
      %6311 = dma.vmem_to_hbm [thread:$0]  %s6306, 256, %s11, [#allocation4], 128, 128, 8
    $region77: #{tpu_custom_call.1} parent=1 // pred_fallthru
      _
    // Predicated region
    $region78: #{tpu_custom_call.1} parent=1 // pred_check
      _
    $region79: #{tpu_custom_call.1} parent=1 // pred_check_branch
      %6313 = sbr.rel (0) target = $region81
    $region80: #{tpu_custom_call.1} parent=1 // pred_region
      %6314 = dma.done [#allocation4], 256
    $region81: #{tpu_custom_call.1} parent=1 // pred_fallthru
      _
    %6315 = vsyncpa [#allocation3], 1
    %6316 = vsyncpa [#allocation6], 1
    %6317 = vsyncpa [#allocation9], 1
    %6318 = vsyncpa [#allocation12], 1
    %6319 = vsyncpa [#allocation4], 1

</llo_original>
